<compile_context>
chip_gen: v5e
topology: v5e:2x2
jax: 0.10.0
libtpu: 0.0.40
codegen_flags: <defaults>
</compile_context>

<pallas_src>
import functools

import jax
import jax.numpy as jnp
from jax import lax
from jax.experimental import pallas as pl
from jax.experimental.pallas import tpu as pltpu

_LANE = 128


def _round_up(x, m):
    return (x + m - 1) // m * m


def _basic_block_kernel(x_ref, w1_ref, ss1_ref, w2_ref, ss2_ref, out_ref,
                        act_ref, acc_ref, *, H, W, C1p, C2p):
    """One batch image per grid step.

    x_ref   : (1, (H+2)*(W+2)+2, C1p) bf16  flat spatially+channel padded input
    w1_ref  : (9, C1p, C2p)           bf16  per-tap conv1 weights
    ss1_ref : (2, C2p)                f32   [scale; shift] folded BN1 (+bias)
    w2_ref  : (9, C2p, C2p)           bf16  per-tap conv2 weights
    ss2_ref : (2, C2p)                f32   [scale; shift] folded BN2 (+bias)
    out_ref : (1, H*(W+2), C2p)       f32   flat output (junk cols sliced later)
    act_ref : ((H+2)*(W+2)+2, C2p)    bf16  flat padded intermediate (scratch)
    acc_ref : (H*(W+2), C2p)          f32   shared matmul accumulator (scratch)
    """
    Wp = W + 2
    M = H * Wp
    taps = [(dy, dx) for dy in range(3) for dx in range(3)]

    def conv9(load_tap, w_ref):
        # Nine accumulating matmuls over shifted contiguous row-slices.
        for t, (dy, dx) in enumerate(taps):
            lhs = load_tap(dy * Wp + dx)                       # (M, Cin_p) bf16
            contrib = jnp.dot(lhs, w_ref[t],
                              preferred_element_type=jnp.float32)
            if t == 0:
                acc_ref[...] = contrib
            else:
                acc_ref[...] += contrib

    # Columns >= W of every Wp-wide accumulator row are junk ("wrap-around"
    # pixels); they must be zeroed before they become conv2's side padding.
    col = lax.broadcasted_iota(jnp.int32, (H, Wp, C2p), 1)
    valid = col < W

    # ---------------- conv1 + BN1 + ReLU ----------------
    conv9(lambda off: x_ref[0, pl.ds(off, M), :], w1_ref)
    y1 = jnp.maximum(acc_ref[...] * ss1_ref[0:1, :] + ss1_ref[1:2, :], 0.0)
    y1 = jnp.where(valid, y1.reshape(H, Wp, C2p), 0.0).reshape(M, C2p)

    # Intermediate stays on-chip as conv2's zero-padded input.  The stored
    # block (offset W+3) covers the interior and both side borders (masked to
    # zero above); only the top/bottom border rows need explicit zeros.
    zeros_edge = jnp.zeros((W + 3, C2p), act_ref.dtype)
    act_ref[pl.ds(0, W + 3), :] = zeros_edge
    act_ref[pl.ds(W + 3 + M, W + 3), :] = zeros_edge
    act_ref[pl.ds(W + 3, M), :] = y1.astype(act_ref.dtype)

    # ---------------- conv2 + BN2 + ReLU ----------------
    conv9(lambda off: act_ref[pl.ds(off, M), :], w2_ref)
    y2 = jnp.maximum(acc_ref[...] * ss2_ref[0:1, :] + ss2_ref[1:2, :], 0.0)
    out_ref[0] = y2.astype(out_ref.dtype)


def _fold_bn(conv_bias, gamma, beta, mean, var, eps, cpad):
    """Fold conv bias + eval-mode BN into y = conv(x)*scale + shift, padded."""
    inv_std = 1.0 / jnp.sqrt(var + eps)
    scale = gamma * inv_std
    shift = beta + (conv_bias - mean) * scale
    c = scale.shape[0]
    scale = jnp.pad(scale, (0, cpad - c)).astype(jnp.float32)   # pad scale=0
    shift = jnp.pad(shift, (0, cpad - c)).astype(jnp.float32)   # pad shift=0
    return jnp.stack([scale, shift], axis=0)                    # (2, cpad)


def _pack_weights(w_hwio, cin_pad, cout_pad, dtype):
    """(3,3,Cin,Cout) -> zero-padded per-tap weights (9, cin_pad, cout_pad)."""
    kh, kw, cin, cout = w_hwio.shape
    w = jnp.pad(w_hwio, ((0, 0), (0, 0),
                         (0, cin_pad - cin), (0, cout_pad - cout)))
    return w.reshape(kh * kw, cin_pad, cout_pad).astype(dtype)


def _pick_vmem_limit(needed_bytes):
    """Generation-aware VMEM limit derived from actual block/scratch sizes."""
    phys = 64 * 1024 * 1024                     # conservative default (v7x/TC)
    try:
        phys = getattr(pltpu.get_tpu_info(), "vmem_capacity_bytes", phys)
    except Exception:
        pass
    cap = (phys * 3) // 4                       # headroom; over-budget fails loudly
    return int(min(max(needed_bytes + (8 << 20), 16 << 20), cap))


def basic_block_forward(x_nchw, params, eps=1e-5, compute_dtype=jnp.bfloat16):
    """BasicBlock forward (stride=1), NCHW in / NCHW out, BN in eval mode."""
    N, Cin, H, W = x_nchw.shape
    Cout = params["w1"].shape[-1]
    assert params["w2"].shape[-2] == Cout and params["w2"].shape[-1] == Cout

    Wp = W + 2
    Lp = (H + 2) * Wp          # flat length of the spatially padded image
    M = H * Wp                 # matmul M (includes ~2/W junk columns per row)
    C1p = _round_up(Cin, _LANE)
    C2p = _round_up(Cout, _LANE)

    # Lane-dense, spatially padded, flattened input (one fused XLA pass; the
    # kernel then needs zero staging stores).  +2 overrun rows for the last tap.
    x = jnp.transpose(x_nchw, (0, 2, 3, 1)).astype(compute_dtype)   # NHWC bf16
    x = jnp.pad(x, ((0, 0), (1, 1), (1, 1), (0, C1p - Cin)))
    x = x.reshape(N, Lp, C1p)
    x = jnp.pad(x, ((0, 0), (0, 2), (0, 0)))                        # (N, Lp+2, C1p)

    w1m = _pack_weights(params["w1"], C1p, C2p, compute_dtype)      # (9,C1p,C2p)
    w2m = _pack_weights(params["w2"], C2p, C2p, compute_dtype)      # (9,C2p,C2p)
    ss1 = _fold_bn(params["b1"], params["bn1_gamma"], params["bn1_beta"],
                   params["bn1_mean"], params["bn1_var"], eps, C2p)
    ss2 = _fold_bn(params["b2"], params["bn2_gamma"], params["bn2_beta"],
                   params["bn2_mean"], params["bn2_var"], eps, C2p)

    kernel = functools.partial(_basic_block_kernel, H=H, W=W, C1p=C1p, C2p=C2p)

    # Real (unpadded) FLOPs; bytes of what is actually streamed.
    flops = 2 * N * H * W * 9 * (Cin * Cout + Cout * Cout)
    bytes_accessed = (x.size * x.dtype.itemsize
                      + w1m.size * w1m.dtype.itemsize
                      + w2m.size * w2m.dtype.itemsize
                      + ss1.size * 4 + ss2.size * 4
                      + N * M * C2p * 4)

    itm = jnp.dtype(compute_dtype).itemsize
    block_bytes = ((Lp + 2) * C1p * itm                 # input block
                   + M * C2p * 4                        # output block
                   + 9 * C1p * C2p * itm                # w1
                   + 9 * C2p * C2p * itm                # w2
                   + 2 * 2 * C2p * 4)                   # ss1 + ss2
    scratch_bytes = (Lp + 2) * C2p * itm + M * C2p * 4
    vmem_limit = _pick_vmem_limit(2 * block_bytes + scratch_bytes)

    out_flat = pl.pallas_call(
        kernel,
        out_shape=jax.ShapeDtypeStruct((N, M, C2p), jnp.float32),
        grid_spec=pltpu.PrefetchScalarGridSpec(
            num_scalar_prefetch=0,
            grid=(N,),
            in_specs=[
                pl.BlockSpec((1, Lp + 2, C1p), lambda n: (n, 0, 0)),
                pl.BlockSpec((9, C1p, C2p), lambda n: (0, 0, 0)),
                pl.BlockSpec((2, C2p), lambda n: (0, 0)),
                pl.BlockSpec((9, C2p, C2p), lambda n: (0, 0, 0)),
                pl.BlockSpec((2, C2p), lambda n: (0, 0)),
            ],
            out_specs=pl.BlockSpec((1, M, C2p), lambda n: (n, 0, 0)),
            scratch_shapes=[
                pltpu.VMEM((Lp + 2, C2p), compute_dtype),   # flat padded interm.
                pltpu.VMEM((M, C2p), jnp.float32),          # shared accumulator
            ],
        ),
        compiler_params=pltpu.CompilerParams(
            dimension_semantics=("parallel",),
            vmem_limit_bytes=vmem_limit),
        cost_estimate=pl.CostEstimate(flops=flops, transcendentals=0,
                                      bytes_accessed=bytes_accessed),
    )(x, w1m, ss1, w2m, ss2)

    # Drop junk columns / pad channels and go back to NCHW in one fused pass.
    out = out_flat.reshape(N, H, Wp, C2p)[:, :, :W, :Cout]
    return jnp.transpose(out, (0, 3, 1, 2))      # NHWC -> NCHW, f32


def _reference_forward(x_nchw, params, eps=1e-5, compute_dtype=jnp.bfloat16):
    """Pure-JAX reference mirroring the kernel's bf16-input / f32-accum math."""
    def conv_bn_relu(x, w_hwio, b, gamma, beta, mean, var):
        w_oihw = jnp.transpose(w_hwio, (3, 2, 0, 1)).astype(compute_dtype)
        y = lax.conv_general_dilated(
            x.astype(compute_dtype), w_oihw, window_strides=(1, 1),
            padding=((1, 1), (1, 1)),
            dimension_numbers=("NCHW", "OIHW", "NCHW"),
            preferred_element_type=jnp.float32)
        inv_std = 1.0 / jnp.sqrt(var + eps)
        scale = (gamma * inv_std)[None, :, None, None]
        shift = (beta + (b - mean) * gamma * inv_std)[None, :, None, None]
        return jnp.maximum(y * scale + shift, 0.0)

    out = conv_bn_relu(x_nchw, params["w1"], params["b1"],
                       params["bn1_gamma"], params["bn1_beta"],
                       params["bn1_mean"], params["bn1_var"])
    out = conv_bn_relu(out, params["w2"], params["b2"],
                       params["bn2_gamma"], params["bn2_beta"],
                       params["bn2_mean"], params["bn2_var"])
    return out


def make_params(key, inplanes, planes):
    ks = jax.random.split(key, 6)
    return {
        # weights in HWIO layout (3, 3, Cin, Cout)
        "w1": 0.1 * jax.random.normal(ks[0], (3, 3, inplanes, planes), jnp.float32),
        "b1": 0.05 * jax.random.normal(ks[1], (planes,), jnp.float32),
        "w2": 0.1 * jax.random.normal(ks[2], (3, 3, planes, planes), jnp.float32),
        "b2": 0.05 * jax.random.normal(ks[3], (planes,), jnp.float32),
        "bn1_gamma": 1.0 + 0.1 * jax.random.normal(ks[4], (planes,), jnp.float32),
        "bn1_beta": 0.1 * jnp.ones((planes,), jnp.float32),
        "bn1_mean": jnp.zeros((planes,), jnp.float32),
        "bn1_var": jnp.ones((planes,), jnp.float32),
        "bn2_gamma": 1.0 + 0.1 * jax.random.normal(ks[5], (planes,), jnp.float32),
        "bn2_beta": -0.1 * jnp.ones((planes,), jnp.float32),
        "bn2_mean": jnp.zeros((planes,), jnp.float32),
        "bn2_var": jnp.ones((planes,), jnp.float32),
    }


if __name__ == "__main__":
    key = jax.random.PRNGKey(0)
    k_x, k_p = jax.random.split(key)

    N, inplanes, planes, H, W = 2, 4, 8, 16, 16
    x = jax.random.normal(k_x, (N, inplanes, H, W), jnp.float32)  # NCHW
    params = make_params(k_p, inplanes, planes)

    out = jax.block_until_ready(basic_block_forward(x, params))
    ref = jax.block_until_ready(_reference_forward(x, params))

    assert out.shape == (N, planes, H, W)
    assert out.dtype == jnp.float32
    max_err = float(jnp.max(jnp.abs(out - ref)))
    assert jnp.allclose(out, ref, atol=3e-3, rtol=3e-3), f"mismatch: {max_err}"

    print("KERNEL_OK")
</pallas_src>

<mosaic_0001>
module attributes {stable_mosaic.version = 11 : i64} {
  func.func @_basic_block_kernel(%arg0: i32, %arg1: memref<1x326x128xbf16, #tpu.memory_space<vmem>>, %arg2: memref<9x128x128xbf16, #tpu.memory_space<vmem>>, %arg3: memref<2x128xf32, #tpu.memory_space<vmem>>, %arg4: memref<9x128x128xbf16, #tpu.memory_space<vmem>>, %arg5: memref<2x128xf32, #tpu.memory_space<vmem>>, %arg6: memref<1x288x128xf32, #tpu.memory_space<vmem>>, %arg7: memref<326x128xbf16, #tpu.memory_space<vmem>>, %arg8: memref<288x128xf32, #tpu.memory_space<vmem>>) attributes {dimension_semantics = [#tpu.dimension_semantics<parallel>], iteration_bounds = array<i64: 2>, scalar_prefetch = 0 : i64, scratch_operands = 2 : i64, tpu.core_type = #tpu.core_type<tc>, window_params = [{transform_indices = @transform_0, window_bounds = array<i64: 1, 326, 128>}, {pipeline_mode = #tpu.pipeline_mode<synchronous>, transform_indices = @transform_1, window_bounds = array<i64: 9, 128, 128>}, {pipeline_mode = #tpu.pipeline_mode<synchronous>, transform_indices = @transform_2, window_bounds = array<i64: 2, 128>}, {pipeline_mode = #tpu.pipeline_mode<synchronous>, transform_indices = @transform_3, window_bounds = array<i64: 9, 128, 128>}, {pipeline_mode = #tpu.pipeline_mode<synchronous>, transform_indices = @transform_4, window_bounds = array<i64: 2, 128>}, {transform_indices = @transform_5, window_bounds = array<i64: 1, 288, 128>}]} {
    %0 = tpu.iota {dimensions = array<i32: 1>} : vector<16x18x128xi32>
    %c16_i32 = arith.constant 16 : i32
    %1 = vector.broadcast %c16_i32 : i32 to vector<16x18x128xi32>
    %2 = arith.cmpi slt, %0, %1 : vector<16x18x128xi32>
    %c0 = arith.constant 0 : index
    %c0_0 = arith.constant 0 : index
    %c0_1 = arith.constant 0 : index
    %3 = vector.load %arg1[%c0, %c0_0, %c0_1] : memref<1x326x128xbf16, #tpu.memory_space<vmem>>, vector<1x288x128xbf16>
    %4 = vector.shape_cast %3 : vector<1x288x128xbf16> to vector<288x128xbf16>
    %c0_2 = arith.constant 0 : index
    %c0_3 = arith.constant 0 : index
    %c0_4 = arith.constant 0 : index
    %5 = vector.load %arg2[%c0_2, %c0_3, %c0_4] : memref<9x128x128xbf16, #tpu.memory_space<vmem>>, vector<1x128x128xbf16>
    %6 = vector.shape_cast %5 : vector<1x128x128xbf16> to vector<128x128xbf16>
    %cst = arith.constant dense<0.000000e+00> : vector<288x128xf32>
    %7 = tpu.matmul %4, %6, %cst {dimension_numbers = #tpu.dot_dimension_numbers<[1], [0], [0], [1], [0, 0, 1, 1], [], []>} : vector<288x128xbf16>, vector<128x128xbf16>, vector<288x128xf32> -> vector<288x128xf32>
    %c0_5 = arith.constant 0 : index
    %c0_6 = arith.constant 0 : index
    %8 = vector.load %arg8[%c0_5, %c0_6] : memref<288x128xf32, #tpu.memory_space<vmem>>, vector<288x128xf32>
    tpu.vector_store %arg8[%c0_5, %c0_6], %7 {strides = array<i32>} : memref<288x128xf32, #tpu.memory_space<vmem>>, vector<288x128xf32>,
    %c0_7 = arith.constant 0 : index
    %c1 = arith.constant 1 : index
    %c0_8 = arith.constant 0 : index
    %9 = vector.load %arg1[%c0_7, %c1, %c0_8] : memref<1x326x128xbf16, #tpu.memory_space<vmem>>, vector<1x288x128xbf16>
    %10 = vector.shape_cast %9 : vector<1x288x128xbf16> to vector<288x128xbf16>
    %c1_9 = arith.constant 1 : index
    %c0_10 = arith.constant 0 : index
    %c0_11 = arith.constant 0 : index
    %11 = vector.load %arg2[%c1_9, %c0_10, %c0_11] : memref<9x128x128xbf16, #tpu.memory_space<vmem>>, vector<1x128x128xbf16>
    %12 = vector.shape_cast %11 : vector<1x128x128xbf16> to vector<128x128xbf16>
    %cst_12 = arith.constant dense<0.000000e+00> : vector<288x128xf32>
    %13 = tpu.matmul %10, %12, %cst_12 {dimension_numbers = #tpu.dot_dimension_numbers<[1], [0], [0], [1], [0, 0, 1, 1], [], []>} : vector<288x128xbf16>, vector<128x128xbf16>, vector<288x128xf32> -> vector<288x128xf32>
    %c0_13 = arith.constant 0 : index
    %c0_14 = arith.constant 0 : index
    %14 = vector.load %arg8[%c0_13, %c0_14] : memref<288x128xf32, #tpu.memory_space<vmem>>, vector<288x128xf32>
    %15 = arith.addf %14, %13 : vector<288x128xf32>
    %c0_15 = arith.constant 0 : index
    %c0_16 = arith.constant 0 : index
    %16 = vector.load %arg8[%c0_15, %c0_16] : memref<288x128xf32, #tpu.memory_space<vmem>>, vector<288x128xf32>
    tpu.vector_store %arg8[%c0_15, %c0_16], %15 {strides = array<i32>} : memref<288x128xf32, #tpu.memory_space<vmem>>, vector<288x128xf32>,
    %c0_17 = arith.constant 0 : index
    %c2 = arith.constant 2 : index
    %c0_18 = arith.constant 0 : index
    %17 = vector.load %arg1[%c0_17, %c2, %c0_18] : memref<1x326x128xbf16, #tpu.memory_space<vmem>>, vector<1x288x128xbf16>
    %18 = vector.shape_cast %17 : vector<1x288x128xbf16> to vector<288x128xbf16>
    %c2_19 = arith.constant 2 : index
    %c0_20 = arith.constant 0 : index
    %c0_21 = arith.constant 0 : index
    %19 = vector.load %arg2[%c2_19, %c0_20, %c0_21] : memref<9x128x128xbf16, #tpu.memory_space<vmem>>, vector<1x128x128xbf16>
    %20 = vector.shape_cast %19 : vector<1x128x128xbf16> to vector<128x128xbf16>
    %cst_22 = arith.constant dense<0.000000e+00> : vector<288x128xf32>
    %21 = tpu.matmul %18, %20, %cst_22 {dimension_numbers = #tpu.dot_dimension_numbers<[1], [0], [0], [1], [0, 0, 1, 1], [], []>} : vector<288x128xbf16>, vector<128x128xbf16>, vector<288x128xf32> -> vector<288x128xf32>
    %c0_23 = arith.constant 0 : index
    %c0_24 = arith.constant 0 : index
    %22 = vector.load %arg8[%c0_23, %c0_24] : memref<288x128xf32, #tpu.memory_space<vmem>>, vector<288x128xf32>
    %23 = arith.addf %22, %21 : vector<288x128xf32>
    %c0_25 = arith.constant 0 : index
    %c0_26 = arith.constant 0 : index
    %24 = vector.load %arg8[%c0_25, %c0_26] : memref<288x128xf32, #tpu.memory_space<vmem>>, vector<288x128xf32>
    tpu.vector_store %arg8[%c0_25, %c0_26], %23 {strides = array<i32>} : memref<288x128xf32, #tpu.memory_space<vmem>>, vector<288x128xf32>,
    %c0_27 = arith.constant 0 : index
    %c18 = arith.constant 18 : index
    %c0_28 = arith.constant 0 : index
    %25 = vector.load %arg1[%c0_27, %c18, %c0_28] : memref<1x326x128xbf16, #tpu.memory_space<vmem>>, vector<1x288x128xbf16>
    %26 = vector.shape_cast %25 : vector<1x288x128xbf16> to vector<288x128xbf16>
    %c3 = arith.constant 3 : index
    %c0_29 = arith.constant 0 : index
    %c0_30 = arith.constant 0 : index
    %27 = vector.load %arg2[%c3, %c0_29, %c0_30] : memref<9x128x128xbf16, #tpu.memory_space<vmem>>, vector<1x128x128xbf16>
    %28 = vector.shape_cast %27 : vector<1x128x128xbf16> to vector<128x128xbf16>
    %cst_31 = arith.constant dense<0.000000e+00> : vector<288x128xf32>
    %29 = tpu.matmul %26, %28, %cst_31 {dimension_numbers = #tpu.dot_dimension_numbers<[1], [0], [0], [1], [0, 0, 1, 1], [], []>} : vector<288x128xbf16>, vector<128x128xbf16>, vector<288x128xf32> -> vector<288x128xf32>
    %c0_32 = arith.constant 0 : index
    %c0_33 = arith.constant 0 : index
    %30 = vector.load %arg8[%c0_32, %c0_33] : memref<288x128xf32, #tpu.memory_space<vmem>>, vector<288x128xf32>
    %31 = arith.addf %30, %29 : vector<288x128xf32>
    %c0_34 = arith.constant 0 : index
    %c0_35 = arith.constant 0 : index
    %32 = vector.load %arg8[%c0_34, %c0_35] : memref<288x128xf32, #tpu.memory_space<vmem>>, vector<288x128xf32>
    tpu.vector_store %arg8[%c0_34, %c0_35], %31 {strides = array<i32>} : memref<288x128xf32, #tpu.memory_space<vmem>>, vector<288x128xf32>,
    %c0_36 = arith.constant 0 : index
    %c19 = arith.constant 19 : index
    %c0_37 = arith.constant 0 : index
    %33 = vector.load %arg1[%c0_36, %c19, %c0_37] : memref<1x326x128xbf16, #tpu.memory_space<vmem>>, vector<1x288x128xbf16>
    %34 = vector.shape_cast %33 : vector<1x288x128xbf16> to vector<288x128xbf16>
    %c4 = arith.constant 4 : index
    %c0_38 = arith.constant 0 : index
    %c0_39 = arith.constant 0 : index
    %35 = vector.load %arg2[%c4, %c0_38, %c0_39] : memref<9x128x128xbf16, #tpu.memory_space<vmem>>, vector<1x128x128xbf16>
    %36 = vector.shape_cast %35 : vector<1x128x128xbf16> to vector<128x128xbf16>
    %cst_40 = arith.constant dense<0.000000e+00> : vector<288x128xf32>
    %37 = tpu.matmul %34, %36, %cst_40 {dimension_numbers = #tpu.dot_dimension_numbers<[1], [0], [0], [1], [0, 0, 1, 1], [], []>} : vector<288x128xbf16>, vector<128x128xbf16>, vector<288x128xf32> -> vector<288x128xf32>
    %c0_41 = arith.constant 0 : index
    %c0_42 = arith.constant 0 : index
    %38 = vector.load %arg8[%c0_41, %c0_42] : memref<288x128xf32, #tpu.memory_space<vmem>>, vector<288x128xf32>
    %39 = arith.addf %38, %37 : vector<288x128xf32>
    %c0_43 = arith.constant 0 : index
    %c0_44 = arith.constant 0 : index
    %40 = vector.load %arg8[%c0_43, %c0_44] : memref<288x128xf32, #tpu.memory_space<vmem>>, vector<288x128xf32>
    tpu.vector_store %arg8[%c0_43, %c0_44], %39 {strides = array<i32>} : memref<288x128xf32, #tpu.memory_space<vmem>>, vector<288x128xf32>,
    %c0_45 = arith.constant 0 : index
    %c20 = arith.constant 20 : index
    %c0_46 = arith.constant 0 : index
    %41 = vector.load %arg1[%c0_45, %c20, %c0_46] : memref<1x326x128xbf16, #tpu.memory_space<vmem>>, vector<1x288x128xbf16>
    %42 = vector.shape_cast %41 : vector<1x288x128xbf16> to vector<288x128xbf16>
    %c5 = arith.constant 5 : index
    %c0_47 = arith.constant 0 : index
    %c0_48 = arith.constant 0 : index
    %43 = vector.load %arg2[%c5, %c0_47, %c0_48] : memref<9x128x128xbf16, #tpu.memory_space<vmem>>, vector<1x128x128xbf16>
    %44 = vector.shape_cast %43 : vector<1x128x128xbf16> to vector<128x128xbf16>
    %cst_49 = arith.constant dense<0.000000e+00> : vector<288x128xf32>
    %45 = tpu.matmul %42, %44, %cst_49 {dimension_numbers = #tpu.dot_dimension_numbers<[1], [0], [0], [1], [0, 0, 1, 1], [], []>} : vector<288x128xbf16>, vector<128x128xbf16>, vector<288x128xf32> -> vector<288x128xf32>
    %c0_50 = arith.constant 0 : index
    %c0_51 = arith.constant 0 : index
    %46 = vector.load %arg8[%c0_50, %c0_51] : memref<288x128xf32, #tpu.memory_space<vmem>>, vector<288x128xf32>
    %47 = arith.addf %46, %45 : vector<288x128xf32>
    %c0_52 = arith.constant 0 : index
    %c0_53 = arith.constant 0 : index
    %48 = vector.load %arg8[%c0_52, %c0_53] : memref<288x128xf32, #tpu.memory_space<vmem>>, vector<288x128xf32>
    tpu.vector_store %arg8[%c0_52, %c0_53], %47 {strides = array<i32>} : memref<288x128xf32, #tpu.memory_space<vmem>>, vector<288x128xf32>,
    %c0_54 = arith.constant 0 : index
    %c36 = arith.constant 36 : index
    %c0_55 = arith.constant 0 : index
    %49 = vector.load %arg1[%c0_54, %c36, %c0_55] : memref<1x326x128xbf16, #tpu.memory_space<vmem>>, vector<1x288x128xbf16>
    %50 = vector.shape_cast %49 : vector<1x288x128xbf16> to vector<288x128xbf16>
    %c6 = arith.constant 6 : index
    %c0_56 = arith.constant 0 : index
    %c0_57 = arith.constant 0 : index
    %51 = vector.load %arg2[%c6, %c0_56, %c0_57] : memref<9x128x128xbf16, #tpu.memory_space<vmem>>, vector<1x128x128xbf16>
    %52 = vector.shape_cast %51 : vector<1x128x128xbf16> to vector<128x128xbf16>
    %cst_58 = arith.constant dense<0.000000e+00> : vector<288x128xf32>
    %53 = tpu.matmul %50, %52, %cst_58 {dimension_numbers = #tpu.dot_dimension_numbers<[1], [0], [0], [1], [0, 0, 1, 1], [], []>} : vector<288x128xbf16>, vector<128x128xbf16>, vector<288x128xf32> -> vector<288x128xf32>
    %c0_59 = arith.constant 0 : index
    %c0_60 = arith.constant 0 : index
    %54 = vector.load %arg8[%c0_59, %c0_60] : memref<288x128xf32, #tpu.memory_space<vmem>>, vector<288x128xf32>
    %55 = arith.addf %54, %53 : vector<288x128xf32>
    %c0_61 = arith.constant 0 : index
    %c0_62 = arith.constant 0 : index
    %56 = vector.load %arg8[%c0_61, %c0_62] : memref<288x128xf32, #tpu.memory_space<vmem>>, vector<288x128xf32>
    tpu.vector_store %arg8[%c0_61, %c0_62], %55 {strides = array<i32>} : memref<288x128xf32, #tpu.memory_space<vmem>>, vector<288x128xf32>,
    %c0_63 = arith.constant 0 : index
    %c37 = arith.constant 37 : index
    %c0_64 = arith.constant 0 : index
    %57 = vector.load %arg1[%c0_63, %c37, %c0_64] : memref<1x326x128xbf16, #tpu.memory_space<vmem>>, vector<1x288x128xbf16>
    %58 = vector.shape_cast %57 : vector<1x288x128xbf16> to vector<288x128xbf16>
    %c7 = arith.constant 7 : index
    %c0_65 = arith.constant 0 : index
    %c0_66 = arith.constant 0 : index
    %59 = vector.load %arg2[%c7, %c0_65, %c0_66] : memref<9x128x128xbf16, #tpu.memory_space<vmem>>, vector<1x128x128xbf16>
    %60 = vector.shape_cast %59 : vector<1x128x128xbf16> to vector<128x128xbf16>
    %cst_67 = arith.constant dense<0.000000e+00> : vector<288x128xf32>
    %61 = tpu.matmul %58, %60, %cst_67 {dimension_numbers = #tpu.dot_dimension_numbers<[1], [0], [0], [1], [0, 0, 1, 1], [], []>} : vector<288x128xbf16>, vector<128x128xbf16>, vector<288x128xf32> -> vector<288x128xf32>
    %c0_68 = arith.constant 0 : index
    %c0_69 = arith.constant 0 : index
    %62 = vector.load %arg8[%c0_68, %c0_69] : memref<288x128xf32, #tpu.memory_space<vmem>>, vector<288x128xf32>
    %63 = arith.addf %62, %61 : vector<288x128xf32>
    %c0_70 = arith.constant 0 : index
    %c0_71 = arith.constant 0 : index
    %64 = vector.load %arg8[%c0_70, %c0_71] : memref<288x128xf32, #tpu.memory_space<vmem>>, vector<288x128xf32>
    tpu.vector_store %arg8[%c0_70, %c0_71], %63 {strides = array<i32>} : memref<288x128xf32, #tpu.memory_space<vmem>>, vector<288x128xf32>,
    %c0_72 = arith.constant 0 : index
    %c38 = arith.constant 38 : index
    %c0_73 = arith.constant 0 : index
    %65 = vector.load %arg1[%c0_72, %c38, %c0_73] : memref<1x326x128xbf16, #tpu.memory_space<vmem>>, vector<1x288x128xbf16>
    %66 = vector.shape_cast %65 : vector<1x288x128xbf16> to vector<288x128xbf16>
    %c8 = arith.constant 8 : index
    %c0_74 = arith.constant 0 : index
    %c0_75 = arith.constant 0 : index
    %67 = vector.load %arg2[%c8, %c0_74, %c0_75] : memref<9x128x128xbf16, #tpu.memory_space<vmem>>, vector<1x128x128xbf16>
    %68 = vector.shape_cast %67 : vector<1x128x128xbf16> to vector<128x128xbf16>
    %cst_76 = arith.constant dense<0.000000e+00> : vector<288x128xf32>
    %69 = tpu.matmul %66, %68, %cst_76 {dimension_numbers = #tpu.dot_dimension_numbers<[1], [0], [0], [1], [0, 0, 1, 1], [], []>} : vector<288x128xbf16>, vector<128x128xbf16>, vector<288x128xf32> -> vector<288x128xf32>
    %c0_77 = arith.constant 0 : index
    %c0_78 = arith.constant 0 : index
    %70 = vector.load %arg8[%c0_77, %c0_78] : memref<288x128xf32, #tpu.memory_space<vmem>>, vector<288x128xf32>
    %71 = arith.addf %70, %69 : vector<288x128xf32>
    %c0_79 = arith.constant 0 : index
    %c0_80 = arith.constant 0 : index
    %72 = vector.load %arg8[%c0_79, %c0_80] : memref<288x128xf32, #tpu.memory_space<vmem>>, vector<288x128xf32>
    tpu.vector_store %arg8[%c0_79, %c0_80], %71 {strides = array<i32>} : memref<288x128xf32, #tpu.memory_space<vmem>>, vector<288x128xf32>,
    %c0_81 = arith.constant 0 : index
    %c0_82 = arith.constant 0 : index
    %73 = vector.load %arg8[%c0_81, %c0_82] : memref<288x128xf32, #tpu.memory_space<vmem>>, vector<288x128xf32>
    %c0_83 = arith.constant 0 : index
    %c0_84 = arith.constant 0 : index
    %74 = vector.load %arg3[%c0_83, %c0_84] : memref<2x128xf32, #tpu.memory_space<vmem>>, vector<1x128xf32>
    %75 = vector.broadcast %74 : vector<1x128xf32> to vector<288x128xf32>
    %76 = arith.mulf %73, %75 : vector<288x128xf32>
    %c1_85 = arith.constant 1 : index
    %c0_86 = arith.constant 0 : index
    %77 = vector.load %arg3[%c1_85, %c0_86] : memref<2x128xf32, #tpu.memory_space<vmem>>, vector<1x128xf32>
    %78 = vector.broadcast %77 : vector<1x128xf32> to vector<288x128xf32>
    %79 = arith.addf %76, %78 : vector<288x128xf32>
    %cst_87 = arith.constant 0.000000e+00 : f32
    %80 = vector.broadcast %cst_87 : f32 to vector<288x128xf32>
    %81 = arith.maximumf %79, %80 : vector<288x128xf32>
    %82 = vector.shape_cast %81 : vector<288x128xf32> to vector<16x18x128xf32>
    %cst_88 = arith.constant 0.000000e+00 : f32
    %83 = vector.broadcast %cst_88 : f32 to vector<16x18x128xf32>
    %84 = arith.select %2, %82, %83 : vector<16x18x128xi1>, vector<16x18x128xf32>
    %85 = vector.shape_cast %84 : vector<16x18x128xf32> to vector<288x128xf32>
    %cst_89 = arith.constant 0.000000e+00 : bf16
    %86 = vector.broadcast %cst_89 : bf16 to vector<19x128xbf16>
    %c0_90 = arith.constant 0 : index
    %c0_91 = arith.constant 0 : index
    %87 = vector.load %arg7[%c0_90, %c0_91] : memref<326x128xbf16, #tpu.memory_space<vmem>>, vector<19x128xbf16>
    tpu.vector_store %arg7[%c0_90, %c0_91], %86 {strides = array<i32>} : memref<326x128xbf16, #tpu.memory_space<vmem>>, vector<19x128xbf16>,
    %c307 = arith.constant 307 : index
    %c0_92 = arith.constant 0 : index
    %88 = vector.load %arg7[%c307, %c0_92] : memref<326x128xbf16, #tpu.memory_space<vmem>>, vector<19x128xbf16>
    tpu.vector_store %arg7[%c307, %c0_92], %86 {strides = array<i32>} : memref<326x128xbf16, #tpu.memory_space<vmem>>, vector<19x128xbf16>,
    %89 = arith.truncf %85 : vector<288x128xf32> to vector<288x128xbf16>
    %c19_93 = arith.constant 19 : index
    %c0_94 = arith.constant 0 : index
    %90 = vector.load %arg7[%c19_93, %c0_94] : memref<326x128xbf16, #tpu.memory_space<vmem>>, vector<288x128xbf16>
    tpu.vector_store %arg7[%c19_93, %c0_94], %89 {strides = array<i32>} : memref<326x128xbf16, #tpu.memory_space<vmem>>, vector<288x128xbf16>,
    %c0_95 = arith.constant 0 : index
    %c0_96 = arith.constant 0 : index
    %91 = vector.load %arg7[%c0_95, %c0_96] : memref<326x128xbf16, #tpu.memory_space<vmem>>, vector<288x128xbf16>
    %c0_97 = arith.constant 0 : index
    %c0_98 = arith.constant 0 : index
    %c0_99 = arith.constant 0 : index
    %92 = vector.load %arg4[%c0_97, %c0_98, %c0_99] : memref<9x128x128xbf16, #tpu.memory_space<vmem>>, vector<1x128x128xbf16>
    %93 = vector.shape_cast %92 : vector<1x128x128xbf16> to vector<128x128xbf16>
    %cst_100 = arith.constant dense<0.000000e+00> : vector<288x128xf32>
    %94 = tpu.matmul %91, %93, %cst_100 {dimension_numbers = #tpu.dot_dimension_numbers<[1], [0], [0], [1], [0, 0, 1, 1], [], []>} : vector<288x128xbf16>, vector<128x128xbf16>, vector<288x128xf32> -> vector<288x128xf32>
    %c0_101 = arith.constant 0 : index
    %c0_102 = arith.constant 0 : index
    %95 = vector.load %arg8[%c0_101, %c0_102] : memref<288x128xf32, #tpu.memory_space<vmem>>, vector<288x128xf32>
    tpu.vector_store %arg8[%c0_101, %c0_102], %94 {strides = array<i32>} : memref<288x128xf32, #tpu.memory_space<vmem>>, vector<288x128xf32>,
    %c1_103 = arith.constant 1 : index
    %c0_104 = arith.constant 0 : index
    %96 = vector.load %arg7[%c1_103, %c0_104] : memref<326x128xbf16, #tpu.memory_space<vmem>>, vector<288x128xbf16>
    %c1_105 = arith.constant 1 : index
    %c0_106 = arith.constant 0 : index
    %c0_107 = arith.constant 0 : index
    %97 = vector.load %arg4[%c1_105, %c0_106, %c0_107] : memref<9x128x128xbf16, #tpu.memory_space<vmem>>, vector<1x128x128xbf16>
    %98 = vector.shape_cast %97 : vector<1x128x128xbf16> to vector<128x128xbf16>
    %cst_108 = arith.constant dense<0.000000e+00> : vector<288x128xf32>
    %99 = tpu.matmul %96, %98, %cst_108 {dimension_numbers = #tpu.dot_dimension_numbers<[1], [0], [0], [1], [0, 0, 1, 1], [], []>} : vector<288x128xbf16>, vector<128x128xbf16>, vector<288x128xf32> -> vector<288x128xf32>
    %c0_109 = arith.constant 0 : index
    %c0_110 = arith.constant 0 : index
    %100 = vector.load %arg8[%c0_109, %c0_110] : memref<288x128xf32, #tpu.memory_space<vmem>>, vector<288x128xf32>
    %101 = arith.addf %100, %99 : vector<288x128xf32>
    %c0_111 = arith.constant 0 : index
    %c0_112 = arith.constant 0 : index
    %102 = vector.load %arg8[%c0_111, %c0_112] : memref<288x128xf32, #tpu.memory_space<vmem>>, vector<288x128xf32>
    tpu.vector_store %arg8[%c0_111, %c0_112], %101 {strides = array<i32>} : memref<288x128xf32, #tpu.memory_space<vmem>>, vector<288x128xf32>,
    %c2_113 = arith.constant 2 : index
    %c0_114 = arith.constant 0 : index
    %103 = vector.load %arg7[%c2_113, %c0_114] : memref<326x128xbf16, #tpu.memory_space<vmem>>, vector<288x128xbf16>
    %c2_115 = arith.constant 2 : index
    %c0_116 = arith.constant 0 : index
    %c0_117 = arith.constant 0 : index
    %104 = vector.load %arg4[%c2_115, %c0_116, %c0_117] : memref<9x128x128xbf16, #tpu.memory_space<vmem>>, vector<1x128x128xbf16>
    %105 = vector.shape_cast %104 : vector<1x128x128xbf16> to vector<128x128xbf16>
    %cst_118 = arith.constant dense<0.000000e+00> : vector<288x128xf32>
    %106 = tpu.matmul %103, %105, %cst_118 {dimension_numbers = #tpu.dot_dimension_numbers<[1], [0], [0], [1], [0, 0, 1, 1], [], []>} : vector<288x128xbf16>, vector<128x128xbf16>, vector<288x128xf32> -> vector<288x128xf32>
    %c0_119 = arith.constant 0 : index
    %c0_120 = arith.constant 0 : index
    %107 = vector.load %arg8[%c0_119, %c0_120] : memref<288x128xf32, #tpu.memory_space<vmem>>, vector<288x128xf32>
    %108 = arith.addf %107, %106 : vector<288x128xf32>
    %c0_121 = arith.constant 0 : index
    %c0_122 = arith.constant 0 : index
    %109 = vector.load %arg8[%c0_121, %c0_122] : memref<288x128xf32, #tpu.memory_space<vmem>>, vector<288x128xf32>
    tpu.vector_store %arg8[%c0_121, %c0_122], %108 {strides = array<i32>} : memref<288x128xf32, #tpu.memory_space<vmem>>, vector<288x128xf32>,
    %c18_123 = arith.constant 18 : index
    %c0_124 = arith.constant 0 : index
    %110 = vector.load %arg7[%c18_123, %c0_124] : memref<326x128xbf16, #tpu.memory_space<vmem>>, vector<288x128xbf16>
    %c3_125 = arith.constant 3 : index
    %c0_126 = arith.constant 0 : index
    %c0_127 = arith.constant 0 : index
    %111 = vector.load %arg4[%c3_125, %c0_126, %c0_127] : memref<9x128x128xbf16, #tpu.memory_space<vmem>>, vector<1x128x128xbf16>
    %112 = vector.shape_cast %111 : vector<1x128x128xbf16> to vector<128x128xbf16>
    %cst_128 = arith.constant dense<0.000000e+00> : vector<288x128xf32>
    %113 = tpu.matmul %110, %112, %cst_128 {dimension_numbers = #tpu.dot_dimension_numbers<[1], [0], [0], [1], [0, 0, 1, 1], [], []>} : vector<288x128xbf16>, vector<128x128xbf16>, vector<288x128xf32> -> vector<288x128xf32>
    %c0_129 = arith.constant 0 : index
    %c0_130 = arith.constant 0 : index
    %114 = vector.load %arg8[%c0_129, %c0_130] : memref<288x128xf32, #tpu.memory_space<vmem>>, vector<288x128xf32>
    %115 = arith.addf %114, %113 : vector<288x128xf32>
    %c0_131 = arith.constant 0 : index
    %c0_132 = arith.constant 0 : index
    %116 = vector.load %arg8[%c0_131, %c0_132] : memref<288x128xf32, #tpu.memory_space<vmem>>, vector<288x128xf32>
    tpu.vector_store %arg8[%c0_131, %c0_132], %115 {strides = array<i32>} : memref<288x128xf32, #tpu.memory_space<vmem>>, vector<288x128xf32>,
    %c19_133 = arith.constant 19 : index
    %c0_134 = arith.constant 0 : index
    %117 = vector.load %arg7[%c19_133, %c0_134] : memref<326x128xbf16, #tpu.memory_space<vmem>>, vector<288x128xbf16>
    %c4_135 = arith.constant 4 : index
    %c0_136 = arith.constant 0 : index
    %c0_137 = arith.constant 0 : index
    %118 = vector.load %arg4[%c4_135, %c0_136, %c0_137] : memref<9x128x128xbf16, #tpu.memory_space<vmem>>, vector<1x128x128xbf16>
    %119 = vector.shape_cast %118 : vector<1x128x128xbf16> to vector<128x128xbf16>
    %cst_138 = arith.constant dense<0.000000e+00> : vector<288x128xf32>
    %120 = tpu.matmul %117, %119, %cst_138 {dimension_numbers = #tpu.dot_dimension_numbers<[1], [0], [0], [1], [0, 0, 1, 1], [], []>} : vector<288x128xbf16>, vector<128x128xbf16>, vector<288x128xf32> -> vector<288x128xf32>
    %c0_139 = arith.constant 0 : index
    %c0_140 = arith.constant 0 : index
    %121 = vector.load %arg8[%c0_139, %c0_140] : memref<288x128xf32, #tpu.memory_space<vmem>>, vector<288x128xf32>
    %122 = arith.addf %121, %120 : vector<288x128xf32>
    %c0_141 = arith.constant 0 : index
    %c0_142 = arith.constant 0 : index
    %123 = vector.load %arg8[%c0_141, %c0_142] : memref<288x128xf32, #tpu.memory_space<vmem>>, vector<288x128xf32>
    tpu.vector_store %arg8[%c0_141, %c0_142], %122 {strides = array<i32>} : memref<288x128xf32, #tpu.memory_space<vmem>>, vector<288x128xf32>,
    %c20_143 = arith.constant 20 : index
    %c0_144 = arith.constant 0 : index
    %124 = vector.load %arg7[%c20_143, %c0_144] : memref<326x128xbf16, #tpu.memory_space<vmem>>, vector<288x128xbf16>
    %c5_145 = arith.constant 5 : index
    %c0_146 = arith.constant 0 : index
    %c0_147 = arith.constant 0 : index
    %125 = vector.load %arg4[%c5_145, %c0_146, %c0_147] : memref<9x128x128xbf16, #tpu.memory_space<vmem>>, vector<1x128x128xbf16>
    %126 = vector.shape_cast %125 : vector<1x128x128xbf16> to vector<128x128xbf16>
    %cst_148 = arith.constant dense<0.000000e+00> : vector<288x128xf32>
    %127 = tpu.matmul %124, %126, %cst_148 {dimension_numbers = #tpu.dot_dimension_numbers<[1], [0], [0], [1], [0, 0, 1, 1], [], []>} : vector<288x128xbf16>, vector<128x128xbf16>, vector<288x128xf32> -> vector<288x128xf32>
    %c0_149 = arith.constant 0 : index
    %c0_150 = arith.constant 0 : index
    %128 = vector.load %arg8[%c0_149, %c0_150] : memref<288x128xf32, #tpu.memory_space<vmem>>, vector<288x128xf32>
    %129 = arith.addf %128, %127 : vector<288x128xf32>
    %c0_151 = arith.constant 0 : index
    %c0_152 = arith.constant 0 : index
    %130 = vector.load %arg8[%c0_151, %c0_152] : memref<288x128xf32, #tpu.memory_space<vmem>>, vector<288x128xf32>
    tpu.vector_store %arg8[%c0_151, %c0_152], %129 {strides = array<i32>} : memref<288x128xf32, #tpu.memory_space<vmem>>, vector<288x128xf32>,
    %c36_153 = arith.constant 36 : index
    %c0_154 = arith.constant 0 : index
    %131 = vector.load %arg7[%c36_153, %c0_154] : memref<326x128xbf16, #tpu.memory_space<vmem>>, vector<288x128xbf16>
    %c6_155 = arith.constant 6 : index
    %c0_156 = arith.constant 0 : index
    %c0_157 = arith.constant 0 : index
    %132 = vector.load %arg4[%c6_155, %c0_156, %c0_157] : memref<9x128x128xbf16, #tpu.memory_space<vmem>>, vector<1x128x128xbf16>
    %133 = vector.shape_cast %132 : vector<1x128x128xbf16> to vector<128x128xbf16>
    %cst_158 = arith.constant dense<0.000000e+00> : vector<288x128xf32>
    %134 = tpu.matmul %131, %133, %cst_158 {dimension_numbers = #tpu.dot_dimension_numbers<[1], [0], [0], [1], [0, 0, 1, 1], [], []>} : vector<288x128xbf16>, vector<128x128xbf16>, vector<288x128xf32> -> vector<288x128xf32>
    %c0_159 = arith.constant 0 : index
    %c0_160 = arith.constant 0 : index
    %135 = vector.load %arg8[%c0_159, %c0_160] : memref<288x128xf32, #tpu.memory_space<vmem>>, vector<288x128xf32>
    %136 = arith.addf %135, %134 : vector<288x128xf32>
    %c0_161 = arith.constant 0 : index
    %c0_162 = arith.constant 0 : index
    %137 = vector.load %arg8[%c0_161, %c0_162] : memref<288x128xf32, #tpu.memory_space<vmem>>, vector<288x128xf32>
    tpu.vector_store %arg8[%c0_161, %c0_162], %136 {strides = array<i32>} : memref<288x128xf32, #tpu.memory_space<vmem>>, vector<288x128xf32>,
    %c37_163 = arith.constant 37 : index
    %c0_164 = arith.constant 0 : index
    %138 = vector.load %arg7[%c37_163, %c0_164] : memref<326x128xbf16, #tpu.memory_space<vmem>>, vector<288x128xbf16>
    %c7_165 = arith.constant 7 : index
    %c0_166 = arith.constant 0 : index
    %c0_167 = arith.constant 0 : index
    %139 = vector.load %arg4[%c7_165, %c0_166, %c0_167] : memref<9x128x128xbf16, #tpu.memory_space<vmem>>, vector<1x128x128xbf16>
    %140 = vector.shape_cast %139 : vector<1x128x128xbf16> to vector<128x128xbf16>
    %cst_168 = arith.constant dense<0.000000e+00> : vector<288x128xf32>
    %141 = tpu.matmul %138, %140, %cst_168 {dimension_numbers = #tpu.dot_dimension_numbers<[1], [0], [0], [1], [0, 0, 1, 1], [], []>} : vector<288x128xbf16>, vector<128x128xbf16>, vector<288x128xf32> -> vector<288x128xf32>
    %c0_169 = arith.constant 0 : index
    %c0_170 = arith.constant 0 : index
    %142 = vector.load %arg8[%c0_169, %c0_170] : memref<288x128xf32, #tpu.memory_space<vmem>>, vector<288x128xf32>
    %143 = arith.addf %142, %141 : vector<288x128xf32>
    %c0_171 = arith.constant 0 : index
    %c0_172 = arith.constant 0 : index
    %144 = vector.load %arg8[%c0_171, %c0_172] : memref<288x128xf32, #tpu.memory_space<vmem>>, vector<288x128xf32>
    tpu.vector_store %arg8[%c0_171, %c0_172], %143 {strides = array<i32>} : memref<288x128xf32, #tpu.memory_space<vmem>>, vector<288x128xf32>,
    %c38_173 = arith.constant 38 : index
    %c0_174 = arith.constant 0 : index
    %145 = vector.load %arg7[%c38_173, %c0_174] : memref<326x128xbf16, #tpu.memory_space<vmem>>, vector<288x128xbf16>
    %c8_175 = arith.constant 8 : index
    %c0_176 = arith.constant 0 : index
    %c0_177 = arith.constant 0 : index
    %146 = vector.load %arg4[%c8_175, %c0_176, %c0_177] : memref<9x128x128xbf16, #tpu.memory_space<vmem>>, vector<1x128x128xbf16>
    %147 = vector.shape_cast %146 : vector<1x128x128xbf16> to vector<128x128xbf16>
    %cst_178 = arith.constant dense<0.000000e+00> : vector<288x128xf32>
    %148 = tpu.matmul %145, %147, %cst_178 {dimension_numbers = #tpu.dot_dimension_numbers<[1], [0], [0], [1], [0, 0, 1, 1], [], []>} : vector<288x128xbf16>, vector<128x128xbf16>, vector<288x128xf32> -> vector<288x128xf32>
    %c0_179 = arith.constant 0 : index
    %c0_180 = arith.constant 0 : index
    %149 = vector.load %arg8[%c0_179, %c0_180] : memref<288x128xf32, #tpu.memory_space<vmem>>, vector<288x128xf32>
    %150 = arith.addf %149, %148 : vector<288x128xf32>
    %c0_181 = arith.constant 0 : index
    %c0_182 = arith.constant 0 : index
    %151 = vector.load %arg8[%c0_181, %c0_182] : memref<288x128xf32, #tpu.memory_space<vmem>>, vector<288x128xf32>
    tpu.vector_store %arg8[%c0_181, %c0_182], %150 {strides = array<i32>} : memref<288x128xf32, #tpu.memory_space<vmem>>, vector<288x128xf32>,
    %c0_183 = arith.constant 0 : index
    %c0_184 = arith.constant 0 : index
    %152 = vector.load %arg8[%c0_183, %c0_184] : memref<288x128xf32, #tpu.memory_space<vmem>>, vector<288x128xf32>
    %c0_185 = arith.constant 0 : index
    %c0_186 = arith.constant 0 : index
    %153 = vector.load %arg5[%c0_185, %c0_186] : memref<2x128xf32, #tpu.memory_space<vmem>>, vector<1x128xf32>
    %154 = vector.broadcast %153 : vector<1x128xf32> to vector<288x128xf32>
    %155 = arith.mulf %152, %154 : vector<288x128xf32>
    %c1_187 = arith.constant 1 : index
    %c0_188 = arith.constant 0 : index
    %156 = vector.load %arg5[%c1_187, %c0_188] : memref<2x128xf32, #tpu.memory_space<vmem>>, vector<1x128xf32>
    %157 = vector.broadcast %156 : vector<1x128xf32> to vector<288x128xf32>
    %158 = arith.addf %155, %157 : vector<288x128xf32>
    %cst_189 = arith.constant 0.000000e+00 : f32
    %159 = vector.broadcast %cst_189 : f32 to vector<288x128xf32>
    %160 = arith.maximumf %158, %159 : vector<288x128xf32>
    %c0_190 = arith.constant 0 : index
    %c0_191 = arith.constant 0 : index
    %c0_192 = arith.constant 0 : index
    %161 = vector.load %arg6[%c0_190, %c0_191, %c0_192] : memref<1x288x128xf32, #tpu.memory_space<vmem>>, vector<1x288x128xf32>
    %162 = vector.shape_cast %161 : vector<1x288x128xf32> to vector<288x128xf32>
    %163 = vector.shape_cast %160 : vector<288x128xf32> to vector<1x288x128xf32>
    tpu.vector_store %arg6[%c0_190, %c0_191, %c0_192], %163 {strides = array<i32>} : memref<1x288x128xf32, #tpu.memory_space<vmem>>, vector<1x288x128xf32>,
    return
  }
  func.func @transform_0(%arg0: i32) -> (i32, i32, i32) {
    %c0_i32 = arith.constant 0 : i32
    %c0_i32_0 = arith.constant 0 : i32
    %c0_i32_1 = arith.constant 0 : i32
    return %arg0, %c0_i32, %c0_i32_0 : i32, i32, i32
  }
  func.func @transform_1(%arg0: i32) -> (i32, i32, i32) {
    %c0_i32 = arith.constant 0 : i32
    %c0_i32_0 = arith.constant 0 : i32
    %c0_i32_1 = arith.constant 0 : i32
    %c0_i32_2 = arith.constant 0 : i32
    return %c0_i32, %c0_i32_0, %c0_i32_1 : i32, i32, i32
  }
  func.func @transform_2(%arg0: i32) -> (i32, i32) {
    %c0_i32 = arith.constant 0 : i32
    %c0_i32_0 = arith.constant 0 : i32
    %c0_i32_1 = arith.constant 0 : i32
    return %c0_i32, %c0_i32_0 : i32, i32
  }
  func.func @transform_3(%arg0: i32) -> (i32, i32, i32) {
    %c0_i32 = arith.constant 0 : i32
    %c0_i32_0 = arith.constant 0 : i32
    %c0_i32_1 = arith.constant 0 : i32
    %c0_i32_2 = arith.constant 0 : i32
    return %c0_i32, %c0_i32_0, %c0_i32_1 : i32, i32, i32
  }
  func.func @transform_4(%arg0: i32) -> (i32, i32) {
    %c0_i32 = arith.constant 0 : i32
    %c0_i32_0 = arith.constant 0 : i32
    %c0_i32_1 = arith.constant 0 : i32
    return %c0_i32, %c0_i32_0 : i32, i32
  }
  func.func @transform_5(%arg0: i32) -> (i32, i32, i32) {
    %c0_i32 = arith.constant 0 : i32
    %c0_i32_0 = arith.constant 0 : i32
    %c0_i32_1 = arith.constant 0 : i32
    return %arg0, %c0_i32, %c0_i32_0 : i32, i32, i32
  }
}

</mosaic_0001>

<llo_original>
// kernel: tpu_custom_call.1
$region0: #{tpu_custom_call.1}
  #allocation0 [shape = 'u32[]', space=smem, size = 0x4, offset = 0x4, fixed_abs, tag = 'smem constant byte address 0x4 - core index']
  #allocation1 [shape = 'u32[72,128]{1,0:T(1,128)}', space=vmem, size = 0x9000, scoped, tag = 'internal scratch']
  #allocation2 [shape = 'bf16[326,128]{1,0:T(8,128)(2,1)}', space=vmem, size = 0x14800, scoped, tag = 'scratch operand']
  #allocation3 [shape = 'f32[288,128]{1,0:T(8,128)}', space=vmem, size = 0x24000, scoped, tag = 'scratch operand']
  %s0 = inlined_call_operand.vmem [shape: bf16[2,326,128], index: 0, kind: input, shape index: {}]
  %s1 = inlined_call_operand.vmem [shape: bf16[9,128,128], index: 1, kind: input, shape index: {}]
  %s2 = inlined_call_operand.vmem [shape: f32[2,128], index: 2, kind: input, shape index: {}]
  %s3 = inlined_call_operand.hbm [shape: bf16[9,128,128], index: 3, kind: input, shape index: {}]
  %s4 = inlined_call_operand.vmem [shape: f32[2,128], index: 4, kind: input, shape index: {}]
  %s5 = inlined_call_operand.hbm [shape: f32[2,288,128], index: 5, kind: output, shape index: {}]
  %s6 = sld [smem:[#allocation0]]
  $region57: #{tpu_custom_call.1} parent=0
    _
  %s8 = ssub.s32 1, %s6
  %s9 = scalar_select 0, %s8, %s6
  $region1: #{tpu_custom_call.1} parent=0
    #allocation4 [shape = 'u8[294912]{0}', space=vmem, size = 0x48000, scoped, tag = 'input window, operand 3, single buffered']
    #allocation5 [shape = 's32[2]{0}', space=sflag, size = 0x8, scoped, tag = 'scoped memory for tpu_custom_call.1']
    #allocation6 [shape = 's32[2]{0}', space=sflag, size = 0x8, scoped, tag = 'scoped memory for tpu_custom_call.1']
    #allocation7 [shape = 'u8[294912]{0}', space=vmem, size = 0x48000, scoped, tag = 'output window, operand 0']
    %10 = vsyncpa [#allocation5], 0
    %11 = vsyncpa [#allocation6], 0
    %s12 = scalar_lea.sflag [#allocation6], 1
    %13 = vsyncpa %s12, 0
    loop: start=0, step=1, limit=4
    $region2: #{tpu_custom_call.1} parent=1 // loop_pre_header
      _
    $region3: #{tpu_custom_call.1} parent=1 // loop_header
      %s15 = sphi 0, %s19
      %p16 = scmp.ge.s32.totalorder %s15, 4
      %s25 = sphi 0, %s27
      %s28 = sphi 0, %s25
      %s29 = sphi 0, %s28
      %s45 = sphi 0, %s29
      %s49 = sphi 0, %s49
      %s51 = sphi 0, %s49
      %s52 = sphi 0, %s51
      %s66 = sphi 0, %s52
      %s70 = sphi 0, %s70
      %s72 = sphi 0, %s70
      %s73 = sphi 0, %s72
      %s87 = sphi 0, %s73
      %s91 = sphi 0, %s91
      %s93 = sphi 0, %s91
      %s94 = sphi 0, %s93
      %s108 = sphi 0, %s94
      %s112 = sphi 0, %s112
      %s114 = sphi 0, %s112
      %s115 = sphi 0, %s114
      %s129 = sphi 0, %s115
      %s135 = sphi 0, %s137
      %s138 = sphi 0, %s135
      %s139 = sphi 0, %s138
      %s155 = sphi 0, %s139
    $region4: #{tpu_custom_call.1} parent=1 // loop_header_branch
      %18 = sbr.rel (%p16) target = $region8
    $region5: #{tpu_custom_call.1} parent=1 // loop_body
      %s20 = ssub.s32 %s15, 1
      %s21 = ssub.s32 %s15, 2
      %s22 = sadd.s32 %s15, 1
      %s23 = ssub.s32 %s15, %s22
      %p24 = scmp.eq.s32.totalorder %s23, 0
      %s26 = sadd.s32 %s25, 1
      %s27 = scalar_select %p24, %s25, %s26
      %p30 = pneg %p24
      %p31 = scmp.eq.s32.totalorder %s15, 1
      %p32 = por %p30, %p31
      %p33 = scmp.ne.s32.totalorder %s25, %s28
      %p34 = scmp.eq.s32.totalorder %s15, 0
      %p35 = por %p33, %p34
      %p36 = scmp.ne.s32.totalorder %s25, %s28
      %p37 = scmp.eq.s32.totalorder %s20, 1
      %p38 = por %p36, %p37
      %p39 = scmp.ne.s32.totalorder %s28, %s29
      %p40 = scmp.eq.s32.totalorder %s20, 0
      %p41 = por %p39, %p40
      %p42 = scmp.ne.s32.totalorder %s28, %s29
      %p43 = scmp.eq.s32.totalorder %s21, 1
      %p44 = por %p42, %p43
      %p46 = scmp.ne.s32.totalorder %s29, %s45
      %p47 = scmp.eq.s32.totalorder %s21, 0
      %p48 = por %p46, %p47
      %s50 = sadd.s32 %s49, 1
      %p53 = scmp.eq.s32.totalorder %s15, 1
      %p54 = scmp.ne.s32.totalorder %s49, %s51
      %p55 = scmp.eq.s32.totalorder %s15, 0
      %p56 = por %p54, %p55
      %p57 = scmp.ne.s32.totalorder %s49, %s51
      %p58 = scmp.eq.s32.totalorder %s20, 1
      %p59 = por %p57, %p58
      %p60 = scmp.ne.s32.totalorder %s51, %s52
      %p61 = scmp.eq.s32.totalorder %s20, 0
      %p62 = por %p60, %p61
      %p63 = scmp.ne.s32.totalorder %s51, %s52
      %p64 = scmp.eq.s32.totalorder %s21, 1
      %p65 = por %p63, %p64
      %p67 = scmp.ne.s32.totalorder %s52, %s66
      %p68 = scmp.eq.s32.totalorder %s21, 0
      %p69 = por %p67, %p68
      %s71 = sadd.s32 %s70, 1
      %p74 = scmp.eq.s32.totalorder %s15, 1
      %p75 = scmp.ne.s32.totalorder %s70, %s72
      %p76 = scmp.eq.s32.totalorder %s15, 0
      %p77 = por %p75, %p76
      %p78 = scmp.ne.s32.totalorder %s70, %s72
      %p79 = scmp.eq.s32.totalorder %s20, 1
      %p80 = por %p78, %p79
      %p81 = scmp.ne.s32.totalorder %s72, %s73
      %p82 = scmp.eq.s32.totalorder %s20, 0
      %p83 = por %p81, %p82
      %p84 = scmp.ne.s32.totalorder %s72, %s73
      %p85 = scmp.eq.s32.totalorder %s21, 1
      %p86 = por %p84, %p85
      %p88 = scmp.ne.s32.totalorder %s73, %s87
      %p89 = scmp.eq.s32.totalorder %s21, 0
      %p90 = por %p88, %p89
      %s92 = sadd.s32 %s91, 1
      %p95 = scmp.eq.s32.totalorder %s15, 1
      %p96 = scmp.ne.s32.totalorder %s91, %s93
      %p97 = scmp.eq.s32.totalorder %s15, 0
      %p98 = por %p96, %p97
      %p99 = scmp.ne.s32.totalorder %s91, %s93
      %p100 = scmp.eq.s32.totalorder %s20, 1
      %p101 = por %p99, %p100
      %p102 = scmp.ne.s32.totalorder %s93, %s94
      %p103 = scmp.eq.s32.totalorder %s20, 0
      %p104 = por %p102, %p103
      %p105 = scmp.ne.s32.totalorder %s93, %s94
      %p106 = scmp.eq.s32.totalorder %s21, 1
      %p107 = por %p105, %p106
      %p109 = scmp.ne.s32.totalorder %s94, %s108
      %p110 = scmp.eq.s32.totalorder %s21, 0
      %p111 = por %p109, %p110
      %s113 = sadd.s32 %s112, 1
      %p116 = scmp.eq.s32.totalorder %s15, 1
      %p117 = scmp.ne.s32.totalorder %s112, %s114
      %p118 = scmp.eq.s32.totalorder %s15, 0
      %p119 = por %p117, %p118
      %p120 = scmp.ne.s32.totalorder %s112, %s114
      %p121 = scmp.eq.s32.totalorder %s20, 1
      %p122 = por %p120, %p121
      %p123 = scmp.ne.s32.totalorder %s114, %s115
      %p124 = scmp.eq.s32.totalorder %s20, 0
      %p125 = por %p123, %p124
      %p126 = scmp.ne.s32.totalorder %s114, %s115
      %p127 = scmp.eq.s32.totalorder %s21, 1
      %p128 = por %p126, %p127
      %p130 = scmp.ne.s32.totalorder %s115, %s129
      %p131 = scmp.eq.s32.totalorder %s21, 0
      %p132 = por %p130, %p131
      %s133 = ssub.s32 %s15, %s22
      %p134 = scmp.eq.s32.totalorder %s133, 0
      %s136 = sadd.s32 %s135, 1
      %s137 = scalar_select %p134, %s135, %s136
      %p140 = pneg %p134
      %p141 = scmp.eq.s32.totalorder %s15, 1
      %p142 = por %p140, %p141
      %p143 = scmp.ne.s32.totalorder %s135, %s138
      %p144 = scmp.eq.s32.totalorder %s15, 0
      %p145 = por %p143, %p144
      %p146 = scmp.ne.s32.totalorder %s135, %s138
      %p147 = scmp.eq.s32.totalorder %s20, 1
      %p148 = por %p146, %p147
      %p149 = scmp.ne.s32.totalorder %s138, %s139
      %p150 = scmp.eq.s32.totalorder %s20, 0
      %p151 = por %p149, %p150
      %p152 = scmp.ne.s32.totalorder %s138, %s139
      %p153 = scmp.eq.s32.totalorder %s21, 1
      %p154 = por %p152, %p153
      %p156 = scmp.ne.s32.totalorder %s139, %s155
      %p157 = scmp.eq.s32.totalorder %s21, 0
      %p158 = por %p156, %p157
      %p159 = scmp.le.s32.totalorder 1, %s15
      %p160 = scmp.lt.s32.totalorder %s15, 3
      %p161 = pnand %p159, %p160
      %p162 = pneg %p161
      // Predicated region
      $region9: #{tpu_custom_call.1} parent=5 // pred_check
        _
      $region10: #{tpu_custom_call.1} parent=5 // pred_check_branch
        %164 = sbr.rel (%p161) target = $region12
      $region11: #{tpu_custom_call.1} parent=5 // pred_region
        %s165 = ssub.s32 %s15, 1
        // Predicated region
        $region13: #{tpu_custom_call.1} parent=11 // pred_check
          %p166 = pneg %p62
        $region14: #{tpu_custom_call.1} parent=11 // pred_check_branch
          %168 = sbr.rel (%p166) target = $region16
        $region15: #{tpu_custom_call.1} parent=11 // pred_region
          _
        $region16: #{tpu_custom_call.1} parent=11 // pred_fallthru
          _
        // Predicated region
        $region17: #{tpu_custom_call.1} parent=11 // pred_check
          %p169 = pneg %p83
        $region18: #{tpu_custom_call.1} parent=11 // pred_check_branch
          %171 = sbr.rel (%p169) target = $region20
        $region19: #{tpu_custom_call.1} parent=11 // pred_region
          _
        $region20: #{tpu_custom_call.1} parent=11 // pred_fallthru
          _
        // Predicated region
        $region21: #{tpu_custom_call.1} parent=11 // pred_check
          %p172 = pneg %p104
        $region22: #{tpu_custom_call.1} parent=11 // pred_check_branch
          %174 = sbr.rel (%p172) target = $region24
        $region23: #{tpu_custom_call.1} parent=11 // pred_region
          %176 = vsyncadd [#allocation5], 0
          %s177 = sshll.u32 %s3, 4
          %s178 = int_to_ptr.hbm [resolvable:$true] %s177
          %s179 = sshll.u32 [#allocation4], 4
          %s180 = int_to_ptr.vmem [resolvable:$true] %s179
          %185 = dma.hbm_to_vmem [thread:$0]  %s178, 9216, %s180, [#allocation5], 64, 64, 4
        $region24: #{tpu_custom_call.1} parent=11 // pred_fallthru
          _
        // Predicated region
        $region25: #{tpu_custom_call.1} parent=11 // pred_check
          %p186 = pneg %p125
        $region26: #{tpu_custom_call.1} parent=11 // pred_check_branch
          %188 = sbr.rel (%p186) target = $region28
        $region27: #{tpu_custom_call.1} parent=11 // pred_region
          _
        $region28: #{tpu_custom_call.1} parent=11 // pred_fallthru
          _
      $region12: #{tpu_custom_call.1} parent=5 // pred_fallthru
        _
      %p189 = scmp.lt.s32.totalorder %s15, 2
      // Predicated region
      $region29: #{tpu_custom_call.1} parent=5 // pred_check
        %p190 = pneg %p189
      $region30: #{tpu_custom_call.1} parent=5 // pred_check_branch
        %192 = sbr.rel (%p190) target = $region32
      $region31: #{tpu_custom_call.1} parent=5 // pred_region
        // Predicated region
        $region33: #{tpu_custom_call.1} parent=31 // pred_check
          %p193 = pneg %p35
        $region34: #{tpu_custom_call.1} parent=31 // pred_check_branch
          %195 = sbr.rel (%p193) target = $region36
        $region35: #{tpu_custom_call.1} parent=31 // pred_region
          %p196 = scmp.lt.s32.totalorder %s15, 1
          %s197 = scalar_select %p196, %s15, 1
          %s198 = smul.addr %s197, 41
          %s199 = smul.addr %s198, 4
          %s200 = scalar_lea.vmem %s0, %s199
        $region36: #{tpu_custom_call.1} parent=31 // pred_fallthru
          _
      $region32: #{tpu_custom_call.1} parent=5 // pred_fallthru
        _
      %p201 = scmp.le.s32.totalorder 1, %s15
      %p202 = scmp.lt.s32.totalorder %s15, 3
      %p203 = pnand %p201, %p202
      %p204 = pneg %p203
      // Predicated region
      $region37: #{tpu_custom_call.1} parent=5 // pred_check
        _
      $region38: #{tpu_custom_call.1} parent=5 // pred_check_branch
        %206 = sbr.rel (%p203) target = $region40
      $region39: #{tpu_custom_call.1} parent=5 // pred_region
        %s207 = ssub.s32 %s15, 1
        // Predicated region
        $region41: #{tpu_custom_call.1} parent=39 // pred_check
          %p208 = pneg %p104
        $region42: #{tpu_custom_call.1} parent=39 // pred_check_branch
          %210 = sbr.rel (%p208) target = $region44
        $region43: #{tpu_custom_call.1} parent=39 // pred_region
          %212 = dma.done [#allocation5], 9216
        $region44: #{tpu_custom_call.1} parent=39 // pred_fallthru
          _
        %p213 = scmp.lt.s32.totalorder %s20, 1
        %s214 = scalar_select %p213, %s20, 1
        %s215 = smul.addr %s214, 41
        %s216 = smul.addr %s215, 4
        %s217 = scalar_lea.vmem %s0, %s216
        %p218 = pneg %p41
        %p219 = pneg %p38
        %p220 = pneg %p62
        %p221 = pneg %p59
        %p222 = pneg %p83
        %p223 = pneg %p80
        %p224 = pneg %p104
        %p225 = pneg %p101
        %p226 = pneg %p125
        %p227 = pneg %p122
        %p228 = pneg %p151
        %p229 = pneg %p148
        %s230 = sand.u32 %s138, 1
        %s231 = scalar_lea.sflag [#allocation6], %s230
        %s232 = sand.u32 %s138, 1
        %s233 = smul.addr %s232, 288
        %s234 = scalar_lea.vmem [#allocation7], %s233
        %p235 = scmp.lt.s32.totalorder %s20, 1
        %s236 = scalar_select %p235, %s20, 1
        %s237 = smul.addr %s236, 41
        %s238 = smul.addr %s237, 4
        %s239 = scalar_lea.vmem %s0, %s238
        %v241 = vlaneseq
        %v242 = vshrl.u32 %v241, 7
        %v243 = vadd.s32 %v242, 8
        %v244 = vadd.s32 %v242, 16
        %vm245 = vcmp.lt.s32.totalorder %v242, 16
        %vm246 = vcmp.lt.s32.totalorder %v243, 16
        %vm247 = vcmp.lt.s32.totalorder %v244, 16
        %v248 = vld [vmem:[%s239] sm:$0xf]
        %v249 = vld [vmem:[%s239 + $0x4] sm:$0xf]
        %v250 = vld [vmem:[%s239 + $0x8] sm:$0xf]
        %v251 = vld [vmem:[%s239 + $0xc] sm:$0xf]
        %v252 = vld [vmem:[%s239 + $0x10] sm:$0xf]
        %v253 = vld [vmem:[%s239 + $0x14] sm:$0xf]
        %v254 = vld [vmem:[%s239 + $0x18] sm:$0xf]
        %v255 = vld [vmem:[%s239 + $0x1c] sm:$0xf]
        %v256 = vld [vmem:[%s239 + $0x20] sm:$0xf]
        %v257 = vld [vmem:[%s239 + $0x24] sm:$0xf]
        %v258 = vld [vmem:[%s239 + $0x28] sm:$0xf]
        %v259 = vld [vmem:[%s239 + $0x2c] sm:$0xf]
        %v260 = vld [vmem:[%s239 + $0x30] sm:$0xf]
        %v261 = vld [vmem:[%s239 + $0x34] sm:$0xf]
        %v262 = vld [vmem:[%s239 + $0x38] sm:$0xf]
        %v263 = vld [vmem:[%s239 + $0x3c] sm:$0xf]
        %v264 = vld [vmem:[%s239 + $0x40] sm:$0xf]
        %v265 = vld [vmem:[%s239 + $0x44] sm:$0xf]
        %v266 = vld [vmem:[%s239 + $0x48] sm:$0xf]
        %v267 = vld [vmem:[%s239 + $0x4c] sm:$0xf]
        %v268 = vld [vmem:[%s239 + $0x50] sm:$0xf]
        %v269 = vld [vmem:[%s239 + $0x54] sm:$0xf]
        %v270 = vld [vmem:[%s239 + $0x58] sm:$0xf]
        %v271 = vld [vmem:[%s239 + $0x5c] sm:$0xf]
        %v272 = vld [vmem:[%s239 + $0x60] sm:$0xf]
        %v273 = vld [vmem:[%s239 + $0x64] sm:$0xf]
        %v274 = vld [vmem:[%s239 + $0x68] sm:$0xf]
        %v275 = vld [vmem:[%s239 + $0x6c] sm:$0xf]
        %v276 = vld [vmem:[%s239 + $0x70] sm:$0xf]
        %v277 = vld [vmem:[%s239 + $0x74] sm:$0xf]
        %v278 = vld [vmem:[%s239 + $0x78] sm:$0xf]
        %v279 = vld [vmem:[%s239 + $0x7c] sm:$0xf]
        %v280 = vld [vmem:[%s239 + $0x80] sm:$0xf]
        %v281 = vld [vmem:[%s239 + $0x84] sm:$0xf]
        %v282 = vld [vmem:[%s239 + $0x88] sm:$0xf]
        %v283 = vld [vmem:[%s239 + $0x8c] sm:$0xf]
        %v284 = vld [vmem:[%s1] sm:$0xf]
        %v285 = vld [vmem:[%s1 + $0x4] sm:$0xf]
        %v286 = vld [vmem:[%s1 + $0x8] sm:$0xf]
        %v287 = vld [vmem:[%s1 + $0xc] sm:$0xf]
        %v288 = vld [vmem:[%s1 + $0x10] sm:$0xf]
        %v289 = vld [vmem:[%s1 + $0x14] sm:$0xf]
        %v290 = vld [vmem:[%s1 + $0x18] sm:$0xf]
        %v291 = vld [vmem:[%s1 + $0x1c] sm:$0xf]
        %v292 = vld [vmem:[%s1 + $0x20] sm:$0xf]
        %v293 = vld [vmem:[%s1 + $0x24] sm:$0xf]
        %v294 = vld [vmem:[%s1 + $0x28] sm:$0xf]
        %v295 = vld [vmem:[%s1 + $0x2c] sm:$0xf]
        %v296 = vld [vmem:[%s1 + $0x30] sm:$0xf]
        %v297 = vld [vmem:[%s1 + $0x34] sm:$0xf]
        %v298 = vld [vmem:[%s1 + $0x38] sm:$0xf]
        %v299 = vld [vmem:[%s1 + $0x3c] sm:$0xf]
        %v336 = vunpack.c.l.b16 %v248
        %v337 = vunpack.c.l.b16 %v249
        %v338 = vunpack.c.l.b16 %v250
        %v339 = vunpack.c.l.b16 %v251
        %v340 = vunpack.c.l.b16 %v252
        %v341 = vunpack.c.l.b16 %v253
        %v342 = vunpack.c.l.b16 %v254
        %v343 = vunpack.c.l.b16 %v255
        %v344 = vunpack.c.l.b16 %v256
        %v345 = vunpack.c.l.b16 %v257
        %v346 = vunpack.c.l.b16 %v258
        %v347 = vunpack.c.l.b16 %v259
        %v348 = vunpack.c.l.b16 %v260
        %v349 = vunpack.c.l.b16 %v261
        %v350 = vunpack.c.l.b16 %v262
        %v351 = vunpack.c.l.b16 %v263
        %v352 = vunpack.c.l.b16 %v264
        %v353 = vunpack.c.l.b16 %v265
        %v354 = vunpack.c.l.b16 %v266
        %v355 = vunpack.c.l.b16 %v267
        %v356 = vunpack.c.l.b16 %v268
        %v357 = vunpack.c.l.b16 %v269
        %v358 = vunpack.c.l.b16 %v270
        %v359 = vunpack.c.l.b16 %v271
        %v360 = vunpack.c.l.b16 %v272
        %v361 = vunpack.c.l.b16 %v273
        %v362 = vunpack.c.l.b16 %v274
        %v363 = vunpack.c.l.b16 %v275
        %v364 = vunpack.c.l.b16 %v276
        %v365 = vunpack.c.l.b16 %v277
        %v366 = vunpack.c.l.b16 %v278
        %v367 = vunpack.c.l.b16 %v279
        %v368 = vunpack.c.l.b16 %v280
        %v369 = vunpack.c.l.b16 %v281
        %v370 = vunpack.c.l.b16 %v282
        %v371 = vunpack.c.l.b16 %v283
        %v372 = vpack.c.b16 %v337, %v336
        %v373 = vpack.c.b16 %v339, %v338
        %v374 = vpack.c.b16 %v341, %v340
        %v375 = vpack.c.b16 %v343, %v342
        %v376 = vpack.c.b16 %v345, %v344
        %v377 = vpack.c.b16 %v347, %v346
        %v378 = vpack.c.b16 %v349, %v348
        %v379 = vpack.c.b16 %v351, %v350
        %v380 = vpack.c.b16 %v353, %v352
        %v381 = vpack.c.b16 %v355, %v354
        %v382 = vpack.c.b16 %v357, %v356
        %v383 = vpack.c.b16 %v359, %v358
        %v384 = vpack.c.b16 %v361, %v360
        %v385 = vpack.c.b16 %v363, %v362
        %v386 = vpack.c.b16 %v365, %v364
        %v387 = vpack.c.b16 %v367, %v366
        %v388 = vpack.c.b16 %v369, %v368
        %v389 = vpack.c.b16 %v371, %v370
        %v424 = vunpack.c.l.b16 %v284
        %v425 = vunpack.c.l.b16 %v285
        %v426 = vunpack.c.l.b16 %v286
        %v427 = vunpack.c.l.b16 %v287
        %v428 = vunpack.c.l.b16 %v288
        %v429 = vunpack.c.l.b16 %v289
        %v430 = vunpack.c.l.b16 %v290
        %v431 = vunpack.c.l.b16 %v291
        %v432 = vunpack.c.l.b16 %v292
        %v433 = vunpack.c.l.b16 %v293
        %v434 = vunpack.c.l.b16 %v294
        %v435 = vunpack.c.l.b16 %v295
        %v436 = vunpack.c.l.b16 %v296
        %v437 = vunpack.c.l.b16 %v297
        %v438 = vunpack.c.l.b16 %v298
        %v439 = vunpack.c.l.b16 %v299
        %v440 = vpack.c.b16 %v425, %v424
        %v441 = vpack.c.b16 %v427, %v426
        %v442 = vpack.c.b16 %v429, %v428
        %v443 = vpack.c.b16 %v431, %v430
        %v444 = vpack.c.b16 %v433, %v432
        %v445 = vpack.c.b16 %v435, %v434
        %v446 = vpack.c.b16 %v437, %v436
        %v447 = vpack.c.b16 %v439, %v438
        %456 = vmatpush.bf16.msra.mxu0 %v447
        %457 = vmatpush.bf16.msra.mxu0 %v446
        %458 = vmatpush.bf16.msra.mxu0 %v445
        %459 = vmatpush.bf16.msra.mxu0 %v444
        %460 = vmatpush.bf16.msra.mxu0 %v443
        %461 = vmatpush.bf16.msra.mxu0 %v442
        %462 = vmatpush.bf16.msra.mxu0 %v441
        %463 = vmatpush.bf16.msra.mxu0 %v440
        %464 = vmatmul.bf16.gmra.mxu0 %v372
        %v465 = vpop.f32.mrf.mxu0
        %v466 = vadd.f32 0.0, %v465
        %v467 = vpop.f32.mrf.mxu0
        %v468 = vadd.f32 0.0, %v467
        %469 = vmatmul.bf16.gmra.mxu0 %v373
        %v470 = vpop.f32.mrf.mxu0
        %v471 = vadd.f32 0.0, %v470
        %v472 = vpop.f32.mrf.mxu0
        %v473 = vadd.f32 0.0, %v472
        %474 = vmatmul.bf16.gmra.mxu0 %v374
        %v475 = vpop.f32.mrf.mxu0
        %v476 = vadd.f32 0.0, %v475
        %v477 = vpop.f32.mrf.mxu0
        %v478 = vadd.f32 0.0, %v477
        %479 = vmatmul.bf16.gmra.mxu0 %v375
        %v480 = vpop.f32.mrf.mxu0
        %v481 = vadd.f32 0.0, %v480
        %v482 = vpop.f32.mrf.mxu0
        %v483 = vadd.f32 0.0, %v482
        %484 = vmatmul.bf16.gmra.mxu0 %v376
        %v485 = vpop.f32.mrf.mxu0
        %v486 = vadd.f32 0.0, %v485
        %v487 = vpop.f32.mrf.mxu0
        %v488 = vadd.f32 0.0, %v487
        %489 = vmatmul.bf16.gmra.mxu0 %v377
        %v490 = vpop.f32.mrf.mxu0
        %v491 = vadd.f32 0.0, %v490
        %v492 = vpop.f32.mrf.mxu0
        %v493 = vadd.f32 0.0, %v492
        %494 = vmatmul.bf16.gmra.mxu0 %v378
        %v495 = vpop.f32.mrf.mxu0
        %v496 = vadd.f32 0.0, %v495
        %v497 = vpop.f32.mrf.mxu0
        %v498 = vadd.f32 0.0, %v497
        %499 = vmatmul.bf16.gmra.mxu0 %v379
        %v500 = vpop.f32.mrf.mxu0
        %v501 = vadd.f32 0.0, %v500
        %v502 = vpop.f32.mrf.mxu0
        %v503 = vadd.f32 0.0, %v502
        %504 = vmatmul.bf16.gmra.mxu0 %v380
        %v505 = vpop.f32.mrf.mxu0
        %v506 = vadd.f32 0.0, %v505
        %v507 = vpop.f32.mrf.mxu0
        %v508 = vadd.f32 0.0, %v507
        %509 = vmatmul.bf16.gmra.mxu0 %v381
        %v510 = vpop.f32.mrf.mxu0
        %v511 = vadd.f32 0.0, %v510
        %v512 = vpop.f32.mrf.mxu0
        %v513 = vadd.f32 0.0, %v512
        %514 = vmatmul.bf16.gmra.mxu0 %v382
        %v515 = vpop.f32.mrf.mxu0
        %v516 = vadd.f32 0.0, %v515
        %v517 = vpop.f32.mrf.mxu0
        %v518 = vadd.f32 0.0, %v517
        %519 = vmatmul.bf16.gmra.mxu0 %v383
        %v520 = vpop.f32.mrf.mxu0
        %v521 = vadd.f32 0.0, %v520
        %v522 = vpop.f32.mrf.mxu0
        %v523 = vadd.f32 0.0, %v522
        %524 = vmatmul.bf16.gmra.mxu0 %v384
        %v525 = vpop.f32.mrf.mxu0
        %v526 = vadd.f32 0.0, %v525
        %v527 = vpop.f32.mrf.mxu0
        %v528 = vadd.f32 0.0, %v527
        %529 = vmatmul.bf16.gmra.mxu0 %v385
        %v530 = vpop.f32.mrf.mxu0
        %v531 = vadd.f32 0.0, %v530
        %v532 = vpop.f32.mrf.mxu0
        %v533 = vadd.f32 0.0, %v532
        %534 = vmatmul.bf16.gmra.mxu0 %v386
        %v535 = vpop.f32.mrf.mxu0
        %v536 = vadd.f32 0.0, %v535
        %v537 = vpop.f32.mrf.mxu0
        %v538 = vadd.f32 0.0, %v537
        %539 = vmatmul.bf16.gmra.mxu0 %v387
        %v540 = vpop.f32.mrf.mxu0
        %v541 = vadd.f32 0.0, %v540
        %v542 = vpop.f32.mrf.mxu0
        %v543 = vadd.f32 0.0, %v542
        %544 = vmatmul.bf16.gmra.mxu0 %v388
        %v545 = vpop.f32.mrf.mxu0
        %v546 = vadd.f32 0.0, %v545
        %v547 = vpop.f32.mrf.mxu0
        %v548 = vadd.f32 0.0, %v547
        %549 = vmatmul.bf16.gmra.mxu0 %v389
        %v550 = vpop.f32.mrf.mxu0
        %v551 = vadd.f32 0.0, %v550
        %v552 = vpop.f32.mrf.mxu0
        %v553 = vadd.f32 0.0, %v552
        %554 = vdwg.mxu0
        %555 = vst [vmem:[#allocation3] sm:$0xff] %v466
        %556 = vst [vmem:[#allocation3 + $0x8] sm:$0xff] %v468
        %557 = vst [vmem:[#allocation3 + $0x10] sm:$0xff] %v471
        %558 = vst [vmem:[#allocation3 + $0x18] sm:$0xff] %v473
        %559 = vst [vmem:[#allocation3 + $0x20] sm:$0xff] %v476
        %560 = vst [vmem:[#allocation3 + $0x28] sm:$0xff] %v478
        %561 = vst [vmem:[#allocation3 + $0x30] sm:$0xff] %v481
        %562 = vst [vmem:[#allocation3 + $0x38] sm:$0xff] %v483
        %563 = vst [vmem:[#allocation3 + $0x40] sm:$0xff] %v486
        %564 = vst [vmem:[#allocation3 + $0x48] sm:$0xff] %v488
        %565 = vst [vmem:[#allocation3 + $0x50] sm:$0xff] %v491
        %566 = vst [vmem:[#allocation3 + $0x58] sm:$0xff] %v493
        %567 = vst [vmem:[#allocation3 + $0x60] sm:$0xff] %v496
        %568 = vst [vmem:[#allocation3 + $0x68] sm:$0xff] %v498
        %569 = vst [vmem:[#allocation3 + $0x70] sm:$0xff] %v501
        %570 = vst [vmem:[#allocation3 + $0x78] sm:$0xff] %v503
        %571 = vst [vmem:[#allocation3 + $0x80] sm:$0xff] %v506
        %572 = vst [vmem:[#allocation3 + $0x88] sm:$0xff] %v508
        %573 = vst [vmem:[#allocation3 + $0x90] sm:$0xff] %v511
        %574 = vst [vmem:[#allocation3 + $0x98] sm:$0xff] %v513
        %575 = vst [vmem:[#allocation3 + $0xa0] sm:$0xff] %v516
        %576 = vst [vmem:[#allocation3 + $0xa8] sm:$0xff] %v518
        %577 = vst [vmem:[#allocation3 + $0xb0] sm:$0xff] %v521
        %578 = vst [vmem:[#allocation3 + $0xb8] sm:$0xff] %v523
        %579 = vst [vmem:[#allocation3 + $0xc0] sm:$0xff] %v526
        %580 = vst [vmem:[#allocation3 + $0xc8] sm:$0xff] %v528
        %581 = vst [vmem:[#allocation3 + $0xd0] sm:$0xff] %v531
        %582 = vst [vmem:[#allocation3 + $0xd8] sm:$0xff] %v533
        %583 = vst [vmem:[#allocation3 + $0xe0] sm:$0xff] %v536
        %584 = vst [vmem:[#allocation3 + $0xe8] sm:$0xff] %v538
        %585 = vst [vmem:[#allocation3 + $0xf0] sm:$0xff] %v541
        %586 = vst [vmem:[#allocation3 + $0xf8] sm:$0xff] %v543
        %587 = vst [vmem:[#allocation3 + $0x100] sm:$0xff] %v546
        %588 = vst [vmem:[#allocation3 + $0x108] sm:$0xff] %v548
        %589 = vst [vmem:[#allocation3 + $0x110] sm:$0xff] %v551
        %590 = vst [vmem:[#allocation3 + $0x118] sm:$0xff] %v553
        %v591 = vld [vmem:[%s239] sm:$0xf]
        %v592 = vld [vmem:[%s239 + $0x4] sm:$0xf]
        %v593 = vld [vmem:[%s239 + $0x8] sm:$0xf]
        %v594 = vld [vmem:[%s239 + $0xc] sm:$0xf]
        %v595 = vld [vmem:[%s239 + $0x10] sm:$0xf]
        %v596 = vld [vmem:[%s239 + $0x14] sm:$0xf]
        %v597 = vld [vmem:[%s239 + $0x18] sm:$0xf]
        %v598 = vld [vmem:[%s239 + $0x1c] sm:$0xf]
        %v599 = vld [vmem:[%s239 + $0x20] sm:$0xf]
        %v600 = vld [vmem:[%s239 + $0x24] sm:$0xf]
        %v601 = vld [vmem:[%s239 + $0x28] sm:$0xf]
        %v602 = vld [vmem:[%s239 + $0x2c] sm:$0xf]
        %v603 = vld [vmem:[%s239 + $0x30] sm:$0xf]
        %v604 = vld [vmem:[%s239 + $0x34] sm:$0xf]
        %v605 = vld [vmem:[%s239 + $0x38] sm:$0xf]
        %v606 = vld [vmem:[%s239 + $0x3c] sm:$0xf]
        %v607 = vld [vmem:[%s239 + $0x40] sm:$0xf]
        %v608 = vld [vmem:[%s239 + $0x44] sm:$0xf]
        %v609 = vld [vmem:[%s239 + $0x48] sm:$0xf]
        %v610 = vld [vmem:[%s239 + $0x4c] sm:$0xf]
        %v611 = vld [vmem:[%s239 + $0x50] sm:$0xf]
        %v612 = vld [vmem:[%s239 + $0x54] sm:$0xf]
        %v613 = vld [vmem:[%s239 + $0x58] sm:$0xf]
        %v614 = vld [vmem:[%s239 + $0x5c] sm:$0xf]
        %v615 = vld [vmem:[%s239 + $0x60] sm:$0xf]
        %v616 = vld [vmem:[%s239 + $0x64] sm:$0xf]
        %v617 = vld [vmem:[%s239 + $0x68] sm:$0xf]
        %v618 = vld [vmem:[%s239 + $0x6c] sm:$0xf]
        %v619 = vld [vmem:[%s239 + $0x70] sm:$0xf]
        %v620 = vld [vmem:[%s239 + $0x74] sm:$0xf]
        %v621 = vld [vmem:[%s239 + $0x78] sm:$0xf]
        %v622 = vld [vmem:[%s239 + $0x7c] sm:$0xf]
        %v623 = vld [vmem:[%s239 + $0x80] sm:$0xf]
        %v624 = vld [vmem:[%s239 + $0x84] sm:$0xf]
        %v625 = vld [vmem:[%s239 + $0x88] sm:$0xf]
        %v626 = vld [vmem:[%s239 + $0x8c] sm:$0xf]
        %v627 = vld [vmem:[%s239 + $0x90] sm:$0x1]
        %s628 = scalar_lea.vmem %s1, 64
        %v629 = vld [vmem:[%s628] sm:$0xf]
        %v630 = vld [vmem:[%s628 + $0x4] sm:$0xf]
        %v631 = vld [vmem:[%s628 + $0x8] sm:$0xf]
        %v632 = vld [vmem:[%s628 + $0xc] sm:$0xf]
        %v633 = vld [vmem:[%s628 + $0x10] sm:$0xf]
        %v634 = vld [vmem:[%s628 + $0x14] sm:$0xf]
        %v635 = vld [vmem:[%s628 + $0x18] sm:$0xf]
        %v636 = vld [vmem:[%s628 + $0x1c] sm:$0xf]
        %v637 = vld [vmem:[%s628 + $0x20] sm:$0xf]
        %v638 = vld [vmem:[%s628 + $0x24] sm:$0xf]
        %v639 = vld [vmem:[%s628 + $0x28] sm:$0xf]
        %v640 = vld [vmem:[%s628 + $0x2c] sm:$0xf]
        %v641 = vld [vmem:[%s628 + $0x30] sm:$0xf]
        %v642 = vld [vmem:[%s628 + $0x34] sm:$0xf]
        %v643 = vld [vmem:[%s628 + $0x38] sm:$0xf]
        %v644 = vld [vmem:[%s628 + $0x3c] sm:$0xf]
        %v682 = vunpack.c.l.b16 %v591
        %v683 = vunpack.c.l.b16 %v592
        %v684 = vunpack.c.l.b16 %v593
        %v685 = vunpack.c.l.b16 %v594
        %v686 = vunpack.c.l.b16 %v595
        %v687 = vunpack.c.l.b16 %v596
        %v688 = vunpack.c.l.b16 %v597
        %v689 = vunpack.c.l.b16 %v598
        %v690 = vunpack.c.l.b16 %v599
        %v691 = vunpack.c.l.b16 %v600
        %v692 = vunpack.c.l.b16 %v601
        %v693 = vunpack.c.l.b16 %v602
        %v694 = vunpack.c.l.b16 %v603
        %v695 = vunpack.c.l.b16 %v604
        %v696 = vunpack.c.l.b16 %v605
        %v697 = vunpack.c.l.b16 %v606
        %v698 = vunpack.c.l.b16 %v607
        %v699 = vunpack.c.l.b16 %v608
        %v700 = vunpack.c.l.b16 %v609
        %v701 = vunpack.c.l.b16 %v610
        %v702 = vunpack.c.l.b16 %v611
        %v703 = vunpack.c.l.b16 %v612
        %v704 = vunpack.c.l.b16 %v613
        %v705 = vunpack.c.l.b16 %v614
        %v706 = vunpack.c.l.b16 %v615
        %v707 = vunpack.c.l.b16 %v616
        %v708 = vunpack.c.l.b16 %v617
        %v709 = vunpack.c.l.b16 %v618
        %v710 = vunpack.c.l.b16 %v619
        %v711 = vunpack.c.l.b16 %v620
        %v712 = vunpack.c.l.b16 %v621
        %v713 = vunpack.c.l.b16 %v622
        %v714 = vunpack.c.l.b16 %v623
        %v715 = vunpack.c.l.b16 %v624
        %v716 = vunpack.c.l.b16 %v625
        %v717 = vunpack.c.l.b16 %v626
        %v718 = vunpack.c.l.b16 %v627
        %v719 = vpack.c.b16 %v683, %v682
        %v720 = vpack.c.b16 %v685, %v684
        %v721 = vpack.c.b16 %v687, %v686
        %v722 = vpack.c.b16 %v689, %v688
        %v723 = vpack.c.b16 %v691, %v690
        %v724 = vpack.c.b16 %v693, %v692
        %v725 = vpack.c.b16 %v695, %v694
        %v726 = vpack.c.b16 %v697, %v696
        %v727 = vpack.c.b16 %v699, %v698
        %v728 = vpack.c.b16 %v701, %v700
        %v729 = vpack.c.b16 %v703, %v702
        %v730 = vpack.c.b16 %v705, %v704
        %v731 = vpack.c.b16 %v707, %v706
        %v732 = vpack.c.b16 %v709, %v708
        %v733 = vpack.c.b16 %v711, %v710
        %v734 = vpack.c.b16 %v713, %v712
        %v735 = vpack.c.b16 %v715, %v714
        %v736 = vpack.c.b16 %v717, %v716
        %v737 = vpack.c.b16 %v718, %v718
        %vm738 = vsmask.f32 7424
        %v740 = vshrl.u32 %v719, 16
        %v742 = vshll.u32 %v719, 16
        %v744 = vrot.slane %v742, 1
        %v745 = vor.u32 %v740, %v744
        %v747 = vshll.u32 %v720, 16
        %v749 = vrot.slane %v747, 1
        %v750 = vsel %vm738, %v745, %v749
        %v751 = vshrl.u32 %v720, 16
        %v753 = vor.u32 %v751, %v749
        %v755 = vshll.u32 %v721, 16
        %v757 = vrot.slane %v755, 1
        %v758 = vsel %vm738, %v753, %v757
        %v759 = vshrl.u32 %v721, 16
        %v761 = vor.u32 %v759, %v757
        %v763 = vshll.u32 %v722, 16
        %v765 = vrot.slane %v763, 1
        %v766 = vsel %vm738, %v761, %v765
        %v767 = vshrl.u32 %v722, 16
        %v769 = vor.u32 %v767, %v765
        %v771 = vshll.u32 %v723, 16
        %v773 = vrot.slane %v771, 1
        %v774 = vsel %vm738, %v769, %v773
        %v775 = vshrl.u32 %v723, 16
        %v777 = vor.u32 %v775, %v773
        %v779 = vshll.u32 %v724, 16
        %v781 = vrot.slane %v779, 1
        %v782 = vsel %vm738, %v777, %v781
        %v783 = vshrl.u32 %v724, 16
        %v785 = vor.u32 %v783, %v781
        %v787 = vshll.u32 %v725, 16
        %v789 = vrot.slane %v787, 1
        %v790 = vsel %vm738, %v785, %v789
        %v791 = vshrl.u32 %v725, 16
        %v793 = vor.u32 %v791, %v789
        %v795 = vshll.u32 %v726, 16
        %v797 = vrot.slane %v795, 1
        %v798 = vsel %vm738, %v793, %v797
        %v799 = vshrl.u32 %v726, 16
        %v801 = vor.u32 %v799, %v797
        %v803 = vshll.u32 %v727, 16
        %v805 = vrot.slane %v803, 1
        %v806 = vsel %vm738, %v801, %v805
        %v807 = vshrl.u32 %v727, 16
        %v809 = vor.u32 %v807, %v805
        %v811 = vshll.u32 %v728, 16
        %v813 = vrot.slane %v811, 1
        %v814 = vsel %vm738, %v809, %v813
        %v815 = vshrl.u32 %v728, 16
        %v817 = vor.u32 %v815, %v813
        %v819 = vshll.u32 %v729, 16
        %v821 = vrot.slane %v819, 1
        %v822 = vsel %vm738, %v817, %v821
        %v823 = vshrl.u32 %v729, 16
        %v825 = vor.u32 %v823, %v821
        %v827 = vshll.u32 %v730, 16
        %v829 = vrot.slane %v827, 1
        %v830 = vsel %vm738, %v825, %v829
        %v831 = vshrl.u32 %v730, 16
        %v833 = vor.u32 %v831, %v829
        %v835 = vshll.u32 %v731, 16
        %v837 = vrot.slane %v835, 1
        %v838 = vsel %vm738, %v833, %v837
        %v839 = vshrl.u32 %v731, 16
        %v841 = vor.u32 %v839, %v837
        %v843 = vshll.u32 %v732, 16
        %v845 = vrot.slane %v843, 1
        %v846 = vsel %vm738, %v841, %v845
        %v847 = vshrl.u32 %v732, 16
        %v849 = vor.u32 %v847, %v845
        %v851 = vshll.u32 %v733, 16
        %v853 = vrot.slane %v851, 1
        %v854 = vsel %vm738, %v849, %v853
        %v855 = vshrl.u32 %v733, 16
        %v857 = vor.u32 %v855, %v853
        %v859 = vshll.u32 %v734, 16
        %v861 = vrot.slane %v859, 1
        %v862 = vsel %vm738, %v857, %v861
        %v863 = vshrl.u32 %v734, 16
        %v865 = vor.u32 %v863, %v861
        %v867 = vshll.u32 %v735, 16
        %v869 = vrot.slane %v867, 1
        %v870 = vsel %vm738, %v865, %v869
        %v871 = vshrl.u32 %v735, 16
        %v873 = vor.u32 %v871, %v869
        %v875 = vshll.u32 %v736, 16
        %v877 = vrot.slane %v875, 1
        %v878 = vsel %vm738, %v873, %v877
        %v879 = vshrl.u32 %v736, 16
        %v881 = vor.u32 %v879, %v877
        %v883 = vshll.u32 %v737, 16
        %v885 = vrot.slane %v883, 1
        %v886 = vsel %vm738, %v881, %v885
        %v921 = vunpack.c.l.b16 %v629
        %v922 = vunpack.c.l.b16 %v630
        %v923 = vunpack.c.l.b16 %v631
        %v924 = vunpack.c.l.b16 %v632
        %v925 = vunpack.c.l.b16 %v633
        %v926 = vunpack.c.l.b16 %v634
        %v927 = vunpack.c.l.b16 %v635
        %v928 = vunpack.c.l.b16 %v636
        %v929 = vunpack.c.l.b16 %v637
        %v930 = vunpack.c.l.b16 %v638
        %v931 = vunpack.c.l.b16 %v639
        %v932 = vunpack.c.l.b16 %v640
        %v933 = vunpack.c.l.b16 %v641
        %v934 = vunpack.c.l.b16 %v642
        %v935 = vunpack.c.l.b16 %v643
        %v936 = vunpack.c.l.b16 %v644
        %v937 = vpack.c.b16 %v922, %v921
        %v938 = vpack.c.b16 %v924, %v923
        %v939 = vpack.c.b16 %v926, %v925
        %v940 = vpack.c.b16 %v928, %v927
        %v941 = vpack.c.b16 %v930, %v929
        %v942 = vpack.c.b16 %v932, %v931
        %v943 = vpack.c.b16 %v934, %v933
        %v944 = vpack.c.b16 %v936, %v935
        %953 = vmatpush.bf16.msra.mxu0 %v944
        %954 = vmatpush.bf16.msra.mxu0 %v943
        %955 = vmatpush.bf16.msra.mxu0 %v942
        %956 = vmatpush.bf16.msra.mxu0 %v941
        %957 = vmatpush.bf16.msra.mxu0 %v940
        %958 = vmatpush.bf16.msra.mxu0 %v939
        %959 = vmatpush.bf16.msra.mxu0 %v938
        %960 = vmatpush.bf16.msra.mxu0 %v937
        %961 = vmatmul.bf16.gmra.mxu0 %v750
        %v962 = vpop.f32.mrf.mxu0
        %v963 = vadd.f32 0.0, %v962
        %v964 = vpop.f32.mrf.mxu0
        %v965 = vadd.f32 0.0, %v964
        %966 = vmatmul.bf16.gmra.mxu0 %v758
        %v967 = vpop.f32.mrf.mxu0
        %v968 = vadd.f32 0.0, %v967
        %v969 = vpop.f32.mrf.mxu0
        %v970 = vadd.f32 0.0, %v969
        %971 = vmatmul.bf16.gmra.mxu0 %v766
        %v972 = vpop.f32.mrf.mxu0
        %v973 = vadd.f32 0.0, %v972
        %v974 = vpop.f32.mrf.mxu0
        %v975 = vadd.f32 0.0, %v974
        %976 = vmatmul.bf16.gmra.mxu0 %v774
        %v977 = vpop.f32.mrf.mxu0
        %v978 = vadd.f32 0.0, %v977
        %v979 = vpop.f32.mrf.mxu0
        %v980 = vadd.f32 0.0, %v979
        %981 = vmatmul.bf16.gmra.mxu0 %v782
        %v982 = vpop.f32.mrf.mxu0
        %v983 = vadd.f32 0.0, %v982
        %v984 = vpop.f32.mrf.mxu0
        %v985 = vadd.f32 0.0, %v984
        %986 = vmatmul.bf16.gmra.mxu0 %v790
        %v987 = vpop.f32.mrf.mxu0
        %v988 = vadd.f32 0.0, %v987
        %v989 = vpop.f32.mrf.mxu0
        %v990 = vadd.f32 0.0, %v989
        %991 = vmatmul.bf16.gmra.mxu0 %v798
        %v992 = vpop.f32.mrf.mxu0
        %v993 = vadd.f32 0.0, %v992
        %v994 = vpop.f32.mrf.mxu0
        %v995 = vadd.f32 0.0, %v994
        %996 = vmatmul.bf16.gmra.mxu0 %v806
        %v997 = vpop.f32.mrf.mxu0
        %v998 = vadd.f32 0.0, %v997
        %v999 = vpop.f32.mrf.mxu0
        %v1000 = vadd.f32 0.0, %v999
        %1001 = vmatmul.bf16.gmra.mxu0 %v814
        %v1002 = vpop.f32.mrf.mxu0
        %v1003 = vadd.f32 0.0, %v1002
        %v1004 = vpop.f32.mrf.mxu0
        %v1005 = vadd.f32 0.0, %v1004
        %1006 = vmatmul.bf16.gmra.mxu0 %v822
        %v1007 = vpop.f32.mrf.mxu0
        %v1008 = vadd.f32 0.0, %v1007
        %v1009 = vpop.f32.mrf.mxu0
        %v1010 = vadd.f32 0.0, %v1009
        %1011 = vmatmul.bf16.gmra.mxu0 %v830
        %v1012 = vpop.f32.mrf.mxu0
        %v1013 = vadd.f32 0.0, %v1012
        %v1014 = vpop.f32.mrf.mxu0
        %v1015 = vadd.f32 0.0, %v1014
        %1016 = vmatmul.bf16.gmra.mxu0 %v838
        %v1017 = vpop.f32.mrf.mxu0
        %v1018 = vadd.f32 0.0, %v1017
        %v1019 = vpop.f32.mrf.mxu0
        %v1020 = vadd.f32 0.0, %v1019
        %1021 = vmatmul.bf16.gmra.mxu0 %v846
        %v1022 = vpop.f32.mrf.mxu0
        %v1023 = vadd.f32 0.0, %v1022
        %v1024 = vpop.f32.mrf.mxu0
        %v1025 = vadd.f32 0.0, %v1024
        %1026 = vmatmul.bf16.gmra.mxu0 %v854
        %v1027 = vpop.f32.mrf.mxu0
        %v1028 = vadd.f32 0.0, %v1027
        %v1029 = vpop.f32.mrf.mxu0
        %v1030 = vadd.f32 0.0, %v1029
        %1031 = vmatmul.bf16.gmra.mxu0 %v862
        %v1032 = vpop.f32.mrf.mxu0
        %v1033 = vadd.f32 0.0, %v1032
        %v1034 = vpop.f32.mrf.mxu0
        %v1035 = vadd.f32 0.0, %v1034
        %1036 = vmatmul.bf16.gmra.mxu0 %v870
        %v1037 = vpop.f32.mrf.mxu0
        %v1038 = vadd.f32 0.0, %v1037
        %v1039 = vpop.f32.mrf.mxu0
        %v1040 = vadd.f32 0.0, %v1039
        %1041 = vmatmul.bf16.gmra.mxu0 %v878
        %v1042 = vpop.f32.mrf.mxu0
        %v1043 = vadd.f32 0.0, %v1042
        %v1044 = vpop.f32.mrf.mxu0
        %v1045 = vadd.f32 0.0, %v1044
        %1046 = vmatmul.bf16.gmra.mxu0 %v886
        %v1047 = vpop.f32.mrf.mxu0
        %v1048 = vadd.f32 0.0, %v1047
        %v1049 = vpop.f32.mrf.mxu0
        %v1050 = vadd.f32 0.0, %v1049
        %1051 = vdwg.mxu0
        %v1052 = vld [vmem:[#allocation3] sm:$0xff]
        %v1053 = vld [vmem:[#allocation3 + $0x8] sm:$0xff]
        %v1054 = vld [vmem:[#allocation3 + $0x10] sm:$0xff]
        %v1055 = vld [vmem:[#allocation3 + $0x18] sm:$0xff]
        %v1056 = vld [vmem:[#allocation3 + $0x20] sm:$0xff]
        %v1057 = vld [vmem:[#allocation3 + $0x28] sm:$0xff]
        %v1058 = vld [vmem:[#allocation3 + $0x30] sm:$0xff]
        %v1059 = vld [vmem:[#allocation3 + $0x38] sm:$0xff]
        %v1060 = vld [vmem:[#allocation3 + $0x40] sm:$0xff]
        %v1061 = vld [vmem:[#allocation3 + $0x48] sm:$0xff]
        %v1062 = vld [vmem:[#allocation3 + $0x50] sm:$0xff]
        %v1063 = vld [vmem:[#allocation3 + $0x58] sm:$0xff]
        %v1064 = vld [vmem:[#allocation3 + $0x60] sm:$0xff]
        %v1065 = vld [vmem:[#allocation3 + $0x68] sm:$0xff]
        %v1066 = vld [vmem:[#allocation3 + $0x70] sm:$0xff]
        %v1067 = vld [vmem:[#allocation3 + $0x78] sm:$0xff]
        %v1068 = vld [vmem:[#allocation3 + $0x80] sm:$0xff]
        %v1069 = vld [vmem:[#allocation3 + $0x88] sm:$0xff]
        %v1070 = vld [vmem:[#allocation3 + $0x90] sm:$0xff]
        %v1071 = vld [vmem:[#allocation3 + $0x98] sm:$0xff]
        %v1072 = vld [vmem:[#allocation3 + $0xa0] sm:$0xff]
        %v1073 = vld [vmem:[#allocation3 + $0xa8] sm:$0xff]
        %v1074 = vld [vmem:[#allocation3 + $0xb0] sm:$0xff]
        %v1075 = vld [vmem:[#allocation3 + $0xb8] sm:$0xff]
        %v1076 = vld [vmem:[#allocation3 + $0xc0] sm:$0xff]
        %v1077 = vld [vmem:[#allocation3 + $0xc8] sm:$0xff]
        %v1078 = vld [vmem:[#allocation3 + $0xd0] sm:$0xff]
        %v1079 = vld [vmem:[#allocation3 + $0xd8] sm:$0xff]
        %v1080 = vld [vmem:[#allocation3 + $0xe0] sm:$0xff]
        %v1081 = vld [vmem:[#allocation3 + $0xe8] sm:$0xff]
        %v1082 = vld [vmem:[#allocation3 + $0xf0] sm:$0xff]
        %v1083 = vld [vmem:[#allocation3 + $0xf8] sm:$0xff]
        %v1084 = vld [vmem:[#allocation3 + $0x100] sm:$0xff]
        %v1085 = vld [vmem:[#allocation3 + $0x108] sm:$0xff]
        %v1086 = vld [vmem:[#allocation3 + $0x110] sm:$0xff]
        %v1087 = vld [vmem:[#allocation3 + $0x118] sm:$0xff]
        %v1088 = vadd.f32 %v1052, %v963
        %v1089 = vadd.f32 %v1053, %v965
        %v1090 = vadd.f32 %v1054, %v968
        %v1091 = vadd.f32 %v1055, %v970
        %v1092 = vadd.f32 %v1056, %v973
        %v1093 = vadd.f32 %v1057, %v975
        %v1094 = vadd.f32 %v1058, %v978
        %v1095 = vadd.f32 %v1059, %v980
        %v1096 = vadd.f32 %v1060, %v983
        %v1097 = vadd.f32 %v1061, %v985
        %v1098 = vadd.f32 %v1062, %v988
        %v1099 = vadd.f32 %v1063, %v990
        %v1100 = vadd.f32 %v1064, %v993
        %v1101 = vadd.f32 %v1065, %v995
        %v1102 = vadd.f32 %v1066, %v998
        %v1103 = vadd.f32 %v1067, %v1000
        %v1104 = vadd.f32 %v1068, %v1003
        %v1105 = vadd.f32 %v1069, %v1005
        %v1106 = vadd.f32 %v1070, %v1008
        %v1107 = vadd.f32 %v1071, %v1010
        %v1108 = vadd.f32 %v1072, %v1013
        %v1109 = vadd.f32 %v1073, %v1015
        %v1110 = vadd.f32 %v1074, %v1018
        %v1111 = vadd.f32 %v1075, %v1020
        %v1112 = vadd.f32 %v1076, %v1023
        %v1113 = vadd.f32 %v1077, %v1025
        %v1114 = vadd.f32 %v1078, %v1028
        %v1115 = vadd.f32 %v1079, %v1030
        %v1116 = vadd.f32 %v1080, %v1033
        %v1117 = vadd.f32 %v1081, %v1035
        %v1118 = vadd.f32 %v1082, %v1038
        %v1119 = vadd.f32 %v1083, %v1040
        %v1120 = vadd.f32 %v1084, %v1043
        %v1121 = vadd.f32 %v1085, %v1045
        %v1122 = vadd.f32 %v1086, %v1048
        %v1123 = vadd.f32 %v1087, %v1050
        %1124 = vst [vmem:[#allocation3] sm:$0xff] %v1088
        %1125 = vst [vmem:[#allocation3 + $0x8] sm:$0xff] %v1089
        %1126 = vst [vmem:[#allocation3 + $0x10] sm:$0xff] %v1090
        %1127 = vst [vmem:[#allocation3 + $0x18] sm:$0xff] %v1091
        %1128 = vst [vmem:[#allocation3 + $0x20] sm:$0xff] %v1092
        %1129 = vst [vmem:[#allocation3 + $0x28] sm:$0xff] %v1093
        %1130 = vst [vmem:[#allocation3 + $0x30] sm:$0xff] %v1094
        %1131 = vst [vmem:[#allocation3 + $0x38] sm:$0xff] %v1095
        %1132 = vst [vmem:[#allocation3 + $0x40] sm:$0xff] %v1096
        %1133 = vst [vmem:[#allocation3 + $0x48] sm:$0xff] %v1097
        %1134 = vst [vmem:[#allocation3 + $0x50] sm:$0xff] %v1098
        %1135 = vst [vmem:[#allocation3 + $0x58] sm:$0xff] %v1099
        %1136 = vst [vmem:[#allocation3 + $0x60] sm:$0xff] %v1100
        %1137 = vst [vmem:[#allocation3 + $0x68] sm:$0xff] %v1101
        %1138 = vst [vmem:[#allocation3 + $0x70] sm:$0xff] %v1102
        %1139 = vst [vmem:[#allocation3 + $0x78] sm:$0xff] %v1103
        %1140 = vst [vmem:[#allocation3 + $0x80] sm:$0xff] %v1104
        %1141 = vst [vmem:[#allocation3 + $0x88] sm:$0xff] %v1105
        %1142 = vst [vmem:[#allocation3 + $0x90] sm:$0xff] %v1106
        %1143 = vst [vmem:[#allocation3 + $0x98] sm:$0xff] %v1107
        %1144 = vst [vmem:[#allocation3 + $0xa0] sm:$0xff] %v1108
        %1145 = vst [vmem:[#allocation3 + $0xa8] sm:$0xff] %v1109
        %1146 = vst [vmem:[#allocation3 + $0xb0] sm:$0xff] %v1110
        %1147 = vst [vmem:[#allocation3 + $0xb8] sm:$0xff] %v1111
        %1148 = vst [vmem:[#allocation3 + $0xc0] sm:$0xff] %v1112
        %1149 = vst [vmem:[#allocation3 + $0xc8] sm:$0xff] %v1113
        %1150 = vst [vmem:[#allocation3 + $0xd0] sm:$0xff] %v1114
        %1151 = vst [vmem:[#allocation3 + $0xd8] sm:$0xff] %v1115
        %1152 = vst [vmem:[#allocation3 + $0xe0] sm:$0xff] %v1116
        %1153 = vst [vmem:[#allocation3 + $0xe8] sm:$0xff] %v1117
        %1154 = vst [vmem:[#allocation3 + $0xf0] sm:$0xff] %v1118
        %1155 = vst [vmem:[#allocation3 + $0xf8] sm:$0xff] %v1119
        %1156 = vst [vmem:[#allocation3 + $0x100] sm:$0xff] %v1120
        %1157 = vst [vmem:[#allocation3 + $0x108] sm:$0xff] %v1121
        %1158 = vst [vmem:[#allocation3 + $0x110] sm:$0xff] %v1122
        %1159 = vst [vmem:[#allocation3 + $0x118] sm:$0xff] %v1123
        %v1160 = vld [vmem:[%s239] sm:$0xe]
        %v1161 = vld [vmem:[%s239 + $0x4] sm:$0xf]
        %v1162 = vld [vmem:[%s239 + $0x8] sm:$0xf]
        %v1163 = vld [vmem:[%s239 + $0xc] sm:$0xf]
        %v1164 = vld [vmem:[%s239 + $0x10] sm:$0xf]
        %v1165 = vld [vmem:[%s239 + $0x14] sm:$0xf]
        %v1166 = vld [vmem:[%s239 + $0x18] sm:$0xf]
        %v1167 = vld [vmem:[%s239 + $0x1c] sm:$0xf]
        %v1168 = vld [vmem:[%s239 + $0x20] sm:$0xf]
        %v1169 = vld [vmem:[%s239 + $0x24] sm:$0xf]
        %v1170 = vld [vmem:[%s239 + $0x28] sm:$0xf]
        %v1171 = vld [vmem:[%s239 + $0x2c] sm:$0xf]
        %v1172 = vld [vmem:[%s239 + $0x30] sm:$0xf]
        %v1173 = vld [vmem:[%s239 + $0x34] sm:$0xf]
        %v1174 = vld [vmem:[%s239 + $0x38] sm:$0xf]
        %v1175 = vld [vmem:[%s239 + $0x3c] sm:$0xf]
        %v1176 = vld [vmem:[%s239 + $0x40] sm:$0xf]
        %v1177 = vld [vmem:[%s239 + $0x44] sm:$0xf]
        %v1178 = vld [vmem:[%s239 + $0x48] sm:$0xf]
        %v1179 = vld [vmem:[%s239 + $0x4c] sm:$0xf]
        %v1180 = vld [vmem:[%s239 + $0x50] sm:$0xf]
        %v1181 = vld [vmem:[%s239 + $0x54] sm:$0xf]
        %v1182 = vld [vmem:[%s239 + $0x58] sm:$0xf]
        %v1183 = vld [vmem:[%s239 + $0x5c] sm:$0xf]
        %v1184 = vld [vmem:[%s239 + $0x60] sm:$0xf]
        %v1185 = vld [vmem:[%s239 + $0x64] sm:$0xf]
        %v1186 = vld [vmem:[%s239 + $0x68] sm:$0xf]
        %v1187 = vld [vmem:[%s239 + $0x6c] sm:$0xf]
        %v1188 = vld [vmem:[%s239 + $0x70] sm:$0xf]
        %v1189 = vld [vmem:[%s239 + $0x74] sm:$0xf]
        %v1190 = vld [vmem:[%s239 + $0x78] sm:$0xf]
        %v1191 = vld [vmem:[%s239 + $0x7c] sm:$0xf]
        %v1192 = vld [vmem:[%s239 + $0x80] sm:$0xf]
        %v1193 = vld [vmem:[%s239 + $0x84] sm:$0xf]
        %v1194 = vld [vmem:[%s239 + $0x88] sm:$0xf]
        %v1195 = vld [vmem:[%s239 + $0x8c] sm:$0xf]
        %v1196 = vld [vmem:[%s239 + $0x90] sm:$0x1]
        %s1197 = scalar_lea.vmem %s1, 128
        %v1198 = vld [vmem:[%s1197] sm:$0xf]
        %v1199 = vld [vmem:[%s1197 + $0x4] sm:$0xf]
        %v1200 = vld [vmem:[%s1197 + $0x8] sm:$0xf]
        %v1201 = vld [vmem:[%s1197 + $0xc] sm:$0xf]
        %v1202 = vld [vmem:[%s1197 + $0x10] sm:$0xf]
        %v1203 = vld [vmem:[%s1197 + $0x14] sm:$0xf]
        %v1204 = vld [vmem:[%s1197 + $0x18] sm:$0xf]
        %v1205 = vld [vmem:[%s1197 + $0x1c] sm:$0xf]
        %v1206 = vld [vmem:[%s1197 + $0x20] sm:$0xf]
        %v1207 = vld [vmem:[%s1197 + $0x24] sm:$0xf]
        %v1208 = vld [vmem:[%s1197 + $0x28] sm:$0xf]
        %v1209 = vld [vmem:[%s1197 + $0x2c] sm:$0xf]
        %v1210 = vld [vmem:[%s1197 + $0x30] sm:$0xf]
        %v1211 = vld [vmem:[%s1197 + $0x34] sm:$0xf]
        %v1212 = vld [vmem:[%s1197 + $0x38] sm:$0xf]
        %v1213 = vld [vmem:[%s1197 + $0x3c] sm:$0xf]
        %v1251 = vunpack.c.l.b16 %v1160
        %v1252 = vunpack.c.l.b16 %v1161
        %v1253 = vunpack.c.l.b16 %v1162
        %v1254 = vunpack.c.l.b16 %v1163
        %v1255 = vunpack.c.l.b16 %v1164
        %v1256 = vunpack.c.l.b16 %v1165
        %v1257 = vunpack.c.l.b16 %v1166
        %v1258 = vunpack.c.l.b16 %v1167
        %v1259 = vunpack.c.l.b16 %v1168
        %v1260 = vunpack.c.l.b16 %v1169
        %v1261 = vunpack.c.l.b16 %v1170
        %v1262 = vunpack.c.l.b16 %v1171
        %v1263 = vunpack.c.l.b16 %v1172
        %v1264 = vunpack.c.l.b16 %v1173
        %v1265 = vunpack.c.l.b16 %v1174
        %v1266 = vunpack.c.l.b16 %v1175
        %v1267 = vunpack.c.l.b16 %v1176
        %v1268 = vunpack.c.l.b16 %v1177
        %v1269 = vunpack.c.l.b16 %v1178
        %v1270 = vunpack.c.l.b16 %v1179
        %v1271 = vunpack.c.l.b16 %v1180
        %v1272 = vunpack.c.l.b16 %v1181
        %v1273 = vunpack.c.l.b16 %v1182
        %v1274 = vunpack.c.l.b16 %v1183
        %v1275 = vunpack.c.l.b16 %v1184
        %v1276 = vunpack.c.l.b16 %v1185
        %v1277 = vunpack.c.l.b16 %v1186
        %v1278 = vunpack.c.l.b16 %v1187
        %v1279 = vunpack.c.l.b16 %v1188
        %v1280 = vunpack.c.l.b16 %v1189
        %v1281 = vunpack.c.l.b16 %v1190
        %v1282 = vunpack.c.l.b16 %v1191
        %v1283 = vunpack.c.l.b16 %v1192
        %v1284 = vunpack.c.l.b16 %v1193
        %v1285 = vunpack.c.l.b16 %v1194
        %v1286 = vunpack.c.l.b16 %v1195
        %v1287 = vunpack.c.l.b16 %v1196
        %v1288 = vpack.c.b16 %v1252, %v1251
        %v1289 = vpack.c.b16 %v1254, %v1253
        %v1290 = vpack.c.b16 %v1256, %v1255
        %v1291 = vpack.c.b16 %v1258, %v1257
        %v1292 = vpack.c.b16 %v1260, %v1259
        %v1293 = vpack.c.b16 %v1262, %v1261
        %v1294 = vpack.c.b16 %v1264, %v1263
        %v1295 = vpack.c.b16 %v1266, %v1265
        %v1296 = vpack.c.b16 %v1268, %v1267
        %v1297 = vpack.c.b16 %v1270, %v1269
        %v1298 = vpack.c.b16 %v1272, %v1271
        %v1299 = vpack.c.b16 %v1274, %v1273
        %v1300 = vpack.c.b16 %v1276, %v1275
        %v1301 = vpack.c.b16 %v1278, %v1277
        %v1302 = vpack.c.b16 %v1280, %v1279
        %v1303 = vpack.c.b16 %v1282, %v1281
        %v1304 = vpack.c.b16 %v1284, %v1283
        %v1305 = vpack.c.b16 %v1286, %v1285
        %v1306 = vpack.c.b16 %v1287, %v1287
        %vm1307 = vcmask 1046528
        %v1308 = vrot.slane %v1288, 1
        %v1309 = vrot.slane %v1289, 1
        %v1310 = vsel %vm1307, %v1308, %v1309
        %v1311 = vrot.slane %v1290, 1
        %v1312 = vsel %vm1307, %v1309, %v1311
        %v1313 = vrot.slane %v1291, 1
        %v1314 = vsel %vm1307, %v1311, %v1313
        %v1315 = vrot.slane %v1292, 1
        %v1316 = vsel %vm1307, %v1313, %v1315
        %v1317 = vrot.slane %v1293, 1
        %v1318 = vsel %vm1307, %v1315, %v1317
        %v1319 = vrot.slane %v1294, 1
        %v1320 = vsel %vm1307, %v1317, %v1319
        %v1321 = vrot.slane %v1295, 1
        %v1322 = vsel %vm1307, %v1319, %v1321
        %v1323 = vrot.slane %v1296, 1
        %v1324 = vsel %vm1307, %v1321, %v1323
        %v1325 = vrot.slane %v1297, 1
        %v1326 = vsel %vm1307, %v1323, %v1325
        %v1327 = vrot.slane %v1298, 1
        %v1328 = vsel %vm1307, %v1325, %v1327
        %v1329 = vrot.slane %v1299, 1
        %v1330 = vsel %vm1307, %v1327, %v1329
        %v1331 = vrot.slane %v1300, 1
        %v1332 = vsel %vm1307, %v1329, %v1331
        %v1333 = vrot.slane %v1301, 1
        %v1334 = vsel %vm1307, %v1331, %v1333
        %v1335 = vrot.slane %v1302, 1
        %v1336 = vsel %vm1307, %v1333, %v1335
        %v1337 = vrot.slane %v1303, 1
        %v1338 = vsel %vm1307, %v1335, %v1337
        %v1339 = vrot.slane %v1304, 1
        %v1340 = vsel %vm1307, %v1337, %v1339
        %v1341 = vrot.slane %v1305, 1
        %v1342 = vsel %vm1307, %v1339, %v1341
        %v1343 = vrot.slane %v1306, 1
        %v1344 = vsel %vm1307, %v1341, %v1343
        %v1379 = vunpack.c.l.b16 %v1198
        %v1380 = vunpack.c.l.b16 %v1199
        %v1381 = vunpack.c.l.b16 %v1200
        %v1382 = vunpack.c.l.b16 %v1201
        %v1383 = vunpack.c.l.b16 %v1202
        %v1384 = vunpack.c.l.b16 %v1203
        %v1385 = vunpack.c.l.b16 %v1204
        %v1386 = vunpack.c.l.b16 %v1205
        %v1387 = vunpack.c.l.b16 %v1206
        %v1388 = vunpack.c.l.b16 %v1207
        %v1389 = vunpack.c.l.b16 %v1208
        %v1390 = vunpack.c.l.b16 %v1209
        %v1391 = vunpack.c.l.b16 %v1210
        %v1392 = vunpack.c.l.b16 %v1211
        %v1393 = vunpack.c.l.b16 %v1212
        %v1394 = vunpack.c.l.b16 %v1213
        %v1395 = vpack.c.b16 %v1380, %v1379
        %v1396 = vpack.c.b16 %v1382, %v1381
        %v1397 = vpack.c.b16 %v1384, %v1383
        %v1398 = vpack.c.b16 %v1386, %v1385
        %v1399 = vpack.c.b16 %v1388, %v1387
        %v1400 = vpack.c.b16 %v1390, %v1389
        %v1401 = vpack.c.b16 %v1392, %v1391
        %v1402 = vpack.c.b16 %v1394, %v1393
        %1411 = vmatpush.bf16.msra.mxu0 %v1402
        %1412 = vmatpush.bf16.msra.mxu0 %v1401
        %1413 = vmatpush.bf16.msra.mxu0 %v1400
        %1414 = vmatpush.bf16.msra.mxu0 %v1399
        %1415 = vmatpush.bf16.msra.mxu0 %v1398
        %1416 = vmatpush.bf16.msra.mxu0 %v1397
        %1417 = vmatpush.bf16.msra.mxu0 %v1396
        %1418 = vmatpush.bf16.msra.mxu0 %v1395
        %1419 = vmatmul.bf16.gmra.mxu0 %v1310
        %v1420 = vpop.f32.mrf.mxu0
        %v1421 = vadd.f32 0.0, %v1420
        %v1422 = vpop.f32.mrf.mxu0
        %v1423 = vadd.f32 0.0, %v1422
        %1424 = vmatmul.bf16.gmra.mxu0 %v1312
        %v1425 = vpop.f32.mrf.mxu0
        %v1426 = vadd.f32 0.0, %v1425
        %v1427 = vpop.f32.mrf.mxu0
        %v1428 = vadd.f32 0.0, %v1427
        %1429 = vmatmul.bf16.gmra.mxu0 %v1314
        %v1430 = vpop.f32.mrf.mxu0
        %v1431 = vadd.f32 0.0, %v1430
        %v1432 = vpop.f32.mrf.mxu0
        %v1433 = vadd.f32 0.0, %v1432
        %1434 = vmatmul.bf16.gmra.mxu0 %v1316
        %v1435 = vpop.f32.mrf.mxu0
        %v1436 = vadd.f32 0.0, %v1435
        %v1437 = vpop.f32.mrf.mxu0
        %v1438 = vadd.f32 0.0, %v1437
        %1439 = vmatmul.bf16.gmra.mxu0 %v1318
        %v1440 = vpop.f32.mrf.mxu0
        %v1441 = vadd.f32 0.0, %v1440
        %v1442 = vpop.f32.mrf.mxu0
        %v1443 = vadd.f32 0.0, %v1442
        %1444 = vmatmul.bf16.gmra.mxu0 %v1320
        %v1445 = vpop.f32.mrf.mxu0
        %v1446 = vadd.f32 0.0, %v1445
        %v1447 = vpop.f32.mrf.mxu0
        %v1448 = vadd.f32 0.0, %v1447
        %1449 = vmatmul.bf16.gmra.mxu0 %v1322
        %v1450 = vpop.f32.mrf.mxu0
        %v1451 = vadd.f32 0.0, %v1450
        %v1452 = vpop.f32.mrf.mxu0
        %v1453 = vadd.f32 0.0, %v1452
        %1454 = vmatmul.bf16.gmra.mxu0 %v1324
        %v1455 = vpop.f32.mrf.mxu0
        %v1456 = vadd.f32 0.0, %v1455
        %v1457 = vpop.f32.mrf.mxu0
        %v1458 = vadd.f32 0.0, %v1457
        %1459 = vmatmul.bf16.gmra.mxu0 %v1326
        %v1460 = vpop.f32.mrf.mxu0
        %v1461 = vadd.f32 0.0, %v1460
        %v1462 = vpop.f32.mrf.mxu0
        %v1463 = vadd.f32 0.0, %v1462
        %1464 = vmatmul.bf16.gmra.mxu0 %v1328
        %v1465 = vpop.f32.mrf.mxu0
        %v1466 = vadd.f32 0.0, %v1465
        %v1467 = vpop.f32.mrf.mxu0
        %v1468 = vadd.f32 0.0, %v1467
        %1469 = vmatmul.bf16.gmra.mxu0 %v1330
        %v1470 = vpop.f32.mrf.mxu0
        %v1471 = vadd.f32 0.0, %v1470
        %v1472 = vpop.f32.mrf.mxu0
        %v1473 = vadd.f32 0.0, %v1472
        %1474 = vmatmul.bf16.gmra.mxu0 %v1332
        %v1475 = vpop.f32.mrf.mxu0
        %v1476 = vadd.f32 0.0, %v1475
        %v1477 = vpop.f32.mrf.mxu0
        %v1478 = vadd.f32 0.0, %v1477
        %1479 = vmatmul.bf16.gmra.mxu0 %v1334
        %v1480 = vpop.f32.mrf.mxu0
        %v1481 = vadd.f32 0.0, %v1480
        %v1482 = vpop.f32.mrf.mxu0
        %v1483 = vadd.f32 0.0, %v1482
        %1484 = vmatmul.bf16.gmra.mxu0 %v1336
        %v1485 = vpop.f32.mrf.mxu0
        %v1486 = vadd.f32 0.0, %v1485
        %v1487 = vpop.f32.mrf.mxu0
        %v1488 = vadd.f32 0.0, %v1487
        %1489 = vmatmul.bf16.gmra.mxu0 %v1338
        %v1490 = vpop.f32.mrf.mxu0
        %v1491 = vadd.f32 0.0, %v1490
        %v1492 = vpop.f32.mrf.mxu0
        %v1493 = vadd.f32 0.0, %v1492
        %1494 = vmatmul.bf16.gmra.mxu0 %v1340
        %v1495 = vpop.f32.mrf.mxu0
        %v1496 = vadd.f32 0.0, %v1495
        %v1497 = vpop.f32.mrf.mxu0
        %v1498 = vadd.f32 0.0, %v1497
        %1499 = vmatmul.bf16.gmra.mxu0 %v1342
        %v1500 = vpop.f32.mrf.mxu0
        %v1501 = vadd.f32 0.0, %v1500
        %v1502 = vpop.f32.mrf.mxu0
        %v1503 = vadd.f32 0.0, %v1502
        %1504 = vmatmul.bf16.gmra.mxu0 %v1344
        %v1505 = vpop.f32.mrf.mxu0
        %v1506 = vadd.f32 0.0, %v1505
        %v1507 = vpop.f32.mrf.mxu0
        %v1508 = vadd.f32 0.0, %v1507
        %1509 = vdwg.mxu0
        %v1510 = vld [vmem:[#allocation3] sm:$0xff]
        %v1511 = vld [vmem:[#allocation3 + $0x8] sm:$0xff]
        %v1512 = vld [vmem:[#allocation3 + $0x10] sm:$0xff]
        %v1513 = vld [vmem:[#allocation3 + $0x18] sm:$0xff]
        %v1514 = vld [vmem:[#allocation3 + $0x20] sm:$0xff]
        %v1515 = vld [vmem:[#allocation3 + $0x28] sm:$0xff]
        %v1516 = vld [vmem:[#allocation3 + $0x30] sm:$0xff]
        %v1517 = vld [vmem:[#allocation3 + $0x38] sm:$0xff]
        %v1518 = vld [vmem:[#allocation3 + $0x40] sm:$0xff]
        %v1519 = vld [vmem:[#allocation3 + $0x48] sm:$0xff]
        %v1520 = vld [vmem:[#allocation3 + $0x50] sm:$0xff]
        %v1521 = vld [vmem:[#allocation3 + $0x58] sm:$0xff]
        %v1522 = vld [vmem:[#allocation3 + $0x60] sm:$0xff]
        %v1523 = vld [vmem:[#allocation3 + $0x68] sm:$0xff]
        %v1524 = vld [vmem:[#allocation3 + $0x70] sm:$0xff]
        %v1525 = vld [vmem:[#allocation3 + $0x78] sm:$0xff]
        %v1526 = vld [vmem:[#allocation3 + $0x80] sm:$0xff]
        %v1527 = vld [vmem:[#allocation3 + $0x88] sm:$0xff]
        %v1528 = vld [vmem:[#allocation3 + $0x90] sm:$0xff]
        %v1529 = vld [vmem:[#allocation3 + $0x98] sm:$0xff]
        %v1530 = vld [vmem:[#allocation3 + $0xa0] sm:$0xff]
        %v1531 = vld [vmem:[#allocation3 + $0xa8] sm:$0xff]
        %v1532 = vld [vmem:[#allocation3 + $0xb0] sm:$0xff]
        %v1533 = vld [vmem:[#allocation3 + $0xb8] sm:$0xff]
        %v1534 = vld [vmem:[#allocation3 + $0xc0] sm:$0xff]
        %v1535 = vld [vmem:[#allocation3 + $0xc8] sm:$0xff]
        %v1536 = vld [vmem:[#allocation3 + $0xd0] sm:$0xff]
        %v1537 = vld [vmem:[#allocation3 + $0xd8] sm:$0xff]
        %v1538 = vld [vmem:[#allocation3 + $0xe0] sm:$0xff]
        %v1539 = vld [vmem:[#allocation3 + $0xe8] sm:$0xff]
        %v1540 = vld [vmem:[#allocation3 + $0xf0] sm:$0xff]
        %v1541 = vld [vmem:[#allocation3 + $0xf8] sm:$0xff]
        %v1542 = vld [vmem:[#allocation3 + $0x100] sm:$0xff]
        %v1543 = vld [vmem:[#allocation3 + $0x108] sm:$0xff]
        %v1544 = vld [vmem:[#allocation3 + $0x110] sm:$0xff]
        %v1545 = vld [vmem:[#allocation3 + $0x118] sm:$0xff]
        %v1546 = vadd.f32 %v1510, %v1421
        %v1547 = vadd.f32 %v1511, %v1423
        %v1548 = vadd.f32 %v1512, %v1426
        %v1549 = vadd.f32 %v1513, %v1428
        %v1550 = vadd.f32 %v1514, %v1431
        %v1551 = vadd.f32 %v1515, %v1433
        %v1552 = vadd.f32 %v1516, %v1436
        %v1553 = vadd.f32 %v1517, %v1438
        %v1554 = vadd.f32 %v1518, %v1441
        %v1555 = vadd.f32 %v1519, %v1443
        %v1556 = vadd.f32 %v1520, %v1446
        %v1557 = vadd.f32 %v1521, %v1448
        %v1558 = vadd.f32 %v1522, %v1451
        %v1559 = vadd.f32 %v1523, %v1453
        %v1560 = vadd.f32 %v1524, %v1456
        %v1561 = vadd.f32 %v1525, %v1458
        %v1562 = vadd.f32 %v1526, %v1461
        %v1563 = vadd.f32 %v1527, %v1463
        %v1564 = vadd.f32 %v1528, %v1466
        %v1565 = vadd.f32 %v1529, %v1468
        %v1566 = vadd.f32 %v1530, %v1471
        %v1567 = vadd.f32 %v1531, %v1473
        %v1568 = vadd.f32 %v1532, %v1476
        %v1569 = vadd.f32 %v1533, %v1478
        %v1570 = vadd.f32 %v1534, %v1481
        %v1571 = vadd.f32 %v1535, %v1483
        %v1572 = vadd.f32 %v1536, %v1486
        %v1573 = vadd.f32 %v1537, %v1488
        %v1574 = vadd.f32 %v1538, %v1491
        %v1575 = vadd.f32 %v1539, %v1493
        %v1576 = vadd.f32 %v1540, %v1496
        %v1577 = vadd.f32 %v1541, %v1498
        %v1578 = vadd.f32 %v1542, %v1501
        %v1579 = vadd.f32 %v1543, %v1503
        %v1580 = vadd.f32 %v1544, %v1506
        %v1581 = vadd.f32 %v1545, %v1508
        %1582 = vst [vmem:[#allocation3] sm:$0xff] %v1546
        %1583 = vst [vmem:[#allocation3 + $0x8] sm:$0xff] %v1547
        %1584 = vst [vmem:[#allocation3 + $0x10] sm:$0xff] %v1548
        %1585 = vst [vmem:[#allocation3 + $0x18] sm:$0xff] %v1549
        %1586 = vst [vmem:[#allocation3 + $0x20] sm:$0xff] %v1550
        %1587 = vst [vmem:[#allocation3 + $0x28] sm:$0xff] %v1551
        %1588 = vst [vmem:[#allocation3 + $0x30] sm:$0xff] %v1552
        %1589 = vst [vmem:[#allocation3 + $0x38] sm:$0xff] %v1553
        %1590 = vst [vmem:[#allocation3 + $0x40] sm:$0xff] %v1554
        %1591 = vst [vmem:[#allocation3 + $0x48] sm:$0xff] %v1555
        %1592 = vst [vmem:[#allocation3 + $0x50] sm:$0xff] %v1556
        %1593 = vst [vmem:[#allocation3 + $0x58] sm:$0xff] %v1557
        %1594 = vst [vmem:[#allocation3 + $0x60] sm:$0xff] %v1558
        %1595 = vst [vmem:[#allocation3 + $0x68] sm:$0xff] %v1559
        %1596 = vst [vmem:[#allocation3 + $0x70] sm:$0xff] %v1560
        %1597 = vst [vmem:[#allocation3 + $0x78] sm:$0xff] %v1561
        %1598 = vst [vmem:[#allocation3 + $0x80] sm:$0xff] %v1562
        %1599 = vst [vmem:[#allocation3 + $0x88] sm:$0xff] %v1563
        %1600 = vst [vmem:[#allocation3 + $0x90] sm:$0xff] %v1564
        %1601 = vst [vmem:[#allocation3 + $0x98] sm:$0xff] %v1565
        %1602 = vst [vmem:[#allocation3 + $0xa0] sm:$0xff] %v1566
        %1603 = vst [vmem:[#allocation3 + $0xa8] sm:$0xff] %v1567
        %1604 = vst [vmem:[#allocation3 + $0xb0] sm:$0xff] %v1568
        %1605 = vst [vmem:[#allocation3 + $0xb8] sm:$0xff] %v1569
        %1606 = vst [vmem:[#allocation3 + $0xc0] sm:$0xff] %v1570
        %1607 = vst [vmem:[#allocation3 + $0xc8] sm:$0xff] %v1571
        %1608 = vst [vmem:[#allocation3 + $0xd0] sm:$0xff] %v1572
        %1609 = vst [vmem:[#allocation3 + $0xd8] sm:$0xff] %v1573
        %1610 = vst [vmem:[#allocation3 + $0xe0] sm:$0xff] %v1574
        %1611 = vst [vmem:[#allocation3 + $0xe8] sm:$0xff] %v1575
        %1612 = vst [vmem:[#allocation3 + $0xf0] sm:$0xff] %v1576
        %1613 = vst [vmem:[#allocation3 + $0xf8] sm:$0xff] %v1577
        %1614 = vst [vmem:[#allocation3 + $0x100] sm:$0xff] %v1578
        %1615 = vst [vmem:[#allocation3 + $0x108] sm:$0xff] %v1579
        %1616 = vst [vmem:[#allocation3 + $0x110] sm:$0xff] %v1580
        %1617 = vst [vmem:[#allocation3 + $0x118] sm:$0xff] %v1581
        %v1618 = vld [vmem:[%s239 + $0x8] sm:$0xe]
        %v1619 = vld [vmem:[%s239 + $0xc] sm:$0xf]
        %v1620 = vld [vmem:[%s239 + $0x10] sm:$0xf]
        %v1621 = vld [vmem:[%s239 + $0x14] sm:$0xf]
        %v1622 = vld [vmem:[%s239 + $0x18] sm:$0xf]
        %v1623 = vld [vmem:[%s239 + $0x1c] sm:$0xf]
        %v1624 = vld [vmem:[%s239 + $0x20] sm:$0xf]
        %v1625 = vld [vmem:[%s239 + $0x24] sm:$0xf]
        %v1626 = vld [vmem:[%s239 + $0x28] sm:$0xf]
        %v1627 = vld [vmem:[%s239 + $0x2c] sm:$0xf]
        %v1628 = vld [vmem:[%s239 + $0x30] sm:$0xf]
        %v1629 = vld [vmem:[%s239 + $0x34] sm:$0xf]
        %v1630 = vld [vmem:[%s239 + $0x38] sm:$0xf]
        %v1631 = vld [vmem:[%s239 + $0x3c] sm:$0xf]
        %v1632 = vld [vmem:[%s239 + $0x40] sm:$0xf]
        %v1633 = vld [vmem:[%s239 + $0x44] sm:$0xf]
        %v1634 = vld [vmem:[%s239 + $0x48] sm:$0xf]
        %v1635 = vld [vmem:[%s239 + $0x4c] sm:$0xf]
        %v1636 = vld [vmem:[%s239 + $0x50] sm:$0xf]
        %v1637 = vld [vmem:[%s239 + $0x54] sm:$0xf]
        %v1638 = vld [vmem:[%s239 + $0x58] sm:$0xf]
        %v1639 = vld [vmem:[%s239 + $0x5c] sm:$0xf]
        %v1640 = vld [vmem:[%s239 + $0x60] sm:$0xf]
        %v1641 = vld [vmem:[%s239 + $0x64] sm:$0xf]
        %v1642 = vld [vmem:[%s239 + $0x68] sm:$0xf]
        %v1643 = vld [vmem:[%s239 + $0x6c] sm:$0xf]
        %v1644 = vld [vmem:[%s239 + $0x70] sm:$0xf]
        %v1645 = vld [vmem:[%s239 + $0x74] sm:$0xf]
        %v1646 = vld [vmem:[%s239 + $0x78] sm:$0xf]
        %v1647 = vld [vmem:[%s239 + $0x7c] sm:$0xf]
        %v1648 = vld [vmem:[%s239 + $0x80] sm:$0xf]
        %v1649 = vld [vmem:[%s239 + $0x84] sm:$0xf]
        %v1650 = vld [vmem:[%s239 + $0x88] sm:$0xf]
        %v1651 = vld [vmem:[%s239 + $0x8c] sm:$0xf]
        %v1652 = vld [vmem:[%s239 + $0x90] sm:$0xf]
        %v1653 = vld [vmem:[%s239 + $0x94] sm:$0xf]
        %v1654 = vld [vmem:[%s239 + $0x98] sm:$0x1]
        %s1655 = scalar_lea.vmem %s1, 192
        %v1656 = vld [vmem:[%s1655] sm:$0xf]
        %v1657 = vld [vmem:[%s1655 + $0x4] sm:$0xf]
        %v1658 = vld [vmem:[%s1655 + $0x8] sm:$0xf]
        %v1659 = vld [vmem:[%s1655 + $0xc] sm:$0xf]
        %v1660 = vld [vmem:[%s1655 + $0x10] sm:$0xf]
        %v1661 = vld [vmem:[%s1655 + $0x14] sm:$0xf]
        %v1662 = vld [vmem:[%s1655 + $0x18] sm:$0xf]
        %v1663 = vld [vmem:[%s1655 + $0x1c] sm:$0xf]
        %v1664 = vld [vmem:[%s1655 + $0x20] sm:$0xf]
        %v1665 = vld [vmem:[%s1655 + $0x24] sm:$0xf]
        %v1666 = vld [vmem:[%s1655 + $0x28] sm:$0xf]
        %v1667 = vld [vmem:[%s1655 + $0x2c] sm:$0xf]
        %v1668 = vld [vmem:[%s1655 + $0x30] sm:$0xf]
        %v1669 = vld [vmem:[%s1655 + $0x34] sm:$0xf]
        %v1670 = vld [vmem:[%s1655 + $0x38] sm:$0xf]
        %v1671 = vld [vmem:[%s1655 + $0x3c] sm:$0xf]
        %v1709 = vunpack.c.l.b16 %v1618
        %v1710 = vunpack.c.l.b16 %v1619
        %v1711 = vunpack.c.l.b16 %v1620
        %v1712 = vunpack.c.l.b16 %v1621
        %v1713 = vunpack.c.l.b16 %v1622
        %v1714 = vunpack.c.l.b16 %v1623
        %v1715 = vunpack.c.l.b16 %v1624
        %v1716 = vunpack.c.l.b16 %v1625
        %v1717 = vunpack.c.l.b16 %v1626
        %v1718 = vunpack.c.l.b16 %v1627
        %v1719 = vunpack.c.l.b16 %v1628
        %v1720 = vunpack.c.l.b16 %v1629
        %v1721 = vunpack.c.l.b16 %v1630
        %v1722 = vunpack.c.l.b16 %v1631
        %v1723 = vunpack.c.l.b16 %v1632
        %v1724 = vunpack.c.l.b16 %v1633
        %v1725 = vunpack.c.l.b16 %v1634
        %v1726 = vunpack.c.l.b16 %v1635
        %v1727 = vunpack.c.l.b16 %v1636
        %v1728 = vunpack.c.l.b16 %v1637
        %v1729 = vunpack.c.l.b16 %v1638
        %v1730 = vunpack.c.l.b16 %v1639
        %v1731 = vunpack.c.l.b16 %v1640
        %v1732 = vunpack.c.l.b16 %v1641
        %v1733 = vunpack.c.l.b16 %v1642
        %v1734 = vunpack.c.l.b16 %v1643
        %v1735 = vunpack.c.l.b16 %v1644
        %v1736 = vunpack.c.l.b16 %v1645
        %v1737 = vunpack.c.l.b16 %v1646
        %v1738 = vunpack.c.l.b16 %v1647
        %v1739 = vunpack.c.l.b16 %v1648
        %v1740 = vunpack.c.l.b16 %v1649
        %v1741 = vunpack.c.l.b16 %v1650
        %v1742 = vunpack.c.l.b16 %v1651
        %v1743 = vunpack.c.l.b16 %v1652
        %v1744 = vunpack.c.l.b16 %v1653
        %v1745 = vunpack.c.l.b16 %v1654
        %v1746 = vpack.c.b16 %v1710, %v1709
        %v1747 = vpack.c.b16 %v1712, %v1711
        %v1748 = vpack.c.b16 %v1714, %v1713
        %v1749 = vpack.c.b16 %v1716, %v1715
        %v1750 = vpack.c.b16 %v1718, %v1717
        %v1751 = vpack.c.b16 %v1720, %v1719
        %v1752 = vpack.c.b16 %v1722, %v1721
        %v1753 = vpack.c.b16 %v1724, %v1723
        %v1754 = vpack.c.b16 %v1726, %v1725
        %v1755 = vpack.c.b16 %v1728, %v1727
        %v1756 = vpack.c.b16 %v1730, %v1729
        %v1757 = vpack.c.b16 %v1732, %v1731
        %v1758 = vpack.c.b16 %v1734, %v1733
        %v1759 = vpack.c.b16 %v1736, %v1735
        %v1760 = vpack.c.b16 %v1738, %v1737
        %v1761 = vpack.c.b16 %v1740, %v1739
        %v1762 = vpack.c.b16 %v1742, %v1741
        %v1763 = vpack.c.b16 %v1744, %v1743
        %v1764 = vpack.c.b16 %v1745, %v1745
        %v1765 = vrot.slane %v1746, 1
        %v1766 = vrot.slane %v1747, 1
        %v1767 = vsel %vm1307, %v1765, %v1766
        %v1768 = vrot.slane %v1748, 1
        %v1769 = vsel %vm1307, %v1766, %v1768
        %v1770 = vrot.slane %v1749, 1
        %v1771 = vsel %vm1307, %v1768, %v1770
        %v1772 = vrot.slane %v1750, 1
        %v1773 = vsel %vm1307, %v1770, %v1772
        %v1774 = vrot.slane %v1751, 1
        %v1775 = vsel %vm1307, %v1772, %v1774
        %v1776 = vrot.slane %v1752, 1
        %v1777 = vsel %vm1307, %v1774, %v1776
        %v1778 = vrot.slane %v1753, 1
        %v1779 = vsel %vm1307, %v1776, %v1778
        %v1780 = vrot.slane %v1754, 1
        %v1781 = vsel %vm1307, %v1778, %v1780
        %v1782 = vrot.slane %v1755, 1
        %v1783 = vsel %vm1307, %v1780, %v1782
        %v1784 = vrot.slane %v1756, 1
        %v1785 = vsel %vm1307, %v1782, %v1784
        %v1786 = vrot.slane %v1757, 1
        %v1787 = vsel %vm1307, %v1784, %v1786
        %v1788 = vrot.slane %v1758, 1
        %v1789 = vsel %vm1307, %v1786, %v1788
        %v1790 = vrot.slane %v1759, 1
        %v1791 = vsel %vm1307, %v1788, %v1790
        %v1792 = vrot.slane %v1760, 1
        %v1793 = vsel %vm1307, %v1790, %v1792
        %v1794 = vrot.slane %v1761, 1
        %v1795 = vsel %vm1307, %v1792, %v1794
        %v1796 = vrot.slane %v1762, 1
        %v1797 = vsel %vm1307, %v1794, %v1796
        %v1798 = vrot.slane %v1763, 1
        %v1799 = vsel %vm1307, %v1796, %v1798
        %v1800 = vrot.slane %v1764, 1
        %v1801 = vsel %vm1307, %v1798, %v1800
        %v1836 = vunpack.c.l.b16 %v1656
        %v1837 = vunpack.c.l.b16 %v1657
        %v1838 = vunpack.c.l.b16 %v1658
        %v1839 = vunpack.c.l.b16 %v1659
        %v1840 = vunpack.c.l.b16 %v1660
        %v1841 = vunpack.c.l.b16 %v1661
        %v1842 = vunpack.c.l.b16 %v1662
        %v1843 = vunpack.c.l.b16 %v1663
        %v1844 = vunpack.c.l.b16 %v1664
        %v1845 = vunpack.c.l.b16 %v1665
        %v1846 = vunpack.c.l.b16 %v1666
        %v1847 = vunpack.c.l.b16 %v1667
        %v1848 = vunpack.c.l.b16 %v1668
        %v1849 = vunpack.c.l.b16 %v1669
        %v1850 = vunpack.c.l.b16 %v1670
        %v1851 = vunpack.c.l.b16 %v1671
        %v1852 = vpack.c.b16 %v1837, %v1836
        %v1853 = vpack.c.b16 %v1839, %v1838
        %v1854 = vpack.c.b16 %v1841, %v1840
        %v1855 = vpack.c.b16 %v1843, %v1842
        %v1856 = vpack.c.b16 %v1845, %v1844
        %v1857 = vpack.c.b16 %v1847, %v1846
        %v1858 = vpack.c.b16 %v1849, %v1848
        %v1859 = vpack.c.b16 %v1851, %v1850
        %1868 = vmatpush.bf16.msra.mxu0 %v1859
        %1869 = vmatpush.bf16.msra.mxu0 %v1858
        %1870 = vmatpush.bf16.msra.mxu0 %v1857
        %1871 = vmatpush.bf16.msra.mxu0 %v1856
        %1872 = vmatpush.bf16.msra.mxu0 %v1855
        %1873 = vmatpush.bf16.msra.mxu0 %v1854
        %1874 = vmatpush.bf16.msra.mxu0 %v1853
        %1875 = vmatpush.bf16.msra.mxu0 %v1852
        %1876 = vmatmul.bf16.gmra.mxu0 %v1767
        %v1877 = vpop.f32.mrf.mxu0
        %v1878 = vadd.f32 0.0, %v1877
        %v1879 = vpop.f32.mrf.mxu0
        %v1880 = vadd.f32 0.0, %v1879
        %1881 = vmatmul.bf16.gmra.mxu0 %v1769
        %v1882 = vpop.f32.mrf.mxu0
        %v1883 = vadd.f32 0.0, %v1882
        %v1884 = vpop.f32.mrf.mxu0
        %v1885 = vadd.f32 0.0, %v1884
        %1886 = vmatmul.bf16.gmra.mxu0 %v1771
        %v1887 = vpop.f32.mrf.mxu0
        %v1888 = vadd.f32 0.0, %v1887
        %v1889 = vpop.f32.mrf.mxu0
        %v1890 = vadd.f32 0.0, %v1889
        %1891 = vmatmul.bf16.gmra.mxu0 %v1773
        %v1892 = vpop.f32.mrf.mxu0
        %v1893 = vadd.f32 0.0, %v1892
        %v1894 = vpop.f32.mrf.mxu0
        %v1895 = vadd.f32 0.0, %v1894
        %1896 = vmatmul.bf16.gmra.mxu0 %v1775
        %v1897 = vpop.f32.mrf.mxu0
        %v1898 = vadd.f32 0.0, %v1897
        %v1899 = vpop.f32.mrf.mxu0
        %v1900 = vadd.f32 0.0, %v1899
        %1901 = vmatmul.bf16.gmra.mxu0 %v1777
        %v1902 = vpop.f32.mrf.mxu0
        %v1903 = vadd.f32 0.0, %v1902
        %v1904 = vpop.f32.mrf.mxu0
        %v1905 = vadd.f32 0.0, %v1904
        %1906 = vmatmul.bf16.gmra.mxu0 %v1779
        %v1907 = vpop.f32.mrf.mxu0
        %v1908 = vadd.f32 0.0, %v1907
        %v1909 = vpop.f32.mrf.mxu0
        %v1910 = vadd.f32 0.0, %v1909
        %1911 = vmatmul.bf16.gmra.mxu0 %v1781
        %v1912 = vpop.f32.mrf.mxu0
        %v1913 = vadd.f32 0.0, %v1912
        %v1914 = vpop.f32.mrf.mxu0
        %v1915 = vadd.f32 0.0, %v1914
        %1916 = vmatmul.bf16.gmra.mxu0 %v1783
        %v1917 = vpop.f32.mrf.mxu0
        %v1918 = vadd.f32 0.0, %v1917
        %v1919 = vpop.f32.mrf.mxu0
        %v1920 = vadd.f32 0.0, %v1919
        %1921 = vmatmul.bf16.gmra.mxu0 %v1785
        %v1922 = vpop.f32.mrf.mxu0
        %v1923 = vadd.f32 0.0, %v1922
        %v1924 = vpop.f32.mrf.mxu0
        %v1925 = vadd.f32 0.0, %v1924
        %1926 = vmatmul.bf16.gmra.mxu0 %v1787
        %v1927 = vpop.f32.mrf.mxu0
        %v1928 = vadd.f32 0.0, %v1927
        %v1929 = vpop.f32.mrf.mxu0
        %v1930 = vadd.f32 0.0, %v1929
        %1931 = vmatmul.bf16.gmra.mxu0 %v1789
        %v1932 = vpop.f32.mrf.mxu0
        %v1933 = vadd.f32 0.0, %v1932
        %v1934 = vpop.f32.mrf.mxu0
        %v1935 = vadd.f32 0.0, %v1934
        %1936 = vmatmul.bf16.gmra.mxu0 %v1791
        %v1937 = vpop.f32.mrf.mxu0
        %v1938 = vadd.f32 0.0, %v1937
        %v1939 = vpop.f32.mrf.mxu0
        %v1940 = vadd.f32 0.0, %v1939
        %1941 = vmatmul.bf16.gmra.mxu0 %v1793
        %v1942 = vpop.f32.mrf.mxu0
        %v1943 = vadd.f32 0.0, %v1942
        %v1944 = vpop.f32.mrf.mxu0
        %v1945 = vadd.f32 0.0, %v1944
        %1946 = vmatmul.bf16.gmra.mxu0 %v1795
        %v1947 = vpop.f32.mrf.mxu0
        %v1948 = vadd.f32 0.0, %v1947
        %v1949 = vpop.f32.mrf.mxu0
        %v1950 = vadd.f32 0.0, %v1949
        %1951 = vmatmul.bf16.gmra.mxu0 %v1797
        %v1952 = vpop.f32.mrf.mxu0
        %v1953 = vadd.f32 0.0, %v1952
        %v1954 = vpop.f32.mrf.mxu0
        %v1955 = vadd.f32 0.0, %v1954
        %1956 = vmatmul.bf16.gmra.mxu0 %v1799
        %v1957 = vpop.f32.mrf.mxu0
        %v1958 = vadd.f32 0.0, %v1957
        %v1959 = vpop.f32.mrf.mxu0
        %v1960 = vadd.f32 0.0, %v1959
        %1961 = vmatmul.bf16.gmra.mxu0 %v1801
        %v1962 = vpop.f32.mrf.mxu0
        %v1963 = vadd.f32 0.0, %v1962
        %v1964 = vpop.f32.mrf.mxu0
        %v1965 = vadd.f32 0.0, %v1964
        %1966 = vdwg.mxu0
        %v1967 = vld [vmem:[#allocation3] sm:$0xff]
        %v1968 = vld [vmem:[#allocation3 + $0x8] sm:$0xff]
        %v1969 = vld [vmem:[#allocation3 + $0x10] sm:$0xff]
        %v1970 = vld [vmem:[#allocation3 + $0x18] sm:$0xff]
        %v1971 = vld [vmem:[#allocation3 + $0x20] sm:$0xff]
        %v1972 = vld [vmem:[#allocation3 + $0x28] sm:$0xff]
        %v1973 = vld [vmem:[#allocation3 + $0x30] sm:$0xff]
        %v1974 = vld [vmem:[#allocation3 + $0x38] sm:$0xff]
        %v1975 = vld [vmem:[#allocation3 + $0x40] sm:$0xff]
        %v1976 = vld [vmem:[#allocation3 + $0x48] sm:$0xff]
        %v1977 = vld [vmem:[#allocation3 + $0x50] sm:$0xff]
        %v1978 = vld [vmem:[#allocation3 + $0x58] sm:$0xff]
        %v1979 = vld [vmem:[#allocation3 + $0x60] sm:$0xff]
        %v1980 = vld [vmem:[#allocation3 + $0x68] sm:$0xff]
        %v1981 = vld [vmem:[#allocation3 + $0x70] sm:$0xff]
        %v1982 = vld [vmem:[#allocation3 + $0x78] sm:$0xff]
        %v1983 = vld [vmem:[#allocation3 + $0x80] sm:$0xff]
        %v1984 = vld [vmem:[#allocation3 + $0x88] sm:$0xff]
        %v1985 = vld [vmem:[#allocation3 + $0x90] sm:$0xff]
        %v1986 = vld [vmem:[#allocation3 + $0x98] sm:$0xff]
        %v1987 = vld [vmem:[#allocation3 + $0xa0] sm:$0xff]
        %v1988 = vld [vmem:[#allocation3 + $0xa8] sm:$0xff]
        %v1989 = vld [vmem:[#allocation3 + $0xb0] sm:$0xff]
        %v1990 = vld [vmem:[#allocation3 + $0xb8] sm:$0xff]
        %v1991 = vld [vmem:[#allocation3 + $0xc0] sm:$0xff]
        %v1992 = vld [vmem:[#allocation3 + $0xc8] sm:$0xff]
        %v1993 = vld [vmem:[#allocation3 + $0xd0] sm:$0xff]
        %v1994 = vld [vmem:[#allocation3 + $0xd8] sm:$0xff]
        %v1995 = vld [vmem:[#allocation3 + $0xe0] sm:$0xff]
        %v1996 = vld [vmem:[#allocation3 + $0xe8] sm:$0xff]
        %v1997 = vld [vmem:[#allocation3 + $0xf0] sm:$0xff]
        %v1998 = vld [vmem:[#allocation3 + $0xf8] sm:$0xff]
        %v1999 = vld [vmem:[#allocation3 + $0x100] sm:$0xff]
        %v2000 = vld [vmem:[#allocation3 + $0x108] sm:$0xff]
        %v2001 = vld [vmem:[#allocation3 + $0x110] sm:$0xff]
        %v2002 = vld [vmem:[#allocation3 + $0x118] sm:$0xff]
        %v2003 = vadd.f32 %v1967, %v1878
        %v2004 = vadd.f32 %v1968, %v1880
        %v2005 = vadd.f32 %v1969, %v1883
        %v2006 = vadd.f32 %v1970, %v1885
        %v2007 = vadd.f32 %v1971, %v1888
        %v2008 = vadd.f32 %v1972, %v1890
        %v2009 = vadd.f32 %v1973, %v1893
        %v2010 = vadd.f32 %v1974, %v1895
        %v2011 = vadd.f32 %v1975, %v1898
        %v2012 = vadd.f32 %v1976, %v1900
        %v2013 = vadd.f32 %v1977, %v1903
        %v2014 = vadd.f32 %v1978, %v1905
        %v2015 = vadd.f32 %v1979, %v1908
        %v2016 = vadd.f32 %v1980, %v1910
        %v2017 = vadd.f32 %v1981, %v1913
        %v2018 = vadd.f32 %v1982, %v1915
        %v2019 = vadd.f32 %v1983, %v1918
        %v2020 = vadd.f32 %v1984, %v1920
        %v2021 = vadd.f32 %v1985, %v1923
        %v2022 = vadd.f32 %v1986, %v1925
        %v2023 = vadd.f32 %v1987, %v1928
        %v2024 = vadd.f32 %v1988, %v1930
        %v2025 = vadd.f32 %v1989, %v1933
        %v2026 = vadd.f32 %v1990, %v1935
        %v2027 = vadd.f32 %v1991, %v1938
        %v2028 = vadd.f32 %v1992, %v1940
        %v2029 = vadd.f32 %v1993, %v1943
        %v2030 = vadd.f32 %v1994, %v1945
        %v2031 = vadd.f32 %v1995, %v1948
        %v2032 = vadd.f32 %v1996, %v1950
        %v2033 = vadd.f32 %v1997, %v1953
        %v2034 = vadd.f32 %v1998, %v1955
        %v2035 = vadd.f32 %v1999, %v1958
        %v2036 = vadd.f32 %v2000, %v1960
        %v2037 = vadd.f32 %v2001, %v1963
        %v2038 = vadd.f32 %v2002, %v1965
        %2039 = vst [vmem:[#allocation3] sm:$0xff] %v2003
        %2040 = vst [vmem:[#allocation3 + $0x8] sm:$0xff] %v2004
        %2041 = vst [vmem:[#allocation3 + $0x10] sm:$0xff] %v2005
        %2042 = vst [vmem:[#allocation3 + $0x18] sm:$0xff] %v2006
        %2043 = vst [vmem:[#allocation3 + $0x20] sm:$0xff] %v2007
        %2044 = vst [vmem:[#allocation3 + $0x28] sm:$0xff] %v2008
        %2045 = vst [vmem:[#allocation3 + $0x30] sm:$0xff] %v2009
        %2046 = vst [vmem:[#allocation3 + $0x38] sm:$0xff] %v2010
        %2047 = vst [vmem:[#allocation3 + $0x40] sm:$0xff] %v2011
        %2048 = vst [vmem:[#allocation3 + $0x48] sm:$0xff] %v2012
        %2049 = vst [vmem:[#allocation3 + $0x50] sm:$0xff] %v2013
        %2050 = vst [vmem:[#allocation3 + $0x58] sm:$0xff] %v2014
        %2051 = vst [vmem:[#allocation3 + $0x60] sm:$0xff] %v2015
        %2052 = vst [vmem:[#allocation3 + $0x68] sm:$0xff] %v2016
        %2053 = vst [vmem:[#allocation3 + $0x70] sm:$0xff] %v2017
        %2054 = vst [vmem:[#allocation3 + $0x78] sm:$0xff] %v2018
        %2055 = vst [vmem:[#allocation3 + $0x80] sm:$0xff] %v2019
        %2056 = vst [vmem:[#allocation3 + $0x88] sm:$0xff] %v2020
        %2057 = vst [vmem:[#allocation3 + $0x90] sm:$0xff] %v2021
        %2058 = vst [vmem:[#allocation3 + $0x98] sm:$0xff] %v2022
        %2059 = vst [vmem:[#allocation3 + $0xa0] sm:$0xff] %v2023
        %2060 = vst [vmem:[#allocation3 + $0xa8] sm:$0xff] %v2024
        %2061 = vst [vmem:[#allocation3 + $0xb0] sm:$0xff] %v2025
        %2062 = vst [vmem:[#allocation3 + $0xb8] sm:$0xff] %v2026
        %2063 = vst [vmem:[#allocation3 + $0xc0] sm:$0xff] %v2027
        %2064 = vst [vmem:[#allocation3 + $0xc8] sm:$0xff] %v2028
        %2065 = vst [vmem:[#allocation3 + $0xd0] sm:$0xff] %v2029
        %2066 = vst [vmem:[#allocation3 + $0xd8] sm:$0xff] %v2030
        %2067 = vst [vmem:[#allocation3 + $0xe0] sm:$0xff] %v2031
        %2068 = vst [vmem:[#allocation3 + $0xe8] sm:$0xff] %v2032
        %2069 = vst [vmem:[#allocation3 + $0xf0] sm:$0xff] %v2033
        %2070 = vst [vmem:[#allocation3 + $0xf8] sm:$0xff] %v2034
        %2071 = vst [vmem:[#allocation3 + $0x100] sm:$0xff] %v2035
        %2072 = vst [vmem:[#allocation3 + $0x108] sm:$0xff] %v2036
        %2073 = vst [vmem:[#allocation3 + $0x110] sm:$0xff] %v2037
        %2074 = vst [vmem:[#allocation3 + $0x118] sm:$0xff] %v2038
        %v2075 = vld [vmem:[%s239 + $0x8] sm:$0xe]
        %v2076 = vld [vmem:[%s239 + $0xc] sm:$0xf]
        %v2077 = vld [vmem:[%s239 + $0x10] sm:$0xf]
        %v2078 = vld [vmem:[%s239 + $0x14] sm:$0xf]
        %v2079 = vld [vmem:[%s239 + $0x18] sm:$0xf]
        %v2080 = vld [vmem:[%s239 + $0x1c] sm:$0xf]
        %v2081 = vld [vmem:[%s239 + $0x20] sm:$0xf]
        %v2082 = vld [vmem:[%s239 + $0x24] sm:$0xf]
        %v2083 = vld [vmem:[%s239 + $0x28] sm:$0xf]
        %v2084 = vld [vmem:[%s239 + $0x2c] sm:$0xf]
        %v2085 = vld [vmem:[%s239 + $0x30] sm:$0xf]
        %v2086 = vld [vmem:[%s239 + $0x34] sm:$0xf]
        %v2087 = vld [vmem:[%s239 + $0x38] sm:$0xf]
        %v2088 = vld [vmem:[%s239 + $0x3c] sm:$0xf]
        %v2089 = vld [vmem:[%s239 + $0x40] sm:$0xf]
        %v2090 = vld [vmem:[%s239 + $0x44] sm:$0xf]
        %v2091 = vld [vmem:[%s239 + $0x48] sm:$0xf]
        %v2092 = vld [vmem:[%s239 + $0x4c] sm:$0xf]
        %v2093 = vld [vmem:[%s239 + $0x50] sm:$0xf]
        %v2094 = vld [vmem:[%s239 + $0x54] sm:$0xf]
        %v2095 = vld [vmem:[%s239 + $0x58] sm:$0xf]
        %v2096 = vld [vmem:[%s239 + $0x5c] sm:$0xf]
        %v2097 = vld [vmem:[%s239 + $0x60] sm:$0xf]
        %v2098 = vld [vmem:[%s239 + $0x64] sm:$0xf]
        %v2099 = vld [vmem:[%s239 + $0x68] sm:$0xf]
        %v2100 = vld [vmem:[%s239 + $0x6c] sm:$0xf]
        %v2101 = vld [vmem:[%s239 + $0x70] sm:$0xf]
        %v2102 = vld [vmem:[%s239 + $0x74] sm:$0xf]
        %v2103 = vld [vmem:[%s239 + $0x78] sm:$0xf]
        %v2104 = vld [vmem:[%s239 + $0x7c] sm:$0xf]
        %v2105 = vld [vmem:[%s239 + $0x80] sm:$0xf]
        %v2106 = vld [vmem:[%s239 + $0x84] sm:$0xf]
        %v2107 = vld [vmem:[%s239 + $0x88] sm:$0xf]
        %v2108 = vld [vmem:[%s239 + $0x8c] sm:$0xf]
        %v2109 = vld [vmem:[%s239 + $0x90] sm:$0xf]
        %v2110 = vld [vmem:[%s239 + $0x94] sm:$0xf]
        %v2111 = vld [vmem:[%s239 + $0x98] sm:$0x3]
        %s2112 = scalar_lea.vmem %s1, 256
        %v2113 = vld [vmem:[%s2112] sm:$0xf]
        %v2114 = vld [vmem:[%s2112 + $0x4] sm:$0xf]
        %v2115 = vld [vmem:[%s2112 + $0x8] sm:$0xf]
        %v2116 = vld [vmem:[%s2112 + $0xc] sm:$0xf]
        %v2117 = vld [vmem:[%s2112 + $0x10] sm:$0xf]
        %v2118 = vld [vmem:[%s2112 + $0x14] sm:$0xf]
        %v2119 = vld [vmem:[%s2112 + $0x18] sm:$0xf]
        %v2120 = vld [vmem:[%s2112 + $0x1c] sm:$0xf]
        %v2121 = vld [vmem:[%s2112 + $0x20] sm:$0xf]
        %v2122 = vld [vmem:[%s2112 + $0x24] sm:$0xf]
        %v2123 = vld [vmem:[%s2112 + $0x28] sm:$0xf]
        %v2124 = vld [vmem:[%s2112 + $0x2c] sm:$0xf]
        %v2125 = vld [vmem:[%s2112 + $0x30] sm:$0xf]
        %v2126 = vld [vmem:[%s2112 + $0x34] sm:$0xf]
        %v2127 = vld [vmem:[%s2112 + $0x38] sm:$0xf]
        %v2128 = vld [vmem:[%s2112 + $0x3c] sm:$0xf]
        %v2166 = vunpack.c.l.b16 %v2075
        %v2167 = vunpack.c.l.b16 %v2076
        %v2168 = vunpack.c.l.b16 %v2077
        %v2169 = vunpack.c.l.b16 %v2078
        %v2170 = vunpack.c.l.b16 %v2079
        %v2171 = vunpack.c.l.b16 %v2080
        %v2172 = vunpack.c.l.b16 %v2081
        %v2173 = vunpack.c.l.b16 %v2082
        %v2174 = vunpack.c.l.b16 %v2083
        %v2175 = vunpack.c.l.b16 %v2084
        %v2176 = vunpack.c.l.b16 %v2085
        %v2177 = vunpack.c.l.b16 %v2086
        %v2178 = vunpack.c.l.b16 %v2087
        %v2179 = vunpack.c.l.b16 %v2088
        %v2180 = vunpack.c.l.b16 %v2089
        %v2181 = vunpack.c.l.b16 %v2090
        %v2182 = vunpack.c.l.b16 %v2091
        %v2183 = vunpack.c.l.b16 %v2092
        %v2184 = vunpack.c.l.b16 %v2093
        %v2185 = vunpack.c.l.b16 %v2094
        %v2186 = vunpack.c.l.b16 %v2095
        %v2187 = vunpack.c.l.b16 %v2096
        %v2188 = vunpack.c.l.b16 %v2097
        %v2189 = vunpack.c.l.b16 %v2098
        %v2190 = vunpack.c.l.b16 %v2099
        %v2191 = vunpack.c.l.b16 %v2100
        %v2192 = vunpack.c.l.b16 %v2101
        %v2193 = vunpack.c.l.b16 %v2102
        %v2194 = vunpack.c.l.b16 %v2103
        %v2195 = vunpack.c.l.b16 %v2104
        %v2196 = vunpack.c.l.b16 %v2105
        %v2197 = vunpack.c.l.b16 %v2106
        %v2198 = vunpack.c.l.b16 %v2107
        %v2199 = vunpack.c.l.b16 %v2108
        %v2200 = vunpack.c.l.b16 %v2109
        %v2201 = vunpack.c.l.b16 %v2110
        %v2202 = vunpack.c.l.b16 %v2111
        %v2203 = vpack.c.b16 %v2167, %v2166
        %v2204 = vpack.c.b16 %v2169, %v2168
        %v2205 = vpack.c.b16 %v2171, %v2170
        %v2206 = vpack.c.b16 %v2173, %v2172
        %v2207 = vpack.c.b16 %v2175, %v2174
        %v2208 = vpack.c.b16 %v2177, %v2176
        %v2209 = vpack.c.b16 %v2179, %v2178
        %v2210 = vpack.c.b16 %v2181, %v2180
        %v2211 = vpack.c.b16 %v2183, %v2182
        %v2212 = vpack.c.b16 %v2185, %v2184
        %v2213 = vpack.c.b16 %v2187, %v2186
        %v2214 = vpack.c.b16 %v2189, %v2188
        %v2215 = vpack.c.b16 %v2191, %v2190
        %v2216 = vpack.c.b16 %v2193, %v2192
        %v2217 = vpack.c.b16 %v2195, %v2194
        %v2218 = vpack.c.b16 %v2197, %v2196
        %v2219 = vpack.c.b16 %v2199, %v2198
        %v2220 = vpack.c.b16 %v2201, %v2200
        %v2221 = vpack.c.b16 %v2202, %v2202
        %vm2222 = vsmask.f32 6400
        %v2224 = vshrl.u32 %v2203, 16
        %v2226 = vrot.slane %v2224, 1
        %v2227 = vshll.u32 %v2203, 16
        %v2229 = vrot.slane %v2227, 2
        %v2230 = vor.u32 %v2226, %v2229
        %v2232 = vshrl.u32 %v2204, 16
        %v2234 = vrot.slane %v2232, 1
        %v2235 = vshll.u32 %v2204, 16
        %v2237 = vrot.slane %v2235, 2
        %v2238 = vor.u32 %v2234, %v2237
        %v2239 = vsel %vm2222, %v2230, %v2238
        %v2241 = vshrl.u32 %v2205, 16
        %v2243 = vrot.slane %v2241, 1
        %v2244 = vshll.u32 %v2205, 16
        %v2246 = vrot.slane %v2244, 2
        %v2247 = vor.u32 %v2243, %v2246
        %v2248 = vsel %vm2222, %v2238, %v2247
        %v2250 = vshrl.u32 %v2206, 16
        %v2252 = vrot.slane %v2250, 1
        %v2253 = vshll.u32 %v2206, 16
        %v2255 = vrot.slane %v2253, 2
        %v2256 = vor.u32 %v2252, %v2255
        %v2257 = vsel %vm2222, %v2247, %v2256
        %v2259 = vshrl.u32 %v2207, 16
        %v2261 = vrot.slane %v2259, 1
        %v2262 = vshll.u32 %v2207, 16
        %v2264 = vrot.slane %v2262, 2
        %v2265 = vor.u32 %v2261, %v2264
        %v2266 = vsel %vm2222, %v2256, %v2265
        %v2268 = vshrl.u32 %v2208, 16
        %v2270 = vrot.slane %v2268, 1
        %v2271 = vshll.u32 %v2208, 16
        %v2273 = vrot.slane %v2271, 2
        %v2274 = vor.u32 %v2270, %v2273
        %v2275 = vsel %vm2222, %v2265, %v2274
        %v2277 = vshrl.u32 %v2209, 16
        %v2279 = vrot.slane %v2277, 1
        %v2280 = vshll.u32 %v2209, 16
        %v2282 = vrot.slane %v2280, 2
        %v2283 = vor.u32 %v2279, %v2282
        %v2284 = vsel %vm2222, %v2274, %v2283
        %v2286 = vshrl.u32 %v2210, 16
        %v2288 = vrot.slane %v2286, 1
        %v2289 = vshll.u32 %v2210, 16
        %v2291 = vrot.slane %v2289, 2
        %v2292 = vor.u32 %v2288, %v2291
        %v2293 = vsel %vm2222, %v2283, %v2292
        %v2295 = vshrl.u32 %v2211, 16
        %v2297 = vrot.slane %v2295, 1
        %v2298 = vshll.u32 %v2211, 16
        %v2300 = vrot.slane %v2298, 2
        %v2301 = vor.u32 %v2297, %v2300
        %v2302 = vsel %vm2222, %v2292, %v2301
        %v2304 = vshrl.u32 %v2212, 16
        %v2306 = vrot.slane %v2304, 1
        %v2307 = vshll.u32 %v2212, 16
        %v2309 = vrot.slane %v2307, 2
        %v2310 = vor.u32 %v2306, %v2309
        %v2311 = vsel %vm2222, %v2301, %v2310
        %v2313 = vshrl.u32 %v2213, 16
        %v2315 = vrot.slane %v2313, 1
        %v2316 = vshll.u32 %v2213, 16
        %v2318 = vrot.slane %v2316, 2
        %v2319 = vor.u32 %v2315, %v2318
        %v2320 = vsel %vm2222, %v2310, %v2319
        %v2322 = vshrl.u32 %v2214, 16
        %v2324 = vrot.slane %v2322, 1
        %v2325 = vshll.u32 %v2214, 16
        %v2327 = vrot.slane %v2325, 2
        %v2328 = vor.u32 %v2324, %v2327
        %v2329 = vsel %vm2222, %v2319, %v2328
        %v2331 = vshrl.u32 %v2215, 16
        %v2333 = vrot.slane %v2331, 1
        %v2334 = vshll.u32 %v2215, 16
        %v2336 = vrot.slane %v2334, 2
        %v2337 = vor.u32 %v2333, %v2336
        %v2338 = vsel %vm2222, %v2328, %v2337
        %v2340 = vshrl.u32 %v2216, 16
        %v2342 = vrot.slane %v2340, 1
        %v2343 = vshll.u32 %v2216, 16
        %v2345 = vrot.slane %v2343, 2
        %v2346 = vor.u32 %v2342, %v2345
        %v2347 = vsel %vm2222, %v2337, %v2346
        %v2349 = vshrl.u32 %v2217, 16
        %v2351 = vrot.slane %v2349, 1
        %v2352 = vshll.u32 %v2217, 16
        %v2354 = vrot.slane %v2352, 2
        %v2355 = vor.u32 %v2351, %v2354
        %v2356 = vsel %vm2222, %v2346, %v2355
        %v2358 = vshrl.u32 %v2218, 16
        %v2360 = vrot.slane %v2358, 1
        %v2361 = vshll.u32 %v2218, 16
        %v2363 = vrot.slane %v2361, 2
        %v2364 = vor.u32 %v2360, %v2363
        %v2365 = vsel %vm2222, %v2355, %v2364
        %v2367 = vshrl.u32 %v2219, 16
        %v2369 = vrot.slane %v2367, 1
        %v2370 = vshll.u32 %v2219, 16
        %v2372 = vrot.slane %v2370, 2
        %v2373 = vor.u32 %v2369, %v2372
        %v2374 = vsel %vm2222, %v2364, %v2373
        %v2376 = vshrl.u32 %v2220, 16
        %v2378 = vrot.slane %v2376, 1
        %v2379 = vshll.u32 %v2220, 16
        %v2381 = vrot.slane %v2379, 2
        %v2382 = vor.u32 %v2378, %v2381
        %v2383 = vsel %vm2222, %v2373, %v2382
        %v2385 = vshrl.u32 %v2221, 16
        %v2387 = vrot.slane %v2385, 1
        %v2388 = vshll.u32 %v2221, 16
        %v2390 = vrot.slane %v2388, 2
        %v2391 = vor.u32 %v2387, %v2390
        %v2392 = vsel %vm2222, %v2382, %v2391
        %v2427 = vunpack.c.l.b16 %v2113
        %v2428 = vunpack.c.l.b16 %v2114
        %v2429 = vunpack.c.l.b16 %v2115
        %v2430 = vunpack.c.l.b16 %v2116
        %v2431 = vunpack.c.l.b16 %v2117
        %v2432 = vunpack.c.l.b16 %v2118
        %v2433 = vunpack.c.l.b16 %v2119
        %v2434 = vunpack.c.l.b16 %v2120
        %v2435 = vunpack.c.l.b16 %v2121
        %v2436 = vunpack.c.l.b16 %v2122
        %v2437 = vunpack.c.l.b16 %v2123
        %v2438 = vunpack.c.l.b16 %v2124
        %v2439 = vunpack.c.l.b16 %v2125
        %v2440 = vunpack.c.l.b16 %v2126
        %v2441 = vunpack.c.l.b16 %v2127
        %v2442 = vunpack.c.l.b16 %v2128
        %v2443 = vpack.c.b16 %v2428, %v2427
        %v2444 = vpack.c.b16 %v2430, %v2429
        %v2445 = vpack.c.b16 %v2432, %v2431
        %v2446 = vpack.c.b16 %v2434, %v2433
        %v2447 = vpack.c.b16 %v2436, %v2435
        %v2448 = vpack.c.b16 %v2438, %v2437
        %v2449 = vpack.c.b16 %v2440, %v2439
        %v2450 = vpack.c.b16 %v2442, %v2441
        %2459 = vmatpush.bf16.msra.mxu0 %v2450
        %2460 = vmatpush.bf16.msra.mxu0 %v2449
        %2461 = vmatpush.bf16.msra.mxu0 %v2448
        %2462 = vmatpush.bf16.msra.mxu0 %v2447
        %2463 = vmatpush.bf16.msra.mxu0 %v2446
        %2464 = vmatpush.bf16.msra.mxu0 %v2445
        %2465 = vmatpush.bf16.msra.mxu0 %v2444
        %2466 = vmatpush.bf16.msra.mxu0 %v2443
        %2467 = vmatmul.bf16.gmra.mxu0 %v2239
        %v2468 = vpop.f32.mrf.mxu0
        %v2469 = vadd.f32 0.0, %v2468
        %v2470 = vpop.f32.mrf.mxu0
        %v2471 = vadd.f32 0.0, %v2470
        %2472 = vmatmul.bf16.gmra.mxu0 %v2248
        %v2473 = vpop.f32.mrf.mxu0
        %v2474 = vadd.f32 0.0, %v2473
        %v2475 = vpop.f32.mrf.mxu0
        %v2476 = vadd.f32 0.0, %v2475
        %2477 = vmatmul.bf16.gmra.mxu0 %v2257
        %v2478 = vpop.f32.mrf.mxu0
        %v2479 = vadd.f32 0.0, %v2478
        %v2480 = vpop.f32.mrf.mxu0
        %v2481 = vadd.f32 0.0, %v2480
        %2482 = vmatmul.bf16.gmra.mxu0 %v2266
        %v2483 = vpop.f32.mrf.mxu0
        %v2484 = vadd.f32 0.0, %v2483
        %v2485 = vpop.f32.mrf.mxu0
        %v2486 = vadd.f32 0.0, %v2485
        %2487 = vmatmul.bf16.gmra.mxu0 %v2275
        %v2488 = vpop.f32.mrf.mxu0
        %v2489 = vadd.f32 0.0, %v2488
        %v2490 = vpop.f32.mrf.mxu0
        %v2491 = vadd.f32 0.0, %v2490
        %2492 = vmatmul.bf16.gmra.mxu0 %v2284
        %v2493 = vpop.f32.mrf.mxu0
        %v2494 = vadd.f32 0.0, %v2493
        %v2495 = vpop.f32.mrf.mxu0
        %v2496 = vadd.f32 0.0, %v2495
        %2497 = vmatmul.bf16.gmra.mxu0 %v2293
        %v2498 = vpop.f32.mrf.mxu0
        %v2499 = vadd.f32 0.0, %v2498
        %v2500 = vpop.f32.mrf.mxu0
        %v2501 = vadd.f32 0.0, %v2500
        %2502 = vmatmul.bf16.gmra.mxu0 %v2302
        %v2503 = vpop.f32.mrf.mxu0
        %v2504 = vadd.f32 0.0, %v2503
        %v2505 = vpop.f32.mrf.mxu0
        %v2506 = vadd.f32 0.0, %v2505
        %2507 = vmatmul.bf16.gmra.mxu0 %v2311
        %v2508 = vpop.f32.mrf.mxu0
        %v2509 = vadd.f32 0.0, %v2508
        %v2510 = vpop.f32.mrf.mxu0
        %v2511 = vadd.f32 0.0, %v2510
        %2512 = vmatmul.bf16.gmra.mxu0 %v2320
        %v2513 = vpop.f32.mrf.mxu0
        %v2514 = vadd.f32 0.0, %v2513
        %v2515 = vpop.f32.mrf.mxu0
        %v2516 = vadd.f32 0.0, %v2515
        %2517 = vmatmul.bf16.gmra.mxu0 %v2329
        %v2518 = vpop.f32.mrf.mxu0
        %v2519 = vadd.f32 0.0, %v2518
        %v2520 = vpop.f32.mrf.mxu0
        %v2521 = vadd.f32 0.0, %v2520
        %2522 = vmatmul.bf16.gmra.mxu0 %v2338
        %v2523 = vpop.f32.mrf.mxu0
        %v2524 = vadd.f32 0.0, %v2523
        %v2525 = vpop.f32.mrf.mxu0
        %v2526 = vadd.f32 0.0, %v2525
        %2527 = vmatmul.bf16.gmra.mxu0 %v2347
        %v2528 = vpop.f32.mrf.mxu0
        %v2529 = vadd.f32 0.0, %v2528
        %v2530 = vpop.f32.mrf.mxu0
        %v2531 = vadd.f32 0.0, %v2530
        %2532 = vmatmul.bf16.gmra.mxu0 %v2356
        %v2533 = vpop.f32.mrf.mxu0
        %v2534 = vadd.f32 0.0, %v2533
        %v2535 = vpop.f32.mrf.mxu0
        %v2536 = vadd.f32 0.0, %v2535
        %2537 = vmatmul.bf16.gmra.mxu0 %v2365
        %v2538 = vpop.f32.mrf.mxu0
        %v2539 = vadd.f32 0.0, %v2538
        %v2540 = vpop.f32.mrf.mxu0
        %v2541 = vadd.f32 0.0, %v2540
        %2542 = vmatmul.bf16.gmra.mxu0 %v2374
        %v2543 = vpop.f32.mrf.mxu0
        %v2544 = vadd.f32 0.0, %v2543
        %v2545 = vpop.f32.mrf.mxu0
        %v2546 = vadd.f32 0.0, %v2545
        %2547 = vmatmul.bf16.gmra.mxu0 %v2383
        %v2548 = vpop.f32.mrf.mxu0
        %v2549 = vadd.f32 0.0, %v2548
        %v2550 = vpop.f32.mrf.mxu0
        %v2551 = vadd.f32 0.0, %v2550
        %2552 = vmatmul.bf16.gmra.mxu0 %v2392
        %v2553 = vpop.f32.mrf.mxu0
        %v2554 = vadd.f32 0.0, %v2553
        %v2555 = vpop.f32.mrf.mxu0
        %v2556 = vadd.f32 0.0, %v2555
        %2557 = vdwg.mxu0
        %v2558 = vld [vmem:[#allocation3] sm:$0xff]
        %v2559 = vld [vmem:[#allocation3 + $0x8] sm:$0xff]
        %v2560 = vld [vmem:[#allocation3 + $0x10] sm:$0xff]
        %v2561 = vld [vmem:[#allocation3 + $0x18] sm:$0xff]
        %v2562 = vld [vmem:[#allocation3 + $0x20] sm:$0xff]
        %v2563 = vld [vmem:[#allocation3 + $0x28] sm:$0xff]
        %v2564 = vld [vmem:[#allocation3 + $0x30] sm:$0xff]
        %v2565 = vld [vmem:[#allocation3 + $0x38] sm:$0xff]
        %v2566 = vld [vmem:[#allocation3 + $0x40] sm:$0xff]
        %v2567 = vld [vmem:[#allocation3 + $0x48] sm:$0xff]
        %v2568 = vld [vmem:[#allocation3 + $0x50] sm:$0xff]
        %v2569 = vld [vmem:[#allocation3 + $0x58] sm:$0xff]
        %v2570 = vld [vmem:[#allocation3 + $0x60] sm:$0xff]
        %v2571 = vld [vmem:[#allocation3 + $0x68] sm:$0xff]
        %v2572 = vld [vmem:[#allocation3 + $0x70] sm:$0xff]
        %v2573 = vld [vmem:[#allocation3 + $0x78] sm:$0xff]
        %v2574 = vld [vmem:[#allocation3 + $0x80] sm:$0xff]
        %v2575 = vld [vmem:[#allocation3 + $0x88] sm:$0xff]
        %v2576 = vld [vmem:[#allocation3 + $0x90] sm:$0xff]
        %v2577 = vld [vmem:[#allocation3 + $0x98] sm:$0xff]
        %v2578 = vld [vmem:[#allocation3 + $0xa0] sm:$0xff]
        %v2579 = vld [vmem:[#allocation3 + $0xa8] sm:$0xff]
        %v2580 = vld [vmem:[#allocation3 + $0xb0] sm:$0xff]
        %v2581 = vld [vmem:[#allocation3 + $0xb8] sm:$0xff]
        %v2582 = vld [vmem:[#allocation3 + $0xc0] sm:$0xff]
        %v2583 = vld [vmem:[#allocation3 + $0xc8] sm:$0xff]
        %v2584 = vld [vmem:[#allocation3 + $0xd0] sm:$0xff]
        %v2585 = vld [vmem:[#allocation3 + $0xd8] sm:$0xff]
        %v2586 = vld [vmem:[#allocation3 + $0xe0] sm:$0xff]
        %v2587 = vld [vmem:[#allocation3 + $0xe8] sm:$0xff]
        %v2588 = vld [vmem:[#allocation3 + $0xf0] sm:$0xff]
        %v2589 = vld [vmem:[#allocation3 + $0xf8] sm:$0xff]
        %v2590 = vld [vmem:[#allocation3 + $0x100] sm:$0xff]
        %v2591 = vld [vmem:[#allocation3 + $0x108] sm:$0xff]
        %v2592 = vld [vmem:[#allocation3 + $0x110] sm:$0xff]
        %v2593 = vld [vmem:[#allocation3 + $0x118] sm:$0xff]
        %v2594 = vadd.f32 %v2558, %v2469
        %v2595 = vadd.f32 %v2559, %v2471
        %v2596 = vadd.f32 %v2560, %v2474
        %v2597 = vadd.f32 %v2561, %v2476
        %v2598 = vadd.f32 %v2562, %v2479
        %v2599 = vadd.f32 %v2563, %v2481
        %v2600 = vadd.f32 %v2564, %v2484
        %v2601 = vadd.f32 %v2565, %v2486
        %v2602 = vadd.f32 %v2566, %v2489
        %v2603 = vadd.f32 %v2567, %v2491
        %v2604 = vadd.f32 %v2568, %v2494
        %v2605 = vadd.f32 %v2569, %v2496
        %v2606 = vadd.f32 %v2570, %v2499
        %v2607 = vadd.f32 %v2571, %v2501
        %v2608 = vadd.f32 %v2572, %v2504
        %v2609 = vadd.f32 %v2573, %v2506
        %v2610 = vadd.f32 %v2574, %v2509
        %v2611 = vadd.f32 %v2575, %v2511
        %v2612 = vadd.f32 %v2576, %v2514
        %v2613 = vadd.f32 %v2577, %v2516
        %v2614 = vadd.f32 %v2578, %v2519
        %v2615 = vadd.f32 %v2579, %v2521
        %v2616 = vadd.f32 %v2580, %v2524
        %v2617 = vadd.f32 %v2581, %v2526
        %v2618 = vadd.f32 %v2582, %v2529
        %v2619 = vadd.f32 %v2583, %v2531
        %v2620 = vadd.f32 %v2584, %v2534
        %v2621 = vadd.f32 %v2585, %v2536
        %v2622 = vadd.f32 %v2586, %v2539
        %v2623 = vadd.f32 %v2587, %v2541
        %v2624 = vadd.f32 %v2588, %v2544
        %v2625 = vadd.f32 %v2589, %v2546
        %v2626 = vadd.f32 %v2590, %v2549
        %v2627 = vadd.f32 %v2591, %v2551
        %v2628 = vadd.f32 %v2592, %v2554
        %v2629 = vadd.f32 %v2593, %v2556
        %2630 = vst [vmem:[#allocation3] sm:$0xff] %v2594
        %2631 = vst [vmem:[#allocation3 + $0x8] sm:$0xff] %v2595
        %2632 = vst [vmem:[#allocation3 + $0x10] sm:$0xff] %v2596
        %2633 = vst [vmem:[#allocation3 + $0x18] sm:$0xff] %v2597
        %2634 = vst [vmem:[#allocation3 + $0x20] sm:$0xff] %v2598
        %2635 = vst [vmem:[#allocation3 + $0x28] sm:$0xff] %v2599
        %2636 = vst [vmem:[#allocation3 + $0x30] sm:$0xff] %v2600
        %2637 = vst [vmem:[#allocation3 + $0x38] sm:$0xff] %v2601
        %2638 = vst [vmem:[#allocation3 + $0x40] sm:$0xff] %v2602
        %2639 = vst [vmem:[#allocation3 + $0x48] sm:$0xff] %v2603
        %2640 = vst [vmem:[#allocation3 + $0x50] sm:$0xff] %v2604
        %2641 = vst [vmem:[#allocation3 + $0x58] sm:$0xff] %v2605
        %2642 = vst [vmem:[#allocation3 + $0x60] sm:$0xff] %v2606
        %2643 = vst [vmem:[#allocation3 + $0x68] sm:$0xff] %v2607
        %2644 = vst [vmem:[#allocation3 + $0x70] sm:$0xff] %v2608
        %2645 = vst [vmem:[#allocation3 + $0x78] sm:$0xff] %v2609
        %2646 = vst [vmem:[#allocation3 + $0x80] sm:$0xff] %v2610
        %2647 = vst [vmem:[#allocation3 + $0x88] sm:$0xff] %v2611
        %2648 = vst [vmem:[#allocation3 + $0x90] sm:$0xff] %v2612
        %2649 = vst [vmem:[#allocation3 + $0x98] sm:$0xff] %v2613
        %2650 = vst [vmem:[#allocation3 + $0xa0] sm:$0xff] %v2614
        %2651 = vst [vmem:[#allocation3 + $0xa8] sm:$0xff] %v2615
        %2652 = vst [vmem:[#allocation3 + $0xb0] sm:$0xff] %v2616
        %2653 = vst [vmem:[#allocation3 + $0xb8] sm:$0xff] %v2617
        %2654 = vst [vmem:[#allocation3 + $0xc0] sm:$0xff] %v2618
        %2655 = vst [vmem:[#allocation3 + $0xc8] sm:$0xff] %v2619
        %2656 = vst [vmem:[#allocation3 + $0xd0] sm:$0xff] %v2620
        %2657 = vst [vmem:[#allocation3 + $0xd8] sm:$0xff] %v2621
        %2658 = vst [vmem:[#allocation3 + $0xe0] sm:$0xff] %v2622
        %2659 = vst [vmem:[#allocation3 + $0xe8] sm:$0xff] %v2623
        %2660 = vst [vmem:[#allocation3 + $0xf0] sm:$0xff] %v2624
        %2661 = vst [vmem:[#allocation3 + $0xf8] sm:$0xff] %v2625
        %2662 = vst [vmem:[#allocation3 + $0x100] sm:$0xff] %v2626
        %2663 = vst [vmem:[#allocation3 + $0x108] sm:$0xff] %v2627
        %2664 = vst [vmem:[#allocation3 + $0x110] sm:$0xff] %v2628
        %2665 = vst [vmem:[#allocation3 + $0x118] sm:$0xff] %v2629
        %v2666 = vld [vmem:[%s239 + $0x8] sm:$0xc]
        %v2667 = vld [vmem:[%s239 + $0xc] sm:$0xf]
        %v2668 = vld [vmem:[%s239 + $0x10] sm:$0xf]
        %v2669 = vld [vmem:[%s239 + $0x14] sm:$0xf]
        %v2670 = vld [vmem:[%s239 + $0x18] sm:$0xf]
        %v2671 = vld [vmem:[%s239 + $0x1c] sm:$0xf]
        %v2672 = vld [vmem:[%s239 + $0x20] sm:$0xf]
        %v2673 = vld [vmem:[%s239 + $0x24] sm:$0xf]
        %v2674 = vld [vmem:[%s239 + $0x28] sm:$0xf]
        %v2675 = vld [vmem:[%s239 + $0x2c] sm:$0xf]
        %v2676 = vld [vmem:[%s239 + $0x30] sm:$0xf]
        %v2677 = vld [vmem:[%s239 + $0x34] sm:$0xf]
        %v2678 = vld [vmem:[%s239 + $0x38] sm:$0xf]
        %v2679 = vld [vmem:[%s239 + $0x3c] sm:$0xf]
        %v2680 = vld [vmem:[%s239 + $0x40] sm:$0xf]
        %v2681 = vld [vmem:[%s239 + $0x44] sm:$0xf]
        %v2682 = vld [vmem:[%s239 + $0x48] sm:$0xf]
        %v2683 = vld [vmem:[%s239 + $0x4c] sm:$0xf]
        %v2684 = vld [vmem:[%s239 + $0x50] sm:$0xf]
        %v2685 = vld [vmem:[%s239 + $0x54] sm:$0xf]
        %v2686 = vld [vmem:[%s239 + $0x58] sm:$0xf]
        %v2687 = vld [vmem:[%s239 + $0x5c] sm:$0xf]
        %v2688 = vld [vmem:[%s239 + $0x60] sm:$0xf]
        %v2689 = vld [vmem:[%s239 + $0x64] sm:$0xf]
        %v2690 = vld [vmem:[%s239 + $0x68] sm:$0xf]
        %v2691 = vld [vmem:[%s239 + $0x6c] sm:$0xf]
        %v2692 = vld [vmem:[%s239 + $0x70] sm:$0xf]
        %v2693 = vld [vmem:[%s239 + $0x74] sm:$0xf]
        %v2694 = vld [vmem:[%s239 + $0x78] sm:$0xf]
        %v2695 = vld [vmem:[%s239 + $0x7c] sm:$0xf]
        %v2696 = vld [vmem:[%s239 + $0x80] sm:$0xf]
        %v2697 = vld [vmem:[%s239 + $0x84] sm:$0xf]
        %v2698 = vld [vmem:[%s239 + $0x88] sm:$0xf]
        %v2699 = vld [vmem:[%s239 + $0x8c] sm:$0xf]
        %v2700 = vld [vmem:[%s239 + $0x90] sm:$0xf]
        %v2701 = vld [vmem:[%s239 + $0x94] sm:$0xf]
        %v2702 = vld [vmem:[%s239 + $0x98] sm:$0x3]
        %s2703 = scalar_lea.vmem %s1, 320
        %v2704 = vld [vmem:[%s2703] sm:$0xf]
        %v2705 = vld [vmem:[%s2703 + $0x4] sm:$0xf]
        %v2706 = vld [vmem:[%s2703 + $0x8] sm:$0xf]
        %v2707 = vld [vmem:[%s2703 + $0xc] sm:$0xf]
        %v2708 = vld [vmem:[%s2703 + $0x10] sm:$0xf]
        %v2709 = vld [vmem:[%s2703 + $0x14] sm:$0xf]
        %v2710 = vld [vmem:[%s2703 + $0x18] sm:$0xf]
        %v2711 = vld [vmem:[%s2703 + $0x1c] sm:$0xf]
        %v2712 = vld [vmem:[%s2703 + $0x20] sm:$0xf]
        %v2713 = vld [vmem:[%s2703 + $0x24] sm:$0xf]
        %v2714 = vld [vmem:[%s2703 + $0x28] sm:$0xf]
        %v2715 = vld [vmem:[%s2703 + $0x2c] sm:$0xf]
        %v2716 = vld [vmem:[%s2703 + $0x30] sm:$0xf]
        %v2717 = vld [vmem:[%s2703 + $0x34] sm:$0xf]
        %v2718 = vld [vmem:[%s2703 + $0x38] sm:$0xf]
        %v2719 = vld [vmem:[%s2703 + $0x3c] sm:$0xf]
        %v2757 = vunpack.c.l.b16 %v2666
        %v2758 = vunpack.c.l.b16 %v2667
        %v2759 = vunpack.c.l.b16 %v2668
        %v2760 = vunpack.c.l.b16 %v2669
        %v2761 = vunpack.c.l.b16 %v2670
        %v2762 = vunpack.c.l.b16 %v2671
        %v2763 = vunpack.c.l.b16 %v2672
        %v2764 = vunpack.c.l.b16 %v2673
        %v2765 = vunpack.c.l.b16 %v2674
        %v2766 = vunpack.c.l.b16 %v2675
        %v2767 = vunpack.c.l.b16 %v2676
        %v2768 = vunpack.c.l.b16 %v2677
        %v2769 = vunpack.c.l.b16 %v2678
        %v2770 = vunpack.c.l.b16 %v2679
        %v2771 = vunpack.c.l.b16 %v2680
        %v2772 = vunpack.c.l.b16 %v2681
        %v2773 = vunpack.c.l.b16 %v2682
        %v2774 = vunpack.c.l.b16 %v2683
        %v2775 = vunpack.c.l.b16 %v2684
        %v2776 = vunpack.c.l.b16 %v2685
        %v2777 = vunpack.c.l.b16 %v2686
        %v2778 = vunpack.c.l.b16 %v2687
        %v2779 = vunpack.c.l.b16 %v2688
        %v2780 = vunpack.c.l.b16 %v2689
        %v2781 = vunpack.c.l.b16 %v2690
        %v2782 = vunpack.c.l.b16 %v2691
        %v2783 = vunpack.c.l.b16 %v2692
        %v2784 = vunpack.c.l.b16 %v2693
        %v2785 = vunpack.c.l.b16 %v2694
        %v2786 = vunpack.c.l.b16 %v2695
        %v2787 = vunpack.c.l.b16 %v2696
        %v2788 = vunpack.c.l.b16 %v2697
        %v2789 = vunpack.c.l.b16 %v2698
        %v2790 = vunpack.c.l.b16 %v2699
        %v2791 = vunpack.c.l.b16 %v2700
        %v2792 = vunpack.c.l.b16 %v2701
        %v2793 = vunpack.c.l.b16 %v2702
        %v2794 = vpack.c.b16 %v2758, %v2757
        %v2795 = vpack.c.b16 %v2760, %v2759
        %v2796 = vpack.c.b16 %v2762, %v2761
        %v2797 = vpack.c.b16 %v2764, %v2763
        %v2798 = vpack.c.b16 %v2766, %v2765
        %v2799 = vpack.c.b16 %v2768, %v2767
        %v2800 = vpack.c.b16 %v2770, %v2769
        %v2801 = vpack.c.b16 %v2772, %v2771
        %v2802 = vpack.c.b16 %v2774, %v2773
        %v2803 = vpack.c.b16 %v2776, %v2775
        %v2804 = vpack.c.b16 %v2778, %v2777
        %v2805 = vpack.c.b16 %v2780, %v2779
        %v2806 = vpack.c.b16 %v2782, %v2781
        %v2807 = vpack.c.b16 %v2784, %v2783
        %v2808 = vpack.c.b16 %v2786, %v2785
        %v2809 = vpack.c.b16 %v2788, %v2787
        %v2810 = vpack.c.b16 %v2790, %v2789
        %v2811 = vpack.c.b16 %v2792, %v2791
        %v2812 = vpack.c.b16 %v2793, %v2793
        %vm2813 = vcmask 1045504
        %v2814 = vrot.slane %v2794, 2
        %v2815 = vrot.slane %v2795, 2
        %v2816 = vsel %vm2813, %v2814, %v2815
        %v2817 = vrot.slane %v2796, 2
        %v2818 = vsel %vm2813, %v2815, %v2817
        %v2819 = vrot.slane %v2797, 2
        %v2820 = vsel %vm2813, %v2817, %v2819
        %v2821 = vrot.slane %v2798, 2
        %v2822 = vsel %vm2813, %v2819, %v2821
        %v2823 = vrot.slane %v2799, 2
        %v2824 = vsel %vm2813, %v2821, %v2823
        %v2825 = vrot.slane %v2800, 2
        %v2826 = vsel %vm2813, %v2823, %v2825
        %v2827 = vrot.slane %v2801, 2
        %v2828 = vsel %vm2813, %v2825, %v2827
        %v2829 = vrot.slane %v2802, 2
        %v2830 = vsel %vm2813, %v2827, %v2829
        %v2831 = vrot.slane %v2803, 2
        %v2832 = vsel %vm2813, %v2829, %v2831
        %v2833 = vrot.slane %v2804, 2
        %v2834 = vsel %vm2813, %v2831, %v2833
        %v2835 = vrot.slane %v2805, 2
        %v2836 = vsel %vm2813, %v2833, %v2835
        %v2837 = vrot.slane %v2806, 2
        %v2838 = vsel %vm2813, %v2835, %v2837
        %v2839 = vrot.slane %v2807, 2
        %v2840 = vsel %vm2813, %v2837, %v2839
        %v2841 = vrot.slane %v2808, 2
        %v2842 = vsel %vm2813, %v2839, %v2841
        %v2843 = vrot.slane %v2809, 2
        %v2844 = vsel %vm2813, %v2841, %v2843
        %v2845 = vrot.slane %v2810, 2
        %v2846 = vsel %vm2813, %v2843, %v2845
        %v2847 = vrot.slane %v2811, 2
        %v2848 = vsel %vm2813, %v2845, %v2847
        %v2849 = vrot.slane %v2812, 2
        %v2850 = vsel %vm2813, %v2847, %v2849
        %v2885 = vunpack.c.l.b16 %v2704
        %v2886 = vunpack.c.l.b16 %v2705
        %v2887 = vunpack.c.l.b16 %v2706
        %v2888 = vunpack.c.l.b16 %v2707
        %v2889 = vunpack.c.l.b16 %v2708
        %v2890 = vunpack.c.l.b16 %v2709
        %v2891 = vunpack.c.l.b16 %v2710
        %v2892 = vunpack.c.l.b16 %v2711
        %v2893 = vunpack.c.l.b16 %v2712
        %v2894 = vunpack.c.l.b16 %v2713
        %v2895 = vunpack.c.l.b16 %v2714
        %v2896 = vunpack.c.l.b16 %v2715
        %v2897 = vunpack.c.l.b16 %v2716
        %v2898 = vunpack.c.l.b16 %v2717
        %v2899 = vunpack.c.l.b16 %v2718
        %v2900 = vunpack.c.l.b16 %v2719
        %v2901 = vpack.c.b16 %v2886, %v2885
        %v2902 = vpack.c.b16 %v2888, %v2887
        %v2903 = vpack.c.b16 %v2890, %v2889
        %v2904 = vpack.c.b16 %v2892, %v2891
        %v2905 = vpack.c.b16 %v2894, %v2893
        %v2906 = vpack.c.b16 %v2896, %v2895
        %v2907 = vpack.c.b16 %v2898, %v2897
        %v2908 = vpack.c.b16 %v2900, %v2899
        %2917 = vmatpush.bf16.msra.mxu0 %v2908
        %2918 = vmatpush.bf16.msra.mxu0 %v2907
        %2919 = vmatpush.bf16.msra.mxu0 %v2906
        %2920 = vmatpush.bf16.msra.mxu0 %v2905
        %2921 = vmatpush.bf16.msra.mxu0 %v2904
        %2922 = vmatpush.bf16.msra.mxu0 %v2903
        %2923 = vmatpush.bf16.msra.mxu0 %v2902
        %2924 = vmatpush.bf16.msra.mxu0 %v2901
        %2925 = vmatmul.bf16.gmra.mxu0 %v2816
        %v2926 = vpop.f32.mrf.mxu0
        %v2927 = vadd.f32 0.0, %v2926
        %v2928 = vpop.f32.mrf.mxu0
        %v2929 = vadd.f32 0.0, %v2928
        %2930 = vmatmul.bf16.gmra.mxu0 %v2818
        %v2931 = vpop.f32.mrf.mxu0
        %v2932 = vadd.f32 0.0, %v2931
        %v2933 = vpop.f32.mrf.mxu0
        %v2934 = vadd.f32 0.0, %v2933
        %2935 = vmatmul.bf16.gmra.mxu0 %v2820
        %v2936 = vpop.f32.mrf.mxu0
        %v2937 = vadd.f32 0.0, %v2936
        %v2938 = vpop.f32.mrf.mxu0
        %v2939 = vadd.f32 0.0, %v2938
        %2940 = vmatmul.bf16.gmra.mxu0 %v2822
        %v2941 = vpop.f32.mrf.mxu0
        %v2942 = vadd.f32 0.0, %v2941
        %v2943 = vpop.f32.mrf.mxu0
        %v2944 = vadd.f32 0.0, %v2943
        %2945 = vmatmul.bf16.gmra.mxu0 %v2824
        %v2946 = vpop.f32.mrf.mxu0
        %v2947 = vadd.f32 0.0, %v2946
        %v2948 = vpop.f32.mrf.mxu0
        %v2949 = vadd.f32 0.0, %v2948
        %2950 = vmatmul.bf16.gmra.mxu0 %v2826
        %v2951 = vpop.f32.mrf.mxu0
        %v2952 = vadd.f32 0.0, %v2951
        %v2953 = vpop.f32.mrf.mxu0
        %v2954 = vadd.f32 0.0, %v2953
        %2955 = vmatmul.bf16.gmra.mxu0 %v2828
        %v2956 = vpop.f32.mrf.mxu0
        %v2957 = vadd.f32 0.0, %v2956
        %v2958 = vpop.f32.mrf.mxu0
        %v2959 = vadd.f32 0.0, %v2958
        %2960 = vmatmul.bf16.gmra.mxu0 %v2830
        %v2961 = vpop.f32.mrf.mxu0
        %v2962 = vadd.f32 0.0, %v2961
        %v2963 = vpop.f32.mrf.mxu0
        %v2964 = vadd.f32 0.0, %v2963
        %2965 = vmatmul.bf16.gmra.mxu0 %v2832
        %v2966 = vpop.f32.mrf.mxu0
        %v2967 = vadd.f32 0.0, %v2966
        %v2968 = vpop.f32.mrf.mxu0
        %v2969 = vadd.f32 0.0, %v2968
        %2970 = vmatmul.bf16.gmra.mxu0 %v2834
        %v2971 = vpop.f32.mrf.mxu0
        %v2972 = vadd.f32 0.0, %v2971
        %v2973 = vpop.f32.mrf.mxu0
        %v2974 = vadd.f32 0.0, %v2973
        %2975 = vmatmul.bf16.gmra.mxu0 %v2836
        %v2976 = vpop.f32.mrf.mxu0
        %v2977 = vadd.f32 0.0, %v2976
        %v2978 = vpop.f32.mrf.mxu0
        %v2979 = vadd.f32 0.0, %v2978
        %2980 = vmatmul.bf16.gmra.mxu0 %v2838
        %v2981 = vpop.f32.mrf.mxu0
        %v2982 = vadd.f32 0.0, %v2981
        %v2983 = vpop.f32.mrf.mxu0
        %v2984 = vadd.f32 0.0, %v2983
        %2985 = vmatmul.bf16.gmra.mxu0 %v2840
        %v2986 = vpop.f32.mrf.mxu0
        %v2987 = vadd.f32 0.0, %v2986
        %v2988 = vpop.f32.mrf.mxu0
        %v2989 = vadd.f32 0.0, %v2988
        %2990 = vmatmul.bf16.gmra.mxu0 %v2842
        %v2991 = vpop.f32.mrf.mxu0
        %v2992 = vadd.f32 0.0, %v2991
        %v2993 = vpop.f32.mrf.mxu0
        %v2994 = vadd.f32 0.0, %v2993
        %2995 = vmatmul.bf16.gmra.mxu0 %v2844
        %v2996 = vpop.f32.mrf.mxu0
        %v2997 = vadd.f32 0.0, %v2996
        %v2998 = vpop.f32.mrf.mxu0
        %v2999 = vadd.f32 0.0, %v2998
        %3000 = vmatmul.bf16.gmra.mxu0 %v2846
        %v3001 = vpop.f32.mrf.mxu0
        %v3002 = vadd.f32 0.0, %v3001
        %v3003 = vpop.f32.mrf.mxu0
        %v3004 = vadd.f32 0.0, %v3003
        %3005 = vmatmul.bf16.gmra.mxu0 %v2848
        %v3006 = vpop.f32.mrf.mxu0
        %v3007 = vadd.f32 0.0, %v3006
        %v3008 = vpop.f32.mrf.mxu0
        %v3009 = vadd.f32 0.0, %v3008
        %3010 = vmatmul.bf16.gmra.mxu0 %v2850
        %v3011 = vpop.f32.mrf.mxu0
        %v3012 = vadd.f32 0.0, %v3011
        %v3013 = vpop.f32.mrf.mxu0
        %v3014 = vadd.f32 0.0, %v3013
        %3015 = vdwg.mxu0
        %v3016 = vld [vmem:[#allocation3] sm:$0xff]
        %v3017 = vld [vmem:[#allocation3 + $0x8] sm:$0xff]
        %v3018 = vld [vmem:[#allocation3 + $0x10] sm:$0xff]
        %v3019 = vld [vmem:[#allocation3 + $0x18] sm:$0xff]
        %v3020 = vld [vmem:[#allocation3 + $0x20] sm:$0xff]
        %v3021 = vld [vmem:[#allocation3 + $0x28] sm:$0xff]
        %v3022 = vld [vmem:[#allocation3 + $0x30] sm:$0xff]
        %v3023 = vld [vmem:[#allocation3 + $0x38] sm:$0xff]
        %v3024 = vld [vmem:[#allocation3 + $0x40] sm:$0xff]
        %v3025 = vld [vmem:[#allocation3 + $0x48] sm:$0xff]
        %v3026 = vld [vmem:[#allocation3 + $0x50] sm:$0xff]
        %v3027 = vld [vmem:[#allocation3 + $0x58] sm:$0xff]
        %v3028 = vld [vmem:[#allocation3 + $0x60] sm:$0xff]
        %v3029 = vld [vmem:[#allocation3 + $0x68] sm:$0xff]
        %v3030 = vld [vmem:[#allocation3 + $0x70] sm:$0xff]
        %v3031 = vld [vmem:[#allocation3 + $0x78] sm:$0xff]
        %v3032 = vld [vmem:[#allocation3 + $0x80] sm:$0xff]
        %v3033 = vld [vmem:[#allocation3 + $0x88] sm:$0xff]
        %v3034 = vld [vmem:[#allocation3 + $0x90] sm:$0xff]
        %v3035 = vld [vmem:[#allocation3 + $0x98] sm:$0xff]
        %v3036 = vld [vmem:[#allocation3 + $0xa0] sm:$0xff]
        %v3037 = vld [vmem:[#allocation3 + $0xa8] sm:$0xff]
        %v3038 = vld [vmem:[#allocation3 + $0xb0] sm:$0xff]
        %v3039 = vld [vmem:[#allocation3 + $0xb8] sm:$0xff]
        %v3040 = vld [vmem:[#allocation3 + $0xc0] sm:$0xff]
        %v3041 = vld [vmem:[#allocation3 + $0xc8] sm:$0xff]
        %v3042 = vld [vmem:[#allocation3 + $0xd0] sm:$0xff]
        %v3043 = vld [vmem:[#allocation3 + $0xd8] sm:$0xff]
        %v3044 = vld [vmem:[#allocation3 + $0xe0] sm:$0xff]
        %v3045 = vld [vmem:[#allocation3 + $0xe8] sm:$0xff]
        %v3046 = vld [vmem:[#allocation3 + $0xf0] sm:$0xff]
        %v3047 = vld [vmem:[#allocation3 + $0xf8] sm:$0xff]
        %v3048 = vld [vmem:[#allocation3 + $0x100] sm:$0xff]
        %v3049 = vld [vmem:[#allocation3 + $0x108] sm:$0xff]
        %v3050 = vld [vmem:[#allocation3 + $0x110] sm:$0xff]
        %v3051 = vld [vmem:[#allocation3 + $0x118] sm:$0xff]
        %v3052 = vadd.f32 %v3016, %v2927
        %v3053 = vadd.f32 %v3017, %v2929
        %v3054 = vadd.f32 %v3018, %v2932
        %v3055 = vadd.f32 %v3019, %v2934
        %v3056 = vadd.f32 %v3020, %v2937
        %v3057 = vadd.f32 %v3021, %v2939
        %v3058 = vadd.f32 %v3022, %v2942
        %v3059 = vadd.f32 %v3023, %v2944
        %v3060 = vadd.f32 %v3024, %v2947
        %v3061 = vadd.f32 %v3025, %v2949
        %v3062 = vadd.f32 %v3026, %v2952
        %v3063 = vadd.f32 %v3027, %v2954
        %v3064 = vadd.f32 %v3028, %v2957
        %v3065 = vadd.f32 %v3029, %v2959
        %v3066 = vadd.f32 %v3030, %v2962
        %v3067 = vadd.f32 %v3031, %v2964
        %v3068 = vadd.f32 %v3032, %v2967
        %v3069 = vadd.f32 %v3033, %v2969
        %v3070 = vadd.f32 %v3034, %v2972
        %v3071 = vadd.f32 %v3035, %v2974
        %v3072 = vadd.f32 %v3036, %v2977
        %v3073 = vadd.f32 %v3037, %v2979
        %v3074 = vadd.f32 %v3038, %v2982
        %v3075 = vadd.f32 %v3039, %v2984
        %v3076 = vadd.f32 %v3040, %v2987
        %v3077 = vadd.f32 %v3041, %v2989
        %v3078 = vadd.f32 %v3042, %v2992
        %v3079 = vadd.f32 %v3043, %v2994
        %v3080 = vadd.f32 %v3044, %v2997
        %v3081 = vadd.f32 %v3045, %v2999
        %v3082 = vadd.f32 %v3046, %v3002
        %v3083 = vadd.f32 %v3047, %v3004
        %v3084 = vadd.f32 %v3048, %v3007
        %v3085 = vadd.f32 %v3049, %v3009
        %v3086 = vadd.f32 %v3050, %v3012
        %v3087 = vadd.f32 %v3051, %v3014
        %3088 = vst [vmem:[#allocation3] sm:$0xff] %v3052
        %3089 = vst [vmem:[#allocation3 + $0x8] sm:$0xff] %v3053
        %3090 = vst [vmem:[#allocation3 + $0x10] sm:$0xff] %v3054
        %3091 = vst [vmem:[#allocation3 + $0x18] sm:$0xff] %v3055
        %3092 = vst [vmem:[#allocation3 + $0x20] sm:$0xff] %v3056
        %3093 = vst [vmem:[#allocation3 + $0x28] sm:$0xff] %v3057
        %3094 = vst [vmem:[#allocation3 + $0x30] sm:$0xff] %v3058
        %3095 = vst [vmem:[#allocation3 + $0x38] sm:$0xff] %v3059
        %3096 = vst [vmem:[#allocation3 + $0x40] sm:$0xff] %v3060
        %3097 = vst [vmem:[#allocation3 + $0x48] sm:$0xff] %v3061
        %3098 = vst [vmem:[#allocation3 + $0x50] sm:$0xff] %v3062
        %3099 = vst [vmem:[#allocation3 + $0x58] sm:$0xff] %v3063
        %3100 = vst [vmem:[#allocation3 + $0x60] sm:$0xff] %v3064
        %3101 = vst [vmem:[#allocation3 + $0x68] sm:$0xff] %v3065
        %3102 = vst [vmem:[#allocation3 + $0x70] sm:$0xff] %v3066
        %3103 = vst [vmem:[#allocation3 + $0x78] sm:$0xff] %v3067
        %3104 = vst [vmem:[#allocation3 + $0x80] sm:$0xff] %v3068
        %3105 = vst [vmem:[#allocation3 + $0x88] sm:$0xff] %v3069
        %3106 = vst [vmem:[#allocation3 + $0x90] sm:$0xff] %v3070
        %3107 = vst [vmem:[#allocation3 + $0x98] sm:$0xff] %v3071
        %3108 = vst [vmem:[#allocation3 + $0xa0] sm:$0xff] %v3072
        %3109 = vst [vmem:[#allocation3 + $0xa8] sm:$0xff] %v3073
        %3110 = vst [vmem:[#allocation3 + $0xb0] sm:$0xff] %v3074
        %3111 = vst [vmem:[#allocation3 + $0xb8] sm:$0xff] %v3075
        %3112 = vst [vmem:[#allocation3 + $0xc0] sm:$0xff] %v3076
        %3113 = vst [vmem:[#allocation3 + $0xc8] sm:$0xff] %v3077
        %3114 = vst [vmem:[#allocation3 + $0xd0] sm:$0xff] %v3078
        %3115 = vst [vmem:[#allocation3 + $0xd8] sm:$0xff] %v3079
        %3116 = vst [vmem:[#allocation3 + $0xe0] sm:$0xff] %v3080
        %3117 = vst [vmem:[#allocation3 + $0xe8] sm:$0xff] %v3081
        %3118 = vst [vmem:[#allocation3 + $0xf0] sm:$0xff] %v3082
        %3119 = vst [vmem:[#allocation3 + $0xf8] sm:$0xff] %v3083
        %3120 = vst [vmem:[#allocation3 + $0x100] sm:$0xff] %v3084
        %3121 = vst [vmem:[#allocation3 + $0x108] sm:$0xff] %v3085
        %3122 = vst [vmem:[#allocation3 + $0x110] sm:$0xff] %v3086
        %3123 = vst [vmem:[#allocation3 + $0x118] sm:$0xff] %v3087
        %v3124 = vld [vmem:[%s239 + $0x10] sm:$0xc]
        %v3125 = vld [vmem:[%s239 + $0x14] sm:$0xf]
        %v3126 = vld [vmem:[%s239 + $0x18] sm:$0xf]
        %v3127 = vld [vmem:[%s239 + $0x1c] sm:$0xf]
        %v3128 = vld [vmem:[%s239 + $0x20] sm:$0xf]
        %v3129 = vld [vmem:[%s239 + $0x24] sm:$0xf]
        %v3130 = vld [vmem:[%s239 + $0x28] sm:$0xf]
        %v3131 = vld [vmem:[%s239 + $0x2c] sm:$0xf]
        %v3132 = vld [vmem:[%s239 + $0x30] sm:$0xf]
        %v3133 = vld [vmem:[%s239 + $0x34] sm:$0xf]
        %v3134 = vld [vmem:[%s239 + $0x38] sm:$0xf]
        %v3135 = vld [vmem:[%s239 + $0x3c] sm:$0xf]
        %v3136 = vld [vmem:[%s239 + $0x40] sm:$0xf]
        %v3137 = vld [vmem:[%s239 + $0x44] sm:$0xf]
        %v3138 = vld [vmem:[%s239 + $0x48] sm:$0xf]
        %v3139 = vld [vmem:[%s239 + $0x4c] sm:$0xf]
        %v3140 = vld [vmem:[%s239 + $0x50] sm:$0xf]
        %v3141 = vld [vmem:[%s239 + $0x54] sm:$0xf]
        %v3142 = vld [vmem:[%s239 + $0x58] sm:$0xf]
        %v3143 = vld [vmem:[%s239 + $0x5c] sm:$0xf]
        %v3144 = vld [vmem:[%s239 + $0x60] sm:$0xf]
        %v3145 = vld [vmem:[%s239 + $0x64] sm:$0xf]
        %v3146 = vld [vmem:[%s239 + $0x68] sm:$0xf]
        %v3147 = vld [vmem:[%s239 + $0x6c] sm:$0xf]
        %v3148 = vld [vmem:[%s239 + $0x70] sm:$0xf]
        %v3149 = vld [vmem:[%s239 + $0x74] sm:$0xf]
        %v3150 = vld [vmem:[%s239 + $0x78] sm:$0xf]
        %v3151 = vld [vmem:[%s239 + $0x7c] sm:$0xf]
        %v3152 = vld [vmem:[%s239 + $0x80] sm:$0xf]
        %v3153 = vld [vmem:[%s239 + $0x84] sm:$0xf]
        %v3154 = vld [vmem:[%s239 + $0x88] sm:$0xf]
        %v3155 = vld [vmem:[%s239 + $0x8c] sm:$0xf]
        %v3156 = vld [vmem:[%s239 + $0x90] sm:$0xf]
        %v3157 = vld [vmem:[%s239 + $0x94] sm:$0xf]
        %v3158 = vld [vmem:[%s239 + $0x98] sm:$0xf]
        %v3159 = vld [vmem:[%s239 + $0x9c] sm:$0xf]
        %v3160 = vld [vmem:[%s239 + $0xa0] sm:$0x3]
        %s3161 = scalar_lea.vmem %s1, 384
        %v3162 = vld [vmem:[%s3161] sm:$0xf]
        %v3163 = vld [vmem:[%s3161 + $0x4] sm:$0xf]
        %v3164 = vld [vmem:[%s3161 + $0x8] sm:$0xf]
        %v3165 = vld [vmem:[%s3161 + $0xc] sm:$0xf]
        %v3166 = vld [vmem:[%s3161 + $0x10] sm:$0xf]
        %v3167 = vld [vmem:[%s3161 + $0x14] sm:$0xf]
        %v3168 = vld [vmem:[%s3161 + $0x18] sm:$0xf]
        %v3169 = vld [vmem:[%s3161 + $0x1c] sm:$0xf]
        %v3170 = vld [vmem:[%s3161 + $0x20] sm:$0xf]
        %v3171 = vld [vmem:[%s3161 + $0x24] sm:$0xf]
        %v3172 = vld [vmem:[%s3161 + $0x28] sm:$0xf]
        %v3173 = vld [vmem:[%s3161 + $0x2c] sm:$0xf]
        %v3174 = vld [vmem:[%s3161 + $0x30] sm:$0xf]
        %v3175 = vld [vmem:[%s3161 + $0x34] sm:$0xf]
        %v3176 = vld [vmem:[%s3161 + $0x38] sm:$0xf]
        %v3177 = vld [vmem:[%s3161 + $0x3c] sm:$0xf]
        %v3215 = vunpack.c.l.b16 %v3124
        %v3216 = vunpack.c.l.b16 %v3125
        %v3217 = vunpack.c.l.b16 %v3126
        %v3218 = vunpack.c.l.b16 %v3127
        %v3219 = vunpack.c.l.b16 %v3128
        %v3220 = vunpack.c.l.b16 %v3129
        %v3221 = vunpack.c.l.b16 %v3130
        %v3222 = vunpack.c.l.b16 %v3131
        %v3223 = vunpack.c.l.b16 %v3132
        %v3224 = vunpack.c.l.b16 %v3133
        %v3225 = vunpack.c.l.b16 %v3134
        %v3226 = vunpack.c.l.b16 %v3135
        %v3227 = vunpack.c.l.b16 %v3136
        %v3228 = vunpack.c.l.b16 %v3137
        %v3229 = vunpack.c.l.b16 %v3138
        %v3230 = vunpack.c.l.b16 %v3139
        %v3231 = vunpack.c.l.b16 %v3140
        %v3232 = vunpack.c.l.b16 %v3141
        %v3233 = vunpack.c.l.b16 %v3142
        %v3234 = vunpack.c.l.b16 %v3143
        %v3235 = vunpack.c.l.b16 %v3144
        %v3236 = vunpack.c.l.b16 %v3145
        %v3237 = vunpack.c.l.b16 %v3146
        %v3238 = vunpack.c.l.b16 %v3147
        %v3239 = vunpack.c.l.b16 %v3148
        %v3240 = vunpack.c.l.b16 %v3149
        %v3241 = vunpack.c.l.b16 %v3150
        %v3242 = vunpack.c.l.b16 %v3151
        %v3243 = vunpack.c.l.b16 %v3152
        %v3244 = vunpack.c.l.b16 %v3153
        %v3245 = vunpack.c.l.b16 %v3154
        %v3246 = vunpack.c.l.b16 %v3155
        %v3247 = vunpack.c.l.b16 %v3156
        %v3248 = vunpack.c.l.b16 %v3157
        %v3249 = vunpack.c.l.b16 %v3158
        %v3250 = vunpack.c.l.b16 %v3159
        %v3251 = vunpack.c.l.b16 %v3160
        %v3252 = vpack.c.b16 %v3216, %v3215
        %v3253 = vpack.c.b16 %v3218, %v3217
        %v3254 = vpack.c.b16 %v3220, %v3219
        %v3255 = vpack.c.b16 %v3222, %v3221
        %v3256 = vpack.c.b16 %v3224, %v3223
        %v3257 = vpack.c.b16 %v3226, %v3225
        %v3258 = vpack.c.b16 %v3228, %v3227
        %v3259 = vpack.c.b16 %v3230, %v3229
        %v3260 = vpack.c.b16 %v3232, %v3231
        %v3261 = vpack.c.b16 %v3234, %v3233
        %v3262 = vpack.c.b16 %v3236, %v3235
        %v3263 = vpack.c.b16 %v3238, %v3237
        %v3264 = vpack.c.b16 %v3240, %v3239
        %v3265 = vpack.c.b16 %v3242, %v3241
        %v3266 = vpack.c.b16 %v3244, %v3243
        %v3267 = vpack.c.b16 %v3246, %v3245
        %v3268 = vpack.c.b16 %v3248, %v3247
        %v3269 = vpack.c.b16 %v3250, %v3249
        %v3270 = vpack.c.b16 %v3251, %v3251
        %v3271 = vrot.slane %v3252, 2
        %v3272 = vrot.slane %v3253, 2
        %v3273 = vsel %vm2813, %v3271, %v3272
        %v3274 = vrot.slane %v3254, 2
        %v3275 = vsel %vm2813, %v3272, %v3274
        %v3276 = vrot.slane %v3255, 2
        %v3277 = vsel %vm2813, %v3274, %v3276
        %v3278 = vrot.slane %v3256, 2
        %v3279 = vsel %vm2813, %v3276, %v3278
        %v3280 = vrot.slane %v3257, 2
        %v3281 = vsel %vm2813, %v3278, %v3280
        %v3282 = vrot.slane %v3258, 2
        %v3283 = vsel %vm2813, %v3280, %v3282
        %v3284 = vrot.slane %v3259, 2
        %v3285 = vsel %vm2813, %v3282, %v3284
        %v3286 = vrot.slane %v3260, 2
        %v3287 = vsel %vm2813, %v3284, %v3286
        %v3288 = vrot.slane %v3261, 2
        %v3289 = vsel %vm2813, %v3286, %v3288
        %v3290 = vrot.slane %v3262, 2
        %v3291 = vsel %vm2813, %v3288, %v3290
        %v3292 = vrot.slane %v3263, 2
        %v3293 = vsel %vm2813, %v3290, %v3292
        %v3294 = vrot.slane %v3264, 2
        %v3295 = vsel %vm2813, %v3292, %v3294
        %v3296 = vrot.slane %v3265, 2
        %v3297 = vsel %vm2813, %v3294, %v3296
        %v3298 = vrot.slane %v3266, 2
        %v3299 = vsel %vm2813, %v3296, %v3298
        %v3300 = vrot.slane %v3267, 2
        %v3301 = vsel %vm2813, %v3298, %v3300
        %v3302 = vrot.slane %v3268, 2
        %v3303 = vsel %vm2813, %v3300, %v3302
        %v3304 = vrot.slane %v3269, 2
        %v3305 = vsel %vm2813, %v3302, %v3304
        %v3306 = vrot.slane %v3270, 2
        %v3307 = vsel %vm2813, %v3304, %v3306
        %v3342 = vunpack.c.l.b16 %v3162
        %v3343 = vunpack.c.l.b16 %v3163
        %v3344 = vunpack.c.l.b16 %v3164
        %v3345 = vunpack.c.l.b16 %v3165
        %v3346 = vunpack.c.l.b16 %v3166
        %v3347 = vunpack.c.l.b16 %v3167
        %v3348 = vunpack.c.l.b16 %v3168
        %v3349 = vunpack.c.l.b16 %v3169
        %v3350 = vunpack.c.l.b16 %v3170
        %v3351 = vunpack.c.l.b16 %v3171
        %v3352 = vunpack.c.l.b16 %v3172
        %v3353 = vunpack.c.l.b16 %v3173
        %v3354 = vunpack.c.l.b16 %v3174
        %v3355 = vunpack.c.l.b16 %v3175
        %v3356 = vunpack.c.l.b16 %v3176
        %v3357 = vunpack.c.l.b16 %v3177
        %v3358 = vpack.c.b16 %v3343, %v3342
        %v3359 = vpack.c.b16 %v3345, %v3344
        %v3360 = vpack.c.b16 %v3347, %v3346
        %v3361 = vpack.c.b16 %v3349, %v3348
        %v3362 = vpack.c.b16 %v3351, %v3350
        %v3363 = vpack.c.b16 %v3353, %v3352
        %v3364 = vpack.c.b16 %v3355, %v3354
        %v3365 = vpack.c.b16 %v3357, %v3356
        %3374 = vmatpush.bf16.msra.mxu0 %v3365
        %3375 = vmatpush.bf16.msra.mxu0 %v3364
        %3376 = vmatpush.bf16.msra.mxu0 %v3363
        %3377 = vmatpush.bf16.msra.mxu0 %v3362
        %3378 = vmatpush.bf16.msra.mxu0 %v3361
        %3379 = vmatpush.bf16.msra.mxu0 %v3360
        %3380 = vmatpush.bf16.msra.mxu0 %v3359
        %3381 = vmatpush.bf16.msra.mxu0 %v3358
        %3382 = vmatmul.bf16.gmra.mxu0 %v3273
        %v3383 = vpop.f32.mrf.mxu0
        %v3384 = vadd.f32 0.0, %v3383
        %v3385 = vpop.f32.mrf.mxu0
        %v3386 = vadd.f32 0.0, %v3385
        %3387 = vmatmul.bf16.gmra.mxu0 %v3275
        %v3388 = vpop.f32.mrf.mxu0
        %v3389 = vadd.f32 0.0, %v3388
        %v3390 = vpop.f32.mrf.mxu0
        %v3391 = vadd.f32 0.0, %v3390
        %3392 = vmatmul.bf16.gmra.mxu0 %v3277
        %v3393 = vpop.f32.mrf.mxu0
        %v3394 = vadd.f32 0.0, %v3393
        %v3395 = vpop.f32.mrf.mxu0
        %v3396 = vadd.f32 0.0, %v3395
        %3397 = vmatmul.bf16.gmra.mxu0 %v3279
        %v3398 = vpop.f32.mrf.mxu0
        %v3399 = vadd.f32 0.0, %v3398
        %v3400 = vpop.f32.mrf.mxu0
        %v3401 = vadd.f32 0.0, %v3400
        %3402 = vmatmul.bf16.gmra.mxu0 %v3281
        %v3403 = vpop.f32.mrf.mxu0
        %v3404 = vadd.f32 0.0, %v3403
        %v3405 = vpop.f32.mrf.mxu0
        %v3406 = vadd.f32 0.0, %v3405
        %3407 = vmatmul.bf16.gmra.mxu0 %v3283
        %v3408 = vpop.f32.mrf.mxu0
        %v3409 = vadd.f32 0.0, %v3408
        %v3410 = vpop.f32.mrf.mxu0
        %v3411 = vadd.f32 0.0, %v3410
        %3412 = vmatmul.bf16.gmra.mxu0 %v3285
        %v3413 = vpop.f32.mrf.mxu0
        %v3414 = vadd.f32 0.0, %v3413
        %v3415 = vpop.f32.mrf.mxu0
        %v3416 = vadd.f32 0.0, %v3415
        %3417 = vmatmul.bf16.gmra.mxu0 %v3287
        %v3418 = vpop.f32.mrf.mxu0
        %v3419 = vadd.f32 0.0, %v3418
        %v3420 = vpop.f32.mrf.mxu0
        %v3421 = vadd.f32 0.0, %v3420
        %3422 = vmatmul.bf16.gmra.mxu0 %v3289
        %v3423 = vpop.f32.mrf.mxu0
        %v3424 = vadd.f32 0.0, %v3423
        %v3425 = vpop.f32.mrf.mxu0
        %v3426 = vadd.f32 0.0, %v3425
        %3427 = vmatmul.bf16.gmra.mxu0 %v3291
        %v3428 = vpop.f32.mrf.mxu0
        %v3429 = vadd.f32 0.0, %v3428
        %v3430 = vpop.f32.mrf.mxu0
        %v3431 = vadd.f32 0.0, %v3430
        %3432 = vmatmul.bf16.gmra.mxu0 %v3293
        %v3433 = vpop.f32.mrf.mxu0
        %v3434 = vadd.f32 0.0, %v3433
        %v3435 = vpop.f32.mrf.mxu0
        %v3436 = vadd.f32 0.0, %v3435
        %3437 = vmatmul.bf16.gmra.mxu0 %v3295
        %v3438 = vpop.f32.mrf.mxu0
        %v3439 = vadd.f32 0.0, %v3438
        %v3440 = vpop.f32.mrf.mxu0
        %v3441 = vadd.f32 0.0, %v3440
        %3442 = vmatmul.bf16.gmra.mxu0 %v3297
        %v3443 = vpop.f32.mrf.mxu0
        %v3444 = vadd.f32 0.0, %v3443
        %v3445 = vpop.f32.mrf.mxu0
        %v3446 = vadd.f32 0.0, %v3445
        %3447 = vmatmul.bf16.gmra.mxu0 %v3299
        %v3448 = vpop.f32.mrf.mxu0
        %v3449 = vadd.f32 0.0, %v3448
        %v3450 = vpop.f32.mrf.mxu0
        %v3451 = vadd.f32 0.0, %v3450
        %3452 = vmatmul.bf16.gmra.mxu0 %v3301
        %v3453 = vpop.f32.mrf.mxu0
        %v3454 = vadd.f32 0.0, %v3453
        %v3455 = vpop.f32.mrf.mxu0
        %v3456 = vadd.f32 0.0, %v3455
        %3457 = vmatmul.bf16.gmra.mxu0 %v3303
        %v3458 = vpop.f32.mrf.mxu0
        %v3459 = vadd.f32 0.0, %v3458
        %v3460 = vpop.f32.mrf.mxu0
        %v3461 = vadd.f32 0.0, %v3460
        %3462 = vmatmul.bf16.gmra.mxu0 %v3305
        %v3463 = vpop.f32.mrf.mxu0
        %v3464 = vadd.f32 0.0, %v3463
        %v3465 = vpop.f32.mrf.mxu0
        %v3466 = vadd.f32 0.0, %v3465
        %3467 = vmatmul.bf16.gmra.mxu0 %v3307
        %v3468 = vpop.f32.mrf.mxu0
        %v3469 = vadd.f32 0.0, %v3468
        %v3470 = vpop.f32.mrf.mxu0
        %v3471 = vadd.f32 0.0, %v3470
        %3472 = vdwg.mxu0
        %v3473 = vld [vmem:[#allocation3] sm:$0xff]
        %v3474 = vld [vmem:[#allocation3 + $0x8] sm:$0xff]
        %v3475 = vld [vmem:[#allocation3 + $0x10] sm:$0xff]
        %v3476 = vld [vmem:[#allocation3 + $0x18] sm:$0xff]
        %v3477 = vld [vmem:[#allocation3 + $0x20] sm:$0xff]
        %v3478 = vld [vmem:[#allocation3 + $0x28] sm:$0xff]
        %v3479 = vld [vmem:[#allocation3 + $0x30] sm:$0xff]
        %v3480 = vld [vmem:[#allocation3 + $0x38] sm:$0xff]
        %v3481 = vld [vmem:[#allocation3 + $0x40] sm:$0xff]
        %v3482 = vld [vmem:[#allocation3 + $0x48] sm:$0xff]
        %v3483 = vld [vmem:[#allocation3 + $0x50] sm:$0xff]
        %v3484 = vld [vmem:[#allocation3 + $0x58] sm:$0xff]
        %v3485 = vld [vmem:[#allocation3 + $0x60] sm:$0xff]
        %v3486 = vld [vmem:[#allocation3 + $0x68] sm:$0xff]
        %v3487 = vld [vmem:[#allocation3 + $0x70] sm:$0xff]
        %v3488 = vld [vmem:[#allocation3 + $0x78] sm:$0xff]
        %v3489 = vld [vmem:[#allocation3 + $0x80] sm:$0xff]
        %v3490 = vld [vmem:[#allocation3 + $0x88] sm:$0xff]
        %v3491 = vld [vmem:[#allocation3 + $0x90] sm:$0xff]
        %v3492 = vld [vmem:[#allocation3 + $0x98] sm:$0xff]
        %v3493 = vld [vmem:[#allocation3 + $0xa0] sm:$0xff]
        %v3494 = vld [vmem:[#allocation3 + $0xa8] sm:$0xff]
        %v3495 = vld [vmem:[#allocation3 + $0xb0] sm:$0xff]
        %v3496 = vld [vmem:[#allocation3 + $0xb8] sm:$0xff]
        %v3497 = vld [vmem:[#allocation3 + $0xc0] sm:$0xff]
        %v3498 = vld [vmem:[#allocation3 + $0xc8] sm:$0xff]
        %v3499 = vld [vmem:[#allocation3 + $0xd0] sm:$0xff]
        %v3500 = vld [vmem:[#allocation3 + $0xd8] sm:$0xff]
        %v3501 = vld [vmem:[#allocation3 + $0xe0] sm:$0xff]
        %v3502 = vld [vmem:[#allocation3 + $0xe8] sm:$0xff]
        %v3503 = vld [vmem:[#allocation3 + $0xf0] sm:$0xff]
        %v3504 = vld [vmem:[#allocation3 + $0xf8] sm:$0xff]
        %v3505 = vld [vmem:[#allocation3 + $0x100] sm:$0xff]
        %v3506 = vld [vmem:[#allocation3 + $0x108] sm:$0xff]
        %v3507 = vld [vmem:[#allocation3 + $0x110] sm:$0xff]
        %v3508 = vld [vmem:[#allocation3 + $0x118] sm:$0xff]
        %v3509 = vadd.f32 %v3473, %v3384
        %v3510 = vadd.f32 %v3474, %v3386
        %v3511 = vadd.f32 %v3475, %v3389
        %v3512 = vadd.f32 %v3476, %v3391
        %v3513 = vadd.f32 %v3477, %v3394
        %v3514 = vadd.f32 %v3478, %v3396
        %v3515 = vadd.f32 %v3479, %v3399
        %v3516 = vadd.f32 %v3480, %v3401
        %v3517 = vadd.f32 %v3481, %v3404
        %v3518 = vadd.f32 %v3482, %v3406
        %v3519 = vadd.f32 %v3483, %v3409
        %v3520 = vadd.f32 %v3484, %v3411
        %v3521 = vadd.f32 %v3485, %v3414
        %v3522 = vadd.f32 %v3486, %v3416
        %v3523 = vadd.f32 %v3487, %v3419
        %v3524 = vadd.f32 %v3488, %v3421
        %v3525 = vadd.f32 %v3489, %v3424
        %v3526 = vadd.f32 %v3490, %v3426
        %v3527 = vadd.f32 %v3491, %v3429
        %v3528 = vadd.f32 %v3492, %v3431
        %v3529 = vadd.f32 %v3493, %v3434
        %v3530 = vadd.f32 %v3494, %v3436
        %v3531 = vadd.f32 %v3495, %v3439
        %v3532 = vadd.f32 %v3496, %v3441
        %v3533 = vadd.f32 %v3497, %v3444
        %v3534 = vadd.f32 %v3498, %v3446
        %v3535 = vadd.f32 %v3499, %v3449
        %v3536 = vadd.f32 %v3500, %v3451
        %v3537 = vadd.f32 %v3501, %v3454
        %v3538 = vadd.f32 %v3502, %v3456
        %v3539 = vadd.f32 %v3503, %v3459
        %v3540 = vadd.f32 %v3504, %v3461
        %v3541 = vadd.f32 %v3505, %v3464
        %v3542 = vadd.f32 %v3506, %v3466
        %v3543 = vadd.f32 %v3507, %v3469
        %v3544 = vadd.f32 %v3508, %v3471
        %3545 = vst [vmem:[#allocation3] sm:$0xff] %v3509
        %3546 = vst [vmem:[#allocation3 + $0x8] sm:$0xff] %v3510
        %3547 = vst [vmem:[#allocation3 + $0x10] sm:$0xff] %v3511
        %3548 = vst [vmem:[#allocation3 + $0x18] sm:$0xff] %v3512
        %3549 = vst [vmem:[#allocation3 + $0x20] sm:$0xff] %v3513
        %3550 = vst [vmem:[#allocation3 + $0x28] sm:$0xff] %v3514
        %3551 = vst [vmem:[#allocation3 + $0x30] sm:$0xff] %v3515
        %3552 = vst [vmem:[#allocation3 + $0x38] sm:$0xff] %v3516
        %3553 = vst [vmem:[#allocation3 + $0x40] sm:$0xff] %v3517
        %3554 = vst [vmem:[#allocation3 + $0x48] sm:$0xff] %v3518
        %3555 = vst [vmem:[#allocation3 + $0x50] sm:$0xff] %v3519
        %3556 = vst [vmem:[#allocation3 + $0x58] sm:$0xff] %v3520
        %3557 = vst [vmem:[#allocation3 + $0x60] sm:$0xff] %v3521
        %3558 = vst [vmem:[#allocation3 + $0x68] sm:$0xff] %v3522
        %3559 = vst [vmem:[#allocation3 + $0x70] sm:$0xff] %v3523
        %3560 = vst [vmem:[#allocation3 + $0x78] sm:$0xff] %v3524
        %3561 = vst [vmem:[#allocation3 + $0x80] sm:$0xff] %v3525
        %3562 = vst [vmem:[#allocation3 + $0x88] sm:$0xff] %v3526
        %3563 = vst [vmem:[#allocation3 + $0x90] sm:$0xff] %v3527
        %3564 = vst [vmem:[#allocation3 + $0x98] sm:$0xff] %v3528
        %3565 = vst [vmem:[#allocation3 + $0xa0] sm:$0xff] %v3529
        %3566 = vst [vmem:[#allocation3 + $0xa8] sm:$0xff] %v3530
        %3567 = vst [vmem:[#allocation3 + $0xb0] sm:$0xff] %v3531
        %3568 = vst [vmem:[#allocation3 + $0xb8] sm:$0xff] %v3532
        %3569 = vst [vmem:[#allocation3 + $0xc0] sm:$0xff] %v3533
        %3570 = vst [vmem:[#allocation3 + $0xc8] sm:$0xff] %v3534
        %3571 = vst [vmem:[#allocation3 + $0xd0] sm:$0xff] %v3535
        %3572 = vst [vmem:[#allocation3 + $0xd8] sm:$0xff] %v3536
        %3573 = vst [vmem:[#allocation3 + $0xe0] sm:$0xff] %v3537
        %3574 = vst [vmem:[#allocation3 + $0xe8] sm:$0xff] %v3538
        %3575 = vst [vmem:[#allocation3 + $0xf0] sm:$0xff] %v3539
        %3576 = vst [vmem:[#allocation3 + $0xf8] sm:$0xff] %v3540
        %3577 = vst [vmem:[#allocation3 + $0x100] sm:$0xff] %v3541
        %3578 = vst [vmem:[#allocation3 + $0x108] sm:$0xff] %v3542
        %3579 = vst [vmem:[#allocation3 + $0x110] sm:$0xff] %v3543
        %3580 = vst [vmem:[#allocation3 + $0x118] sm:$0xff] %v3544
        %v3581 = vld [vmem:[%s239 + $0x10] sm:$0xc]
        %v3582 = vld [vmem:[%s239 + $0x14] sm:$0xf]
        %v3583 = vld [vmem:[%s239 + $0x18] sm:$0xf]
        %v3584 = vld [vmem:[%s239 + $0x1c] sm:$0xf]
        %v3585 = vld [vmem:[%s239 + $0x20] sm:$0xf]
        %v3586 = vld [vmem:[%s239 + $0x24] sm:$0xf]
        %v3587 = vld [vmem:[%s239 + $0x28] sm:$0xf]
        %v3588 = vld [vmem:[%s239 + $0x2c] sm:$0xf]
        %v3589 = vld [vmem:[%s239 + $0x30] sm:$0xf]
        %v3590 = vld [vmem:[%s239 + $0x34] sm:$0xf]
        %v3591 = vld [vmem:[%s239 + $0x38] sm:$0xf]
        %v3592 = vld [vmem:[%s239 + $0x3c] sm:$0xf]
        %v3593 = vld [vmem:[%s239 + $0x40] sm:$0xf]
        %v3594 = vld [vmem:[%s239 + $0x44] sm:$0xf]
        %v3595 = vld [vmem:[%s239 + $0x48] sm:$0xf]
        %v3596 = vld [vmem:[%s239 + $0x4c] sm:$0xf]
        %v3597 = vld [vmem:[%s239 + $0x50] sm:$0xf]
        %v3598 = vld [vmem:[%s239 + $0x54] sm:$0xf]
        %v3599 = vld [vmem:[%s239 + $0x58] sm:$0xf]
        %v3600 = vld [vmem:[%s239 + $0x5c] sm:$0xf]
        %v3601 = vld [vmem:[%s239 + $0x60] sm:$0xf]
        %v3602 = vld [vmem:[%s239 + $0x64] sm:$0xf]
        %v3603 = vld [vmem:[%s239 + $0x68] sm:$0xf]
        %v3604 = vld [vmem:[%s239 + $0x6c] sm:$0xf]
        %v3605 = vld [vmem:[%s239 + $0x70] sm:$0xf]
        %v3606 = vld [vmem:[%s239 + $0x74] sm:$0xf]
        %v3607 = vld [vmem:[%s239 + $0x78] sm:$0xf]
        %v3608 = vld [vmem:[%s239 + $0x7c] sm:$0xf]
        %v3609 = vld [vmem:[%s239 + $0x80] sm:$0xf]
        %v3610 = vld [vmem:[%s239 + $0x84] sm:$0xf]
        %v3611 = vld [vmem:[%s239 + $0x88] sm:$0xf]
        %v3612 = vld [vmem:[%s239 + $0x8c] sm:$0xf]
        %v3613 = vld [vmem:[%s239 + $0x90] sm:$0xf]
        %v3614 = vld [vmem:[%s239 + $0x94] sm:$0xf]
        %v3615 = vld [vmem:[%s239 + $0x98] sm:$0xf]
        %v3616 = vld [vmem:[%s239 + $0x9c] sm:$0xf]
        %v3617 = vld [vmem:[%s239 + $0xa0] sm:$0x7]
        %s3618 = scalar_lea.vmem %s1, 448
        %v3619 = vld [vmem:[%s3618] sm:$0xf]
        %v3620 = vld [vmem:[%s3618 + $0x4] sm:$0xf]
        %v3621 = vld [vmem:[%s3618 + $0x8] sm:$0xf]
        %v3622 = vld [vmem:[%s3618 + $0xc] sm:$0xf]
        %v3623 = vld [vmem:[%s3618 + $0x10] sm:$0xf]
        %v3624 = vld [vmem:[%s3618 + $0x14] sm:$0xf]
        %v3625 = vld [vmem:[%s3618 + $0x18] sm:$0xf]
        %v3626 = vld [vmem:[%s3618 + $0x1c] sm:$0xf]
        %v3627 = vld [vmem:[%s3618 + $0x20] sm:$0xf]
        %v3628 = vld [vmem:[%s3618 + $0x24] sm:$0xf]
        %v3629 = vld [vmem:[%s3618 + $0x28] sm:$0xf]
        %v3630 = vld [vmem:[%s3618 + $0x2c] sm:$0xf]
        %v3631 = vld [vmem:[%s3618 + $0x30] sm:$0xf]
        %v3632 = vld [vmem:[%s3618 + $0x34] sm:$0xf]
        %v3633 = vld [vmem:[%s3618 + $0x38] sm:$0xf]
        %v3634 = vld [vmem:[%s3618 + $0x3c] sm:$0xf]
        %v3672 = vunpack.c.l.b16 %v3581
        %v3673 = vunpack.c.l.b16 %v3582
        %v3674 = vunpack.c.l.b16 %v3583
        %v3675 = vunpack.c.l.b16 %v3584
        %v3676 = vunpack.c.l.b16 %v3585
        %v3677 = vunpack.c.l.b16 %v3586
        %v3678 = vunpack.c.l.b16 %v3587
        %v3679 = vunpack.c.l.b16 %v3588
        %v3680 = vunpack.c.l.b16 %v3589
        %v3681 = vunpack.c.l.b16 %v3590
        %v3682 = vunpack.c.l.b16 %v3591
        %v3683 = vunpack.c.l.b16 %v3592
        %v3684 = vunpack.c.l.b16 %v3593
        %v3685 = vunpack.c.l.b16 %v3594
        %v3686 = vunpack.c.l.b16 %v3595
        %v3687 = vunpack.c.l.b16 %v3596
        %v3688 = vunpack.c.l.b16 %v3597
        %v3689 = vunpack.c.l.b16 %v3598
        %v3690 = vunpack.c.l.b16 %v3599
        %v3691 = vunpack.c.l.b16 %v3600
        %v3692 = vunpack.c.l.b16 %v3601
        %v3693 = vunpack.c.l.b16 %v3602
        %v3694 = vunpack.c.l.b16 %v3603
        %v3695 = vunpack.c.l.b16 %v3604
        %v3696 = vunpack.c.l.b16 %v3605
        %v3697 = vunpack.c.l.b16 %v3606
        %v3698 = vunpack.c.l.b16 %v3607
        %v3699 = vunpack.c.l.b16 %v3608
        %v3700 = vunpack.c.l.b16 %v3609
        %v3701 = vunpack.c.l.b16 %v3610
        %v3702 = vunpack.c.l.b16 %v3611
        %v3703 = vunpack.c.l.b16 %v3612
        %v3704 = vunpack.c.l.b16 %v3613
        %v3705 = vunpack.c.l.b16 %v3614
        %v3706 = vunpack.c.l.b16 %v3615
        %v3707 = vunpack.c.l.b16 %v3616
        %v3708 = vunpack.c.l.b16 %v3617
        %v3709 = vpack.c.b16 %v3673, %v3672
        %v3710 = vpack.c.b16 %v3675, %v3674
        %v3711 = vpack.c.b16 %v3677, %v3676
        %v3712 = vpack.c.b16 %v3679, %v3678
        %v3713 = vpack.c.b16 %v3681, %v3680
        %v3714 = vpack.c.b16 %v3683, %v3682
        %v3715 = vpack.c.b16 %v3685, %v3684
        %v3716 = vpack.c.b16 %v3687, %v3686
        %v3717 = vpack.c.b16 %v3689, %v3688
        %v3718 = vpack.c.b16 %v3691, %v3690
        %v3719 = vpack.c.b16 %v3693, %v3692
        %v3720 = vpack.c.b16 %v3695, %v3694
        %v3721 = vpack.c.b16 %v3697, %v3696
        %v3722 = vpack.c.b16 %v3699, %v3698
        %v3723 = vpack.c.b16 %v3701, %v3700
        %v3724 = vpack.c.b16 %v3703, %v3702
        %v3725 = vpack.c.b16 %v3705, %v3704
        %v3726 = vpack.c.b16 %v3707, %v3706
        %v3727 = vpack.c.b16 %v3708, %v3708
        %vm3728 = vsmask.f32 5376
        %v3730 = vshrl.u32 %v3709, 16
        %v3732 = vrot.slane %v3730, 2
        %v3733 = vshll.u32 %v3709, 16
        %v3735 = vrot.slane %v3733, 3
        %v3736 = vor.u32 %v3732, %v3735
        %v3738 = vshrl.u32 %v3710, 16
        %v3740 = vrot.slane %v3738, 2
        %v3741 = vshll.u32 %v3710, 16
        %v3743 = vrot.slane %v3741, 3
        %v3744 = vor.u32 %v3740, %v3743
        %v3745 = vsel %vm3728, %v3736, %v3744
        %v3747 = vshrl.u32 %v3711, 16
        %v3749 = vrot.slane %v3747, 2
        %v3750 = vshll.u32 %v3711, 16
        %v3752 = vrot.slane %v3750, 3
        %v3753 = vor.u32 %v3749, %v3752
        %v3754 = vsel %vm3728, %v3744, %v3753
        %v3756 = vshrl.u32 %v3712, 16
        %v3758 = vrot.slane %v3756, 2
        %v3759 = vshll.u32 %v3712, 16
        %v3761 = vrot.slane %v3759, 3
        %v3762 = vor.u32 %v3758, %v3761
        %v3763 = vsel %vm3728, %v3753, %v3762
        %v3765 = vshrl.u32 %v3713, 16
        %v3767 = vrot.slane %v3765, 2
        %v3768 = vshll.u32 %v3713, 16
        %v3770 = vrot.slane %v3768, 3
        %v3771 = vor.u32 %v3767, %v3770
        %v3772 = vsel %vm3728, %v3762, %v3771
        %v3774 = vshrl.u32 %v3714, 16
        %v3776 = vrot.slane %v3774, 2
        %v3777 = vshll.u32 %v3714, 16
        %v3779 = vrot.slane %v3777, 3
        %v3780 = vor.u32 %v3776, %v3779
        %v3781 = vsel %vm3728, %v3771, %v3780
        %v3783 = vshrl.u32 %v3715, 16
        %v3785 = vrot.slane %v3783, 2
        %v3786 = vshll.u32 %v3715, 16
        %v3788 = vrot.slane %v3786, 3
        %v3789 = vor.u32 %v3785, %v3788
        %v3790 = vsel %vm3728, %v3780, %v3789
        %v3792 = vshrl.u32 %v3716, 16
        %v3794 = vrot.slane %v3792, 2
        %v3795 = vshll.u32 %v3716, 16
        %v3797 = vrot.slane %v3795, 3
        %v3798 = vor.u32 %v3794, %v3797
        %v3799 = vsel %vm3728, %v3789, %v3798
        %v3801 = vshrl.u32 %v3717, 16
        %v3803 = vrot.slane %v3801, 2
        %v3804 = vshll.u32 %v3717, 16
        %v3806 = vrot.slane %v3804, 3
        %v3807 = vor.u32 %v3803, %v3806
        %v3808 = vsel %vm3728, %v3798, %v3807
        %v3810 = vshrl.u32 %v3718, 16
        %v3812 = vrot.slane %v3810, 2
        %v3813 = vshll.u32 %v3718, 16
        %v3815 = vrot.slane %v3813, 3
        %v3816 = vor.u32 %v3812, %v3815
        %v3817 = vsel %vm3728, %v3807, %v3816
        %v3819 = vshrl.u32 %v3719, 16
        %v3821 = vrot.slane %v3819, 2
        %v3822 = vshll.u32 %v3719, 16
        %v3824 = vrot.slane %v3822, 3
        %v3825 = vor.u32 %v3821, %v3824
        %v3826 = vsel %vm3728, %v3816, %v3825
        %v3828 = vshrl.u32 %v3720, 16
        %v3830 = vrot.slane %v3828, 2
        %v3831 = vshll.u32 %v3720, 16
        %v3833 = vrot.slane %v3831, 3
        %v3834 = vor.u32 %v3830, %v3833
        %v3835 = vsel %vm3728, %v3825, %v3834
        %v3837 = vshrl.u32 %v3721, 16
        %v3839 = vrot.slane %v3837, 2
        %v3840 = vshll.u32 %v3721, 16
        %v3842 = vrot.slane %v3840, 3
        %v3843 = vor.u32 %v3839, %v3842
        %v3844 = vsel %vm3728, %v3834, %v3843
        %v3846 = vshrl.u32 %v3722, 16
        %v3848 = vrot.slane %v3846, 2
        %v3849 = vshll.u32 %v3722, 16
        %v3851 = vrot.slane %v3849, 3
        %v3852 = vor.u32 %v3848, %v3851
        %v3853 = vsel %vm3728, %v3843, %v3852
        %v3855 = vshrl.u32 %v3723, 16
        %v3857 = vrot.slane %v3855, 2
        %v3858 = vshll.u32 %v3723, 16
        %v3860 = vrot.slane %v3858, 3
        %v3861 = vor.u32 %v3857, %v3860
        %v3862 = vsel %vm3728, %v3852, %v3861
        %v3864 = vshrl.u32 %v3724, 16
        %v3866 = vrot.slane %v3864, 2
        %v3867 = vshll.u32 %v3724, 16
        %v3869 = vrot.slane %v3867, 3
        %v3870 = vor.u32 %v3866, %v3869
        %v3871 = vsel %vm3728, %v3861, %v3870
        %v3873 = vshrl.u32 %v3725, 16
        %v3875 = vrot.slane %v3873, 2
        %v3876 = vshll.u32 %v3725, 16
        %v3878 = vrot.slane %v3876, 3
        %v3879 = vor.u32 %v3875, %v3878
        %v3880 = vsel %vm3728, %v3870, %v3879
        %v3882 = vshrl.u32 %v3726, 16
        %v3884 = vrot.slane %v3882, 2
        %v3885 = vshll.u32 %v3726, 16
        %v3887 = vrot.slane %v3885, 3
        %v3888 = vor.u32 %v3884, %v3887
        %v3889 = vsel %vm3728, %v3879, %v3888
        %v3891 = vshrl.u32 %v3727, 16
        %v3893 = vrot.slane %v3891, 2
        %v3894 = vshll.u32 %v3727, 16
        %v3896 = vrot.slane %v3894, 3
        %v3897 = vor.u32 %v3893, %v3896
        %v3898 = vsel %vm3728, %v3888, %v3897
        %v3933 = vunpack.c.l.b16 %v3619
        %v3934 = vunpack.c.l.b16 %v3620
        %v3935 = vunpack.c.l.b16 %v3621
        %v3936 = vunpack.c.l.b16 %v3622
        %v3937 = vunpack.c.l.b16 %v3623
        %v3938 = vunpack.c.l.b16 %v3624
        %v3939 = vunpack.c.l.b16 %v3625
        %v3940 = vunpack.c.l.b16 %v3626
        %v3941 = vunpack.c.l.b16 %v3627
        %v3942 = vunpack.c.l.b16 %v3628
        %v3943 = vunpack.c.l.b16 %v3629
        %v3944 = vunpack.c.l.b16 %v3630
        %v3945 = vunpack.c.l.b16 %v3631
        %v3946 = vunpack.c.l.b16 %v3632
        %v3947 = vunpack.c.l.b16 %v3633
        %v3948 = vunpack.c.l.b16 %v3634
        %v3949 = vpack.c.b16 %v3934, %v3933
        %v3950 = vpack.c.b16 %v3936, %v3935
        %v3951 = vpack.c.b16 %v3938, %v3937
        %v3952 = vpack.c.b16 %v3940, %v3939
        %v3953 = vpack.c.b16 %v3942, %v3941
        %v3954 = vpack.c.b16 %v3944, %v3943
        %v3955 = vpack.c.b16 %v3946, %v3945
        %v3956 = vpack.c.b16 %v3948, %v3947
        %3965 = vmatpush.bf16.msra.mxu0 %v3956
        %3966 = vmatpush.bf16.msra.mxu0 %v3955
        %3967 = vmatpush.bf16.msra.mxu0 %v3954
        %3968 = vmatpush.bf16.msra.mxu0 %v3953
        %3969 = vmatpush.bf16.msra.mxu0 %v3952
        %3970 = vmatpush.bf16.msra.mxu0 %v3951
        %3971 = vmatpush.bf16.msra.mxu0 %v3950
        %3972 = vmatpush.bf16.msra.mxu0 %v3949
        %3973 = vmatmul.bf16.gmra.mxu0 %v3745
        %v3974 = vpop.f32.mrf.mxu0
        %v3975 = vadd.f32 0.0, %v3974
        %v3976 = vpop.f32.mrf.mxu0
        %v3977 = vadd.f32 0.0, %v3976
        %3978 = vmatmul.bf16.gmra.mxu0 %v3754
        %v3979 = vpop.f32.mrf.mxu0
        %v3980 = vadd.f32 0.0, %v3979
        %v3981 = vpop.f32.mrf.mxu0
        %v3982 = vadd.f32 0.0, %v3981
        %3983 = vmatmul.bf16.gmra.mxu0 %v3763
        %v3984 = vpop.f32.mrf.mxu0
        %v3985 = vadd.f32 0.0, %v3984
        %v3986 = vpop.f32.mrf.mxu0
        %v3987 = vadd.f32 0.0, %v3986
        %3988 = vmatmul.bf16.gmra.mxu0 %v3772
        %v3989 = vpop.f32.mrf.mxu0
        %v3990 = vadd.f32 0.0, %v3989
        %v3991 = vpop.f32.mrf.mxu0
        %v3992 = vadd.f32 0.0, %v3991
        %3993 = vmatmul.bf16.gmra.mxu0 %v3781
        %v3994 = vpop.f32.mrf.mxu0
        %v3995 = vadd.f32 0.0, %v3994
        %v3996 = vpop.f32.mrf.mxu0
        %v3997 = vadd.f32 0.0, %v3996
        %3998 = vmatmul.bf16.gmra.mxu0 %v3790
        %v3999 = vpop.f32.mrf.mxu0
        %v4000 = vadd.f32 0.0, %v3999
        %v4001 = vpop.f32.mrf.mxu0
        %v4002 = vadd.f32 0.0, %v4001
        %4003 = vmatmul.bf16.gmra.mxu0 %v3799
        %v4004 = vpop.f32.mrf.mxu0
        %v4005 = vadd.f32 0.0, %v4004
        %v4006 = vpop.f32.mrf.mxu0
        %v4007 = vadd.f32 0.0, %v4006
        %4008 = vmatmul.bf16.gmra.mxu0 %v3808
        %v4009 = vpop.f32.mrf.mxu0
        %v4010 = vadd.f32 0.0, %v4009
        %v4011 = vpop.f32.mrf.mxu0
        %v4012 = vadd.f32 0.0, %v4011
        %4013 = vmatmul.bf16.gmra.mxu0 %v3817
        %v4014 = vpop.f32.mrf.mxu0
        %v4015 = vadd.f32 0.0, %v4014
        %v4016 = vpop.f32.mrf.mxu0
        %v4017 = vadd.f32 0.0, %v4016
        %4018 = vmatmul.bf16.gmra.mxu0 %v3826
        %v4019 = vpop.f32.mrf.mxu0
        %v4020 = vadd.f32 0.0, %v4019
        %v4021 = vpop.f32.mrf.mxu0
        %v4022 = vadd.f32 0.0, %v4021
        %4023 = vmatmul.bf16.gmra.mxu0 %v3835
        %v4024 = vpop.f32.mrf.mxu0
        %v4025 = vadd.f32 0.0, %v4024
        %v4026 = vpop.f32.mrf.mxu0
        %v4027 = vadd.f32 0.0, %v4026
        %4028 = vmatmul.bf16.gmra.mxu0 %v3844
        %v4029 = vpop.f32.mrf.mxu0
        %v4030 = vadd.f32 0.0, %v4029
        %v4031 = vpop.f32.mrf.mxu0
        %v4032 = vadd.f32 0.0, %v4031
        %4033 = vmatmul.bf16.gmra.mxu0 %v3853
        %v4034 = vpop.f32.mrf.mxu0
        %v4035 = vadd.f32 0.0, %v4034
        %v4036 = vpop.f32.mrf.mxu0
        %v4037 = vadd.f32 0.0, %v4036
        %4038 = vmatmul.bf16.gmra.mxu0 %v3862
        %v4039 = vpop.f32.mrf.mxu0
        %v4040 = vadd.f32 0.0, %v4039
        %v4041 = vpop.f32.mrf.mxu0
        %v4042 = vadd.f32 0.0, %v4041
        %4043 = vmatmul.bf16.gmra.mxu0 %v3871
        %v4044 = vpop.f32.mrf.mxu0
        %v4045 = vadd.f32 0.0, %v4044
        %v4046 = vpop.f32.mrf.mxu0
        %v4047 = vadd.f32 0.0, %v4046
        %4048 = vmatmul.bf16.gmra.mxu0 %v3880
        %v4049 = vpop.f32.mrf.mxu0
        %v4050 = vadd.f32 0.0, %v4049
        %v4051 = vpop.f32.mrf.mxu0
        %v4052 = vadd.f32 0.0, %v4051
        %4053 = vmatmul.bf16.gmra.mxu0 %v3889
        %v4054 = vpop.f32.mrf.mxu0
        %v4055 = vadd.f32 0.0, %v4054
        %v4056 = vpop.f32.mrf.mxu0
        %v4057 = vadd.f32 0.0, %v4056
        %4058 = vmatmul.bf16.gmra.mxu0 %v3898
        %v4059 = vpop.f32.mrf.mxu0
        %v4060 = vadd.f32 0.0, %v4059
        %v4061 = vpop.f32.mrf.mxu0
        %v4062 = vadd.f32 0.0, %v4061
        %4063 = vdwg.mxu0
        %v4064 = vld [vmem:[#allocation3] sm:$0xff]
        %v4065 = vld [vmem:[#allocation3 + $0x8] sm:$0xff]
        %v4066 = vld [vmem:[#allocation3 + $0x10] sm:$0xff]
        %v4067 = vld [vmem:[#allocation3 + $0x18] sm:$0xff]
        %v4068 = vld [vmem:[#allocation3 + $0x20] sm:$0xff]
        %v4069 = vld [vmem:[#allocation3 + $0x28] sm:$0xff]
        %v4070 = vld [vmem:[#allocation3 + $0x30] sm:$0xff]
        %v4071 = vld [vmem:[#allocation3 + $0x38] sm:$0xff]
        %v4072 = vld [vmem:[#allocation3 + $0x40] sm:$0xff]
        %v4073 = vld [vmem:[#allocation3 + $0x48] sm:$0xff]
        %v4074 = vld [vmem:[#allocation3 + $0x50] sm:$0xff]
        %v4075 = vld [vmem:[#allocation3 + $0x58] sm:$0xff]
        %v4076 = vld [vmem:[#allocation3 + $0x60] sm:$0xff]
        %v4077 = vld [vmem:[#allocation3 + $0x68] sm:$0xff]
        %v4078 = vld [vmem:[#allocation3 + $0x70] sm:$0xff]
        %v4079 = vld [vmem:[#allocation3 + $0x78] sm:$0xff]
        %v4080 = vld [vmem:[#allocation3 + $0x80] sm:$0xff]
        %v4081 = vld [vmem:[#allocation3 + $0x88] sm:$0xff]
        %v4082 = vld [vmem:[#allocation3 + $0x90] sm:$0xff]
        %v4083 = vld [vmem:[#allocation3 + $0x98] sm:$0xff]
        %v4084 = vld [vmem:[#allocation3 + $0xa0] sm:$0xff]
        %v4085 = vld [vmem:[#allocation3 + $0xa8] sm:$0xff]
        %v4086 = vld [vmem:[#allocation3 + $0xb0] sm:$0xff]
        %v4087 = vld [vmem:[#allocation3 + $0xb8] sm:$0xff]
        %v4088 = vld [vmem:[#allocation3 + $0xc0] sm:$0xff]
        %v4089 = vld [vmem:[#allocation3 + $0xc8] sm:$0xff]
        %v4090 = vld [vmem:[#allocation3 + $0xd0] sm:$0xff]
        %v4091 = vld [vmem:[#allocation3 + $0xd8] sm:$0xff]
        %v4092 = vld [vmem:[#allocation3 + $0xe0] sm:$0xff]
        %v4093 = vld [vmem:[#allocation3 + $0xe8] sm:$0xff]
        %v4094 = vld [vmem:[#allocation3 + $0xf0] sm:$0xff]
        %v4095 = vld [vmem:[#allocation3 + $0xf8] sm:$0xff]
        %v4096 = vld [vmem:[#allocation3 + $0x100] sm:$0xff]
        %v4097 = vld [vmem:[#allocation3 + $0x108] sm:$0xff]
        %v4098 = vld [vmem:[#allocation3 + $0x110] sm:$0xff]
        %v4099 = vld [vmem:[#allocation3 + $0x118] sm:$0xff]
        %v4100 = vadd.f32 %v4064, %v3975
        %v4101 = vadd.f32 %v4065, %v3977
        %v4102 = vadd.f32 %v4066, %v3980
        %v4103 = vadd.f32 %v4067, %v3982
        %v4104 = vadd.f32 %v4068, %v3985
        %v4105 = vadd.f32 %v4069, %v3987
        %v4106 = vadd.f32 %v4070, %v3990
        %v4107 = vadd.f32 %v4071, %v3992
        %v4108 = vadd.f32 %v4072, %v3995
        %v4109 = vadd.f32 %v4073, %v3997
        %v4110 = vadd.f32 %v4074, %v4000
        %v4111 = vadd.f32 %v4075, %v4002
        %v4112 = vadd.f32 %v4076, %v4005
        %v4113 = vadd.f32 %v4077, %v4007
        %v4114 = vadd.f32 %v4078, %v4010
        %v4115 = vadd.f32 %v4079, %v4012
        %v4116 = vadd.f32 %v4080, %v4015
        %v4117 = vadd.f32 %v4081, %v4017
        %v4118 = vadd.f32 %v4082, %v4020
        %v4119 = vadd.f32 %v4083, %v4022
        %v4120 = vadd.f32 %v4084, %v4025
        %v4121 = vadd.f32 %v4085, %v4027
        %v4122 = vadd.f32 %v4086, %v4030
        %v4123 = vadd.f32 %v4087, %v4032
        %v4124 = vadd.f32 %v4088, %v4035
        %v4125 = vadd.f32 %v4089, %v4037
        %v4126 = vadd.f32 %v4090, %v4040
        %v4127 = vadd.f32 %v4091, %v4042
        %v4128 = vadd.f32 %v4092, %v4045
        %v4129 = vadd.f32 %v4093, %v4047
        %v4130 = vadd.f32 %v4094, %v4050
        %v4131 = vadd.f32 %v4095, %v4052
        %v4132 = vadd.f32 %v4096, %v4055
        %v4133 = vadd.f32 %v4097, %v4057
        %v4134 = vadd.f32 %v4098, %v4060
        %v4135 = vadd.f32 %v4099, %v4062
        %4136 = vst [vmem:[#allocation3] sm:$0xff] %v4100
        %4137 = vst [vmem:[#allocation3 + $0x8] sm:$0xff] %v4101
        %4138 = vst [vmem:[#allocation3 + $0x10] sm:$0xff] %v4102
        %4139 = vst [vmem:[#allocation3 + $0x18] sm:$0xff] %v4103
        %4140 = vst [vmem:[#allocation3 + $0x20] sm:$0xff] %v4104
        %4141 = vst [vmem:[#allocation3 + $0x28] sm:$0xff] %v4105
        %4142 = vst [vmem:[#allocation3 + $0x30] sm:$0xff] %v4106
        %4143 = vst [vmem:[#allocation3 + $0x38] sm:$0xff] %v4107
        %4144 = vst [vmem:[#allocation3 + $0x40] sm:$0xff] %v4108
        %4145 = vst [vmem:[#allocation3 + $0x48] sm:$0xff] %v4109
        %4146 = vst [vmem:[#allocation3 + $0x50] sm:$0xff] %v4110
        %4147 = vst [vmem:[#allocation3 + $0x58] sm:$0xff] %v4111
        %4148 = vst [vmem:[#allocation3 + $0x60] sm:$0xff] %v4112
        %4149 = vst [vmem:[#allocation3 + $0x68] sm:$0xff] %v4113
        %4150 = vst [vmem:[#allocation3 + $0x70] sm:$0xff] %v4114
        %4151 = vst [vmem:[#allocation3 + $0x78] sm:$0xff] %v4115
        %4152 = vst [vmem:[#allocation3 + $0x80] sm:$0xff] %v4116
        %4153 = vst [vmem:[#allocation3 + $0x88] sm:$0xff] %v4117
        %4154 = vst [vmem:[#allocation3 + $0x90] sm:$0xff] %v4118
        %4155 = vst [vmem:[#allocation3 + $0x98] sm:$0xff] %v4119
        %4156 = vst [vmem:[#allocation3 + $0xa0] sm:$0xff] %v4120
        %4157 = vst [vmem:[#allocation3 + $0xa8] sm:$0xff] %v4121
        %4158 = vst [vmem:[#allocation3 + $0xb0] sm:$0xff] %v4122
        %4159 = vst [vmem:[#allocation3 + $0xb8] sm:$0xff] %v4123
        %4160 = vst [vmem:[#allocation3 + $0xc0] sm:$0xff] %v4124
        %4161 = vst [vmem:[#allocation3 + $0xc8] sm:$0xff] %v4125
        %4162 = vst [vmem:[#allocation3 + $0xd0] sm:$0xff] %v4126
        %4163 = vst [vmem:[#allocation3 + $0xd8] sm:$0xff] %v4127
        %4164 = vst [vmem:[#allocation3 + $0xe0] sm:$0xff] %v4128
        %4165 = vst [vmem:[#allocation3 + $0xe8] sm:$0xff] %v4129
        %4166 = vst [vmem:[#allocation3 + $0xf0] sm:$0xff] %v4130
        %4167 = vst [vmem:[#allocation3 + $0xf8] sm:$0xff] %v4131
        %4168 = vst [vmem:[#allocation3 + $0x100] sm:$0xff] %v4132
        %4169 = vst [vmem:[#allocation3 + $0x108] sm:$0xff] %v4133
        %4170 = vst [vmem:[#allocation3 + $0x110] sm:$0xff] %v4134
        %4171 = vst [vmem:[#allocation3 + $0x118] sm:$0xff] %v4135
        %v4172 = vld [vmem:[%s239 + $0x10] sm:$0x8]
        %v4173 = vld [vmem:[%s239 + $0x14] sm:$0xf]
        %v4174 = vld [vmem:[%s239 + $0x18] sm:$0xf]
        %v4175 = vld [vmem:[%s239 + $0x1c] sm:$0xf]
        %v4176 = vld [vmem:[%s239 + $0x20] sm:$0xf]
        %v4177 = vld [vmem:[%s239 + $0x24] sm:$0xf]
        %v4178 = vld [vmem:[%s239 + $0x28] sm:$0xf]
        %v4179 = vld [vmem:[%s239 + $0x2c] sm:$0xf]
        %v4180 = vld [vmem:[%s239 + $0x30] sm:$0xf]
        %v4181 = vld [vmem:[%s239 + $0x34] sm:$0xf]
        %v4182 = vld [vmem:[%s239 + $0x38] sm:$0xf]
        %v4183 = vld [vmem:[%s239 + $0x3c] sm:$0xf]
        %v4184 = vld [vmem:[%s239 + $0x40] sm:$0xf]
        %v4185 = vld [vmem:[%s239 + $0x44] sm:$0xf]
        %v4186 = vld [vmem:[%s239 + $0x48] sm:$0xf]
        %v4187 = vld [vmem:[%s239 + $0x4c] sm:$0xf]
        %v4188 = vld [vmem:[%s239 + $0x50] sm:$0xf]
        %v4189 = vld [vmem:[%s239 + $0x54] sm:$0xf]
        %v4190 = vld [vmem:[%s239 + $0x58] sm:$0xf]
        %v4191 = vld [vmem:[%s239 + $0x5c] sm:$0xf]
        %v4192 = vld [vmem:[%s239 + $0x60] sm:$0xf]
        %v4193 = vld [vmem:[%s239 + $0x64] sm:$0xf]
        %v4194 = vld [vmem:[%s239 + $0x68] sm:$0xf]
        %v4195 = vld [vmem:[%s239 + $0x6c] sm:$0xf]
        %v4196 = vld [vmem:[%s239 + $0x70] sm:$0xf]
        %v4197 = vld [vmem:[%s239 + $0x74] sm:$0xf]
        %v4198 = vld [vmem:[%s239 + $0x78] sm:$0xf]
        %v4199 = vld [vmem:[%s239 + $0x7c] sm:$0xf]
        %v4200 = vld [vmem:[%s239 + $0x80] sm:$0xf]
        %v4201 = vld [vmem:[%s239 + $0x84] sm:$0xf]
        %v4202 = vld [vmem:[%s239 + $0x88] sm:$0xf]
        %v4203 = vld [vmem:[%s239 + $0x8c] sm:$0xf]
        %v4204 = vld [vmem:[%s239 + $0x90] sm:$0xf]
        %v4205 = vld [vmem:[%s239 + $0x94] sm:$0xf]
        %v4206 = vld [vmem:[%s239 + $0x98] sm:$0xf]
        %v4207 = vld [vmem:[%s239 + $0x9c] sm:$0xf]
        %v4208 = vld [vmem:[%s239 + $0xa0] sm:$0x7]
        %s4209 = scalar_lea.vmem %s1, 512
        %v4210 = vld [vmem:[%s4209] sm:$0xf]
        %v4211 = vld [vmem:[%s4209 + $0x4] sm:$0xf]
        %v4212 = vld [vmem:[%s4209 + $0x8] sm:$0xf]
        %v4213 = vld [vmem:[%s4209 + $0xc] sm:$0xf]
        %v4214 = vld [vmem:[%s4209 + $0x10] sm:$0xf]
        %v4215 = vld [vmem:[%s4209 + $0x14] sm:$0xf]
        %v4216 = vld [vmem:[%s4209 + $0x18] sm:$0xf]
        %v4217 = vld [vmem:[%s4209 + $0x1c] sm:$0xf]
        %v4218 = vld [vmem:[%s4209 + $0x20] sm:$0xf]
        %v4219 = vld [vmem:[%s4209 + $0x24] sm:$0xf]
        %v4220 = vld [vmem:[%s4209 + $0x28] sm:$0xf]
        %v4221 = vld [vmem:[%s4209 + $0x2c] sm:$0xf]
        %v4222 = vld [vmem:[%s4209 + $0x30] sm:$0xf]
        %v4223 = vld [vmem:[%s4209 + $0x34] sm:$0xf]
        %v4224 = vld [vmem:[%s4209 + $0x38] sm:$0xf]
        %v4225 = vld [vmem:[%s4209 + $0x3c] sm:$0xf]
        %v4263 = vunpack.c.l.b16 %v4172
        %v4264 = vunpack.c.l.b16 %v4173
        %v4265 = vunpack.c.l.b16 %v4174
        %v4266 = vunpack.c.l.b16 %v4175
        %v4267 = vunpack.c.l.b16 %v4176
        %v4268 = vunpack.c.l.b16 %v4177
        %v4269 = vunpack.c.l.b16 %v4178
        %v4270 = vunpack.c.l.b16 %v4179
        %v4271 = vunpack.c.l.b16 %v4180
        %v4272 = vunpack.c.l.b16 %v4181
        %v4273 = vunpack.c.l.b16 %v4182
        %v4274 = vunpack.c.l.b16 %v4183
        %v4275 = vunpack.c.l.b16 %v4184
        %v4276 = vunpack.c.l.b16 %v4185
        %v4277 = vunpack.c.l.b16 %v4186
        %v4278 = vunpack.c.l.b16 %v4187
        %v4279 = vunpack.c.l.b16 %v4188
        %v4280 = vunpack.c.l.b16 %v4189
        %v4281 = vunpack.c.l.b16 %v4190
        %v4282 = vunpack.c.l.b16 %v4191
        %v4283 = vunpack.c.l.b16 %v4192
        %v4284 = vunpack.c.l.b16 %v4193
        %v4285 = vunpack.c.l.b16 %v4194
        %v4286 = vunpack.c.l.b16 %v4195
        %v4287 = vunpack.c.l.b16 %v4196
        %v4288 = vunpack.c.l.b16 %v4197
        %v4289 = vunpack.c.l.b16 %v4198
        %v4290 = vunpack.c.l.b16 %v4199
        %v4291 = vunpack.c.l.b16 %v4200
        %v4292 = vunpack.c.l.b16 %v4201
        %v4293 = vunpack.c.l.b16 %v4202
        %v4294 = vunpack.c.l.b16 %v4203
        %v4295 = vunpack.c.l.b16 %v4204
        %v4296 = vunpack.c.l.b16 %v4205
        %v4297 = vunpack.c.l.b16 %v4206
        %v4298 = vunpack.c.l.b16 %v4207
        %v4299 = vunpack.c.l.b16 %v4208
        %v4300 = vpack.c.b16 %v4264, %v4263
        %v4301 = vpack.c.b16 %v4266, %v4265
        %v4302 = vpack.c.b16 %v4268, %v4267
        %v4303 = vpack.c.b16 %v4270, %v4269
        %v4304 = vpack.c.b16 %v4272, %v4271
        %v4305 = vpack.c.b16 %v4274, %v4273
        %v4306 = vpack.c.b16 %v4276, %v4275
        %v4307 = vpack.c.b16 %v4278, %v4277
        %v4308 = vpack.c.b16 %v4280, %v4279
        %v4309 = vpack.c.b16 %v4282, %v4281
        %v4310 = vpack.c.b16 %v4284, %v4283
        %v4311 = vpack.c.b16 %v4286, %v4285
        %v4312 = vpack.c.b16 %v4288, %v4287
        %v4313 = vpack.c.b16 %v4290, %v4289
        %v4314 = vpack.c.b16 %v4292, %v4291
        %v4315 = vpack.c.b16 %v4294, %v4293
        %v4316 = vpack.c.b16 %v4296, %v4295
        %v4317 = vpack.c.b16 %v4298, %v4297
        %v4318 = vpack.c.b16 %v4299, %v4299
        %vm4319 = vcmask 1044480
        %v4320 = vrot.slane %v4300, 3
        %v4321 = vrot.slane %v4301, 3
        %v4322 = vsel %vm4319, %v4320, %v4321
        %v4323 = vrot.slane %v4302, 3
        %v4324 = vsel %vm4319, %v4321, %v4323
        %v4325 = vrot.slane %v4303, 3
        %v4326 = vsel %vm4319, %v4323, %v4325
        %v4327 = vrot.slane %v4304, 3
        %v4328 = vsel %vm4319, %v4325, %v4327
        %v4329 = vrot.slane %v4305, 3
        %v4330 = vsel %vm4319, %v4327, %v4329
        %v4331 = vrot.slane %v4306, 3
        %v4332 = vsel %vm4319, %v4329, %v4331
        %v4333 = vrot.slane %v4307, 3
        %v4334 = vsel %vm4319, %v4331, %v4333
        %v4335 = vrot.slane %v4308, 3
        %v4336 = vsel %vm4319, %v4333, %v4335
        %v4337 = vrot.slane %v4309, 3
        %v4338 = vsel %vm4319, %v4335, %v4337
        %v4339 = vrot.slane %v4310, 3
        %v4340 = vsel %vm4319, %v4337, %v4339
        %v4341 = vrot.slane %v4311, 3
        %v4342 = vsel %vm4319, %v4339, %v4341
        %v4343 = vrot.slane %v4312, 3
        %v4344 = vsel %vm4319, %v4341, %v4343
        %v4345 = vrot.slane %v4313, 3
        %v4346 = vsel %vm4319, %v4343, %v4345
        %v4347 = vrot.slane %v4314, 3
        %v4348 = vsel %vm4319, %v4345, %v4347
        %v4349 = vrot.slane %v4315, 3
        %v4350 = vsel %vm4319, %v4347, %v4349
        %v4351 = vrot.slane %v4316, 3
        %v4352 = vsel %vm4319, %v4349, %v4351
        %v4353 = vrot.slane %v4317, 3
        %v4354 = vsel %vm4319, %v4351, %v4353
        %v4355 = vrot.slane %v4318, 3
        %v4356 = vsel %vm4319, %v4353, %v4355
        %v4391 = vunpack.c.l.b16 %v4210
        %v4392 = vunpack.c.l.b16 %v4211
        %v4393 = vunpack.c.l.b16 %v4212
        %v4394 = vunpack.c.l.b16 %v4213
        %v4395 = vunpack.c.l.b16 %v4214
        %v4396 = vunpack.c.l.b16 %v4215
        %v4397 = vunpack.c.l.b16 %v4216
        %v4398 = vunpack.c.l.b16 %v4217
        %v4399 = vunpack.c.l.b16 %v4218
        %v4400 = vunpack.c.l.b16 %v4219
        %v4401 = vunpack.c.l.b16 %v4220
        %v4402 = vunpack.c.l.b16 %v4221
        %v4403 = vunpack.c.l.b16 %v4222
        %v4404 = vunpack.c.l.b16 %v4223
        %v4405 = vunpack.c.l.b16 %v4224
        %v4406 = vunpack.c.l.b16 %v4225
        %v4407 = vpack.c.b16 %v4392, %v4391
        %v4408 = vpack.c.b16 %v4394, %v4393
        %v4409 = vpack.c.b16 %v4396, %v4395
        %v4410 = vpack.c.b16 %v4398, %v4397
        %v4411 = vpack.c.b16 %v4400, %v4399
        %v4412 = vpack.c.b16 %v4402, %v4401
        %v4413 = vpack.c.b16 %v4404, %v4403
        %v4414 = vpack.c.b16 %v4406, %v4405
        %4423 = vmatpush.bf16.msra.mxu0 %v4414
        %4424 = vmatpush.bf16.msra.mxu0 %v4413
        %4425 = vmatpush.bf16.msra.mxu0 %v4412
        %4426 = vmatpush.bf16.msra.mxu0 %v4411
        %4427 = vmatpush.bf16.msra.mxu0 %v4410
        %4428 = vmatpush.bf16.msra.mxu0 %v4409
        %4429 = vmatpush.bf16.msra.mxu0 %v4408
        %4430 = vmatpush.bf16.msra.mxu0 %v4407
        %4431 = vmatmul.bf16.gmra.mxu0 %v4322
        %v4432 = vpop.f32.mrf.mxu0
        %v4433 = vadd.f32 0.0, %v4432
        %v4434 = vpop.f32.mrf.mxu0
        %v4435 = vadd.f32 0.0, %v4434
        %4436 = vmatmul.bf16.gmra.mxu0 %v4324
        %v4437 = vpop.f32.mrf.mxu0
        %v4438 = vadd.f32 0.0, %v4437
        %v4439 = vpop.f32.mrf.mxu0
        %v4440 = vadd.f32 0.0, %v4439
        %4441 = vmatmul.bf16.gmra.mxu0 %v4326
        %v4442 = vpop.f32.mrf.mxu0
        %v4443 = vadd.f32 0.0, %v4442
        %v4444 = vpop.f32.mrf.mxu0
        %v4445 = vadd.f32 0.0, %v4444
        %4446 = vmatmul.bf16.gmra.mxu0 %v4328
        %v4447 = vpop.f32.mrf.mxu0
        %v4448 = vadd.f32 0.0, %v4447
        %v4449 = vpop.f32.mrf.mxu0
        %v4450 = vadd.f32 0.0, %v4449
        %4451 = vmatmul.bf16.gmra.mxu0 %v4330
        %v4452 = vpop.f32.mrf.mxu0
        %v4453 = vadd.f32 0.0, %v4452
        %v4454 = vpop.f32.mrf.mxu0
        %v4455 = vadd.f32 0.0, %v4454
        %4456 = vmatmul.bf16.gmra.mxu0 %v4332
        %v4457 = vpop.f32.mrf.mxu0
        %v4458 = vadd.f32 0.0, %v4457
        %v4459 = vpop.f32.mrf.mxu0
        %v4460 = vadd.f32 0.0, %v4459
        %4461 = vmatmul.bf16.gmra.mxu0 %v4334
        %v4462 = vpop.f32.mrf.mxu0
        %v4463 = vadd.f32 0.0, %v4462
        %v4464 = vpop.f32.mrf.mxu0
        %v4465 = vadd.f32 0.0, %v4464
        %4466 = vmatmul.bf16.gmra.mxu0 %v4336
        %v4467 = vpop.f32.mrf.mxu0
        %v4468 = vadd.f32 0.0, %v4467
        %v4469 = vpop.f32.mrf.mxu0
        %v4470 = vadd.f32 0.0, %v4469
        %4471 = vmatmul.bf16.gmra.mxu0 %v4338
        %v4472 = vpop.f32.mrf.mxu0
        %v4473 = vadd.f32 0.0, %v4472
        %v4474 = vpop.f32.mrf.mxu0
        %v4475 = vadd.f32 0.0, %v4474
        %4476 = vmatmul.bf16.gmra.mxu0 %v4340
        %v4477 = vpop.f32.mrf.mxu0
        %v4478 = vadd.f32 0.0, %v4477
        %v4479 = vpop.f32.mrf.mxu0
        %v4480 = vadd.f32 0.0, %v4479
        %4481 = vmatmul.bf16.gmra.mxu0 %v4342
        %v4482 = vpop.f32.mrf.mxu0
        %v4483 = vadd.f32 0.0, %v4482
        %v4484 = vpop.f32.mrf.mxu0
        %v4485 = vadd.f32 0.0, %v4484
        %4486 = vmatmul.bf16.gmra.mxu0 %v4344
        %v4487 = vpop.f32.mrf.mxu0
        %v4488 = vadd.f32 0.0, %v4487
        %v4489 = vpop.f32.mrf.mxu0
        %v4490 = vadd.f32 0.0, %v4489
        %4491 = vmatmul.bf16.gmra.mxu0 %v4346
        %v4492 = vpop.f32.mrf.mxu0
        %v4493 = vadd.f32 0.0, %v4492
        %v4494 = vpop.f32.mrf.mxu0
        %v4495 = vadd.f32 0.0, %v4494
        %4496 = vmatmul.bf16.gmra.mxu0 %v4348
        %v4497 = vpop.f32.mrf.mxu0
        %v4498 = vadd.f32 0.0, %v4497
        %v4499 = vpop.f32.mrf.mxu0
        %v4500 = vadd.f32 0.0, %v4499
        %4501 = vmatmul.bf16.gmra.mxu0 %v4350
        %v4502 = vpop.f32.mrf.mxu0
        %v4503 = vadd.f32 0.0, %v4502
        %v4504 = vpop.f32.mrf.mxu0
        %v4505 = vadd.f32 0.0, %v4504
        %4506 = vmatmul.bf16.gmra.mxu0 %v4352
        %v4507 = vpop.f32.mrf.mxu0
        %v4508 = vadd.f32 0.0, %v4507
        %v4509 = vpop.f32.mrf.mxu0
        %v4510 = vadd.f32 0.0, %v4509
        %4511 = vmatmul.bf16.gmra.mxu0 %v4354
        %v4512 = vpop.f32.mrf.mxu0
        %v4513 = vadd.f32 0.0, %v4512
        %v4514 = vpop.f32.mrf.mxu0
        %v4515 = vadd.f32 0.0, %v4514
        %4516 = vmatmul.bf16.gmra.mxu0 %v4356
        %v4517 = vpop.f32.mrf.mxu0
        %v4518 = vadd.f32 0.0, %v4517
        %v4519 = vpop.f32.mrf.mxu0
        %v4520 = vadd.f32 0.0, %v4519
        %4521 = vdwg.mxu0
        %v4522 = vld [vmem:[#allocation3] sm:$0xff]
        %v4523 = vld [vmem:[#allocation3 + $0x8] sm:$0xff]
        %v4524 = vld [vmem:[#allocation3 + $0x10] sm:$0xff]
        %v4525 = vld [vmem:[#allocation3 + $0x18] sm:$0xff]
        %v4526 = vld [vmem:[#allocation3 + $0x20] sm:$0xff]
        %v4527 = vld [vmem:[#allocation3 + $0x28] sm:$0xff]
        %v4528 = vld [vmem:[#allocation3 + $0x30] sm:$0xff]
        %v4529 = vld [vmem:[#allocation3 + $0x38] sm:$0xff]
        %v4530 = vld [vmem:[#allocation3 + $0x40] sm:$0xff]
        %v4531 = vld [vmem:[#allocation3 + $0x48] sm:$0xff]
        %v4532 = vld [vmem:[#allocation3 + $0x50] sm:$0xff]
        %v4533 = vld [vmem:[#allocation3 + $0x58] sm:$0xff]
        %v4534 = vld [vmem:[#allocation3 + $0x60] sm:$0xff]
        %v4535 = vld [vmem:[#allocation3 + $0x68] sm:$0xff]
        %v4536 = vld [vmem:[#allocation3 + $0x70] sm:$0xff]
        %v4537 = vld [vmem:[#allocation3 + $0x78] sm:$0xff]
        %v4538 = vld [vmem:[#allocation3 + $0x80] sm:$0xff]
        %v4539 = vld [vmem:[#allocation3 + $0x88] sm:$0xff]
        %v4540 = vld [vmem:[#allocation3 + $0x90] sm:$0xff]
        %v4541 = vld [vmem:[#allocation3 + $0x98] sm:$0xff]
        %v4542 = vld [vmem:[#allocation3 + $0xa0] sm:$0xff]
        %v4543 = vld [vmem:[#allocation3 + $0xa8] sm:$0xff]
        %v4544 = vld [vmem:[#allocation3 + $0xb0] sm:$0xff]
        %v4545 = vld [vmem:[#allocation3 + $0xb8] sm:$0xff]
        %v4546 = vld [vmem:[#allocation3 + $0xc0] sm:$0xff]
        %v4547 = vld [vmem:[#allocation3 + $0xc8] sm:$0xff]
        %v4548 = vld [vmem:[#allocation3 + $0xd0] sm:$0xff]
        %v4549 = vld [vmem:[#allocation3 + $0xd8] sm:$0xff]
        %v4550 = vld [vmem:[#allocation3 + $0xe0] sm:$0xff]
        %v4551 = vld [vmem:[#allocation3 + $0xe8] sm:$0xff]
        %v4552 = vld [vmem:[#allocation3 + $0xf0] sm:$0xff]
        %v4553 = vld [vmem:[#allocation3 + $0xf8] sm:$0xff]
        %v4554 = vld [vmem:[#allocation3 + $0x100] sm:$0xff]
        %v4555 = vld [vmem:[#allocation3 + $0x108] sm:$0xff]
        %v4556 = vld [vmem:[#allocation3 + $0x110] sm:$0xff]
        %v4557 = vld [vmem:[#allocation3 + $0x118] sm:$0xff]
        %v4558 = vadd.f32 %v4522, %v4433
        %v4559 = vadd.f32 %v4523, %v4435
        %v4560 = vadd.f32 %v4524, %v4438
        %v4561 = vadd.f32 %v4525, %v4440
        %v4562 = vadd.f32 %v4526, %v4443
        %v4563 = vadd.f32 %v4527, %v4445
        %v4564 = vadd.f32 %v4528, %v4448
        %v4565 = vadd.f32 %v4529, %v4450
        %v4566 = vadd.f32 %v4530, %v4453
        %v4567 = vadd.f32 %v4531, %v4455
        %v4568 = vadd.f32 %v4532, %v4458
        %v4569 = vadd.f32 %v4533, %v4460
        %v4570 = vadd.f32 %v4534, %v4463
        %v4571 = vadd.f32 %v4535, %v4465
        %v4572 = vadd.f32 %v4536, %v4468
        %v4573 = vadd.f32 %v4537, %v4470
        %v4574 = vadd.f32 %v4538, %v4473
        %v4575 = vadd.f32 %v4539, %v4475
        %v4576 = vadd.f32 %v4540, %v4478
        %v4577 = vadd.f32 %v4541, %v4480
        %v4578 = vadd.f32 %v4542, %v4483
        %v4579 = vadd.f32 %v4543, %v4485
        %v4580 = vadd.f32 %v4544, %v4488
        %v4581 = vadd.f32 %v4545, %v4490
        %v4582 = vadd.f32 %v4546, %v4493
        %v4583 = vadd.f32 %v4547, %v4495
        %v4584 = vadd.f32 %v4548, %v4498
        %v4585 = vadd.f32 %v4549, %v4500
        %v4586 = vadd.f32 %v4550, %v4503
        %v4587 = vadd.f32 %v4551, %v4505
        %v4588 = vadd.f32 %v4552, %v4508
        %v4589 = vadd.f32 %v4553, %v4510
        %v4590 = vadd.f32 %v4554, %v4513
        %v4591 = vadd.f32 %v4555, %v4515
        %v4592 = vadd.f32 %v4556, %v4518
        %v4593 = vadd.f32 %v4557, %v4520
        %4594 = vst [vmem:[#allocation3] sm:$0xff] %v4558
        %4595 = vst [vmem:[#allocation3 + $0x8] sm:$0xff] %v4559
        %4596 = vst [vmem:[#allocation3 + $0x10] sm:$0xff] %v4560
        %4597 = vst [vmem:[#allocation3 + $0x18] sm:$0xff] %v4561
        %4598 = vst [vmem:[#allocation3 + $0x20] sm:$0xff] %v4562
        %4599 = vst [vmem:[#allocation3 + $0x28] sm:$0xff] %v4563
        %4600 = vst [vmem:[#allocation3 + $0x30] sm:$0xff] %v4564
        %4601 = vst [vmem:[#allocation3 + $0x38] sm:$0xff] %v4565
        %4602 = vst [vmem:[#allocation3 + $0x40] sm:$0xff] %v4566
        %4603 = vst [vmem:[#allocation3 + $0x48] sm:$0xff] %v4567
        %4604 = vst [vmem:[#allocation3 + $0x50] sm:$0xff] %v4568
        %4605 = vst [vmem:[#allocation3 + $0x58] sm:$0xff] %v4569
        %4606 = vst [vmem:[#allocation3 + $0x60] sm:$0xff] %v4570
        %4607 = vst [vmem:[#allocation3 + $0x68] sm:$0xff] %v4571
        %4608 = vst [vmem:[#allocation3 + $0x70] sm:$0xff] %v4572
        %4609 = vst [vmem:[#allocation3 + $0x78] sm:$0xff] %v4573
        %4610 = vst [vmem:[#allocation3 + $0x80] sm:$0xff] %v4574
        %4611 = vst [vmem:[#allocation3 + $0x88] sm:$0xff] %v4575
        %4612 = vst [vmem:[#allocation3 + $0x90] sm:$0xff] %v4576
        %4613 = vst [vmem:[#allocation3 + $0x98] sm:$0xff] %v4577
        %4614 = vst [vmem:[#allocation3 + $0xa0] sm:$0xff] %v4578
        %4615 = vst [vmem:[#allocation3 + $0xa8] sm:$0xff] %v4579
        %4616 = vst [vmem:[#allocation3 + $0xb0] sm:$0xff] %v4580
        %4617 = vst [vmem:[#allocation3 + $0xb8] sm:$0xff] %v4581
        %4618 = vst [vmem:[#allocation3 + $0xc0] sm:$0xff] %v4582
        %4619 = vst [vmem:[#allocation3 + $0xc8] sm:$0xff] %v4583
        %4620 = vst [vmem:[#allocation3 + $0xd0] sm:$0xff] %v4584
        %4621 = vst [vmem:[#allocation3 + $0xd8] sm:$0xff] %v4585
        %4622 = vst [vmem:[#allocation3 + $0xe0] sm:$0xff] %v4586
        %4623 = vst [vmem:[#allocation3 + $0xe8] sm:$0xff] %v4587
        %4624 = vst [vmem:[#allocation3 + $0xf0] sm:$0xff] %v4588
        %4625 = vst [vmem:[#allocation3 + $0xf8] sm:$0xff] %v4589
        %4626 = vst [vmem:[#allocation3 + $0x100] sm:$0xff] %v4590
        %4627 = vst [vmem:[#allocation3 + $0x108] sm:$0xff] %v4591
        %4628 = vst [vmem:[#allocation3 + $0x110] sm:$0xff] %v4592
        %4629 = vst [vmem:[#allocation3 + $0x118] sm:$0xff] %v4593
        %v4630 = vld [vmem:[#allocation3] sm:$0xff]
        %v4631 = vld [vmem:[#allocation3 + $0x8] sm:$0xff]
        %v4632 = vld [vmem:[#allocation3 + $0x10] sm:$0xff]
        %v4633 = vld [vmem:[#allocation3 + $0x18] sm:$0xff]
        %v4634 = vld [vmem:[#allocation3 + $0x20] sm:$0xff]
        %v4635 = vld [vmem:[#allocation3 + $0x28] sm:$0xff]
        %v4636 = vld [vmem:[#allocation3 + $0x30] sm:$0xff]
        %v4637 = vld [vmem:[#allocation3 + $0x38] sm:$0xff]
        %v4638 = vld [vmem:[#allocation3 + $0x40] sm:$0xff]
        %v4639 = vld [vmem:[#allocation3 + $0x48] sm:$0xff]
        %v4640 = vld [vmem:[#allocation3 + $0x50] sm:$0xff]
        %v4641 = vld [vmem:[#allocation3 + $0x58] sm:$0xff]
        %v4642 = vld [vmem:[#allocation3 + $0x60] sm:$0xff]
        %v4643 = vld [vmem:[#allocation3 + $0x68] sm:$0xff]
        %v4644 = vld [vmem:[#allocation3 + $0x70] sm:$0xff]
        %v4645 = vld [vmem:[#allocation3 + $0x78] sm:$0xff]
        %v4646 = vld [vmem:[#allocation3 + $0x80] sm:$0xff]
        %v4647 = vld [vmem:[#allocation3 + $0x88] sm:$0xff]
        %v4648 = vld [vmem:[#allocation3 + $0x90] sm:$0xff]
        %v4649 = vld [vmem:[#allocation3 + $0x98] sm:$0xff]
        %v4650 = vld [vmem:[#allocation3 + $0xa0] sm:$0xff]
        %v4651 = vld [vmem:[#allocation3 + $0xa8] sm:$0xff]
        %v4652 = vld [vmem:[#allocation3 + $0xb0] sm:$0xff]
        %v4653 = vld [vmem:[#allocation3 + $0xb8] sm:$0xff]
        %v4654 = vld [vmem:[#allocation3 + $0xc0] sm:$0xff]
        %v4655 = vld [vmem:[#allocation3 + $0xc8] sm:$0xff]
        %v4656 = vld [vmem:[#allocation3 + $0xd0] sm:$0xff]
        %v4657 = vld [vmem:[#allocation3 + $0xd8] sm:$0xff]
        %v4658 = vld [vmem:[#allocation3 + $0xe0] sm:$0xff]
        %v4659 = vld [vmem:[#allocation3 + $0xe8] sm:$0xff]
        %v4660 = vld [vmem:[#allocation3 + $0xf0] sm:$0xff]
        %v4661 = vld [vmem:[#allocation3 + $0xf8] sm:$0xff]
        %v4662 = vld [vmem:[#allocation3 + $0x100] sm:$0xff]
        %v4663 = vld [vmem:[#allocation3 + $0x108] sm:$0xff]
        %v4664 = vld [vmem:[#allocation3 + $0x110] sm:$0xff]
        %v4665 = vld [vmem:[#allocation3 + $0x118] sm:$0xff]
        %v4666 = vld [vmem:[%s2] sm:$0x1]
        %v4667 = vperm.slane %v4666, 0
        %v4668 = vmul.f32 %v4630, %v4667
        %v4669 = vmul.f32 %v4631, %v4667
        %v4670 = vmul.f32 %v4632, %v4667
        %v4671 = vmul.f32 %v4633, %v4667
        %v4672 = vmul.f32 %v4634, %v4667
        %v4673 = vmul.f32 %v4635, %v4667
        %v4674 = vmul.f32 %v4636, %v4667
        %v4675 = vmul.f32 %v4637, %v4667
        %v4676 = vmul.f32 %v4638, %v4667
        %v4677 = vmul.f32 %v4639, %v4667
        %v4678 = vmul.f32 %v4640, %v4667
        %v4679 = vmul.f32 %v4641, %v4667
        %v4680 = vmul.f32 %v4642, %v4667
        %v4681 = vmul.f32 %v4643, %v4667
        %v4682 = vmul.f32 %v4644, %v4667
        %v4683 = vmul.f32 %v4645, %v4667
        %v4684 = vmul.f32 %v4646, %v4667
        %v4685 = vmul.f32 %v4647, %v4667
        %v4686 = vmul.f32 %v4648, %v4667
        %v4687 = vmul.f32 %v4649, %v4667
        %v4688 = vmul.f32 %v4650, %v4667
        %v4689 = vmul.f32 %v4651, %v4667
        %v4690 = vmul.f32 %v4652, %v4667
        %v4691 = vmul.f32 %v4653, %v4667
        %v4692 = vmul.f32 %v4654, %v4667
        %v4693 = vmul.f32 %v4655, %v4667
        %v4694 = vmul.f32 %v4656, %v4667
        %v4695 = vmul.f32 %v4657, %v4667
        %v4696 = vmul.f32 %v4658, %v4667
        %v4697 = vmul.f32 %v4659, %v4667
        %v4698 = vmul.f32 %v4660, %v4667
        %v4699 = vmul.f32 %v4661, %v4667
        %v4700 = vmul.f32 %v4662, %v4667
        %v4701 = vmul.f32 %v4663, %v4667
        %v4702 = vmul.f32 %v4664, %v4667
        %v4703 = vmul.f32 %v4665, %v4667
        %v4704 = vld [vmem:[%s2 + $0x1] sm:$0x1]
        %v4705 = vperm.slane %v4704, 0
        %v4706 = vadd.f32 %v4668, %v4705
        %v4707 = vadd.f32 %v4669, %v4705
        %v4708 = vadd.f32 %v4670, %v4705
        %v4709 = vadd.f32 %v4671, %v4705
        %v4710 = vadd.f32 %v4672, %v4705
        %v4711 = vadd.f32 %v4673, %v4705
        %v4712 = vadd.f32 %v4674, %v4705
        %v4713 = vadd.f32 %v4675, %v4705
        %v4714 = vadd.f32 %v4676, %v4705
        %v4715 = vadd.f32 %v4677, %v4705
        %v4716 = vadd.f32 %v4678, %v4705
        %v4717 = vadd.f32 %v4679, %v4705
        %v4718 = vadd.f32 %v4680, %v4705
        %v4719 = vadd.f32 %v4681, %v4705
        %v4720 = vadd.f32 %v4682, %v4705
        %v4721 = vadd.f32 %v4683, %v4705
        %v4722 = vadd.f32 %v4684, %v4705
        %v4723 = vadd.f32 %v4685, %v4705
        %v4724 = vadd.f32 %v4686, %v4705
        %v4725 = vadd.f32 %v4687, %v4705
        %v4726 = vadd.f32 %v4688, %v4705
        %v4727 = vadd.f32 %v4689, %v4705
        %v4728 = vadd.f32 %v4690, %v4705
        %v4729 = vadd.f32 %v4691, %v4705
        %v4730 = vadd.f32 %v4692, %v4705
        %v4731 = vadd.f32 %v4693, %v4705
        %v4732 = vadd.f32 %v4694, %v4705
        %v4733 = vadd.f32 %v4695, %v4705
        %v4734 = vadd.f32 %v4696, %v4705
        %v4735 = vadd.f32 %v4697, %v4705
        %v4736 = vadd.f32 %v4698, %v4705
        %v4737 = vadd.f32 %v4699, %v4705
        %v4738 = vadd.f32 %v4700, %v4705
        %v4739 = vadd.f32 %v4701, %v4705
        %v4740 = vadd.f32 %v4702, %v4705
        %v4741 = vadd.f32 %v4703, %v4705
        %v4742 = vmax.f32 %v4706, 0.0
        %v4743 = vmax.f32 %v4707, 0.0
        %v4744 = vmax.f32 %v4708, 0.0
        %v4745 = vmax.f32 %v4709, 0.0
        %v4746 = vmax.f32 %v4710, 0.0
        %v4747 = vmax.f32 %v4711, 0.0
        %v4748 = vmax.f32 %v4712, 0.0
        %v4749 = vmax.f32 %v4713, 0.0
        %v4750 = vmax.f32 %v4714, 0.0
        %v4751 = vmax.f32 %v4715, 0.0
        %v4752 = vmax.f32 %v4716, 0.0
        %v4753 = vmax.f32 %v4717, 0.0
        %v4754 = vmax.f32 %v4718, 0.0
        %v4755 = vmax.f32 %v4719, 0.0
        %v4756 = vmax.f32 %v4720, 0.0
        %v4757 = vmax.f32 %v4721, 0.0
        %v4758 = vmax.f32 %v4722, 0.0
        %v4759 = vmax.f32 %v4723, 0.0
        %v4760 = vmax.f32 %v4724, 0.0
        %v4761 = vmax.f32 %v4725, 0.0
        %v4762 = vmax.f32 %v4726, 0.0
        %v4763 = vmax.f32 %v4727, 0.0
        %v4764 = vmax.f32 %v4728, 0.0
        %v4765 = vmax.f32 %v4729, 0.0
        %v4766 = vmax.f32 %v4730, 0.0
        %v4767 = vmax.f32 %v4731, 0.0
        %v4768 = vmax.f32 %v4732, 0.0
        %v4769 = vmax.f32 %v4733, 0.0
        %v4770 = vmax.f32 %v4734, 0.0
        %v4771 = vmax.f32 %v4735, 0.0
        %v4772 = vmax.f32 %v4736, 0.0
        %v4773 = vmax.f32 %v4737, 0.0
        %v4774 = vmax.f32 %v4738, 0.0
        %v4775 = vmax.f32 %v4739, 0.0
        %v4776 = vmax.f32 %v4740, 0.0
        %v4777 = vmax.f32 %v4741, 0.0
        %v4814 = vrot.slane %v4742, 2
        %v4815 = vrot.slane %v4742, 4
        %v4816 = vrot.slane %v4742, 6
        %v4817 = vrot.slane %v4743, 2
        %v4818 = vrot.slane %v4743, 4
        %v4819 = vrot.slane %v4743, 6
        %v4820 = vrot.slane %v4744, 2
        %v4821 = vrot.slane %v4744, 4
        %v4822 = vrot.slane %v4744, 6
        %v4823 = vrot.slane %v4745, 2
        %v4824 = vrot.slane %v4745, 4
        %v4825 = vrot.slane %v4745, 6
        %v4826 = vrot.slane %v4746, 2
        %v4827 = vrot.slane %v4746, 4
        %v4828 = vrot.slane %v4746, 6
        %v4829 = vrot.slane %v4747, 2
        %v4830 = vrot.slane %v4747, 4
        %v4831 = vrot.slane %v4747, 6
        %v4832 = vrot.slane %v4748, 2
        %v4833 = vrot.slane %v4748, 4
        %v4834 = vrot.slane %v4748, 6
        %v4835 = vrot.slane %v4749, 2
        %v4836 = vrot.slane %v4749, 4
        %v4837 = vrot.slane %v4749, 6
        %v4838 = vrot.slane %v4750, 2
        %v4839 = vrot.slane %v4750, 4
        %v4840 = vrot.slane %v4750, 6
        %v4841 = vrot.slane %v4751, 2
        %v4842 = vrot.slane %v4751, 4
        %v4843 = vrot.slane %v4751, 6
        %v4844 = vrot.slane %v4752, 2
        %v4845 = vrot.slane %v4752, 4
        %v4846 = vrot.slane %v4752, 6
        %v4847 = vrot.slane %v4753, 2
        %v4848 = vrot.slane %v4753, 4
        %v4849 = vrot.slane %v4753, 6
        %v4850 = vrot.slane %v4754, 2
        %v4851 = vrot.slane %v4754, 4
        %v4852 = vrot.slane %v4754, 6
        %v4853 = vrot.slane %v4755, 2
        %v4854 = vrot.slane %v4755, 4
        %v4855 = vrot.slane %v4755, 6
        %v4856 = vrot.slane %v4756, 2
        %v4857 = vrot.slane %v4756, 4
        %v4858 = vrot.slane %v4756, 6
        %v4859 = vrot.slane %v4757, 2
        %v4860 = vrot.slane %v4757, 4
        %v4861 = vrot.slane %v4757, 6
        %v4862 = vrot.slane %v4758, 2
        %v4863 = vrot.slane %v4758, 4
        %v4864 = vrot.slane %v4758, 6
        %v4865 = vrot.slane %v4759, 2
        %v4866 = vrot.slane %v4759, 4
        %v4867 = vrot.slane %v4759, 6
        %v4868 = vrot.slane %v4760, 2
        %v4869 = vrot.slane %v4760, 4
        %v4870 = vrot.slane %v4760, 6
        %v4871 = vrot.slane %v4761, 2
        %v4872 = vrot.slane %v4761, 4
        %v4873 = vrot.slane %v4761, 6
        %v4874 = vrot.slane %v4762, 2
        %v4875 = vrot.slane %v4762, 4
        %v4876 = vrot.slane %v4762, 6
        %v4877 = vrot.slane %v4763, 2
        %v4878 = vrot.slane %v4763, 4
        %v4879 = vrot.slane %v4763, 6
        %v4880 = vrot.slane %v4764, 2
        %v4881 = vrot.slane %v4764, 4
        %v4882 = vrot.slane %v4764, 6
        %v4883 = vrot.slane %v4765, 2
        %v4884 = vrot.slane %v4765, 4
        %v4885 = vrot.slane %v4765, 6
        %v4886 = vrot.slane %v4766, 2
        %v4887 = vrot.slane %v4766, 4
        %v4888 = vrot.slane %v4766, 6
        %v4889 = vrot.slane %v4767, 2
        %v4890 = vrot.slane %v4767, 4
        %v4891 = vrot.slane %v4767, 6
        %v4892 = vrot.slane %v4768, 2
        %v4893 = vrot.slane %v4768, 4
        %v4894 = vrot.slane %v4768, 6
        %v4895 = vrot.slane %v4769, 2
        %v4896 = vrot.slane %v4769, 4
        %v4897 = vrot.slane %v4769, 6
        %v4898 = vrot.slane %v4770, 2
        %v4899 = vrot.slane %v4770, 4
        %v4900 = vrot.slane %v4770, 6
        %v4901 = vrot.slane %v4771, 2
        %v4902 = vrot.slane %v4771, 4
        %v4903 = vrot.slane %v4771, 6
        %v4904 = vrot.slane %v4772, 2
        %v4905 = vrot.slane %v4772, 4
        %v4906 = vrot.slane %v4772, 6
        %v4907 = vrot.slane %v4773, 2
        %v4908 = vrot.slane %v4773, 4
        %v4909 = vrot.slane %v4773, 6
        %v4910 = vrot.slane %v4774, 2
        %v4911 = vrot.slane %v4774, 4
        %v4912 = vrot.slane %v4774, 6
        %v4913 = vrot.slane %v4775, 2
        %v4914 = vrot.slane %v4775, 4
        %v4915 = vrot.slane %v4775, 6
        %v4916 = vrot.slane %v4776, 2
        %v4917 = vrot.slane %v4776, 4
        %v4918 = vrot.slane %v4776, 6
        %v4919 = vrot.slane %v4777, 2
        %v4920 = vrot.slane %v4777, 4
        %v4921 = vrot.slane %v4777, 6
        %4922 = vst [vmem:[#allocation1] ss:$4 sm:$0xff] %v4742
        %s4923 = scalar_lea.vmem [#allocation1], 1
        %4924 = vst [vmem:[%s4923] ss:$4 sm:$0xff] %v4814
        %s4925 = scalar_lea.vmem [#allocation1], 2
        %4926 = vst [vmem:[%s4925] ss:$4 sm:$0xff] %v4815
        %s4927 = scalar_lea.vmem [#allocation1], 3
        %4928 = vst [vmem:[%s4927] ss:$4 sm:$0xff] %v4816
        %s4929 = scalar_lea.vmem [#allocation1], 32
        %4930 = vst [vmem:[%s4929] ss:$4 sm:$0xff] %v4743
        %s4931 = scalar_lea.vmem [#allocation1], 33
        %4932 = vst [vmem:[%s4931] ss:$4 sm:$0xff] %v4817
        %s4933 = scalar_lea.vmem [#allocation1], 34
        %4934 = vst [vmem:[%s4933] ss:$4 sm:$0xff] %v4818
        %s4935 = scalar_lea.vmem [#allocation1], 35
        %4936 = vst [vmem:[%s4935] ss:$4 sm:$0xff] %v4819
        %v4937 = vld.sshfl [vmem:[#allocation1] sm:$0xff pattern:$0x73625140]
        %v4938 = vld.sshfl [vmem:[#allocation1 + $0x20] sm:$0xff pattern:$0x73625140]
        %4939 = vst [vmem:[#allocation1] ss:$4 sm:$0xff] %v4744
        %v4940 = vld.sshfl [vmem:[#allocation1] sm:$0xff pattern:$0x73625140]
        %4941 = vst [vmem:[%s4929] ss:$4 sm:$0xff] %v4820
        %4942 = vst [vmem:[%s4931] ss:$4 sm:$0xff] %v4821
        %4943 = vst [vmem:[%s4933] ss:$4 sm:$0xff] %v4822
        %4944 = vst [vmem:[%s4935] ss:$4 sm:$0xff] %v4745
        %v4945 = vld.sshfl [vmem:[#allocation1 + $0x20] sm:$0xff pattern:$0x73625140]
        %4946 = vst [vmem:[#allocation1] ss:$4 sm:$0xff] %v4823
        %4947 = vst [vmem:[%s4923] ss:$4 sm:$0xff] %v4824
        %4948 = vst [vmem:[%s4925] ss:$4 sm:$0xff] %v4825
        %4949 = vst [vmem:[%s4927] ss:$4 sm:$0xff] %v4746
        %4950 = vst [vmem:[%s4929] ss:$4 sm:$0xff] %v4826
        %v4951 = vld.sshfl [vmem:[#allocation1] sm:$0xff pattern:$0x73625140]
        %v4952 = vld.sshfl [vmem:[#allocation1 + $0x20] sm:$0xff pattern:$0x73625140]
        %4953 = vst [vmem:[#allocation1] ss:$4 sm:$0xff] %v4827
        %4954 = vst [vmem:[%s4923] ss:$4 sm:$0xff] %v4828
        %4955 = vst [vmem:[%s4925] ss:$4 sm:$0xff] %v4747
        %4956 = vst [vmem:[%s4927] ss:$4 sm:$0xff] %v4829
        %4957 = vst [vmem:[%s4929] ss:$4 sm:$0xff] %v4830
        %4958 = vst [vmem:[%s4931] ss:$4 sm:$0xff] %v4831
        %4959 = vst [vmem:[%s4933] ss:$4 sm:$0xff] %v4748
        %4960 = vst [vmem:[%s4935] ss:$4 sm:$0xff] %v4832
        %v4961 = vld.sshfl [vmem:[#allocation1] sm:$0xff pattern:$0x73625140]
        %v4962 = vld.sshfl [vmem:[#allocation1 + $0x20] sm:$0xff pattern:$0x73625140]
        %4963 = vst [vmem:[#allocation1] ss:$4 sm:$0xff] %v4833
        %v4964 = vld.sshfl [vmem:[#allocation1] sm:$0xff pattern:$0x73625140]
        %4965 = vst [vmem:[%s4929] ss:$4 sm:$0xff] %v4834
        %4966 = vst [vmem:[%s4931] ss:$4 sm:$0xff] %v4749
        %4967 = vst [vmem:[%s4933] ss:$4 sm:$0xff] %v4835
        %4968 = vst [vmem:[%s4935] ss:$4 sm:$0xff] %v4836
        %v4969 = vld.sshfl [vmem:[#allocation1 + $0x20] sm:$0xff pattern:$0x73625140]
        %4970 = vst [vmem:[#allocation1] ss:$4 sm:$0xff] %v4837
        %4971 = vst [vmem:[%s4923] ss:$4 sm:$0xff] %v4750
        %4972 = vst [vmem:[%s4925] ss:$4 sm:$0xff] %v4838
        %4973 = vst [vmem:[%s4927] ss:$4 sm:$0xff] %v4839
        %4974 = vst [vmem:[%s4929] ss:$4 sm:$0xff] %v4840
        %v4975 = vld.sshfl [vmem:[#allocation1] sm:$0xff pattern:$0x73625140]
        %v4976 = vld.sshfl [vmem:[#allocation1 + $0x20] sm:$0xff pattern:$0x73625140]
        %4977 = vst [vmem:[#allocation1] ss:$4 sm:$0xff] %v4751
        %4978 = vst [vmem:[%s4923] ss:$4 sm:$0xff] %v4841
        %4979 = vst [vmem:[%s4925] ss:$4 sm:$0xff] %v4842
        %4980 = vst [vmem:[%s4927] ss:$4 sm:$0xff] %v4843
        %4981 = vst [vmem:[%s4929] ss:$4 sm:$0xff] %v4752
        %4982 = vst [vmem:[%s4931] ss:$4 sm:$0xff] %v4844
        %4983 = vst [vmem:[%s4933] ss:$4 sm:$0xff] %v4845
        %4984 = vst [vmem:[%s4935] ss:$4 sm:$0xff] %v4846
        %v4985 = vld.sshfl [vmem:[#allocation1] sm:$0xff pattern:$0x73625140]
        %v4986 = vld.sshfl [vmem:[#allocation1 + $0x20] sm:$0xff pattern:$0x73625140]
        %4987 = vst [vmem:[#allocation1] ss:$4 sm:$0xff] %v4753
        %v4988 = vld.sshfl [vmem:[#allocation1] sm:$0xff pattern:$0x73625140]
        %4989 = vst [vmem:[%s4929] ss:$4 sm:$0xff] %v4847
        %4990 = vst [vmem:[%s4931] ss:$4 sm:$0xff] %v4848
        %4991 = vst [vmem:[%s4933] ss:$4 sm:$0xff] %v4849
        %4992 = vst [vmem:[%s4935] ss:$4 sm:$0xff] %v4754
        %v4993 = vld.sshfl [vmem:[#allocation1 + $0x20] sm:$0xff pattern:$0x73625140]
        %4994 = vst [vmem:[#allocation1] ss:$4 sm:$0xff] %v4850
        %4995 = vst [vmem:[%s4923] ss:$4 sm:$0xff] %v4851
        %4996 = vst [vmem:[%s4925] ss:$4 sm:$0xff] %v4852
        %4997 = vst [vmem:[%s4927] ss:$4 sm:$0xff] %v4755
        %4998 = vst [vmem:[%s4929] ss:$4 sm:$0xff] %v4853
        %v4999 = vld.sshfl [vmem:[#allocation1] sm:$0xff pattern:$0x73625140]
        %v5000 = vld.sshfl [vmem:[#allocation1 + $0x20] sm:$0xff pattern:$0x73625140]
        %5001 = vst [vmem:[#allocation1] ss:$4 sm:$0xff] %v4854
        %5002 = vst [vmem:[%s4923] ss:$4 sm:$0xff] %v4855
        %5003 = vst [vmem:[%s4925] ss:$4 sm:$0xff] %v4756
        %5004 = vst [vmem:[%s4927] ss:$4 sm:$0xff] %v4856
        %5005 = vst [vmem:[%s4929] ss:$4 sm:$0xff] %v4857
        %5006 = vst [vmem:[%s4931] ss:$4 sm:$0xff] %v4858
        %5007 = vst [vmem:[%s4933] ss:$4 sm:$0xff] %v4757
        %5008 = vst [vmem:[%s4935] ss:$4 sm:$0xff] %v4859
        %v5009 = vld.sshfl [vmem:[#allocation1] sm:$0xff pattern:$0x73625140]
        %v5010 = vld.sshfl [vmem:[#allocation1 + $0x20] sm:$0xff pattern:$0x73625140]
        %5011 = vst [vmem:[#allocation1] ss:$4 sm:$0xff] %v4860
        %v5012 = vld.sshfl [vmem:[#allocation1] sm:$0xff pattern:$0x73625140]
        %5013 = vst [vmem:[%s4929] ss:$4 sm:$0xff] %v4861
        %5014 = vst [vmem:[%s4931] ss:$4 sm:$0xff] %v4758
        %5015 = vst [vmem:[%s4933] ss:$4 sm:$0xff] %v4862
        %5016 = vst [vmem:[%s4935] ss:$4 sm:$0xff] %v4863
        %v5017 = vld.sshfl [vmem:[#allocation1 + $0x20] sm:$0xff pattern:$0x73625140]
        %5018 = vst [vmem:[#allocation1] ss:$4 sm:$0xff] %v4864
        %5019 = vst [vmem:[%s4923] ss:$4 sm:$0xff] %v4759
        %5020 = vst [vmem:[%s4925] ss:$4 sm:$0xff] %v4865
        %5021 = vst [vmem:[%s4927] ss:$4 sm:$0xff] %v4866
        %5022 = vst [vmem:[%s4929] ss:$4 sm:$0xff] %v4867
        %v5023 = vld.sshfl [vmem:[#allocation1] sm:$0xff pattern:$0x73625140]
        %v5024 = vld.sshfl [vmem:[#allocation1 + $0x20] sm:$0xff pattern:$0x73625140]
        %5025 = vst [vmem:[#allocation1] ss:$4 sm:$0xff] %v4760
        %5026 = vst [vmem:[%s4923] ss:$4 sm:$0xff] %v4868
        %5027 = vst [vmem:[%s4925] ss:$4 sm:$0xff] %v4869
        %5028 = vst [vmem:[%s4927] ss:$4 sm:$0xff] %v4870
        %5029 = vst [vmem:[%s4929] ss:$4 sm:$0xff] %v4761
        %5030 = vst [vmem:[%s4931] ss:$4 sm:$0xff] %v4871
        %5031 = vst [vmem:[%s4933] ss:$4 sm:$0xff] %v4872
        %5032 = vst [vmem:[%s4935] ss:$4 sm:$0xff] %v4873
        %v5033 = vld.sshfl [vmem:[#allocation1] sm:$0xff pattern:$0x73625140]
        %v5034 = vld.sshfl [vmem:[#allocation1 + $0x20] sm:$0xff pattern:$0x73625140]
        %5035 = vst [vmem:[#allocation1] ss:$4 sm:$0xff] %v4762
        %v5036 = vld.sshfl [vmem:[#allocation1] sm:$0xff pattern:$0x73625140]
        %5037 = vst [vmem:[%s4929] ss:$4 sm:$0xff] %v4874
        %5038 = vst [vmem:[%s4931] ss:$4 sm:$0xff] %v4875
        %5039 = vst [vmem:[%s4933] ss:$4 sm:$0xff] %v4876
        %5040 = vst [vmem:[%s4935] ss:$4 sm:$0xff] %v4763
        %v5041 = vld.sshfl [vmem:[#allocation1 + $0x20] sm:$0xff pattern:$0x73625140]
        %5042 = vst [vmem:[#allocation1] ss:$4 sm:$0xff] %v4877
        %5043 = vst [vmem:[%s4923] ss:$4 sm:$0xff] %v4878
        %5044 = vst [vmem:[%s4925] ss:$4 sm:$0xff] %v4879
        %5045 = vst [vmem:[%s4927] ss:$4 sm:$0xff] %v4764
        %5046 = vst [vmem:[%s4929] ss:$4 sm:$0xff] %v4880
        %v5047 = vld.sshfl [vmem:[#allocation1] sm:$0xff pattern:$0x73625140]
        %v5048 = vld.sshfl [vmem:[#allocation1 + $0x20] sm:$0xff pattern:$0x73625140]
        %5049 = vst [vmem:[#allocation1] ss:$4 sm:$0xff] %v4881
        %5050 = vst [vmem:[%s4923] ss:$4 sm:$0xff] %v4882
        %5051 = vst [vmem:[%s4925] ss:$4 sm:$0xff] %v4765
        %5052 = vst [vmem:[%s4927] ss:$4 sm:$0xff] %v4883
        %5053 = vst [vmem:[%s4929] ss:$4 sm:$0xff] %v4884
        %5054 = vst [vmem:[%s4931] ss:$4 sm:$0xff] %v4885
        %5055 = vst [vmem:[%s4933] ss:$4 sm:$0xff] %v4766
        %5056 = vst [vmem:[%s4935] ss:$4 sm:$0xff] %v4886
        %v5057 = vld.sshfl [vmem:[#allocation1] sm:$0xff pattern:$0x73625140]
        %v5058 = vld.sshfl [vmem:[#allocation1 + $0x20] sm:$0xff pattern:$0x73625140]
        %5059 = vst [vmem:[#allocation1] ss:$4 sm:$0xff] %v4887
        %v5060 = vld.sshfl [vmem:[#allocation1] sm:$0xff pattern:$0x73625140]
        %5061 = vst [vmem:[%s4929] ss:$4 sm:$0xff] %v4888
        %5062 = vst [vmem:[%s4931] ss:$4 sm:$0xff] %v4767
        %5063 = vst [vmem:[%s4933] ss:$4 sm:$0xff] %v4889
        %5064 = vst [vmem:[%s4935] ss:$4 sm:$0xff] %v4890
        %v5065 = vld.sshfl [vmem:[#allocation1 + $0x20] sm:$0xff pattern:$0x73625140]
        %5066 = vst [vmem:[#allocation1] ss:$4 sm:$0xff] %v4891
        %5067 = vst [vmem:[%s4923] ss:$4 sm:$0xff] %v4768
        %5068 = vst [vmem:[%s4925] ss:$4 sm:$0xff] %v4892
        %5069 = vst [vmem:[%s4927] ss:$4 sm:$0xff] %v4893
        %5070 = vst [vmem:[%s4929] ss:$4 sm:$0xff] %v4894
        %v5071 = vld.sshfl [vmem:[#allocation1] sm:$0xff pattern:$0x73625140]
        %v5072 = vld.sshfl [vmem:[#allocation1 + $0x20] sm:$0xff pattern:$0x73625140]
        %5073 = vst [vmem:[#allocation1] ss:$4 sm:$0xff] %v4769
        %5074 = vst [vmem:[%s4923] ss:$4 sm:$0xff] %v4895
        %5075 = vst [vmem:[%s4925] ss:$4 sm:$0xff] %v4896
        %5076 = vst [vmem:[%s4927] ss:$4 sm:$0xff] %v4897
        %5077 = vst [vmem:[%s4929] ss:$4 sm:$0xff] %v4770
        %5078 = vst [vmem:[%s4931] ss:$4 sm:$0xff] %v4898
        %5079 = vst [vmem:[%s4933] ss:$4 sm:$0xff] %v4899
        %5080 = vst [vmem:[%s4935] ss:$4 sm:$0xff] %v4900
        %v5081 = vld.sshfl [vmem:[#allocation1] sm:$0xff pattern:$0x73625140]
        %v5082 = vld.sshfl [vmem:[#allocation1 + $0x20] sm:$0xff pattern:$0x73625140]
        %5083 = vst [vmem:[#allocation1] ss:$4 sm:$0xff] %v4771
        %v5084 = vld.sshfl [vmem:[#allocation1] sm:$0xff pattern:$0x73625140]
        %5085 = vst [vmem:[%s4929] ss:$4 sm:$0xff] %v4901
        %5086 = vst [vmem:[%s4931] ss:$4 sm:$0xff] %v4902
        %5087 = vst [vmem:[%s4933] ss:$4 sm:$0xff] %v4903
        %5088 = vst [vmem:[%s4935] ss:$4 sm:$0xff] %v4772
        %v5089 = vld.sshfl [vmem:[#allocation1 + $0x20] sm:$0xff pattern:$0x73625140]
        %5090 = vst [vmem:[#allocation1] ss:$4 sm:$0xff] %v4904
        %5091 = vst [vmem:[%s4923] ss:$4 sm:$0xff] %v4905
        %5092 = vst [vmem:[%s4925] ss:$4 sm:$0xff] %v4906
        %5093 = vst [vmem:[%s4927] ss:$4 sm:$0xff] %v4773
        %5094 = vst [vmem:[%s4929] ss:$4 sm:$0xff] %v4907
        %v5095 = vld.sshfl [vmem:[#allocation1] sm:$0xff pattern:$0x73625140]
        %v5096 = vld.sshfl [vmem:[#allocation1 + $0x20] sm:$0xff pattern:$0x73625140]
        %5097 = vst [vmem:[#allocation1] ss:$4 sm:$0xff] %v4908
        %5098 = vst [vmem:[%s4923] ss:$4 sm:$0xff] %v4909
        %5099 = vst [vmem:[%s4925] ss:$4 sm:$0xff] %v4774
        %5100 = vst [vmem:[%s4927] ss:$4 sm:$0xff] %v4910
        %5101 = vst [vmem:[%s4929] ss:$4 sm:$0xff] %v4911
        %5102 = vst [vmem:[%s4931] ss:$4 sm:$0xff] %v4912
        %5103 = vst [vmem:[%s4933] ss:$4 sm:$0xff] %v4775
        %5104 = vst [vmem:[%s4935] ss:$4 sm:$0xff] %v4913
        %v5105 = vld.sshfl [vmem:[#allocation1] sm:$0xff pattern:$0x73625140]
        %v5106 = vld.sshfl [vmem:[#allocation1 + $0x20] sm:$0xff pattern:$0x73625140]
        %5107 = vst [vmem:[#allocation1] ss:$4 sm:$0xff] %v4914
        %v5108 = vld.sshfl [vmem:[#allocation1] sm:$0xff pattern:$0x73625140]
        %5109 = vst [vmem:[%s4929] ss:$4 sm:$0xff] %v4915
        %5110 = vst [vmem:[%s4931] ss:$4 sm:$0xff] %v4776
        %5111 = vst [vmem:[%s4933] ss:$4 sm:$0xff] %v4916
        %5112 = vst [vmem:[%s4935] ss:$4 sm:$0xff] %v4917
        %v5113 = vld.sshfl [vmem:[#allocation1 + $0x20] sm:$0xff pattern:$0x73625140]
        %5114 = vst [vmem:[#allocation1] ss:$4 sm:$0xff] %v4918
        %5115 = vst [vmem:[%s4923] ss:$4 sm:$0xff] %v4777
        %5116 = vst [vmem:[%s4925] ss:$4 sm:$0xff] %v4919
        %5117 = vst [vmem:[%s4927] ss:$4 sm:$0xff] %v4920
        %5118 = vst [vmem:[%s4929] ss:$4 sm:$0xff] %v4921
        %v5119 = vld.sshfl [vmem:[#allocation1] sm:$0xff pattern:$0x73625140]
        %v5120 = vld.sshfl [vmem:[#allocation1 + $0x20] sm:$0xff pattern:$0x73625140]
        %v5169 = vsel %vm245, %v4937, 0.0
        %v5170 = vsel %vm246, %v4938, 0.0
        %v5171 = vsel %vm247, %v4940, 0.0
        %v5172 = vsel %vm245, %v4945, 0.0
        %v5173 = vsel %vm246, %v4951, 0.0
        %v5174 = vsel %vm247, %v4952, 0.0
        %v5175 = vsel %vm245, %v4961, 0.0
        %v5176 = vsel %vm246, %v4962, 0.0
        %v5177 = vsel %vm247, %v4964, 0.0
        %v5178 = vsel %vm245, %v4969, 0.0
        %v5179 = vsel %vm246, %v4975, 0.0
        %v5180 = vsel %vm247, %v4976, 0.0
        %v5181 = vsel %vm245, %v4985, 0.0
        %v5182 = vsel %vm246, %v4986, 0.0
        %v5183 = vsel %vm247, %v4988, 0.0
        %v5184 = vsel %vm245, %v4993, 0.0
        %v5185 = vsel %vm246, %v4999, 0.0
        %v5186 = vsel %vm247, %v5000, 0.0
        %v5187 = vsel %vm245, %v5009, 0.0
        %v5188 = vsel %vm246, %v5010, 0.0
        %v5189 = vsel %vm247, %v5012, 0.0
        %v5190 = vsel %vm245, %v5017, 0.0
        %v5191 = vsel %vm246, %v5023, 0.0
        %v5192 = vsel %vm247, %v5024, 0.0
        %v5193 = vsel %vm245, %v5033, 0.0
        %v5194 = vsel %vm246, %v5034, 0.0
        %v5195 = vsel %vm247, %v5036, 0.0
        %v5196 = vsel %vm245, %v5041, 0.0
        %v5197 = vsel %vm246, %v5047, 0.0
        %v5198 = vsel %vm247, %v5048, 0.0
        %v5199 = vsel %vm245, %v5057, 0.0
        %v5200 = vsel %vm246, %v5058, 0.0
        %v5201 = vsel %vm247, %v5060, 0.0
        %v5202 = vsel %vm245, %v5065, 0.0
        %v5203 = vsel %vm246, %v5071, 0.0
        %v5204 = vsel %vm247, %v5072, 0.0
        %v5205 = vsel %vm245, %v5081, 0.0
        %v5206 = vsel %vm246, %v5082, 0.0
        %v5207 = vsel %vm247, %v5084, 0.0
        %v5208 = vsel %vm245, %v5089, 0.0
        %v5209 = vsel %vm246, %v5095, 0.0
        %v5210 = vsel %vm247, %v5096, 0.0
        %v5211 = vsel %vm245, %v5105, 0.0
        %v5212 = vsel %vm246, %v5106, 0.0
        %v5213 = vsel %vm247, %v5108, 0.0
        %v5214 = vsel %vm245, %v5113, 0.0
        %v5215 = vsel %vm246, %v5119, 0.0
        %v5216 = vsel %vm247, %v5120, 0.0
        %v5265 = vrot.slane %v5169, 2
        %v5266 = vrot.slane %v5169, 4
        %v5267 = vrot.slane %v5169, 6
        %v5268 = vrot.slane %v5170, 2
        %v5269 = vrot.slane %v5170, 4
        %v5270 = vrot.slane %v5170, 6
        %v5271 = vrot.slane %v5172, 2
        %v5272 = vrot.slane %v5172, 4
        %v5273 = vrot.slane %v5172, 6
        %v5274 = vrot.slane %v5173, 2
        %v5275 = vrot.slane %v5173, 4
        %v5276 = vrot.slane %v5173, 6
        %v5277 = vrot.slane %v5175, 2
        %v5278 = vrot.slane %v5175, 4
        %v5279 = vrot.slane %v5175, 6
        %v5280 = vrot.slane %v5176, 2
        %v5281 = vrot.slane %v5176, 4
        %v5282 = vrot.slane %v5176, 6
        %v5283 = vrot.slane %v5178, 2
        %v5284 = vrot.slane %v5178, 4
        %v5285 = vrot.slane %v5178, 6
        %v5286 = vrot.slane %v5179, 2
        %v5287 = vrot.slane %v5179, 4
        %v5288 = vrot.slane %v5179, 6
        %v5289 = vrot.slane %v5181, 2
        %v5290 = vrot.slane %v5181, 4
        %v5291 = vrot.slane %v5181, 6
        %v5292 = vrot.slane %v5182, 2
        %v5293 = vrot.slane %v5182, 4
        %v5294 = vrot.slane %v5182, 6
        %v5295 = vrot.slane %v5184, 2
        %v5296 = vrot.slane %v5184, 4
        %v5297 = vrot.slane %v5184, 6
        %v5298 = vrot.slane %v5185, 2
        %v5299 = vrot.slane %v5185, 4
        %v5300 = vrot.slane %v5185, 6
        %v5301 = vrot.slane %v5187, 2
        %v5302 = vrot.slane %v5187, 4
        %v5303 = vrot.slane %v5187, 6
        %v5304 = vrot.slane %v5188, 2
        %v5305 = vrot.slane %v5188, 4
        %v5306 = vrot.slane %v5188, 6
        %v5307 = vrot.slane %v5190, 2
        %v5308 = vrot.slane %v5190, 4
        %v5309 = vrot.slane %v5190, 6
        %v5310 = vrot.slane %v5191, 2
        %v5311 = vrot.slane %v5191, 4
        %v5312 = vrot.slane %v5191, 6
        %v5313 = vrot.slane %v5193, 2
        %v5314 = vrot.slane %v5193, 4
        %v5315 = vrot.slane %v5193, 6
        %v5316 = vrot.slane %v5194, 2
        %v5317 = vrot.slane %v5194, 4
        %v5318 = vrot.slane %v5194, 6
        %v5319 = vrot.slane %v5196, 2
        %v5320 = vrot.slane %v5196, 4
        %v5321 = vrot.slane %v5196, 6
        %v5322 = vrot.slane %v5197, 2
        %v5323 = vrot.slane %v5197, 4
        %v5324 = vrot.slane %v5197, 6
        %v5325 = vrot.slane %v5199, 2
        %v5326 = vrot.slane %v5199, 4
        %v5327 = vrot.slane %v5199, 6
        %v5328 = vrot.slane %v5200, 2
        %v5329 = vrot.slane %v5200, 4
        %v5330 = vrot.slane %v5200, 6
        %v5331 = vrot.slane %v5202, 2
        %v5332 = vrot.slane %v5202, 4
        %v5333 = vrot.slane %v5202, 6
        %v5334 = vrot.slane %v5203, 2
        %v5335 = vrot.slane %v5203, 4
        %v5336 = vrot.slane %v5203, 6
        %v5337 = vrot.slane %v5205, 2
        %v5338 = vrot.slane %v5205, 4
        %v5339 = vrot.slane %v5205, 6
        %v5340 = vrot.slane %v5206, 2
        %v5341 = vrot.slane %v5206, 4
        %v5342 = vrot.slane %v5206, 6
        %v5343 = vrot.slane %v5208, 2
        %v5344 = vrot.slane %v5208, 4
        %v5345 = vrot.slane %v5208, 6
        %v5346 = vrot.slane %v5209, 2
        %v5347 = vrot.slane %v5209, 4
        %v5348 = vrot.slane %v5209, 6
        %v5349 = vrot.slane %v5211, 2
        %v5350 = vrot.slane %v5211, 4
        %v5351 = vrot.slane %v5211, 6
        %v5352 = vrot.slane %v5212, 2
        %v5353 = vrot.slane %v5212, 4
        %v5354 = vrot.slane %v5212, 6
        %v5355 = vrot.slane %v5214, 2
        %v5356 = vrot.slane %v5214, 4
        %v5357 = vrot.slane %v5214, 6
        %v5358 = vrot.slane %v5215, 2
        %v5359 = vrot.slane %v5215, 4
        %v5360 = vrot.slane %v5215, 6
        %5361 = vst [vmem:[#allocation2] sm:$0xf] 0
        %5362 = vst [vmem:[#allocation2 + $0x4] sm:$0xf] 0
        %vm5363 = vcmask 1041408
        %vm5364 = vsmask.f32 1280
        %vm5365 = vmand %vm5363, %vm5364
        %v5366 = vld [vmem:[#allocation2 + $0x8] sm:$0x3]
        %v5367 = vsel %vm5365, 0, %v5366
        %5368 = vst [vmem:[#allocation2 + $0x8] sm:$0x3] %v5367
        %vm5369 = vcmask 1043457
        %vm5370 = vsmask.f32 7942
        %vm5371 = vmand %vm5369, %vm5370
        %v5372 = vld [vmem:[#allocation2 + $0x98] sm:$0xe]
        %v5373 = vsel %vm5371, 0, %v5372
        %5374 = vst [vmem:[#allocation2 + $0x98] sm:$0xe] %v5373
        %5375 = vst [vmem:[#allocation2 + $0x9c] sm:$0xf] 0
        %5376 = vst [vmem:[#allocation2 + $0xa0] sm:$0x7] 0
        %5377 = vst [vmem:[#allocation1] ss:$4 sm:$0xff] %v5169
        %s5378 = scalar_lea.vmem [#allocation1], 1
        %5379 = vst [vmem:[%s5378] ss:$4 sm:$0xff] %v5265
        %s5380 = scalar_lea.vmem [#allocation1], 2
        %5381 = vst [vmem:[%s5380] ss:$4 sm:$0xff] %v5266
        %s5382 = scalar_lea.vmem [#allocation1], 3
        %5383 = vst [vmem:[%s5382] ss:$4 sm:$0xff] %v5267
        %s5384 = scalar_lea.vmem [#allocation1], 32
        %5385 = vst [vmem:[%s5384] ss:$4 sm:$0xff] %v5170
        %s5386 = scalar_lea.vmem [#allocation1], 33
        %5387 = vst [vmem:[%s5386] ss:$4 sm:$0xff] %v5268
        %s5388 = scalar_lea.vmem [#allocation1], 34
        %5389 = vst [vmem:[%s5388] ss:$4 sm:$0xff] %v5269
        %s5390 = scalar_lea.vmem [#allocation1], 35
        %5391 = vst [vmem:[%s5390] ss:$4 sm:$0xff] %v5270
        %v5392 = vld.sshfl [vmem:[#allocation1] sm:$0xff pattern:$0x73625140]
        %v5393 = vld.sshfl [vmem:[#allocation1 + $0x20] sm:$0xff pattern:$0x73625140]
        %5394 = vst [vmem:[#allocation1] ss:$4 sm:$0xff] %v5171
        %5395 = vst [vmem:[%s5378] ss:$4 sm:$0xff] %v5172
        %5396 = vst [vmem:[%s5380] ss:$4 sm:$0xff] %v5271
        %5397 = vst [vmem:[%s5382] ss:$4 sm:$0xff] %v5272
        %5398 = vst [vmem:[%s5384] ss:$4 sm:$0xff] %v5273
        %5399 = vst [vmem:[%s5386] ss:$4 sm:$0xff] %v5173
        %5400 = vst [vmem:[%s5388] ss:$4 sm:$0xff] %v5274
        %5401 = vst [vmem:[%s5390] ss:$4 sm:$0xff] %v5275
        %v5402 = vld.sshfl [vmem:[#allocation1] sm:$0xff pattern:$0x73625140]
        %v5403 = vld.sshfl [vmem:[#allocation1 + $0x20] sm:$0xff pattern:$0x73625140]
        %5404 = vst [vmem:[#allocation1] ss:$4 sm:$0xff] %v5276
        %5405 = vst [vmem:[%s5378] ss:$4 sm:$0xff] %v5174
        %5406 = vst [vmem:[%s5380] ss:$4 sm:$0xff] %v5175
        %5407 = vst [vmem:[%s5382] ss:$4 sm:$0xff] %v5277
        %5408 = vst [vmem:[%s5384] ss:$4 sm:$0xff] %v5278
        %5409 = vst [vmem:[%s5386] ss:$4 sm:$0xff] %v5279
        %5410 = vst [vmem:[%s5388] ss:$4 sm:$0xff] %v5176
        %5411 = vst [vmem:[%s5390] ss:$4 sm:$0xff] %v5280
        %v5412 = vld.sshfl [vmem:[#allocation1] sm:$0xff pattern:$0x73625140]
        %v5413 = vld.sshfl [vmem:[#allocation1 + $0x20] sm:$0xff pattern:$0x73625140]
        %5414 = vst [vmem:[#allocation1] ss:$4 sm:$0xff] %v5281
        %5415 = vst [vmem:[%s5378] ss:$4 sm:$0xff] %v5282
        %5416 = vst [vmem:[%s5380] ss:$4 sm:$0xff] %v5177
        %5417 = vst [vmem:[%s5382] ss:$4 sm:$0xff] %v5178
        %5418 = vst [vmem:[%s5384] ss:$4 sm:$0xff] %v5283
        %5419 = vst [vmem:[%s5386] ss:$4 sm:$0xff] %v5284
        %5420 = vst [vmem:[%s5388] ss:$4 sm:$0xff] %v5285
        %5421 = vst [vmem:[%s5390] ss:$4 sm:$0xff] %v5179
        %v5422 = vld.sshfl [vmem:[#allocation1] sm:$0xff pattern:$0x73625140]
        %v5423 = vld.sshfl [vmem:[#allocation1 + $0x20] sm:$0xff pattern:$0x73625140]
        %5424 = vst [vmem:[#allocation1] ss:$4 sm:$0xff] %v5286
        %5425 = vst [vmem:[%s5378] ss:$4 sm:$0xff] %v5287
        %5426 = vst [vmem:[%s5380] ss:$4 sm:$0xff] %v5288
        %5427 = vst [vmem:[%s5382] ss:$4 sm:$0xff] %v5180
        %5428 = vst [vmem:[%s5384] ss:$4 sm:$0xff] %v5181
        %5429 = vst [vmem:[%s5386] ss:$4 sm:$0xff] %v5289
        %5430 = vst [vmem:[%s5388] ss:$4 sm:$0xff] %v5290
        %5431 = vst [vmem:[%s5390] ss:$4 sm:$0xff] %v5291
        %v5432 = vld.sshfl [vmem:[#allocation1] sm:$0xff pattern:$0x73625140]
        %v5433 = vld.sshfl [vmem:[#allocation1 + $0x20] sm:$0xff pattern:$0x73625140]
        %5434 = vst [vmem:[#allocation1] ss:$4 sm:$0xff] %v5182
        %5435 = vst [vmem:[%s5378] ss:$4 sm:$0xff] %v5292
        %5436 = vst [vmem:[%s5380] ss:$4 sm:$0xff] %v5293
        %5437 = vst [vmem:[%s5382] ss:$4 sm:$0xff] %v5294
        %5438 = vst [vmem:[%s5384] ss:$4 sm:$0xff] %v5183
        %5439 = vst [vmem:[%s5386] ss:$4 sm:$0xff] %v5184
        %5440 = vst [vmem:[%s5388] ss:$4 sm:$0xff] %v5295
        %5441 = vst [vmem:[%s5390] ss:$4 sm:$0xff] %v5296
        %v5442 = vld.sshfl [vmem:[#allocation1] sm:$0xff pattern:$0x73625140]
        %v5443 = vld.sshfl [vmem:[#allocation1 + $0x20] sm:$0xff pattern:$0x73625140]
        %5444 = vst [vmem:[#allocation1] ss:$4 sm:$0xff] %v5297
        %5445 = vst [vmem:[%s5378] ss:$4 sm:$0xff] %v5185
        %5446 = vst [vmem:[%s5380] ss:$4 sm:$0xff] %v5298
        %5447 = vst [vmem:[%s5382] ss:$4 sm:$0xff] %v5299
        %5448 = vst [vmem:[%s5384] ss:$4 sm:$0xff] %v5300
        %5449 = vst [vmem:[%s5386] ss:$4 sm:$0xff] %v5186
        %5450 = vst [vmem:[%s5388] ss:$4 sm:$0xff] %v5187
        %5451 = vst [vmem:[%s5390] ss:$4 sm:$0xff] %v5301
        %v5452 = vld.sshfl [vmem:[#allocation1] sm:$0xff pattern:$0x73625140]
        %v5453 = vld.sshfl [vmem:[#allocation1 + $0x20] sm:$0xff pattern:$0x73625140]
        %5454 = vst [vmem:[#allocation1] ss:$4 sm:$0xff] %v5302
        %5455 = vst [vmem:[%s5378] ss:$4 sm:$0xff] %v5303
        %5456 = vst [vmem:[%s5380] ss:$4 sm:$0xff] %v5188
        %5457 = vst [vmem:[%s5382] ss:$4 sm:$0xff] %v5304
        %5458 = vst [vmem:[%s5384] ss:$4 sm:$0xff] %v5305
        %5459 = vst [vmem:[%s5386] ss:$4 sm:$0xff] %v5306
        %5460 = vst [vmem:[%s5388] ss:$4 sm:$0xff] %v5189
        %5461 = vst [vmem:[%s5390] ss:$4 sm:$0xff] %v5190
        %v5462 = vld.sshfl [vmem:[#allocation1] sm:$0xff pattern:$0x73625140]
        %v5463 = vld.sshfl [vmem:[#allocation1 + $0x20] sm:$0xff pattern:$0x73625140]
        %5464 = vst [vmem:[#allocation1] ss:$4 sm:$0xff] %v5307
        %5465 = vst [vmem:[%s5378] ss:$4 sm:$0xff] %v5308
        %5466 = vst [vmem:[%s5380] ss:$4 sm:$0xff] %v5309
        %5467 = vst [vmem:[%s5382] ss:$4 sm:$0xff] %v5191
        %5468 = vst [vmem:[%s5384] ss:$4 sm:$0xff] %v5310
        %5469 = vst [vmem:[%s5386] ss:$4 sm:$0xff] %v5311
        %5470 = vst [vmem:[%s5388] ss:$4 sm:$0xff] %v5312
        %5471 = vst [vmem:[%s5390] ss:$4 sm:$0xff] %v5192
        %v5472 = vld.sshfl [vmem:[#allocation1] sm:$0xff pattern:$0x73625140]
        %v5473 = vld.sshfl [vmem:[#allocation1 + $0x20] sm:$0xff pattern:$0x73625140]
        %5474 = vst [vmem:[#allocation1] ss:$4 sm:$0xff] %v5193
        %5475 = vst [vmem:[%s5378] ss:$4 sm:$0xff] %v5313
        %5476 = vst [vmem:[%s5380] ss:$4 sm:$0xff] %v5314
        %5477 = vst [vmem:[%s5382] ss:$4 sm:$0xff] %v5315
        %5478 = vst [vmem:[%s5384] ss:$4 sm:$0xff] %v5194
        %5479 = vst [vmem:[%s5386] ss:$4 sm:$0xff] %v5316
        %5480 = vst [vmem:[%s5388] ss:$4 sm:$0xff] %v5317
        %5481 = vst [vmem:[%s5390] ss:$4 sm:$0xff] %v5318
        %v5482 = vld.sshfl [vmem:[#allocation1] sm:$0xff pattern:$0x73625140]
        %v5483 = vld.sshfl [vmem:[#allocation1 + $0x20] sm:$0xff pattern:$0x73625140]
        %5484 = vst [vmem:[#allocation1] ss:$4 sm:$0xff] %v5195
        %5485 = vst [vmem:[%s5378] ss:$4 sm:$0xff] %v5196
        %5486 = vst [vmem:[%s5380] ss:$4 sm:$0xff] %v5319
        %5487 = vst [vmem:[%s5382] ss:$4 sm:$0xff] %v5320
        %5488 = vst [vmem:[%s5384] ss:$4 sm:$0xff] %v5321
        %5489 = vst [vmem:[%s5386] ss:$4 sm:$0xff] %v5197
        %5490 = vst [vmem:[%s5388] ss:$4 sm:$0xff] %v5322
        %5491 = vst [vmem:[%s5390] ss:$4 sm:$0xff] %v5323
        %v5492 = vld.sshfl [vmem:[#allocation1] sm:$0xff pattern:$0x73625140]
        %v5493 = vld.sshfl [vmem:[#allocation1 + $0x20] sm:$0xff pattern:$0x73625140]
        %5494 = vst [vmem:[#allocation1] ss:$4 sm:$0xff] %v5324
        %5495 = vst [vmem:[%s5378] ss:$4 sm:$0xff] %v5198
        %5496 = vst [vmem:[%s5380] ss:$4 sm:$0xff] %v5199
        %5497 = vst [vmem:[%s5382] ss:$4 sm:$0xff] %v5325
        %5498 = vst [vmem:[%s5384] ss:$4 sm:$0xff] %v5326
        %5499 = vst [vmem:[%s5386] ss:$4 sm:$0xff] %v5327
        %5500 = vst [vmem:[%s5388] ss:$4 sm:$0xff] %v5200
        %5501 = vst [vmem:[%s5390] ss:$4 sm:$0xff] %v5328
        %v5502 = vld.sshfl [vmem:[#allocation1] sm:$0xff pattern:$0x73625140]
        %v5503 = vld.sshfl [vmem:[#allocation1 + $0x20] sm:$0xff pattern:$0x73625140]
        %5504 = vst [vmem:[#allocation1] ss:$4 sm:$0xff] %v5329
        %5505 = vst [vmem:[%s5378] ss:$4 sm:$0xff] %v5330
        %5506 = vst [vmem:[%s5380] ss:$4 sm:$0xff] %v5201
        %5507 = vst [vmem:[%s5382] ss:$4 sm:$0xff] %v5202
        %5508 = vst [vmem:[%s5384] ss:$4 sm:$0xff] %v5331
        %5509 = vst [vmem:[%s5386] ss:$4 sm:$0xff] %v5332
        %5510 = vst [vmem:[%s5388] ss:$4 sm:$0xff] %v5333
        %5511 = vst [vmem:[%s5390] ss:$4 sm:$0xff] %v5203
        %v5512 = vld.sshfl [vmem:[#allocation1] sm:$0xff pattern:$0x73625140]
        %v5513 = vld.sshfl [vmem:[#allocation1 + $0x20] sm:$0xff pattern:$0x73625140]
        %5514 = vst [vmem:[#allocation1] ss:$4 sm:$0xff] %v5334
        %5515 = vst [vmem:[%s5378] ss:$4 sm:$0xff] %v5335
        %5516 = vst [vmem:[%s5380] ss:$4 sm:$0xff] %v5336
        %5517 = vst [vmem:[%s5382] ss:$4 sm:$0xff] %v5204
        %5518 = vst [vmem:[%s5384] ss:$4 sm:$0xff] %v5205
        %5519 = vst [vmem:[%s5386] ss:$4 sm:$0xff] %v5337
        %5520 = vst [vmem:[%s5388] ss:$4 sm:$0xff] %v5338
        %5521 = vst [vmem:[%s5390] ss:$4 sm:$0xff] %v5339
        %v5522 = vld.sshfl [vmem:[#allocation1] sm:$0xff pattern:$0x73625140]
        %v5523 = vld.sshfl [vmem:[#allocation1 + $0x20] sm:$0xff pattern:$0x73625140]
        %5524 = vst [vmem:[#allocation1] ss:$4 sm:$0xff] %v5206
        %5525 = vst [vmem:[%s5378] ss:$4 sm:$0xff] %v5340
        %5526 = vst [vmem:[%s5380] ss:$4 sm:$0xff] %v5341
        %5527 = vst [vmem:[%s5382] ss:$4 sm:$0xff] %v5342
        %5528 = vst [vmem:[%s5384] ss:$4 sm:$0xff] %v5207
        %5529 = vst [vmem:[%s5386] ss:$4 sm:$0xff] %v5208
        %5530 = vst [vmem:[%s5388] ss:$4 sm:$0xff] %v5343
        %5531 = vst [vmem:[%s5390] ss:$4 sm:$0xff] %v5344
        %v5532 = vld.sshfl [vmem:[#allocation1] sm:$0xff pattern:$0x73625140]
        %v5533 = vld.sshfl [vmem:[#allocation1 + $0x20] sm:$0xff pattern:$0x73625140]
        %5534 = vst [vmem:[#allocation1] ss:$4 sm:$0xff] %v5345
        %5535 = vst [vmem:[%s5378] ss:$4 sm:$0xff] %v5209
        %5536 = vst [vmem:[%s5380] ss:$4 sm:$0xff] %v5346
        %5537 = vst [vmem:[%s5382] ss:$4 sm:$0xff] %v5347
        %5538 = vst [vmem:[%s5384] ss:$4 sm:$0xff] %v5348
        %5539 = vst [vmem:[%s5386] ss:$4 sm:$0xff] %v5210
        %5540 = vst [vmem:[%s5388] ss:$4 sm:$0xff] %v5211
        %5541 = vst [vmem:[%s5390] ss:$4 sm:$0xff] %v5349
        %v5542 = vld.sshfl [vmem:[#allocation1] sm:$0xff pattern:$0x73625140]
        %v5543 = vld.sshfl [vmem:[#allocation1 + $0x20] sm:$0xff pattern:$0x73625140]
        %5544 = vst [vmem:[#allocation1] ss:$4 sm:$0xff] %v5350
        %5545 = vst [vmem:[%s5378] ss:$4 sm:$0xff] %v5351
        %5546 = vst [vmem:[%s5380] ss:$4 sm:$0xff] %v5212
        %5547 = vst [vmem:[%s5382] ss:$4 sm:$0xff] %v5352
        %5548 = vst [vmem:[%s5384] ss:$4 sm:$0xff] %v5353
        %5549 = vst [vmem:[%s5386] ss:$4 sm:$0xff] %v5354
        %5550 = vst [vmem:[%s5388] ss:$4 sm:$0xff] %v5213
        %5551 = vst [vmem:[%s5390] ss:$4 sm:$0xff] %v5214
        %v5552 = vld.sshfl [vmem:[#allocation1] sm:$0xff pattern:$0x73625140]
        %v5553 = vld.sshfl [vmem:[#allocation1 + $0x20] sm:$0xff pattern:$0x73625140]
        %5554 = vst [vmem:[#allocation1] ss:$4 sm:$0xff] %v5355
        %5555 = vst [vmem:[%s5378] ss:$4 sm:$0xff] %v5356
        %5556 = vst [vmem:[%s5380] ss:$4 sm:$0xff] %v5357
        %5557 = vst [vmem:[%s5382] ss:$4 sm:$0xff] %v5215
        %5558 = vst [vmem:[%s5384] ss:$4 sm:$0xff] %v5358
        %5559 = vst [vmem:[%s5386] ss:$4 sm:$0xff] %v5359
        %5560 = vst [vmem:[%s5388] ss:$4 sm:$0xff] %v5360
        %5561 = vst [vmem:[%s5390] ss:$4 sm:$0xff] %v5216
        %v5562 = vld.sshfl [vmem:[#allocation1] sm:$0xff pattern:$0x73625140]
        %v5563 = vld.sshfl [vmem:[#allocation1 + $0x20] sm:$0xff pattern:$0x73625140]
        %v5600 = vpack.c.bf16 %v5392, %v5392
        %v5601 = vpack.c.bf16 %v5393, %v5393
        %v5602 = vpack.c.bf16 %v5402, %v5402
        %v5603 = vpack.c.bf16 %v5403, %v5403
        %v5604 = vpack.c.bf16 %v5412, %v5412
        %v5605 = vpack.c.bf16 %v5413, %v5413
        %v5606 = vpack.c.bf16 %v5422, %v5422
        %v5607 = vpack.c.bf16 %v5423, %v5423
        %v5608 = vpack.c.bf16 %v5432, %v5432
        %v5609 = vpack.c.bf16 %v5433, %v5433
        %v5610 = vpack.c.bf16 %v5442, %v5442
        %v5611 = vpack.c.bf16 %v5443, %v5443
        %v5612 = vpack.c.bf16 %v5452, %v5452
        %v5613 = vpack.c.bf16 %v5453, %v5453
        %v5614 = vpack.c.bf16 %v5462, %v5462
        %v5615 = vpack.c.bf16 %v5463, %v5463
        %v5616 = vpack.c.bf16 %v5472, %v5472
        %v5617 = vpack.c.bf16 %v5473, %v5473
        %v5618 = vpack.c.bf16 %v5482, %v5482
        %v5619 = vpack.c.bf16 %v5483, %v5483
        %v5620 = vpack.c.bf16 %v5492, %v5492
        %v5621 = vpack.c.bf16 %v5493, %v5493
        %v5622 = vpack.c.bf16 %v5502, %v5502
        %v5623 = vpack.c.bf16 %v5503, %v5503
        %v5624 = vpack.c.bf16 %v5512, %v5512
        %v5625 = vpack.c.bf16 %v5513, %v5513
        %v5626 = vpack.c.bf16 %v5522, %v5522
        %v5627 = vpack.c.bf16 %v5523, %v5523
        %v5628 = vpack.c.bf16 %v5532, %v5532
        %v5629 = vpack.c.bf16 %v5533, %v5533
        %v5630 = vpack.c.bf16 %v5542, %v5542
        %v5631 = vpack.c.bf16 %v5543, %v5543
        %v5632 = vpack.c.bf16 %v5552, %v5552
        %v5633 = vpack.c.bf16 %v5553, %v5553
        %v5634 = vpack.c.bf16 %v5562, %v5562
        %v5635 = vpack.c.bf16 %v5563, %v5563
        %vm5636 = vsmask.f32 5392
        %vm5637 = vmor %vm5364, %vm5636
        %v5639 = vshrl.u32 %v5600, 16
        %v5641 = vrot.slane %v5639, 6
        %v5642 = vshll.u32 %v5600, 16
        %v5644 = vrot.slane %v5642, 7
        %v5645 = vor.u32 %v5641, %v5644
        %v5646 = vrot.slane %v5645, 4
        %v5648 = vshrl.u32 %v5601, 16
        %v5650 = vrot.slane %v5648, 6
        %v5651 = vshll.u32 %v5601, 16
        %v5653 = vrot.slane %v5651, 7
        %v5654 = vor.u32 %v5650, %v5653
        %v5655 = vsel %vm5637, %v5646, %v5654
        %v5656 = vrot.slane %v5654, 4
        %v5658 = vshrl.u32 %v5602, 16
        %v5660 = vrot.slane %v5658, 6
        %v5661 = vshll.u32 %v5602, 16
        %v5663 = vrot.slane %v5661, 7
        %v5664 = vor.u32 %v5660, %v5663
        %v5665 = vsel %vm5637, %v5656, %v5664
        %v5666 = vrot.slane %v5664, 4
        %v5668 = vshrl.u32 %v5603, 16
        %v5670 = vrot.slane %v5668, 6
        %v5671 = vshll.u32 %v5603, 16
        %v5673 = vrot.slane %v5671, 7
        %v5674 = vor.u32 %v5670, %v5673
        %v5675 = vsel %vm5637, %v5666, %v5674
        %v5676 = vrot.slane %v5674, 4
        %v5678 = vshrl.u32 %v5604, 16
        %v5680 = vrot.slane %v5678, 6
        %v5681 = vshll.u32 %v5604, 16
        %v5683 = vrot.slane %v5681, 7
        %v5684 = vor.u32 %v5680, %v5683
        %v5685 = vsel %vm5637, %v5676, %v5684
        %v5686 = vrot.slane %v5684, 4
        %v5688 = vshrl.u32 %v5605, 16
        %v5690 = vrot.slane %v5688, 6
        %v5691 = vshll.u32 %v5605, 16
        %v5693 = vrot.slane %v5691, 7
        %v5694 = vor.u32 %v5690, %v5693
        %v5695 = vsel %vm5637, %v5686, %v5694
        %v5696 = vrot.slane %v5694, 4
        %v5698 = vshrl.u32 %v5606, 16
        %v5700 = vrot.slane %v5698, 6
        %v5701 = vshll.u32 %v5606, 16
        %v5703 = vrot.slane %v5701, 7
        %v5704 = vor.u32 %v5700, %v5703
        %v5705 = vsel %vm5637, %v5696, %v5704
        %v5706 = vrot.slane %v5704, 4
        %v5708 = vshrl.u32 %v5607, 16
        %v5710 = vrot.slane %v5708, 6
        %v5711 = vshll.u32 %v5607, 16
        %v5713 = vrot.slane %v5711, 7
        %v5714 = vor.u32 %v5710, %v5713
        %v5715 = vsel %vm5637, %v5706, %v5714
        %v5716 = vrot.slane %v5714, 4
        %v5718 = vshrl.u32 %v5608, 16
        %v5720 = vrot.slane %v5718, 6
        %v5721 = vshll.u32 %v5608, 16
        %v5723 = vrot.slane %v5721, 7
        %v5724 = vor.u32 %v5720, %v5723
        %v5725 = vsel %vm5637, %v5716, %v5724
        %v5726 = vrot.slane %v5724, 4
        %v5728 = vshrl.u32 %v5609, 16
        %v5730 = vrot.slane %v5728, 6
        %v5731 = vshll.u32 %v5609, 16
        %v5733 = vrot.slane %v5731, 7
        %v5734 = vor.u32 %v5730, %v5733
        %v5735 = vsel %vm5637, %v5726, %v5734
        %v5736 = vrot.slane %v5734, 4
        %v5738 = vshrl.u32 %v5610, 16
        %v5740 = vrot.slane %v5738, 6
        %v5741 = vshll.u32 %v5610, 16
        %v5743 = vrot.slane %v5741, 7
        %v5744 = vor.u32 %v5740, %v5743
        %v5745 = vsel %vm5637, %v5736, %v5744
        %v5746 = vrot.slane %v5744, 4
        %v5748 = vshrl.u32 %v5611, 16
        %v5750 = vrot.slane %v5748, 6
        %v5751 = vshll.u32 %v5611, 16
        %v5753 = vrot.slane %v5751, 7
        %v5754 = vor.u32 %v5750, %v5753
        %v5755 = vsel %vm5637, %v5746, %v5754
        %v5756 = vrot.slane %v5754, 4
        %v5758 = vshrl.u32 %v5612, 16
        %v5760 = vrot.slane %v5758, 6
        %v5761 = vshll.u32 %v5612, 16
        %v5763 = vrot.slane %v5761, 7
        %v5764 = vor.u32 %v5760, %v5763
        %v5765 = vsel %vm5637, %v5756, %v5764
        %v5766 = vrot.slane %v5764, 4
        %v5768 = vshrl.u32 %v5613, 16
        %v5770 = vrot.slane %v5768, 6
        %v5771 = vshll.u32 %v5613, 16
        %v5773 = vrot.slane %v5771, 7
        %v5774 = vor.u32 %v5770, %v5773
        %v5775 = vsel %vm5637, %v5766, %v5774
        %v5776 = vrot.slane %v5774, 4
        %v5778 = vshrl.u32 %v5614, 16
        %v5780 = vrot.slane %v5778, 6
        %v5781 = vshll.u32 %v5614, 16
        %v5783 = vrot.slane %v5781, 7
        %v5784 = vor.u32 %v5780, %v5783
        %v5785 = vsel %vm5637, %v5776, %v5784
        %v5786 = vrot.slane %v5784, 4
        %v5788 = vshrl.u32 %v5615, 16
        %v5790 = vrot.slane %v5788, 6
        %v5791 = vshll.u32 %v5615, 16
        %v5793 = vrot.slane %v5791, 7
        %v5794 = vor.u32 %v5790, %v5793
        %v5795 = vsel %vm5637, %v5786, %v5794
        %v5796 = vrot.slane %v5794, 4
        %v5798 = vshrl.u32 %v5616, 16
        %v5800 = vrot.slane %v5798, 6
        %v5801 = vshll.u32 %v5616, 16
        %v5803 = vrot.slane %v5801, 7
        %v5804 = vor.u32 %v5800, %v5803
        %v5805 = vsel %vm5637, %v5796, %v5804
        %v5806 = vrot.slane %v5804, 4
        %v5808 = vshrl.u32 %v5617, 16
        %v5810 = vrot.slane %v5808, 6
        %v5811 = vshll.u32 %v5617, 16
        %v5813 = vrot.slane %v5811, 7
        %v5814 = vor.u32 %v5810, %v5813
        %v5815 = vsel %vm5637, %v5806, %v5814
        %v5816 = vrot.slane %v5814, 4
        %v5818 = vshrl.u32 %v5618, 16
        %v5820 = vrot.slane %v5818, 6
        %v5821 = vshll.u32 %v5618, 16
        %v5823 = vrot.slane %v5821, 7
        %v5824 = vor.u32 %v5820, %v5823
        %v5825 = vsel %vm5637, %v5816, %v5824
        %v5826 = vrot.slane %v5824, 4
        %v5828 = vshrl.u32 %v5619, 16
        %v5830 = vrot.slane %v5828, 6
        %v5831 = vshll.u32 %v5619, 16
        %v5833 = vrot.slane %v5831, 7
        %v5834 = vor.u32 %v5830, %v5833
        %v5835 = vsel %vm5637, %v5826, %v5834
        %v5836 = vrot.slane %v5834, 4
        %v5838 = vshrl.u32 %v5620, 16
        %v5840 = vrot.slane %v5838, 6
        %v5841 = vshll.u32 %v5620, 16
        %v5843 = vrot.slane %v5841, 7
        %v5844 = vor.u32 %v5840, %v5843
        %v5845 = vsel %vm5637, %v5836, %v5844
        %v5846 = vrot.slane %v5844, 4
        %v5848 = vshrl.u32 %v5621, 16
        %v5850 = vrot.slane %v5848, 6
        %v5851 = vshll.u32 %v5621, 16
        %v5853 = vrot.slane %v5851, 7
        %v5854 = vor.u32 %v5850, %v5853
        %v5855 = vsel %vm5637, %v5846, %v5854
        %v5856 = vrot.slane %v5854, 4
        %v5858 = vshrl.u32 %v5622, 16
        %v5860 = vrot.slane %v5858, 6
        %v5861 = vshll.u32 %v5622, 16
        %v5863 = vrot.slane %v5861, 7
        %v5864 = vor.u32 %v5860, %v5863
        %v5865 = vsel %vm5637, %v5856, %v5864
        %v5866 = vrot.slane %v5864, 4
        %v5868 = vshrl.u32 %v5623, 16
        %v5870 = vrot.slane %v5868, 6
        %v5871 = vshll.u32 %v5623, 16
        %v5873 = vrot.slane %v5871, 7
        %v5874 = vor.u32 %v5870, %v5873
        %v5875 = vsel %vm5637, %v5866, %v5874
        %v5876 = vrot.slane %v5874, 4
        %v5878 = vshrl.u32 %v5624, 16
        %v5880 = vrot.slane %v5878, 6
        %v5881 = vshll.u32 %v5624, 16
        %v5883 = vrot.slane %v5881, 7
        %v5884 = vor.u32 %v5880, %v5883
        %v5885 = vsel %vm5637, %v5876, %v5884
        %v5886 = vrot.slane %v5884, 4
        %v5888 = vshrl.u32 %v5625, 16
        %v5890 = vrot.slane %v5888, 6
        %v5891 = vshll.u32 %v5625, 16
        %v5893 = vrot.slane %v5891, 7
        %v5894 = vor.u32 %v5890, %v5893
        %v5895 = vsel %vm5637, %v5886, %v5894
        %v5896 = vrot.slane %v5894, 4
        %v5898 = vshrl.u32 %v5626, 16
        %v5900 = vrot.slane %v5898, 6
        %v5901 = vshll.u32 %v5626, 16
        %v5903 = vrot.slane %v5901, 7
        %v5904 = vor.u32 %v5900, %v5903
        %v5905 = vsel %vm5637, %v5896, %v5904
        %v5906 = vrot.slane %v5904, 4
        %v5908 = vshrl.u32 %v5627, 16
        %v5910 = vrot.slane %v5908, 6
        %v5911 = vshll.u32 %v5627, 16
        %v5913 = vrot.slane %v5911, 7
        %v5914 = vor.u32 %v5910, %v5913
        %v5915 = vsel %vm5637, %v5906, %v5914
        %v5916 = vrot.slane %v5914, 4
        %v5918 = vshrl.u32 %v5628, 16
        %v5920 = vrot.slane %v5918, 6
        %v5921 = vshll.u32 %v5628, 16
        %v5923 = vrot.slane %v5921, 7
        %v5924 = vor.u32 %v5920, %v5923
        %v5925 = vsel %vm5637, %v5916, %v5924
        %v5926 = vrot.slane %v5924, 4
        %v5928 = vshrl.u32 %v5629, 16
        %v5930 = vrot.slane %v5928, 6
        %v5931 = vshll.u32 %v5629, 16
        %v5933 = vrot.slane %v5931, 7
        %v5934 = vor.u32 %v5930, %v5933
        %v5935 = vsel %vm5637, %v5926, %v5934
        %v5936 = vrot.slane %v5934, 4
        %v5938 = vshrl.u32 %v5630, 16
        %v5940 = vrot.slane %v5938, 6
        %v5941 = vshll.u32 %v5630, 16
        %v5943 = vrot.slane %v5941, 7
        %v5944 = vor.u32 %v5940, %v5943
        %v5945 = vsel %vm5637, %v5936, %v5944
        %v5946 = vrot.slane %v5944, 4
        %v5948 = vshrl.u32 %v5631, 16
        %v5950 = vrot.slane %v5948, 6
        %v5951 = vshll.u32 %v5631, 16
        %v5953 = vrot.slane %v5951, 7
        %v5954 = vor.u32 %v5950, %v5953
        %v5955 = vsel %vm5637, %v5946, %v5954
        %v5956 = vrot.slane %v5954, 4
        %v5958 = vshrl.u32 %v5632, 16
        %v5960 = vrot.slane %v5958, 6
        %v5961 = vshll.u32 %v5632, 16
        %v5963 = vrot.slane %v5961, 7
        %v5964 = vor.u32 %v5960, %v5963
        %v5965 = vsel %vm5637, %v5956, %v5964
        %v5966 = vrot.slane %v5964, 4
        %v5968 = vshrl.u32 %v5633, 16
        %v5970 = vrot.slane %v5968, 6
        %v5971 = vshll.u32 %v5633, 16
        %v5973 = vrot.slane %v5971, 7
        %v5974 = vor.u32 %v5970, %v5973
        %v5975 = vsel %vm5637, %v5966, %v5974
        %v5976 = vrot.slane %v5974, 4
        %v5978 = vshrl.u32 %v5634, 16
        %v5980 = vrot.slane %v5978, 6
        %v5981 = vshll.u32 %v5634, 16
        %v5983 = vrot.slane %v5981, 7
        %v5984 = vor.u32 %v5980, %v5983
        %v5985 = vsel %vm5637, %v5976, %v5984
        %v5986 = vrot.slane %v5984, 4
        %v5988 = vshrl.u32 %v5635, 16
        %v5990 = vrot.slane %v5988, 6
        %v5991 = vshll.u32 %v5635, 16
        %v5993 = vrot.slane %v5991, 7
        %v5994 = vor.u32 %v5990, %v5993
        %v5995 = vsel %vm5637, %v5986, %v5994
        %v5996 = vrot.slane %v5994, 4
        %v6034 = vld [vmem:[#allocation2 + $0x8] sm:$0xe]
        %v6035 = vsel %vm5371, %v5645, %v6034
        %6036 = vst [vmem:[#allocation2 + $0x8] sm:$0xe] %v6035
        %6037 = vst [vmem:[#allocation2 + $0xc] sm:$0xf] %v5655
        %6038 = vst [vmem:[#allocation2 + $0x10] sm:$0xf] %v5665
        %6039 = vst [vmem:[#allocation2 + $0x14] sm:$0xf] %v5675
        %6040 = vst [vmem:[#allocation2 + $0x18] sm:$0xf] %v5685
        %6041 = vst [vmem:[#allocation2 + $0x1c] sm:$0xf] %v5695
        %6042 = vst [vmem:[#allocation2 + $0x20] sm:$0xf] %v5705
        %6043 = vst [vmem:[#allocation2 + $0x24] sm:$0xf] %v5715
        %6044 = vst [vmem:[#allocation2 + $0x28] sm:$0xf] %v5725
        %6045 = vst [vmem:[#allocation2 + $0x2c] sm:$0xf] %v5735
        %6046 = vst [vmem:[#allocation2 + $0x30] sm:$0xf] %v5745
        %6047 = vst [vmem:[#allocation2 + $0x34] sm:$0xf] %v5755
        %6048 = vst [vmem:[#allocation2 + $0x38] sm:$0xf] %v5765
        %6049 = vst [vmem:[#allocation2 + $0x3c] sm:$0xf] %v5775
        %6050 = vst [vmem:[#allocation2 + $0x40] sm:$0xf] %v5785
        %6051 = vst [vmem:[#allocation2 + $0x44] sm:$0xf] %v5795
        %6052 = vst [vmem:[#allocation2 + $0x48] sm:$0xf] %v5805
        %6053 = vst [vmem:[#allocation2 + $0x4c] sm:$0xf] %v5815
        %6054 = vst [vmem:[#allocation2 + $0x50] sm:$0xf] %v5825
        %6055 = vst [vmem:[#allocation2 + $0x54] sm:$0xf] %v5835
        %6056 = vst [vmem:[#allocation2 + $0x58] sm:$0xf] %v5845
        %6057 = vst [vmem:[#allocation2 + $0x5c] sm:$0xf] %v5855
        %6058 = vst [vmem:[#allocation2 + $0x60] sm:$0xf] %v5865
        %6059 = vst [vmem:[#allocation2 + $0x64] sm:$0xf] %v5875
        %6060 = vst [vmem:[#allocation2 + $0x68] sm:$0xf] %v5885
        %6061 = vst [vmem:[#allocation2 + $0x6c] sm:$0xf] %v5895
        %6062 = vst [vmem:[#allocation2 + $0x70] sm:$0xf] %v5905
        %6063 = vst [vmem:[#allocation2 + $0x74] sm:$0xf] %v5915
        %6064 = vst [vmem:[#allocation2 + $0x78] sm:$0xf] %v5925
        %6065 = vst [vmem:[#allocation2 + $0x7c] sm:$0xf] %v5935
        %6066 = vst [vmem:[#allocation2 + $0x80] sm:$0xf] %v5945
        %6067 = vst [vmem:[#allocation2 + $0x84] sm:$0xf] %v5955
        %6068 = vst [vmem:[#allocation2 + $0x88] sm:$0xf] %v5965
        %6069 = vst [vmem:[#allocation2 + $0x8c] sm:$0xf] %v5975
        %6070 = vst [vmem:[#allocation2 + $0x90] sm:$0xf] %v5985
        %6071 = vst [vmem:[#allocation2 + $0x94] sm:$0xf] %v5995
        %v6072 = vld [vmem:[#allocation2 + $0x98] sm:$0x3]
        %v6073 = vsel %vm5365, %v5996, %v6072
        %6074 = vst [vmem:[#allocation2 + $0x98] sm:$0x3] %v6073
        %v6075 = vld [vmem:[#allocation2] sm:$0xf]
        %v6076 = vld [vmem:[#allocation2 + $0x4] sm:$0xf]
        %v6077 = vld [vmem:[#allocation2 + $0x8] sm:$0xf]
        %v6078 = vld [vmem:[#allocation2 + $0xc] sm:$0xf]
        %v6079 = vld [vmem:[#allocation2 + $0x10] sm:$0xf]
        %v6080 = vld [vmem:[#allocation2 + $0x14] sm:$0xf]
        %v6081 = vld [vmem:[#allocation2 + $0x18] sm:$0xf]
        %v6082 = vld [vmem:[#allocation2 + $0x1c] sm:$0xf]
        %v6083 = vld [vmem:[#allocation2 + $0x20] sm:$0xf]
        %v6084 = vld [vmem:[#allocation2 + $0x24] sm:$0xf]
        %v6085 = vld [vmem:[#allocation2 + $0x28] sm:$0xf]
        %v6086 = vld [vmem:[#allocation2 + $0x2c] sm:$0xf]
        %v6087 = vld [vmem:[#allocation2 + $0x30] sm:$0xf]
        %v6088 = vld [vmem:[#allocation2 + $0x34] sm:$0xf]
        %v6089 = vld [vmem:[#allocation2 + $0x38] sm:$0xf]
        %v6090 = vld [vmem:[#allocation2 + $0x3c] sm:$0xf]
        %v6091 = vld [vmem:[#allocation2 + $0x40] sm:$0xf]
        %v6092 = vld [vmem:[#allocation2 + $0x44] sm:$0xf]
        %v6093 = vld [vmem:[#allocation2 + $0x48] sm:$0xf]
        %v6094 = vld [vmem:[#allocation2 + $0x4c] sm:$0xf]
        %v6095 = vld [vmem:[#allocation2 + $0x50] sm:$0xf]
        %v6096 = vld [vmem:[#allocation2 + $0x54] sm:$0xf]
        %v6097 = vld [vmem:[#allocation2 + $0x58] sm:$0xf]
        %v6098 = vld [vmem:[#allocation2 + $0x5c] sm:$0xf]
        %v6099 = vld [vmem:[#allocation2 + $0x60] sm:$0xf]
        %v6100 = vld [vmem:[#allocation2 + $0x64] sm:$0xf]
        %v6101 = vld [vmem:[#allocation2 + $0x68] sm:$0xf]
        %v6102 = vld [vmem:[#allocation2 + $0x6c] sm:$0xf]
        %v6103 = vld [vmem:[#allocation2 + $0x70] sm:$0xf]
        %v6104 = vld [vmem:[#allocation2 + $0x74] sm:$0xf]
        %v6105 = vld [vmem:[#allocation2 + $0x78] sm:$0xf]
        %v6106 = vld [vmem:[#allocation2 + $0x7c] sm:$0xf]
        %v6107 = vld [vmem:[#allocation2 + $0x80] sm:$0xf]
        %v6108 = vld [vmem:[#allocation2 + $0x84] sm:$0xf]
        %v6109 = vld [vmem:[#allocation2 + $0x88] sm:$0xf]
        %v6110 = vld [vmem:[#allocation2 + $0x8c] sm:$0xf]
        %v6111 = vld [vmem:[#allocation4] sm:$0xf]
        %v6112 = vld [vmem:[#allocation4 + $0x4] sm:$0xf]
        %v6113 = vld [vmem:[#allocation4 + $0x8] sm:$0xf]
        %v6114 = vld [vmem:[#allocation4 + $0xc] sm:$0xf]
        %v6115 = vld [vmem:[#allocation4 + $0x10] sm:$0xf]
        %v6116 = vld [vmem:[#allocation4 + $0x14] sm:$0xf]
        %v6117 = vld [vmem:[#allocation4 + $0x18] sm:$0xf]
        %v6118 = vld [vmem:[#allocation4 + $0x1c] sm:$0xf]
        %v6119 = vld [vmem:[#allocation4 + $0x20] sm:$0xf]
        %v6120 = vld [vmem:[#allocation4 + $0x24] sm:$0xf]
        %v6121 = vld [vmem:[#allocation4 + $0x28] sm:$0xf]
        %v6122 = vld [vmem:[#allocation4 + $0x2c] sm:$0xf]
        %v6123 = vld [vmem:[#allocation4 + $0x30] sm:$0xf]
        %v6124 = vld [vmem:[#allocation4 + $0x34] sm:$0xf]
        %v6125 = vld [vmem:[#allocation4 + $0x38] sm:$0xf]
        %v6126 = vld [vmem:[#allocation4 + $0x3c] sm:$0xf]
        %v6163 = vunpack.c.l.b16 %v6075
        %v6164 = vunpack.c.l.b16 %v6076
        %v6165 = vunpack.c.l.b16 %v6077
        %v6166 = vunpack.c.l.b16 %v6078
        %v6167 = vunpack.c.l.b16 %v6079
        %v6168 = vunpack.c.l.b16 %v6080
        %v6169 = vunpack.c.l.b16 %v6081
        %v6170 = vunpack.c.l.b16 %v6082
        %v6171 = vunpack.c.l.b16 %v6083
        %v6172 = vunpack.c.l.b16 %v6084
        %v6173 = vunpack.c.l.b16 %v6085
        %v6174 = vunpack.c.l.b16 %v6086
        %v6175 = vunpack.c.l.b16 %v6087
        %v6176 = vunpack.c.l.b16 %v6088
        %v6177 = vunpack.c.l.b16 %v6089
        %v6178 = vunpack.c.l.b16 %v6090
        %v6179 = vunpack.c.l.b16 %v6091
        %v6180 = vunpack.c.l.b16 %v6092
        %v6181 = vunpack.c.l.b16 %v6093
        %v6182 = vunpack.c.l.b16 %v6094
        %v6183 = vunpack.c.l.b16 %v6095
        %v6184 = vunpack.c.l.b16 %v6096
        %v6185 = vunpack.c.l.b16 %v6097
        %v6186 = vunpack.c.l.b16 %v6098
        %v6187 = vunpack.c.l.b16 %v6099
        %v6188 = vunpack.c.l.b16 %v6100
        %v6189 = vunpack.c.l.b16 %v6101
        %v6190 = vunpack.c.l.b16 %v6102
        %v6191 = vunpack.c.l.b16 %v6103
        %v6192 = vunpack.c.l.b16 %v6104
        %v6193 = vunpack.c.l.b16 %v6105
        %v6194 = vunpack.c.l.b16 %v6106
        %v6195 = vunpack.c.l.b16 %v6107
        %v6196 = vunpack.c.l.b16 %v6108
        %v6197 = vunpack.c.l.b16 %v6109
        %v6198 = vunpack.c.l.b16 %v6110
        %v6199 = vpack.c.b16 %v6164, %v6163
        %v6200 = vpack.c.b16 %v6166, %v6165
        %v6201 = vpack.c.b16 %v6168, %v6167
        %v6202 = vpack.c.b16 %v6170, %v6169
        %v6203 = vpack.c.b16 %v6172, %v6171
        %v6204 = vpack.c.b16 %v6174, %v6173
        %v6205 = vpack.c.b16 %v6176, %v6175
        %v6206 = vpack.c.b16 %v6178, %v6177
        %v6207 = vpack.c.b16 %v6180, %v6179
        %v6208 = vpack.c.b16 %v6182, %v6181
        %v6209 = vpack.c.b16 %v6184, %v6183
        %v6210 = vpack.c.b16 %v6186, %v6185
        %v6211 = vpack.c.b16 %v6188, %v6187
        %v6212 = vpack.c.b16 %v6190, %v6189
        %v6213 = vpack.c.b16 %v6192, %v6191
        %v6214 = vpack.c.b16 %v6194, %v6193
        %v6215 = vpack.c.b16 %v6196, %v6195
        %v6216 = vpack.c.b16 %v6198, %v6197
        %v6251 = vunpack.c.l.b16 %v6111
        %v6252 = vunpack.c.l.b16 %v6112
        %v6253 = vunpack.c.l.b16 %v6113
        %v6254 = vunpack.c.l.b16 %v6114
        %v6255 = vunpack.c.l.b16 %v6115
        %v6256 = vunpack.c.l.b16 %v6116
        %v6257 = vunpack.c.l.b16 %v6117
        %v6258 = vunpack.c.l.b16 %v6118
        %v6259 = vunpack.c.l.b16 %v6119
        %v6260 = vunpack.c.l.b16 %v6120
        %v6261 = vunpack.c.l.b16 %v6121
        %v6262 = vunpack.c.l.b16 %v6122
        %v6263 = vunpack.c.l.b16 %v6123
        %v6264 = vunpack.c.l.b16 %v6124
        %v6265 = vunpack.c.l.b16 %v6125
        %v6266 = vunpack.c.l.b16 %v6126
        %v6267 = vpack.c.b16 %v6252, %v6251
        %v6268 = vpack.c.b16 %v6254, %v6253
        %v6269 = vpack.c.b16 %v6256, %v6255
        %v6270 = vpack.c.b16 %v6258, %v6257
        %v6271 = vpack.c.b16 %v6260, %v6259
        %v6272 = vpack.c.b16 %v6262, %v6261
        %v6273 = vpack.c.b16 %v6264, %v6263
        %v6274 = vpack.c.b16 %v6266, %v6265
        %6283 = vmatpush.bf16.msra.mxu0 %v6274
        %6284 = vmatpush.bf16.msra.mxu0 %v6273
        %6285 = vmatpush.bf16.msra.mxu0 %v6272
        %6286 = vmatpush.bf16.msra.mxu0 %v6271
        %6287 = vmatpush.bf16.msra.mxu0 %v6270
        %6288 = vmatpush.bf16.msra.mxu0 %v6269
        %6289 = vmatpush.bf16.msra.mxu0 %v6268
        %6290 = vmatpush.bf16.msra.mxu0 %v6267
        %6291 = vmatmul.bf16.gmra.mxu0 %v6199
        %v6292 = vpop.f32.mrf.mxu0
        %v6293 = vadd.f32 0.0, %v6292
        %v6294 = vpop.f32.mrf.mxu0
        %v6295 = vadd.f32 0.0, %v6294
        %6296 = vmatmul.bf16.gmra.mxu0 %v6200
        %v6297 = vpop.f32.mrf.mxu0
        %v6298 = vadd.f32 0.0, %v6297
        %v6299 = vpop.f32.mrf.mxu0
        %v6300 = vadd.f32 0.0, %v6299
        %6301 = vmatmul.bf16.gmra.mxu0 %v6201
        %v6302 = vpop.f32.mrf.mxu0
        %v6303 = vadd.f32 0.0, %v6302
        %v6304 = vpop.f32.mrf.mxu0
        %v6305 = vadd.f32 0.0, %v6304
        %6306 = vmatmul.bf16.gmra.mxu0 %v6202
        %v6307 = vpop.f32.mrf.mxu0
        %v6308 = vadd.f32 0.0, %v6307
        %v6309 = vpop.f32.mrf.mxu0
        %v6310 = vadd.f32 0.0, %v6309
        %6311 = vmatmul.bf16.gmra.mxu0 %v6203
        %v6312 = vpop.f32.mrf.mxu0
        %v6313 = vadd.f32 0.0, %v6312
        %v6314 = vpop.f32.mrf.mxu0
        %v6315 = vadd.f32 0.0, %v6314
        %6316 = vmatmul.bf16.gmra.mxu0 %v6204
        %v6317 = vpop.f32.mrf.mxu0
        %v6318 = vadd.f32 0.0, %v6317
        %v6319 = vpop.f32.mrf.mxu0
        %v6320 = vadd.f32 0.0, %v6319
        %6321 = vmatmul.bf16.gmra.mxu0 %v6205
        %v6322 = vpop.f32.mrf.mxu0
        %v6323 = vadd.f32 0.0, %v6322
        %v6324 = vpop.f32.mrf.mxu0
        %v6325 = vadd.f32 0.0, %v6324
        %6326 = vmatmul.bf16.gmra.mxu0 %v6206
        %v6327 = vpop.f32.mrf.mxu0
        %v6328 = vadd.f32 0.0, %v6327
        %v6329 = vpop.f32.mrf.mxu0
        %v6330 = vadd.f32 0.0, %v6329
        %6331 = vmatmul.bf16.gmra.mxu0 %v6207
        %v6332 = vpop.f32.mrf.mxu0
        %v6333 = vadd.f32 0.0, %v6332
        %v6334 = vpop.f32.mrf.mxu0
        %v6335 = vadd.f32 0.0, %v6334
        %6336 = vmatmul.bf16.gmra.mxu0 %v6208
        %v6337 = vpop.f32.mrf.mxu0
        %v6338 = vadd.f32 0.0, %v6337
        %v6339 = vpop.f32.mrf.mxu0
        %v6340 = vadd.f32 0.0, %v6339
        %6341 = vmatmul.bf16.gmra.mxu0 %v6209
        %v6342 = vpop.f32.mrf.mxu0
        %v6343 = vadd.f32 0.0, %v6342
        %v6344 = vpop.f32.mrf.mxu0
        %v6345 = vadd.f32 0.0, %v6344
        %6346 = vmatmul.bf16.gmra.mxu0 %v6210
        %v6347 = vpop.f32.mrf.mxu0
        %v6348 = vadd.f32 0.0, %v6347
        %v6349 = vpop.f32.mrf.mxu0
        %v6350 = vadd.f32 0.0, %v6349
        %6351 = vmatmul.bf16.gmra.mxu0 %v6211
        %v6352 = vpop.f32.mrf.mxu0
        %v6353 = vadd.f32 0.0, %v6352
        %v6354 = vpop.f32.mrf.mxu0
        %v6355 = vadd.f32 0.0, %v6354
        %6356 = vmatmul.bf16.gmra.mxu0 %v6212
        %v6357 = vpop.f32.mrf.mxu0
        %v6358 = vadd.f32 0.0, %v6357
        %v6359 = vpop.f32.mrf.mxu0
        %v6360 = vadd.f32 0.0, %v6359
        %6361 = vmatmul.bf16.gmra.mxu0 %v6213
        %v6362 = vpop.f32.mrf.mxu0
        %v6363 = vadd.f32 0.0, %v6362
        %v6364 = vpop.f32.mrf.mxu0
        %v6365 = vadd.f32 0.0, %v6364
        %6366 = vmatmul.bf16.gmra.mxu0 %v6214
        %v6367 = vpop.f32.mrf.mxu0
        %v6368 = vadd.f32 0.0, %v6367
        %v6369 = vpop.f32.mrf.mxu0
        %v6370 = vadd.f32 0.0, %v6369
        %6371 = vmatmul.bf16.gmra.mxu0 %v6215
        %v6372 = vpop.f32.mrf.mxu0
        %v6373 = vadd.f32 0.0, %v6372
        %v6374 = vpop.f32.mrf.mxu0
        %v6375 = vadd.f32 0.0, %v6374
        %6376 = vmatmul.bf16.gmra.mxu0 %v6216
        %v6377 = vpop.f32.mrf.mxu0
        %v6378 = vadd.f32 0.0, %v6377
        %v6379 = vpop.f32.mrf.mxu0
        %v6380 = vadd.f32 0.0, %v6379
        %6381 = vdwg.mxu0
        %6382 = vst [vmem:[#allocation3] sm:$0xff] %v6293
        %6383 = vst [vmem:[#allocation3 + $0x8] sm:$0xff] %v6295
        %6384 = vst [vmem:[#allocation3 + $0x10] sm:$0xff] %v6298
        %6385 = vst [vmem:[#allocation3 + $0x18] sm:$0xff] %v6300
        %6386 = vst [vmem:[#allocation3 + $0x20] sm:$0xff] %v6303
        %6387 = vst [vmem:[#allocation3 + $0x28] sm:$0xff] %v6305
        %6388 = vst [vmem:[#allocation3 + $0x30] sm:$0xff] %v6308
        %6389 = vst [vmem:[#allocation3 + $0x38] sm:$0xff] %v6310
        %6390 = vst [vmem:[#allocation3 + $0x40] sm:$0xff] %v6313
        %6391 = vst [vmem:[#allocation3 + $0x48] sm:$0xff] %v6315
        %6392 = vst [vmem:[#allocation3 + $0x50] sm:$0xff] %v6318
        %6393 = vst [vmem:[#allocation3 + $0x58] sm:$0xff] %v6320
        %6394 = vst [vmem:[#allocation3 + $0x60] sm:$0xff] %v6323
        %6395 = vst [vmem:[#allocation3 + $0x68] sm:$0xff] %v6325
        %6396 = vst [vmem:[#allocation3 + $0x70] sm:$0xff] %v6328
        %6397 = vst [vmem:[#allocation3 + $0x78] sm:$0xff] %v6330
        %6398 = vst [vmem:[#allocation3 + $0x80] sm:$0xff] %v6333
        %6399 = vst [vmem:[#allocation3 + $0x88] sm:$0xff] %v6335
        %6400 = vst [vmem:[#allocation3 + $0x90] sm:$0xff] %v6338
        %6401 = vst [vmem:[#allocation3 + $0x98] sm:$0xff] %v6340
        %6402 = vst [vmem:[#allocation3 + $0xa0] sm:$0xff] %v6343
        %6403 = vst [vmem:[#allocation3 + $0xa8] sm:$0xff] %v6345
        %6404 = vst [vmem:[#allocation3 + $0xb0] sm:$0xff] %v6348
        %6405 = vst [vmem:[#allocation3 + $0xb8] sm:$0xff] %v6350
        %6406 = vst [vmem:[#allocation3 + $0xc0] sm:$0xff] %v6353
        %6407 = vst [vmem:[#allocation3 + $0xc8] sm:$0xff] %v6355
        %6408 = vst [vmem:[#allocation3 + $0xd0] sm:$0xff] %v6358
        %6409 = vst [vmem:[#allocation3 + $0xd8] sm:$0xff] %v6360
        %6410 = vst [vmem:[#allocation3 + $0xe0] sm:$0xff] %v6363
        %6411 = vst [vmem:[#allocation3 + $0xe8] sm:$0xff] %v6365
        %6412 = vst [vmem:[#allocation3 + $0xf0] sm:$0xff] %v6368
        %6413 = vst [vmem:[#allocation3 + $0xf8] sm:$0xff] %v6370
        %6414 = vst [vmem:[#allocation3 + $0x100] sm:$0xff] %v6373
        %6415 = vst [vmem:[#allocation3 + $0x108] sm:$0xff] %v6375
        %6416 = vst [vmem:[#allocation3 + $0x110] sm:$0xff] %v6378
        %6417 = vst [vmem:[#allocation3 + $0x118] sm:$0xff] %v6380
        %v6418 = vld [vmem:[#allocation2] sm:$0xf]
        %v6419 = vld [vmem:[#allocation2 + $0x4] sm:$0xf]
        %v6420 = vld [vmem:[#allocation2 + $0x8] sm:$0xf]
        %v6421 = vld [vmem:[#allocation2 + $0xc] sm:$0xf]
        %v6422 = vld [vmem:[#allocation2 + $0x10] sm:$0xf]
        %v6423 = vld [vmem:[#allocation2 + $0x14] sm:$0xf]
        %v6424 = vld [vmem:[#allocation2 + $0x18] sm:$0xf]
        %v6425 = vld [vmem:[#allocation2 + $0x1c] sm:$0xf]
        %v6426 = vld [vmem:[#allocation2 + $0x20] sm:$0xf]
        %v6427 = vld [vmem:[#allocation2 + $0x24] sm:$0xf]
        %v6428 = vld [vmem:[#allocation2 + $0x28] sm:$0xf]
        %v6429 = vld [vmem:[#allocation2 + $0x2c] sm:$0xf]
        %v6430 = vld [vmem:[#allocation2 + $0x30] sm:$0xf]
        %v6431 = vld [vmem:[#allocation2 + $0x34] sm:$0xf]
        %v6432 = vld [vmem:[#allocation2 + $0x38] sm:$0xf]
        %v6433 = vld [vmem:[#allocation2 + $0x3c] sm:$0xf]
        %v6434 = vld [vmem:[#allocation2 + $0x40] sm:$0xf]
        %v6435 = vld [vmem:[#allocation2 + $0x44] sm:$0xf]
        %v6436 = vld [vmem:[#allocation2 + $0x48] sm:$0xf]
        %v6437 = vld [vmem:[#allocation2 + $0x4c] sm:$0xf]
        %v6438 = vld [vmem:[#allocation2 + $0x50] sm:$0xf]
        %v6439 = vld [vmem:[#allocation2 + $0x54] sm:$0xf]
        %v6440 = vld [vmem:[#allocation2 + $0x58] sm:$0xf]
        %v6441 = vld [vmem:[#allocation2 + $0x5c] sm:$0xf]
        %v6442 = vld [vmem:[#allocation2 + $0x60] sm:$0xf]
        %v6443 = vld [vmem:[#allocation2 + $0x64] sm:$0xf]
        %v6444 = vld [vmem:[#allocation2 + $0x68] sm:$0xf]
        %v6445 = vld [vmem:[#allocation2 + $0x6c] sm:$0xf]
        %v6446 = vld [vmem:[#allocation2 + $0x70] sm:$0xf]
        %v6447 = vld [vmem:[#allocation2 + $0x74] sm:$0xf]
        %v6448 = vld [vmem:[#allocation2 + $0x78] sm:$0xf]
        %v6449 = vld [vmem:[#allocation2 + $0x7c] sm:$0xf]
        %v6450 = vld [vmem:[#allocation2 + $0x80] sm:$0xf]
        %v6451 = vld [vmem:[#allocation2 + $0x84] sm:$0xf]
        %v6452 = vld [vmem:[#allocation2 + $0x88] sm:$0xf]
        %v6453 = vld [vmem:[#allocation2 + $0x8c] sm:$0xf]
        %v6454 = vld [vmem:[#allocation2 + $0x90] sm:$0x1]
        %s6455 = scalar_lea.vmem [#allocation4], 64
        %v6456 = vld [vmem:[%s6455] sm:$0xf]
        %v6457 = vld [vmem:[%s6455 + $0x4] sm:$0xf]
        %v6458 = vld [vmem:[%s6455 + $0x8] sm:$0xf]
        %v6459 = vld [vmem:[%s6455 + $0xc] sm:$0xf]
        %v6460 = vld [vmem:[%s6455 + $0x10] sm:$0xf]
        %v6461 = vld [vmem:[%s6455 + $0x14] sm:$0xf]
        %v6462 = vld [vmem:[%s6455 + $0x18] sm:$0xf]
        %v6463 = vld [vmem:[%s6455 + $0x1c] sm:$0xf]
        %v6464 = vld [vmem:[%s6455 + $0x20] sm:$0xf]
        %v6465 = vld [vmem:[%s6455 + $0x24] sm:$0xf]
        %v6466 = vld [vmem:[%s6455 + $0x28] sm:$0xf]
        %v6467 = vld [vmem:[%s6455 + $0x2c] sm:$0xf]
        %v6468 = vld [vmem:[%s6455 + $0x30] sm:$0xf]
        %v6469 = vld [vmem:[%s6455 + $0x34] sm:$0xf]
        %v6470 = vld [vmem:[%s6455 + $0x38] sm:$0xf]
        %v6471 = vld [vmem:[%s6455 + $0x3c] sm:$0xf]
        %v6509 = vunpack.c.l.b16 %v6418
        %v6510 = vunpack.c.l.b16 %v6419
        %v6511 = vunpack.c.l.b16 %v6420
        %v6512 = vunpack.c.l.b16 %v6421
        %v6513 = vunpack.c.l.b16 %v6422
        %v6514 = vunpack.c.l.b16 %v6423
        %v6515 = vunpack.c.l.b16 %v6424
        %v6516 = vunpack.c.l.b16 %v6425
        %v6517 = vunpack.c.l.b16 %v6426
        %v6518 = vunpack.c.l.b16 %v6427
        %v6519 = vunpack.c.l.b16 %v6428
        %v6520 = vunpack.c.l.b16 %v6429
        %v6521 = vunpack.c.l.b16 %v6430
        %v6522 = vunpack.c.l.b16 %v6431
        %v6523 = vunpack.c.l.b16 %v6432
        %v6524 = vunpack.c.l.b16 %v6433
        %v6525 = vunpack.c.l.b16 %v6434
        %v6526 = vunpack.c.l.b16 %v6435
        %v6527 = vunpack.c.l.b16 %v6436
        %v6528 = vunpack.c.l.b16 %v6437
        %v6529 = vunpack.c.l.b16 %v6438
        %v6530 = vunpack.c.l.b16 %v6439
        %v6531 = vunpack.c.l.b16 %v6440
        %v6532 = vunpack.c.l.b16 %v6441
        %v6533 = vunpack.c.l.b16 %v6442
        %v6534 = vunpack.c.l.b16 %v6443
        %v6535 = vunpack.c.l.b16 %v6444
        %v6536 = vunpack.c.l.b16 %v6445
        %v6537 = vunpack.c.l.b16 %v6446
        %v6538 = vunpack.c.l.b16 %v6447
        %v6539 = vunpack.c.l.b16 %v6448
        %v6540 = vunpack.c.l.b16 %v6449
        %v6541 = vunpack.c.l.b16 %v6450
        %v6542 = vunpack.c.l.b16 %v6451
        %v6543 = vunpack.c.l.b16 %v6452
        %v6544 = vunpack.c.l.b16 %v6453
        %v6545 = vunpack.c.l.b16 %v6454
        %v6546 = vpack.c.b16 %v6510, %v6509
        %v6547 = vpack.c.b16 %v6512, %v6511
        %v6548 = vpack.c.b16 %v6514, %v6513
        %v6549 = vpack.c.b16 %v6516, %v6515
        %v6550 = vpack.c.b16 %v6518, %v6517
        %v6551 = vpack.c.b16 %v6520, %v6519
        %v6552 = vpack.c.b16 %v6522, %v6521
        %v6553 = vpack.c.b16 %v6524, %v6523
        %v6554 = vpack.c.b16 %v6526, %v6525
        %v6555 = vpack.c.b16 %v6528, %v6527
        %v6556 = vpack.c.b16 %v6530, %v6529
        %v6557 = vpack.c.b16 %v6532, %v6531
        %v6558 = vpack.c.b16 %v6534, %v6533
        %v6559 = vpack.c.b16 %v6536, %v6535
        %v6560 = vpack.c.b16 %v6538, %v6537
        %v6561 = vpack.c.b16 %v6540, %v6539
        %v6562 = vpack.c.b16 %v6542, %v6541
        %v6563 = vpack.c.b16 %v6544, %v6543
        %v6564 = vpack.c.b16 %v6545, %v6545
        %v6566 = vshrl.u32 %v6546, 16
        %v6568 = vshll.u32 %v6546, 16
        %v6570 = vrot.slane %v6568, 1
        %v6571 = vor.u32 %v6566, %v6570
        %v6573 = vshll.u32 %v6547, 16
        %v6575 = vrot.slane %v6573, 1
        %v6576 = vsel %vm738, %v6571, %v6575
        %v6577 = vshrl.u32 %v6547, 16
        %v6579 = vor.u32 %v6577, %v6575
        %v6581 = vshll.u32 %v6548, 16
        %v6583 = vrot.slane %v6581, 1
        %v6584 = vsel %vm738, %v6579, %v6583
        %v6585 = vshrl.u32 %v6548, 16
        %v6587 = vor.u32 %v6585, %v6583
        %v6589 = vshll.u32 %v6549, 16
        %v6591 = vrot.slane %v6589, 1
        %v6592 = vsel %vm738, %v6587, %v6591
        %v6593 = vshrl.u32 %v6549, 16
        %v6595 = vor.u32 %v6593, %v6591
        %v6597 = vshll.u32 %v6550, 16
        %v6599 = vrot.slane %v6597, 1
        %v6600 = vsel %vm738, %v6595, %v6599
        %v6601 = vshrl.u32 %v6550, 16
        %v6603 = vor.u32 %v6601, %v6599
        %v6605 = vshll.u32 %v6551, 16
        %v6607 = vrot.slane %v6605, 1
        %v6608 = vsel %vm738, %v6603, %v6607
        %v6609 = vshrl.u32 %v6551, 16
        %v6611 = vor.u32 %v6609, %v6607
        %v6613 = vshll.u32 %v6552, 16
        %v6615 = vrot.slane %v6613, 1
        %v6616 = vsel %vm738, %v6611, %v6615
        %v6617 = vshrl.u32 %v6552, 16
        %v6619 = vor.u32 %v6617, %v6615
        %v6621 = vshll.u32 %v6553, 16
        %v6623 = vrot.slane %v6621, 1
        %v6624 = vsel %vm738, %v6619, %v6623
        %v6625 = vshrl.u32 %v6553, 16
        %v6627 = vor.u32 %v6625, %v6623
        %v6629 = vshll.u32 %v6554, 16
        %v6631 = vrot.slane %v6629, 1
        %v6632 = vsel %vm738, %v6627, %v6631
        %v6633 = vshrl.u32 %v6554, 16
        %v6635 = vor.u32 %v6633, %v6631
        %v6637 = vshll.u32 %v6555, 16
        %v6639 = vrot.slane %v6637, 1
        %v6640 = vsel %vm738, %v6635, %v6639
        %v6641 = vshrl.u32 %v6555, 16
        %v6643 = vor.u32 %v6641, %v6639
        %v6645 = vshll.u32 %v6556, 16
        %v6647 = vrot.slane %v6645, 1
        %v6648 = vsel %vm738, %v6643, %v6647
        %v6649 = vshrl.u32 %v6556, 16
        %v6651 = vor.u32 %v6649, %v6647
        %v6653 = vshll.u32 %v6557, 16
        %v6655 = vrot.slane %v6653, 1
        %v6656 = vsel %vm738, %v6651, %v6655
        %v6657 = vshrl.u32 %v6557, 16
        %v6659 = vor.u32 %v6657, %v6655
        %v6661 = vshll.u32 %v6558, 16
        %v6663 = vrot.slane %v6661, 1
        %v6664 = vsel %vm738, %v6659, %v6663
        %v6665 = vshrl.u32 %v6558, 16
        %v6667 = vor.u32 %v6665, %v6663
        %v6669 = vshll.u32 %v6559, 16
        %v6671 = vrot.slane %v6669, 1
        %v6672 = vsel %vm738, %v6667, %v6671
        %v6673 = vshrl.u32 %v6559, 16
        %v6675 = vor.u32 %v6673, %v6671
        %v6677 = vshll.u32 %v6560, 16
        %v6679 = vrot.slane %v6677, 1
        %v6680 = vsel %vm738, %v6675, %v6679
        %v6681 = vshrl.u32 %v6560, 16
        %v6683 = vor.u32 %v6681, %v6679
        %v6685 = vshll.u32 %v6561, 16
        %v6687 = vrot.slane %v6685, 1
        %v6688 = vsel %vm738, %v6683, %v6687
        %v6689 = vshrl.u32 %v6561, 16
        %v6691 = vor.u32 %v6689, %v6687
        %v6693 = vshll.u32 %v6562, 16
        %v6695 = vrot.slane %v6693, 1
        %v6696 = vsel %vm738, %v6691, %v6695
        %v6697 = vshrl.u32 %v6562, 16
        %v6699 = vor.u32 %v6697, %v6695
        %v6701 = vshll.u32 %v6563, 16
        %v6703 = vrot.slane %v6701, 1
        %v6704 = vsel %vm738, %v6699, %v6703
        %v6705 = vshrl.u32 %v6563, 16
        %v6707 = vor.u32 %v6705, %v6703
        %v6709 = vshll.u32 %v6564, 16
        %v6711 = vrot.slane %v6709, 1
        %v6712 = vsel %vm738, %v6707, %v6711
        %v6747 = vunpack.c.l.b16 %v6456
        %v6748 = vunpack.c.l.b16 %v6457
        %v6749 = vunpack.c.l.b16 %v6458
        %v6750 = vunpack.c.l.b16 %v6459
        %v6751 = vunpack.c.l.b16 %v6460
        %v6752 = vunpack.c.l.b16 %v6461
        %v6753 = vunpack.c.l.b16 %v6462
        %v6754 = vunpack.c.l.b16 %v6463
        %v6755 = vunpack.c.l.b16 %v6464
        %v6756 = vunpack.c.l.b16 %v6465
        %v6757 = vunpack.c.l.b16 %v6466
        %v6758 = vunpack.c.l.b16 %v6467
        %v6759 = vunpack.c.l.b16 %v6468
        %v6760 = vunpack.c.l.b16 %v6469
        %v6761 = vunpack.c.l.b16 %v6470
        %v6762 = vunpack.c.l.b16 %v6471
        %v6763 = vpack.c.b16 %v6748, %v6747
        %v6764 = vpack.c.b16 %v6750, %v6749
        %v6765 = vpack.c.b16 %v6752, %v6751
        %v6766 = vpack.c.b16 %v6754, %v6753
        %v6767 = vpack.c.b16 %v6756, %v6755
        %v6768 = vpack.c.b16 %v6758, %v6757
        %v6769 = vpack.c.b16 %v6760, %v6759
        %v6770 = vpack.c.b16 %v6762, %v6761
        %6779 = vmatpush.bf16.msra.mxu0 %v6770
        %6780 = vmatpush.bf16.msra.mxu0 %v6769
        %6781 = vmatpush.bf16.msra.mxu0 %v6768
        %6782 = vmatpush.bf16.msra.mxu0 %v6767
        %6783 = vmatpush.bf16.msra.mxu0 %v6766
        %6784 = vmatpush.bf16.msra.mxu0 %v6765
        %6785 = vmatpush.bf16.msra.mxu0 %v6764
        %6786 = vmatpush.bf16.msra.mxu0 %v6763
        %6787 = vmatmul.bf16.gmra.mxu0 %v6576
        %v6788 = vpop.f32.mrf.mxu0
        %v6789 = vadd.f32 0.0, %v6788
        %v6790 = vpop.f32.mrf.mxu0
        %v6791 = vadd.f32 0.0, %v6790
        %6792 = vmatmul.bf16.gmra.mxu0 %v6584
        %v6793 = vpop.f32.mrf.mxu0
        %v6794 = vadd.f32 0.0, %v6793
        %v6795 = vpop.f32.mrf.mxu0
        %v6796 = vadd.f32 0.0, %v6795
        %6797 = vmatmul.bf16.gmra.mxu0 %v6592
        %v6798 = vpop.f32.mrf.mxu0
        %v6799 = vadd.f32 0.0, %v6798
        %v6800 = vpop.f32.mrf.mxu0
        %v6801 = vadd.f32 0.0, %v6800
        %6802 = vmatmul.bf16.gmra.mxu0 %v6600
        %v6803 = vpop.f32.mrf.mxu0
        %v6804 = vadd.f32 0.0, %v6803
        %v6805 = vpop.f32.mrf.mxu0
        %v6806 = vadd.f32 0.0, %v6805
        %6807 = vmatmul.bf16.gmra.mxu0 %v6608
        %v6808 = vpop.f32.mrf.mxu0
        %v6809 = vadd.f32 0.0, %v6808
        %v6810 = vpop.f32.mrf.mxu0
        %v6811 = vadd.f32 0.0, %v6810
        %6812 = vmatmul.bf16.gmra.mxu0 %v6616
        %v6813 = vpop.f32.mrf.mxu0
        %v6814 = vadd.f32 0.0, %v6813
        %v6815 = vpop.f32.mrf.mxu0
        %v6816 = vadd.f32 0.0, %v6815
        %6817 = vmatmul.bf16.gmra.mxu0 %v6624
        %v6818 = vpop.f32.mrf.mxu0
        %v6819 = vadd.f32 0.0, %v6818
        %v6820 = vpop.f32.mrf.mxu0
        %v6821 = vadd.f32 0.0, %v6820
        %6822 = vmatmul.bf16.gmra.mxu0 %v6632
        %v6823 = vpop.f32.mrf.mxu0
        %v6824 = vadd.f32 0.0, %v6823
        %v6825 = vpop.f32.mrf.mxu0
        %v6826 = vadd.f32 0.0, %v6825
        %6827 = vmatmul.bf16.gmra.mxu0 %v6640
        %v6828 = vpop.f32.mrf.mxu0
        %v6829 = vadd.f32 0.0, %v6828
        %v6830 = vpop.f32.mrf.mxu0
        %v6831 = vadd.f32 0.0, %v6830
        %6832 = vmatmul.bf16.gmra.mxu0 %v6648
        %v6833 = vpop.f32.mrf.mxu0
        %v6834 = vadd.f32 0.0, %v6833
        %v6835 = vpop.f32.mrf.mxu0
        %v6836 = vadd.f32 0.0, %v6835
        %6837 = vmatmul.bf16.gmra.mxu0 %v6656
        %v6838 = vpop.f32.mrf.mxu0
        %v6839 = vadd.f32 0.0, %v6838
        %v6840 = vpop.f32.mrf.mxu0
        %v6841 = vadd.f32 0.0, %v6840
        %6842 = vmatmul.bf16.gmra.mxu0 %v6664
        %v6843 = vpop.f32.mrf.mxu0
        %v6844 = vadd.f32 0.0, %v6843
        %v6845 = vpop.f32.mrf.mxu0
        %v6846 = vadd.f32 0.0, %v6845
        %6847 = vmatmul.bf16.gmra.mxu0 %v6672
        %v6848 = vpop.f32.mrf.mxu0
        %v6849 = vadd.f32 0.0, %v6848
        %v6850 = vpop.f32.mrf.mxu0
        %v6851 = vadd.f32 0.0, %v6850
        %6852 = vmatmul.bf16.gmra.mxu0 %v6680
        %v6853 = vpop.f32.mrf.mxu0
        %v6854 = vadd.f32 0.0, %v6853
        %v6855 = vpop.f32.mrf.mxu0
        %v6856 = vadd.f32 0.0, %v6855
        %6857 = vmatmul.bf16.gmra.mxu0 %v6688
        %v6858 = vpop.f32.mrf.mxu0
        %v6859 = vadd.f32 0.0, %v6858
        %v6860 = vpop.f32.mrf.mxu0
        %v6861 = vadd.f32 0.0, %v6860
        %6862 = vmatmul.bf16.gmra.mxu0 %v6696
        %v6863 = vpop.f32.mrf.mxu0
        %v6864 = vadd.f32 0.0, %v6863
        %v6865 = vpop.f32.mrf.mxu0
        %v6866 = vadd.f32 0.0, %v6865
        %6867 = vmatmul.bf16.gmra.mxu0 %v6704
        %v6868 = vpop.f32.mrf.mxu0
        %v6869 = vadd.f32 0.0, %v6868
        %v6870 = vpop.f32.mrf.mxu0
        %v6871 = vadd.f32 0.0, %v6870
        %6872 = vmatmul.bf16.gmra.mxu0 %v6712
        %v6873 = vpop.f32.mrf.mxu0
        %v6874 = vadd.f32 0.0, %v6873
        %v6875 = vpop.f32.mrf.mxu0
        %v6876 = vadd.f32 0.0, %v6875
        %6877 = vdwg.mxu0
        %v6878 = vld [vmem:[#allocation3] sm:$0xff]
        %v6879 = vld [vmem:[#allocation3 + $0x8] sm:$0xff]
        %v6880 = vld [vmem:[#allocation3 + $0x10] sm:$0xff]
        %v6881 = vld [vmem:[#allocation3 + $0x18] sm:$0xff]
        %v6882 = vld [vmem:[#allocation3 + $0x20] sm:$0xff]
        %v6883 = vld [vmem:[#allocation3 + $0x28] sm:$0xff]
        %v6884 = vld [vmem:[#allocation3 + $0x30] sm:$0xff]
        %v6885 = vld [vmem:[#allocation3 + $0x38] sm:$0xff]
        %v6886 = vld [vmem:[#allocation3 + $0x40] sm:$0xff]
        %v6887 = vld [vmem:[#allocation3 + $0x48] sm:$0xff]
        %v6888 = vld [vmem:[#allocation3 + $0x50] sm:$0xff]
        %v6889 = vld [vmem:[#allocation3 + $0x58] sm:$0xff]
        %v6890 = vld [vmem:[#allocation3 + $0x60] sm:$0xff]
        %v6891 = vld [vmem:[#allocation3 + $0x68] sm:$0xff]
        %v6892 = vld [vmem:[#allocation3 + $0x70] sm:$0xff]
        %v6893 = vld [vmem:[#allocation3 + $0x78] sm:$0xff]
        %v6894 = vld [vmem:[#allocation3 + $0x80] sm:$0xff]
        %v6895 = vld [vmem:[#allocation3 + $0x88] sm:$0xff]
        %v6896 = vld [vmem:[#allocation3 + $0x90] sm:$0xff]
        %v6897 = vld [vmem:[#allocation3 + $0x98] sm:$0xff]
        %v6898 = vld [vmem:[#allocation3 + $0xa0] sm:$0xff]
        %v6899 = vld [vmem:[#allocation3 + $0xa8] sm:$0xff]
        %v6900 = vld [vmem:[#allocation3 + $0xb0] sm:$0xff]
        %v6901 = vld [vmem:[#allocation3 + $0xb8] sm:$0xff]
        %v6902 = vld [vmem:[#allocation3 + $0xc0] sm:$0xff]
        %v6903 = vld [vmem:[#allocation3 + $0xc8] sm:$0xff]
        %v6904 = vld [vmem:[#allocation3 + $0xd0] sm:$0xff]
        %v6905 = vld [vmem:[#allocation3 + $0xd8] sm:$0xff]
        %v6906 = vld [vmem:[#allocation3 + $0xe0] sm:$0xff]
        %v6907 = vld [vmem:[#allocation3 + $0xe8] sm:$0xff]
        %v6908 = vld [vmem:[#allocation3 + $0xf0] sm:$0xff]
        %v6909 = vld [vmem:[#allocation3 + $0xf8] sm:$0xff]
        %v6910 = vld [vmem:[#allocation3 + $0x100] sm:$0xff]
        %v6911 = vld [vmem:[#allocation3 + $0x108] sm:$0xff]
        %v6912 = vld [vmem:[#allocation3 + $0x110] sm:$0xff]
        %v6913 = vld [vmem:[#allocation3 + $0x118] sm:$0xff]
        %v6914 = vadd.f32 %v6878, %v6789
        %v6915 = vadd.f32 %v6879, %v6791
        %v6916 = vadd.f32 %v6880, %v6794
        %v6917 = vadd.f32 %v6881, %v6796
        %v6918 = vadd.f32 %v6882, %v6799
        %v6919 = vadd.f32 %v6883, %v6801
        %v6920 = vadd.f32 %v6884, %v6804
        %v6921 = vadd.f32 %v6885, %v6806
        %v6922 = vadd.f32 %v6886, %v6809
        %v6923 = vadd.f32 %v6887, %v6811
        %v6924 = vadd.f32 %v6888, %v6814
        %v6925 = vadd.f32 %v6889, %v6816
        %v6926 = vadd.f32 %v6890, %v6819
        %v6927 = vadd.f32 %v6891, %v6821
        %v6928 = vadd.f32 %v6892, %v6824
        %v6929 = vadd.f32 %v6893, %v6826
        %v6930 = vadd.f32 %v6894, %v6829
        %v6931 = vadd.f32 %v6895, %v6831
        %v6932 = vadd.f32 %v6896, %v6834
        %v6933 = vadd.f32 %v6897, %v6836
        %v6934 = vadd.f32 %v6898, %v6839
        %v6935 = vadd.f32 %v6899, %v6841
        %v6936 = vadd.f32 %v6900, %v6844
        %v6937 = vadd.f32 %v6901, %v6846
        %v6938 = vadd.f32 %v6902, %v6849
        %v6939 = vadd.f32 %v6903, %v6851
        %v6940 = vadd.f32 %v6904, %v6854
        %v6941 = vadd.f32 %v6905, %v6856
        %v6942 = vadd.f32 %v6906, %v6859
        %v6943 = vadd.f32 %v6907, %v6861
        %v6944 = vadd.f32 %v6908, %v6864
        %v6945 = vadd.f32 %v6909, %v6866
        %v6946 = vadd.f32 %v6910, %v6869
        %v6947 = vadd.f32 %v6911, %v6871
        %v6948 = vadd.f32 %v6912, %v6874
        %v6949 = vadd.f32 %v6913, %v6876
        %6950 = vst [vmem:[#allocation3] sm:$0xff] %v6914
        %6951 = vst [vmem:[#allocation3 + $0x8] sm:$0xff] %v6915
        %6952 = vst [vmem:[#allocation3 + $0x10] sm:$0xff] %v6916
        %6953 = vst [vmem:[#allocation3 + $0x18] sm:$0xff] %v6917
        %6954 = vst [vmem:[#allocation3 + $0x20] sm:$0xff] %v6918
        %6955 = vst [vmem:[#allocation3 + $0x28] sm:$0xff] %v6919
        %6956 = vst [vmem:[#allocation3 + $0x30] sm:$0xff] %v6920
        %6957 = vst [vmem:[#allocation3 + $0x38] sm:$0xff] %v6921
        %6958 = vst [vmem:[#allocation3 + $0x40] sm:$0xff] %v6922
        %6959 = vst [vmem:[#allocation3 + $0x48] sm:$0xff] %v6923
        %6960 = vst [vmem:[#allocation3 + $0x50] sm:$0xff] %v6924
        %6961 = vst [vmem:[#allocation3 + $0x58] sm:$0xff] %v6925
        %6962 = vst [vmem:[#allocation3 + $0x60] sm:$0xff] %v6926
        %6963 = vst [vmem:[#allocation3 + $0x68] sm:$0xff] %v6927
        %6964 = vst [vmem:[#allocation3 + $0x70] sm:$0xff] %v6928
        %6965 = vst [vmem:[#allocation3 + $0x78] sm:$0xff] %v6929
        %6966 = vst [vmem:[#allocation3 + $0x80] sm:$0xff] %v6930
        %6967 = vst [vmem:[#allocation3 + $0x88] sm:$0xff] %v6931
        %6968 = vst [vmem:[#allocation3 + $0x90] sm:$0xff] %v6932
        %6969 = vst [vmem:[#allocation3 + $0x98] sm:$0xff] %v6933
        %6970 = vst [vmem:[#allocation3 + $0xa0] sm:$0xff] %v6934
        %6971 = vst [vmem:[#allocation3 + $0xa8] sm:$0xff] %v6935
        %6972 = vst [vmem:[#allocation3 + $0xb0] sm:$0xff] %v6936
        %6973 = vst [vmem:[#allocation3 + $0xb8] sm:$0xff] %v6937
        %6974 = vst [vmem:[#allocation3 + $0xc0] sm:$0xff] %v6938
        %6975 = vst [vmem:[#allocation3 + $0xc8] sm:$0xff] %v6939
        %6976 = vst [vmem:[#allocation3 + $0xd0] sm:$0xff] %v6940
        %6977 = vst [vmem:[#allocation3 + $0xd8] sm:$0xff] %v6941
        %6978 = vst [vmem:[#allocation3 + $0xe0] sm:$0xff] %v6942
        %6979 = vst [vmem:[#allocation3 + $0xe8] sm:$0xff] %v6943
        %6980 = vst [vmem:[#allocation3 + $0xf0] sm:$0xff] %v6944
        %6981 = vst [vmem:[#allocation3 + $0xf8] sm:$0xff] %v6945
        %6982 = vst [vmem:[#allocation3 + $0x100] sm:$0xff] %v6946
        %6983 = vst [vmem:[#allocation3 + $0x108] sm:$0xff] %v6947
        %6984 = vst [vmem:[#allocation3 + $0x110] sm:$0xff] %v6948
        %6985 = vst [vmem:[#allocation3 + $0x118] sm:$0xff] %v6949
        %v6986 = vld [vmem:[#allocation2] sm:$0xe]
        %v6987 = vld [vmem:[#allocation2 + $0x4] sm:$0xf]
        %v6988 = vld [vmem:[#allocation2 + $0x8] sm:$0xf]
        %v6989 = vld [vmem:[#allocation2 + $0xc] sm:$0xf]
        %v6990 = vld [vmem:[#allocation2 + $0x10] sm:$0xf]
        %v6991 = vld [vmem:[#allocation2 + $0x14] sm:$0xf]
        %v6992 = vld [vmem:[#allocation2 + $0x18] sm:$0xf]
        %v6993 = vld [vmem:[#allocation2 + $0x1c] sm:$0xf]
        %v6994 = vld [vmem:[#allocation2 + $0x20] sm:$0xf]
        %v6995 = vld [vmem:[#allocation2 + $0x24] sm:$0xf]
        %v6996 = vld [vmem:[#allocation2 + $0x28] sm:$0xf]
        %v6997 = vld [vmem:[#allocation2 + $0x2c] sm:$0xf]
        %v6998 = vld [vmem:[#allocation2 + $0x30] sm:$0xf]
        %v6999 = vld [vmem:[#allocation2 + $0x34] sm:$0xf]
        %v7000 = vld [vmem:[#allocation2 + $0x38] sm:$0xf]
        %v7001 = vld [vmem:[#allocation2 + $0x3c] sm:$0xf]
        %v7002 = vld [vmem:[#allocation2 + $0x40] sm:$0xf]
        %v7003 = vld [vmem:[#allocation2 + $0x44] sm:$0xf]
        %v7004 = vld [vmem:[#allocation2 + $0x48] sm:$0xf]
        %v7005 = vld [vmem:[#allocation2 + $0x4c] sm:$0xf]
        %v7006 = vld [vmem:[#allocation2 + $0x50] sm:$0xf]
        %v7007 = vld [vmem:[#allocation2 + $0x54] sm:$0xf]
        %v7008 = vld [vmem:[#allocation2 + $0x58] sm:$0xf]
        %v7009 = vld [vmem:[#allocation2 + $0x5c] sm:$0xf]
        %v7010 = vld [vmem:[#allocation2 + $0x60] sm:$0xf]
        %v7011 = vld [vmem:[#allocation2 + $0x64] sm:$0xf]
        %v7012 = vld [vmem:[#allocation2 + $0x68] sm:$0xf]
        %v7013 = vld [vmem:[#allocation2 + $0x6c] sm:$0xf]
        %v7014 = vld [vmem:[#allocation2 + $0x70] sm:$0xf]
        %v7015 = vld [vmem:[#allocation2 + $0x74] sm:$0xf]
        %v7016 = vld [vmem:[#allocation2 + $0x78] sm:$0xf]
        %v7017 = vld [vmem:[#allocation2 + $0x7c] sm:$0xf]
        %v7018 = vld [vmem:[#allocation2 + $0x80] sm:$0xf]
        %v7019 = vld [vmem:[#allocation2 + $0x84] sm:$0xf]
        %v7020 = vld [vmem:[#allocation2 + $0x88] sm:$0xf]
        %v7021 = vld [vmem:[#allocation2 + $0x8c] sm:$0xf]
        %v7022 = vld [vmem:[#allocation2 + $0x90] sm:$0x1]
        %s7023 = scalar_lea.vmem [#allocation4], 128
        %v7024 = vld [vmem:[%s7023] sm:$0xf]
        %v7025 = vld [vmem:[%s7023 + $0x4] sm:$0xf]
        %v7026 = vld [vmem:[%s7023 + $0x8] sm:$0xf]
        %v7027 = vld [vmem:[%s7023 + $0xc] sm:$0xf]
        %v7028 = vld [vmem:[%s7023 + $0x10] sm:$0xf]
        %v7029 = vld [vmem:[%s7023 + $0x14] sm:$0xf]
        %v7030 = vld [vmem:[%s7023 + $0x18] sm:$0xf]
        %v7031 = vld [vmem:[%s7023 + $0x1c] sm:$0xf]
        %v7032 = vld [vmem:[%s7023 + $0x20] sm:$0xf]
        %v7033 = vld [vmem:[%s7023 + $0x24] sm:$0xf]
        %v7034 = vld [vmem:[%s7023 + $0x28] sm:$0xf]
        %v7035 = vld [vmem:[%s7023 + $0x2c] sm:$0xf]
        %v7036 = vld [vmem:[%s7023 + $0x30] sm:$0xf]
        %v7037 = vld [vmem:[%s7023 + $0x34] sm:$0xf]
        %v7038 = vld [vmem:[%s7023 + $0x38] sm:$0xf]
        %v7039 = vld [vmem:[%s7023 + $0x3c] sm:$0xf]
        %v7077 = vunpack.c.l.b16 %v6986
        %v7078 = vunpack.c.l.b16 %v6987
        %v7079 = vunpack.c.l.b16 %v6988
        %v7080 = vunpack.c.l.b16 %v6989
        %v7081 = vunpack.c.l.b16 %v6990
        %v7082 = vunpack.c.l.b16 %v6991
        %v7083 = vunpack.c.l.b16 %v6992
        %v7084 = vunpack.c.l.b16 %v6993
        %v7085 = vunpack.c.l.b16 %v6994
        %v7086 = vunpack.c.l.b16 %v6995
        %v7087 = vunpack.c.l.b16 %v6996
        %v7088 = vunpack.c.l.b16 %v6997
        %v7089 = vunpack.c.l.b16 %v6998
        %v7090 = vunpack.c.l.b16 %v6999
        %v7091 = vunpack.c.l.b16 %v7000
        %v7092 = vunpack.c.l.b16 %v7001
        %v7093 = vunpack.c.l.b16 %v7002
        %v7094 = vunpack.c.l.b16 %v7003
        %v7095 = vunpack.c.l.b16 %v7004
        %v7096 = vunpack.c.l.b16 %v7005
        %v7097 = vunpack.c.l.b16 %v7006
        %v7098 = vunpack.c.l.b16 %v7007
        %v7099 = vunpack.c.l.b16 %v7008
        %v7100 = vunpack.c.l.b16 %v7009
        %v7101 = vunpack.c.l.b16 %v7010
        %v7102 = vunpack.c.l.b16 %v7011
        %v7103 = vunpack.c.l.b16 %v7012
        %v7104 = vunpack.c.l.b16 %v7013
        %v7105 = vunpack.c.l.b16 %v7014
        %v7106 = vunpack.c.l.b16 %v7015
        %v7107 = vunpack.c.l.b16 %v7016
        %v7108 = vunpack.c.l.b16 %v7017
        %v7109 = vunpack.c.l.b16 %v7018
        %v7110 = vunpack.c.l.b16 %v7019
        %v7111 = vunpack.c.l.b16 %v7020
        %v7112 = vunpack.c.l.b16 %v7021
        %v7113 = vunpack.c.l.b16 %v7022
        %v7114 = vpack.c.b16 %v7078, %v7077
        %v7115 = vpack.c.b16 %v7080, %v7079
        %v7116 = vpack.c.b16 %v7082, %v7081
        %v7117 = vpack.c.b16 %v7084, %v7083
        %v7118 = vpack.c.b16 %v7086, %v7085
        %v7119 = vpack.c.b16 %v7088, %v7087
        %v7120 = vpack.c.b16 %v7090, %v7089
        %v7121 = vpack.c.b16 %v7092, %v7091
        %v7122 = vpack.c.b16 %v7094, %v7093
        %v7123 = vpack.c.b16 %v7096, %v7095
        %v7124 = vpack.c.b16 %v7098, %v7097
        %v7125 = vpack.c.b16 %v7100, %v7099
        %v7126 = vpack.c.b16 %v7102, %v7101
        %v7127 = vpack.c.b16 %v7104, %v7103
        %v7128 = vpack.c.b16 %v7106, %v7105
        %v7129 = vpack.c.b16 %v7108, %v7107
        %v7130 = vpack.c.b16 %v7110, %v7109
        %v7131 = vpack.c.b16 %v7112, %v7111
        %v7132 = vpack.c.b16 %v7113, %v7113
        %v7133 = vrot.slane %v7114, 1
        %v7134 = vrot.slane %v7115, 1
        %v7135 = vsel %vm1307, %v7133, %v7134
        %v7136 = vrot.slane %v7116, 1
        %v7137 = vsel %vm1307, %v7134, %v7136
        %v7138 = vrot.slane %v7117, 1
        %v7139 = vsel %vm1307, %v7136, %v7138
        %v7140 = vrot.slane %v7118, 1
        %v7141 = vsel %vm1307, %v7138, %v7140
        %v7142 = vrot.slane %v7119, 1
        %v7143 = vsel %vm1307, %v7140, %v7142
        %v7144 = vrot.slane %v7120, 1
        %v7145 = vsel %vm1307, %v7142, %v7144
        %v7146 = vrot.slane %v7121, 1
        %v7147 = vsel %vm1307, %v7144, %v7146
        %v7148 = vrot.slane %v7122, 1
        %v7149 = vsel %vm1307, %v7146, %v7148
        %v7150 = vrot.slane %v7123, 1
        %v7151 = vsel %vm1307, %v7148, %v7150
        %v7152 = vrot.slane %v7124, 1
        %v7153 = vsel %vm1307, %v7150, %v7152
        %v7154 = vrot.slane %v7125, 1
        %v7155 = vsel %vm1307, %v7152, %v7154
        %v7156 = vrot.slane %v7126, 1
        %v7157 = vsel %vm1307, %v7154, %v7156
        %v7158 = vrot.slane %v7127, 1
        %v7159 = vsel %vm1307, %v7156, %v7158
        %v7160 = vrot.slane %v7128, 1
        %v7161 = vsel %vm1307, %v7158, %v7160
        %v7162 = vrot.slane %v7129, 1
        %v7163 = vsel %vm1307, %v7160, %v7162
        %v7164 = vrot.slane %v7130, 1
        %v7165 = vsel %vm1307, %v7162, %v7164
        %v7166 = vrot.slane %v7131, 1
        %v7167 = vsel %vm1307, %v7164, %v7166
        %v7168 = vrot.slane %v7132, 1
        %v7169 = vsel %vm1307, %v7166, %v7168
        %v7204 = vunpack.c.l.b16 %v7024
        %v7205 = vunpack.c.l.b16 %v7025
        %v7206 = vunpack.c.l.b16 %v7026
        %v7207 = vunpack.c.l.b16 %v7027
        %v7208 = vunpack.c.l.b16 %v7028
        %v7209 = vunpack.c.l.b16 %v7029
        %v7210 = vunpack.c.l.b16 %v7030
        %v7211 = vunpack.c.l.b16 %v7031
        %v7212 = vunpack.c.l.b16 %v7032
        %v7213 = vunpack.c.l.b16 %v7033
        %v7214 = vunpack.c.l.b16 %v7034
        %v7215 = vunpack.c.l.b16 %v7035
        %v7216 = vunpack.c.l.b16 %v7036
        %v7217 = vunpack.c.l.b16 %v7037
        %v7218 = vunpack.c.l.b16 %v7038
        %v7219 = vunpack.c.l.b16 %v7039
        %v7220 = vpack.c.b16 %v7205, %v7204
        %v7221 = vpack.c.b16 %v7207, %v7206
        %v7222 = vpack.c.b16 %v7209, %v7208
        %v7223 = vpack.c.b16 %v7211, %v7210
        %v7224 = vpack.c.b16 %v7213, %v7212
        %v7225 = vpack.c.b16 %v7215, %v7214
        %v7226 = vpack.c.b16 %v7217, %v7216
        %v7227 = vpack.c.b16 %v7219, %v7218
        %7236 = vmatpush.bf16.msra.mxu0 %v7227
        %7237 = vmatpush.bf16.msra.mxu0 %v7226
        %7238 = vmatpush.bf16.msra.mxu0 %v7225
        %7239 = vmatpush.bf16.msra.mxu0 %v7224
        %7240 = vmatpush.bf16.msra.mxu0 %v7223
        %7241 = vmatpush.bf16.msra.mxu0 %v7222
        %7242 = vmatpush.bf16.msra.mxu0 %v7221
        %7243 = vmatpush.bf16.msra.mxu0 %v7220
        %7244 = vmatmul.bf16.gmra.mxu0 %v7135
        %v7245 = vpop.f32.mrf.mxu0
        %v7246 = vadd.f32 0.0, %v7245
        %v7247 = vpop.f32.mrf.mxu0
        %v7248 = vadd.f32 0.0, %v7247
        %7249 = vmatmul.bf16.gmra.mxu0 %v7137
        %v7250 = vpop.f32.mrf.mxu0
        %v7251 = vadd.f32 0.0, %v7250
        %v7252 = vpop.f32.mrf.mxu0
        %v7253 = vadd.f32 0.0, %v7252
        %7254 = vmatmul.bf16.gmra.mxu0 %v7139
        %v7255 = vpop.f32.mrf.mxu0
        %v7256 = vadd.f32 0.0, %v7255
        %v7257 = vpop.f32.mrf.mxu0
        %v7258 = vadd.f32 0.0, %v7257
        %7259 = vmatmul.bf16.gmra.mxu0 %v7141
        %v7260 = vpop.f32.mrf.mxu0
        %v7261 = vadd.f32 0.0, %v7260
        %v7262 = vpop.f32.mrf.mxu0
        %v7263 = vadd.f32 0.0, %v7262
        %7264 = vmatmul.bf16.gmra.mxu0 %v7143
        %v7265 = vpop.f32.mrf.mxu0
        %v7266 = vadd.f32 0.0, %v7265
        %v7267 = vpop.f32.mrf.mxu0
        %v7268 = vadd.f32 0.0, %v7267
        %7269 = vmatmul.bf16.gmra.mxu0 %v7145
        %v7270 = vpop.f32.mrf.mxu0
        %v7271 = vadd.f32 0.0, %v7270
        %v7272 = vpop.f32.mrf.mxu0
        %v7273 = vadd.f32 0.0, %v7272
        %7274 = vmatmul.bf16.gmra.mxu0 %v7147
        %v7275 = vpop.f32.mrf.mxu0
        %v7276 = vadd.f32 0.0, %v7275
        %v7277 = vpop.f32.mrf.mxu0
        %v7278 = vadd.f32 0.0, %v7277
        %7279 = vmatmul.bf16.gmra.mxu0 %v7149
        %v7280 = vpop.f32.mrf.mxu0
        %v7281 = vadd.f32 0.0, %v7280
        %v7282 = vpop.f32.mrf.mxu0
        %v7283 = vadd.f32 0.0, %v7282
        %7284 = vmatmul.bf16.gmra.mxu0 %v7151
        %v7285 = vpop.f32.mrf.mxu0
        %v7286 = vadd.f32 0.0, %v7285
        %v7287 = vpop.f32.mrf.mxu0
        %v7288 = vadd.f32 0.0, %v7287
        %7289 = vmatmul.bf16.gmra.mxu0 %v7153
        %v7290 = vpop.f32.mrf.mxu0
        %v7291 = vadd.f32 0.0, %v7290
        %v7292 = vpop.f32.mrf.mxu0
        %v7293 = vadd.f32 0.0, %v7292
        %7294 = vmatmul.bf16.gmra.mxu0 %v7155
        %v7295 = vpop.f32.mrf.mxu0
        %v7296 = vadd.f32 0.0, %v7295
        %v7297 = vpop.f32.mrf.mxu0
        %v7298 = vadd.f32 0.0, %v7297
        %7299 = vmatmul.bf16.gmra.mxu0 %v7157
        %v7300 = vpop.f32.mrf.mxu0
        %v7301 = vadd.f32 0.0, %v7300
        %v7302 = vpop.f32.mrf.mxu0
        %v7303 = vadd.f32 0.0, %v7302
        %7304 = vmatmul.bf16.gmra.mxu0 %v7159
        %v7305 = vpop.f32.mrf.mxu0
        %v7306 = vadd.f32 0.0, %v7305
        %v7307 = vpop.f32.mrf.mxu0
        %v7308 = vadd.f32 0.0, %v7307
        %7309 = vmatmul.bf16.gmra.mxu0 %v7161
        %v7310 = vpop.f32.mrf.mxu0
        %v7311 = vadd.f32 0.0, %v7310
        %v7312 = vpop.f32.mrf.mxu0
        %v7313 = vadd.f32 0.0, %v7312
        %7314 = vmatmul.bf16.gmra.mxu0 %v7163
        %v7315 = vpop.f32.mrf.mxu0
        %v7316 = vadd.f32 0.0, %v7315
        %v7317 = vpop.f32.mrf.mxu0
        %v7318 = vadd.f32 0.0, %v7317
        %7319 = vmatmul.bf16.gmra.mxu0 %v7165
        %v7320 = vpop.f32.mrf.mxu0
        %v7321 = vadd.f32 0.0, %v7320
        %v7322 = vpop.f32.mrf.mxu0
        %v7323 = vadd.f32 0.0, %v7322
        %7324 = vmatmul.bf16.gmra.mxu0 %v7167
        %v7325 = vpop.f32.mrf.mxu0
        %v7326 = vadd.f32 0.0, %v7325
        %v7327 = vpop.f32.mrf.mxu0
        %v7328 = vadd.f32 0.0, %v7327
        %7329 = vmatmul.bf16.gmra.mxu0 %v7169
        %v7330 = vpop.f32.mrf.mxu0
        %v7331 = vadd.f32 0.0, %v7330
        %v7332 = vpop.f32.mrf.mxu0
        %v7333 = vadd.f32 0.0, %v7332
        %7334 = vdwg.mxu0
        %v7335 = vld [vmem:[#allocation3] sm:$0xff]
        %v7336 = vld [vmem:[#allocation3 + $0x8] sm:$0xff]
        %v7337 = vld [vmem:[#allocation3 + $0x10] sm:$0xff]
        %v7338 = vld [vmem:[#allocation3 + $0x18] sm:$0xff]
        %v7339 = vld [vmem:[#allocation3 + $0x20] sm:$0xff]
        %v7340 = vld [vmem:[#allocation3 + $0x28] sm:$0xff]
        %v7341 = vld [vmem:[#allocation3 + $0x30] sm:$0xff]
        %v7342 = vld [vmem:[#allocation3 + $0x38] sm:$0xff]
        %v7343 = vld [vmem:[#allocation3 + $0x40] sm:$0xff]
        %v7344 = vld [vmem:[#allocation3 + $0x48] sm:$0xff]
        %v7345 = vld [vmem:[#allocation3 + $0x50] sm:$0xff]
        %v7346 = vld [vmem:[#allocation3 + $0x58] sm:$0xff]
        %v7347 = vld [vmem:[#allocation3 + $0x60] sm:$0xff]
        %v7348 = vld [vmem:[#allocation3 + $0x68] sm:$0xff]
        %v7349 = vld [vmem:[#allocation3 + $0x70] sm:$0xff]
        %v7350 = vld [vmem:[#allocation3 + $0x78] sm:$0xff]
        %v7351 = vld [vmem:[#allocation3 + $0x80] sm:$0xff]
        %v7352 = vld [vmem:[#allocation3 + $0x88] sm:$0xff]
        %v7353 = vld [vmem:[#allocation3 + $0x90] sm:$0xff]
        %v7354 = vld [vmem:[#allocation3 + $0x98] sm:$0xff]
        %v7355 = vld [vmem:[#allocation3 + $0xa0] sm:$0xff]
        %v7356 = vld [vmem:[#allocation3 + $0xa8] sm:$0xff]
        %v7357 = vld [vmem:[#allocation3 + $0xb0] sm:$0xff]
        %v7358 = vld [vmem:[#allocation3 + $0xb8] sm:$0xff]
        %v7359 = vld [vmem:[#allocation3 + $0xc0] sm:$0xff]
        %v7360 = vld [vmem:[#allocation3 + $0xc8] sm:$0xff]
        %v7361 = vld [vmem:[#allocation3 + $0xd0] sm:$0xff]
        %v7362 = vld [vmem:[#allocation3 + $0xd8] sm:$0xff]
        %v7363 = vld [vmem:[#allocation3 + $0xe0] sm:$0xff]
        %v7364 = vld [vmem:[#allocation3 + $0xe8] sm:$0xff]
        %v7365 = vld [vmem:[#allocation3 + $0xf0] sm:$0xff]
        %v7366 = vld [vmem:[#allocation3 + $0xf8] sm:$0xff]
        %v7367 = vld [vmem:[#allocation3 + $0x100] sm:$0xff]
        %v7368 = vld [vmem:[#allocation3 + $0x108] sm:$0xff]
        %v7369 = vld [vmem:[#allocation3 + $0x110] sm:$0xff]
        %v7370 = vld [vmem:[#allocation3 + $0x118] sm:$0xff]
        %v7371 = vadd.f32 %v7335, %v7246
        %v7372 = vadd.f32 %v7336, %v7248
        %v7373 = vadd.f32 %v7337, %v7251
        %v7374 = vadd.f32 %v7338, %v7253
        %v7375 = vadd.f32 %v7339, %v7256
        %v7376 = vadd.f32 %v7340, %v7258
        %v7377 = vadd.f32 %v7341, %v7261
        %v7378 = vadd.f32 %v7342, %v7263
        %v7379 = vadd.f32 %v7343, %v7266
        %v7380 = vadd.f32 %v7344, %v7268
        %v7381 = vadd.f32 %v7345, %v7271
        %v7382 = vadd.f32 %v7346, %v7273
        %v7383 = vadd.f32 %v7347, %v7276
        %v7384 = vadd.f32 %v7348, %v7278
        %v7385 = vadd.f32 %v7349, %v7281
        %v7386 = vadd.f32 %v7350, %v7283
        %v7387 = vadd.f32 %v7351, %v7286
        %v7388 = vadd.f32 %v7352, %v7288
        %v7389 = vadd.f32 %v7353, %v7291
        %v7390 = vadd.f32 %v7354, %v7293
        %v7391 = vadd.f32 %v7355, %v7296
        %v7392 = vadd.f32 %v7356, %v7298
        %v7393 = vadd.f32 %v7357, %v7301
        %v7394 = vadd.f32 %v7358, %v7303
        %v7395 = vadd.f32 %v7359, %v7306
        %v7396 = vadd.f32 %v7360, %v7308
        %v7397 = vadd.f32 %v7361, %v7311
        %v7398 = vadd.f32 %v7362, %v7313
        %v7399 = vadd.f32 %v7363, %v7316
        %v7400 = vadd.f32 %v7364, %v7318
        %v7401 = vadd.f32 %v7365, %v7321
        %v7402 = vadd.f32 %v7366, %v7323
        %v7403 = vadd.f32 %v7367, %v7326
        %v7404 = vadd.f32 %v7368, %v7328
        %v7405 = vadd.f32 %v7369, %v7331
        %v7406 = vadd.f32 %v7370, %v7333
        %7407 = vst [vmem:[#allocation3] sm:$0xff] %v7371
        %7408 = vst [vmem:[#allocation3 + $0x8] sm:$0xff] %v7372
        %7409 = vst [vmem:[#allocation3 + $0x10] sm:$0xff] %v7373
        %7410 = vst [vmem:[#allocation3 + $0x18] sm:$0xff] %v7374
        %7411 = vst [vmem:[#allocation3 + $0x20] sm:$0xff] %v7375
        %7412 = vst [vmem:[#allocation3 + $0x28] sm:$0xff] %v7376
        %7413 = vst [vmem:[#allocation3 + $0x30] sm:$0xff] %v7377
        %7414 = vst [vmem:[#allocation3 + $0x38] sm:$0xff] %v7378
        %7415 = vst [vmem:[#allocation3 + $0x40] sm:$0xff] %v7379
        %7416 = vst [vmem:[#allocation3 + $0x48] sm:$0xff] %v7380
        %7417 = vst [vmem:[#allocation3 + $0x50] sm:$0xff] %v7381
        %7418 = vst [vmem:[#allocation3 + $0x58] sm:$0xff] %v7382
        %7419 = vst [vmem:[#allocation3 + $0x60] sm:$0xff] %v7383
        %7420 = vst [vmem:[#allocation3 + $0x68] sm:$0xff] %v7384
        %7421 = vst [vmem:[#allocation3 + $0x70] sm:$0xff] %v7385
        %7422 = vst [vmem:[#allocation3 + $0x78] sm:$0xff] %v7386
        %7423 = vst [vmem:[#allocation3 + $0x80] sm:$0xff] %v7387
        %7424 = vst [vmem:[#allocation3 + $0x88] sm:$0xff] %v7388
        %7425 = vst [vmem:[#allocation3 + $0x90] sm:$0xff] %v7389
        %7426 = vst [vmem:[#allocation3 + $0x98] sm:$0xff] %v7390
        %7427 = vst [vmem:[#allocation3 + $0xa0] sm:$0xff] %v7391
        %7428 = vst [vmem:[#allocation3 + $0xa8] sm:$0xff] %v7392
        %7429 = vst [vmem:[#allocation3 + $0xb0] sm:$0xff] %v7393
        %7430 = vst [vmem:[#allocation3 + $0xb8] sm:$0xff] %v7394
        %7431 = vst [vmem:[#allocation3 + $0xc0] sm:$0xff] %v7395
        %7432 = vst [vmem:[#allocation3 + $0xc8] sm:$0xff] %v7396
        %7433 = vst [vmem:[#allocation3 + $0xd0] sm:$0xff] %v7397
        %7434 = vst [vmem:[#allocation3 + $0xd8] sm:$0xff] %v7398
        %7435 = vst [vmem:[#allocation3 + $0xe0] sm:$0xff] %v7399
        %7436 = vst [vmem:[#allocation3 + $0xe8] sm:$0xff] %v7400
        %7437 = vst [vmem:[#allocation3 + $0xf0] sm:$0xff] %v7401
        %7438 = vst [vmem:[#allocation3 + $0xf8] sm:$0xff] %v7402
        %7439 = vst [vmem:[#allocation3 + $0x100] sm:$0xff] %v7403
        %7440 = vst [vmem:[#allocation3 + $0x108] sm:$0xff] %v7404
        %7441 = vst [vmem:[#allocation3 + $0x110] sm:$0xff] %v7405
        %7442 = vst [vmem:[#allocation3 + $0x118] sm:$0xff] %v7406
        %v7443 = vld [vmem:[#allocation2 + $0x8] sm:$0xe]
        %v7444 = vld [vmem:[#allocation2 + $0xc] sm:$0xf]
        %v7445 = vld [vmem:[#allocation2 + $0x10] sm:$0xf]
        %v7446 = vld [vmem:[#allocation2 + $0x14] sm:$0xf]
        %v7447 = vld [vmem:[#allocation2 + $0x18] sm:$0xf]
        %v7448 = vld [vmem:[#allocation2 + $0x1c] sm:$0xf]
        %v7449 = vld [vmem:[#allocation2 + $0x20] sm:$0xf]
        %v7450 = vld [vmem:[#allocation2 + $0x24] sm:$0xf]
        %v7451 = vld [vmem:[#allocation2 + $0x28] sm:$0xf]
        %v7452 = vld [vmem:[#allocation2 + $0x2c] sm:$0xf]
        %v7453 = vld [vmem:[#allocation2 + $0x30] sm:$0xf]
        %v7454 = vld [vmem:[#allocation2 + $0x34] sm:$0xf]
        %v7455 = vld [vmem:[#allocation2 + $0x38] sm:$0xf]
        %v7456 = vld [vmem:[#allocation2 + $0x3c] sm:$0xf]
        %v7457 = vld [vmem:[#allocation2 + $0x40] sm:$0xf]
        %v7458 = vld [vmem:[#allocation2 + $0x44] sm:$0xf]
        %v7459 = vld [vmem:[#allocation2 + $0x48] sm:$0xf]
        %v7460 = vld [vmem:[#allocation2 + $0x4c] sm:$0xf]
        %v7461 = vld [vmem:[#allocation2 + $0x50] sm:$0xf]
        %v7462 = vld [vmem:[#allocation2 + $0x54] sm:$0xf]
        %v7463 = vld [vmem:[#allocation2 + $0x58] sm:$0xf]
        %v7464 = vld [vmem:[#allocation2 + $0x5c] sm:$0xf]
        %v7465 = vld [vmem:[#allocation2 + $0x60] sm:$0xf]
        %v7466 = vld [vmem:[#allocation2 + $0x64] sm:$0xf]
        %v7467 = vld [vmem:[#allocation2 + $0x68] sm:$0xf]
        %v7468 = vld [vmem:[#allocation2 + $0x6c] sm:$0xf]
        %v7469 = vld [vmem:[#allocation2 + $0x70] sm:$0xf]
        %v7470 = vld [vmem:[#allocation2 + $0x74] sm:$0xf]
        %v7471 = vld [vmem:[#allocation2 + $0x78] sm:$0xf]
        %v7472 = vld [vmem:[#allocation2 + $0x7c] sm:$0xf]
        %v7473 = vld [vmem:[#allocation2 + $0x80] sm:$0xf]
        %v7474 = vld [vmem:[#allocation2 + $0x84] sm:$0xf]
        %v7475 = vld [vmem:[#allocation2 + $0x88] sm:$0xf]
        %v7476 = vld [vmem:[#allocation2 + $0x8c] sm:$0xf]
        %v7477 = vld [vmem:[#allocation2 + $0x90] sm:$0xf]
        %v7478 = vld [vmem:[#allocation2 + $0x94] sm:$0xf]
        %v7479 = vld [vmem:[#allocation2 + $0x98] sm:$0x1]
        %s7480 = scalar_lea.vmem [#allocation4], 192
        %v7481 = vld [vmem:[%s7480] sm:$0xf]
        %v7482 = vld [vmem:[%s7480 + $0x4] sm:$0xf]
        %v7483 = vld [vmem:[%s7480 + $0x8] sm:$0xf]
        %v7484 = vld [vmem:[%s7480 + $0xc] sm:$0xf]
        %v7485 = vld [vmem:[%s7480 + $0x10] sm:$0xf]
        %v7486 = vld [vmem:[%s7480 + $0x14] sm:$0xf]
        %v7487 = vld [vmem:[%s7480 + $0x18] sm:$0xf]
        %v7488 = vld [vmem:[%s7480 + $0x1c] sm:$0xf]
        %v7489 = vld [vmem:[%s7480 + $0x20] sm:$0xf]
        %v7490 = vld [vmem:[%s7480 + $0x24] sm:$0xf]
        %v7491 = vld [vmem:[%s7480 + $0x28] sm:$0xf]
        %v7492 = vld [vmem:[%s7480 + $0x2c] sm:$0xf]
        %v7493 = vld [vmem:[%s7480 + $0x30] sm:$0xf]
        %v7494 = vld [vmem:[%s7480 + $0x34] sm:$0xf]
        %v7495 = vld [vmem:[%s7480 + $0x38] sm:$0xf]
        %v7496 = vld [vmem:[%s7480 + $0x3c] sm:$0xf]
        %v7534 = vunpack.c.l.b16 %v7443
        %v7535 = vunpack.c.l.b16 %v7444
        %v7536 = vunpack.c.l.b16 %v7445
        %v7537 = vunpack.c.l.b16 %v7446
        %v7538 = vunpack.c.l.b16 %v7447
        %v7539 = vunpack.c.l.b16 %v7448
        %v7540 = vunpack.c.l.b16 %v7449
        %v7541 = vunpack.c.l.b16 %v7450
        %v7542 = vunpack.c.l.b16 %v7451
        %v7543 = vunpack.c.l.b16 %v7452
        %v7544 = vunpack.c.l.b16 %v7453
        %v7545 = vunpack.c.l.b16 %v7454
        %v7546 = vunpack.c.l.b16 %v7455
        %v7547 = vunpack.c.l.b16 %v7456
        %v7548 = vunpack.c.l.b16 %v7457
        %v7549 = vunpack.c.l.b16 %v7458
        %v7550 = vunpack.c.l.b16 %v7459
        %v7551 = vunpack.c.l.b16 %v7460
        %v7552 = vunpack.c.l.b16 %v7461
        %v7553 = vunpack.c.l.b16 %v7462
        %v7554 = vunpack.c.l.b16 %v7463
        %v7555 = vunpack.c.l.b16 %v7464
        %v7556 = vunpack.c.l.b16 %v7465
        %v7557 = vunpack.c.l.b16 %v7466
        %v7558 = vunpack.c.l.b16 %v7467
        %v7559 = vunpack.c.l.b16 %v7468
        %v7560 = vunpack.c.l.b16 %v7469
        %v7561 = vunpack.c.l.b16 %v7470
        %v7562 = vunpack.c.l.b16 %v7471
        %v7563 = vunpack.c.l.b16 %v7472
        %v7564 = vunpack.c.l.b16 %v7473
        %v7565 = vunpack.c.l.b16 %v7474
        %v7566 = vunpack.c.l.b16 %v7475
        %v7567 = vunpack.c.l.b16 %v7476
        %v7568 = vunpack.c.l.b16 %v7477
        %v7569 = vunpack.c.l.b16 %v7478
        %v7570 = vunpack.c.l.b16 %v7479
        %v7571 = vpack.c.b16 %v7535, %v7534
        %v7572 = vpack.c.b16 %v7537, %v7536
        %v7573 = vpack.c.b16 %v7539, %v7538
        %v7574 = vpack.c.b16 %v7541, %v7540
        %v7575 = vpack.c.b16 %v7543, %v7542
        %v7576 = vpack.c.b16 %v7545, %v7544
        %v7577 = vpack.c.b16 %v7547, %v7546
        %v7578 = vpack.c.b16 %v7549, %v7548
        %v7579 = vpack.c.b16 %v7551, %v7550
        %v7580 = vpack.c.b16 %v7553, %v7552
        %v7581 = vpack.c.b16 %v7555, %v7554
        %v7582 = vpack.c.b16 %v7557, %v7556
        %v7583 = vpack.c.b16 %v7559, %v7558
        %v7584 = vpack.c.b16 %v7561, %v7560
        %v7585 = vpack.c.b16 %v7563, %v7562
        %v7586 = vpack.c.b16 %v7565, %v7564
        %v7587 = vpack.c.b16 %v7567, %v7566
        %v7588 = vpack.c.b16 %v7569, %v7568
        %v7589 = vpack.c.b16 %v7570, %v7570
        %v7590 = vrot.slane %v7571, 1
        %v7591 = vrot.slane %v7572, 1
        %v7592 = vsel %vm1307, %v7590, %v7591
        %v7593 = vrot.slane %v7573, 1
        %v7594 = vsel %vm1307, %v7591, %v7593
        %v7595 = vrot.slane %v7574, 1
        %v7596 = vsel %vm1307, %v7593, %v7595
        %v7597 = vrot.slane %v7575, 1
        %v7598 = vsel %vm1307, %v7595, %v7597
        %v7599 = vrot.slane %v7576, 1
        %v7600 = vsel %vm1307, %v7597, %v7599
        %v7601 = vrot.slane %v7577, 1
        %v7602 = vsel %vm1307, %v7599, %v7601
        %v7603 = vrot.slane %v7578, 1
        %v7604 = vsel %vm1307, %v7601, %v7603
        %v7605 = vrot.slane %v7579, 1
        %v7606 = vsel %vm1307, %v7603, %v7605
        %v7607 = vrot.slane %v7580, 1
        %v7608 = vsel %vm1307, %v7605, %v7607
        %v7609 = vrot.slane %v7581, 1
        %v7610 = vsel %vm1307, %v7607, %v7609
        %v7611 = vrot.slane %v7582, 1
        %v7612 = vsel %vm1307, %v7609, %v7611
        %v7613 = vrot.slane %v7583, 1
        %v7614 = vsel %vm1307, %v7611, %v7613
        %v7615 = vrot.slane %v7584, 1
        %v7616 = vsel %vm1307, %v7613, %v7615
        %v7617 = vrot.slane %v7585, 1
        %v7618 = vsel %vm1307, %v7615, %v7617
        %v7619 = vrot.slane %v7586, 1
        %v7620 = vsel %vm1307, %v7617, %v7619
        %v7621 = vrot.slane %v7587, 1
        %v7622 = vsel %vm1307, %v7619, %v7621
        %v7623 = vrot.slane %v7588, 1
        %v7624 = vsel %vm1307, %v7621, %v7623
        %v7625 = vrot.slane %v7589, 1
        %v7626 = vsel %vm1307, %v7623, %v7625
        %v7661 = vunpack.c.l.b16 %v7481
        %v7662 = vunpack.c.l.b16 %v7482
        %v7663 = vunpack.c.l.b16 %v7483
        %v7664 = vunpack.c.l.b16 %v7484
        %v7665 = vunpack.c.l.b16 %v7485
        %v7666 = vunpack.c.l.b16 %v7486
        %v7667 = vunpack.c.l.b16 %v7487
        %v7668 = vunpack.c.l.b16 %v7488
        %v7669 = vunpack.c.l.b16 %v7489
        %v7670 = vunpack.c.l.b16 %v7490
        %v7671 = vunpack.c.l.b16 %v7491
        %v7672 = vunpack.c.l.b16 %v7492
        %v7673 = vunpack.c.l.b16 %v7493
        %v7674 = vunpack.c.l.b16 %v7494
        %v7675 = vunpack.c.l.b16 %v7495
        %v7676 = vunpack.c.l.b16 %v7496
        %v7677 = vpack.c.b16 %v7662, %v7661
        %v7678 = vpack.c.b16 %v7664, %v7663
        %v7679 = vpack.c.b16 %v7666, %v7665
        %v7680 = vpack.c.b16 %v7668, %v7667
        %v7681 = vpack.c.b16 %v7670, %v7669
        %v7682 = vpack.c.b16 %v7672, %v7671
        %v7683 = vpack.c.b16 %v7674, %v7673
        %v7684 = vpack.c.b16 %v7676, %v7675
        %7693 = vmatpush.bf16.msra.mxu0 %v7684
        %7694 = vmatpush.bf16.msra.mxu0 %v7683
        %7695 = vmatpush.bf16.msra.mxu0 %v7682
        %7696 = vmatpush.bf16.msra.mxu0 %v7681
        %7697 = vmatpush.bf16.msra.mxu0 %v7680
        %7698 = vmatpush.bf16.msra.mxu0 %v7679
        %7699 = vmatpush.bf16.msra.mxu0 %v7678
        %7700 = vmatpush.bf16.msra.mxu0 %v7677
        %7701 = vmatmul.bf16.gmra.mxu0 %v7592
        %v7702 = vpop.f32.mrf.mxu0
        %v7703 = vadd.f32 0.0, %v7702
        %v7704 = vpop.f32.mrf.mxu0
        %v7705 = vadd.f32 0.0, %v7704
        %7706 = vmatmul.bf16.gmra.mxu0 %v7594
        %v7707 = vpop.f32.mrf.mxu0
        %v7708 = vadd.f32 0.0, %v7707
        %v7709 = vpop.f32.mrf.mxu0
        %v7710 = vadd.f32 0.0, %v7709
        %7711 = vmatmul.bf16.gmra.mxu0 %v7596
        %v7712 = vpop.f32.mrf.mxu0
        %v7713 = vadd.f32 0.0, %v7712
        %v7714 = vpop.f32.mrf.mxu0
        %v7715 = vadd.f32 0.0, %v7714
        %7716 = vmatmul.bf16.gmra.mxu0 %v7598
        %v7717 = vpop.f32.mrf.mxu0
        %v7718 = vadd.f32 0.0, %v7717
        %v7719 = vpop.f32.mrf.mxu0
        %v7720 = vadd.f32 0.0, %v7719
        %7721 = vmatmul.bf16.gmra.mxu0 %v7600
        %v7722 = vpop.f32.mrf.mxu0
        %v7723 = vadd.f32 0.0, %v7722
        %v7724 = vpop.f32.mrf.mxu0
        %v7725 = vadd.f32 0.0, %v7724
        %7726 = vmatmul.bf16.gmra.mxu0 %v7602
        %v7727 = vpop.f32.mrf.mxu0
        %v7728 = vadd.f32 0.0, %v7727
        %v7729 = vpop.f32.mrf.mxu0
        %v7730 = vadd.f32 0.0, %v7729
        %7731 = vmatmul.bf16.gmra.mxu0 %v7604
        %v7732 = vpop.f32.mrf.mxu0
        %v7733 = vadd.f32 0.0, %v7732
        %v7734 = vpop.f32.mrf.mxu0
        %v7735 = vadd.f32 0.0, %v7734
        %7736 = vmatmul.bf16.gmra.mxu0 %v7606
        %v7737 = vpop.f32.mrf.mxu0
        %v7738 = vadd.f32 0.0, %v7737
        %v7739 = vpop.f32.mrf.mxu0
        %v7740 = vadd.f32 0.0, %v7739
        %7741 = vmatmul.bf16.gmra.mxu0 %v7608
        %v7742 = vpop.f32.mrf.mxu0
        %v7743 = vadd.f32 0.0, %v7742
        %v7744 = vpop.f32.mrf.mxu0
        %v7745 = vadd.f32 0.0, %v7744
        %7746 = vmatmul.bf16.gmra.mxu0 %v7610
        %v7747 = vpop.f32.mrf.mxu0
        %v7748 = vadd.f32 0.0, %v7747
        %v7749 = vpop.f32.mrf.mxu0
        %v7750 = vadd.f32 0.0, %v7749
        %7751 = vmatmul.bf16.gmra.mxu0 %v7612
        %v7752 = vpop.f32.mrf.mxu0
        %v7753 = vadd.f32 0.0, %v7752
        %v7754 = vpop.f32.mrf.mxu0
        %v7755 = vadd.f32 0.0, %v7754
        %7756 = vmatmul.bf16.gmra.mxu0 %v7614
        %v7757 = vpop.f32.mrf.mxu0
        %v7758 = vadd.f32 0.0, %v7757
        %v7759 = vpop.f32.mrf.mxu0
        %v7760 = vadd.f32 0.0, %v7759
        %7761 = vmatmul.bf16.gmra.mxu0 %v7616
        %v7762 = vpop.f32.mrf.mxu0
        %v7763 = vadd.f32 0.0, %v7762
        %v7764 = vpop.f32.mrf.mxu0
        %v7765 = vadd.f32 0.0, %v7764
        %7766 = vmatmul.bf16.gmra.mxu0 %v7618
        %v7767 = vpop.f32.mrf.mxu0
        %v7768 = vadd.f32 0.0, %v7767
        %v7769 = vpop.f32.mrf.mxu0
        %v7770 = vadd.f32 0.0, %v7769
        %7771 = vmatmul.bf16.gmra.mxu0 %v7620
        %v7772 = vpop.f32.mrf.mxu0
        %v7773 = vadd.f32 0.0, %v7772
        %v7774 = vpop.f32.mrf.mxu0
        %v7775 = vadd.f32 0.0, %v7774
        %7776 = vmatmul.bf16.gmra.mxu0 %v7622
        %v7777 = vpop.f32.mrf.mxu0
        %v7778 = vadd.f32 0.0, %v7777
        %v7779 = vpop.f32.mrf.mxu0
        %v7780 = vadd.f32 0.0, %v7779
        %7781 = vmatmul.bf16.gmra.mxu0 %v7624
        %v7782 = vpop.f32.mrf.mxu0
        %v7783 = vadd.f32 0.0, %v7782
        %v7784 = vpop.f32.mrf.mxu0
        %v7785 = vadd.f32 0.0, %v7784
        %7786 = vmatmul.bf16.gmra.mxu0 %v7626
        %v7787 = vpop.f32.mrf.mxu0
        %v7788 = vadd.f32 0.0, %v7787
        %v7789 = vpop.f32.mrf.mxu0
        %v7790 = vadd.f32 0.0, %v7789
        %7791 = vdwg.mxu0
        %v7792 = vld [vmem:[#allocation3] sm:$0xff]
        %v7793 = vld [vmem:[#allocation3 + $0x8] sm:$0xff]
        %v7794 = vld [vmem:[#allocation3 + $0x10] sm:$0xff]
        %v7795 = vld [vmem:[#allocation3 + $0x18] sm:$0xff]
        %v7796 = vld [vmem:[#allocation3 + $0x20] sm:$0xff]
        %v7797 = vld [vmem:[#allocation3 + $0x28] sm:$0xff]
        %v7798 = vld [vmem:[#allocation3 + $0x30] sm:$0xff]
        %v7799 = vld [vmem:[#allocation3 + $0x38] sm:$0xff]
        %v7800 = vld [vmem:[#allocation3 + $0x40] sm:$0xff]
        %v7801 = vld [vmem:[#allocation3 + $0x48] sm:$0xff]
        %v7802 = vld [vmem:[#allocation3 + $0x50] sm:$0xff]
        %v7803 = vld [vmem:[#allocation3 + $0x58] sm:$0xff]
        %v7804 = vld [vmem:[#allocation3 + $0x60] sm:$0xff]
        %v7805 = vld [vmem:[#allocation3 + $0x68] sm:$0xff]
        %v7806 = vld [vmem:[#allocation3 + $0x70] sm:$0xff]
        %v7807 = vld [vmem:[#allocation3 + $0x78] sm:$0xff]
        %v7808 = vld [vmem:[#allocation3 + $0x80] sm:$0xff]
        %v7809 = vld [vmem:[#allocation3 + $0x88] sm:$0xff]
        %v7810 = vld [vmem:[#allocation3 + $0x90] sm:$0xff]
        %v7811 = vld [vmem:[#allocation3 + $0x98] sm:$0xff]
        %v7812 = vld [vmem:[#allocation3 + $0xa0] sm:$0xff]
        %v7813 = vld [vmem:[#allocation3 + $0xa8] sm:$0xff]
        %v7814 = vld [vmem:[#allocation3 + $0xb0] sm:$0xff]
        %v7815 = vld [vmem:[#allocation3 + $0xb8] sm:$0xff]
        %v7816 = vld [vmem:[#allocation3 + $0xc0] sm:$0xff]
        %v7817 = vld [vmem:[#allocation3 + $0xc8] sm:$0xff]
        %v7818 = vld [vmem:[#allocation3 + $0xd0] sm:$0xff]
        %v7819 = vld [vmem:[#allocation3 + $0xd8] sm:$0xff]
        %v7820 = vld [vmem:[#allocation3 + $0xe0] sm:$0xff]
        %v7821 = vld [vmem:[#allocation3 + $0xe8] sm:$0xff]
        %v7822 = vld [vmem:[#allocation3 + $0xf0] sm:$0xff]
        %v7823 = vld [vmem:[#allocation3 + $0xf8] sm:$0xff]
        %v7824 = vld [vmem:[#allocation3 + $0x100] sm:$0xff]
        %v7825 = vld [vmem:[#allocation3 + $0x108] sm:$0xff]
        %v7826 = vld [vmem:[#allocation3 + $0x110] sm:$0xff]
        %v7827 = vld [vmem:[#allocation3 + $0x118] sm:$0xff]
        %v7828 = vadd.f32 %v7792, %v7703
        %v7829 = vadd.f32 %v7793, %v7705
        %v7830 = vadd.f32 %v7794, %v7708
        %v7831 = vadd.f32 %v7795, %v7710
        %v7832 = vadd.f32 %v7796, %v7713
        %v7833 = vadd.f32 %v7797, %v7715
        %v7834 = vadd.f32 %v7798, %v7718
        %v7835 = vadd.f32 %v7799, %v7720
        %v7836 = vadd.f32 %v7800, %v7723
        %v7837 = vadd.f32 %v7801, %v7725
        %v7838 = vadd.f32 %v7802, %v7728
        %v7839 = vadd.f32 %v7803, %v7730
        %v7840 = vadd.f32 %v7804, %v7733
        %v7841 = vadd.f32 %v7805, %v7735
        %v7842 = vadd.f32 %v7806, %v7738
        %v7843 = vadd.f32 %v7807, %v7740
        %v7844 = vadd.f32 %v7808, %v7743
        %v7845 = vadd.f32 %v7809, %v7745
        %v7846 = vadd.f32 %v7810, %v7748
        %v7847 = vadd.f32 %v7811, %v7750
        %v7848 = vadd.f32 %v7812, %v7753
        %v7849 = vadd.f32 %v7813, %v7755
        %v7850 = vadd.f32 %v7814, %v7758
        %v7851 = vadd.f32 %v7815, %v7760
        %v7852 = vadd.f32 %v7816, %v7763
        %v7853 = vadd.f32 %v7817, %v7765
        %v7854 = vadd.f32 %v7818, %v7768
        %v7855 = vadd.f32 %v7819, %v7770
        %v7856 = vadd.f32 %v7820, %v7773
        %v7857 = vadd.f32 %v7821, %v7775
        %v7858 = vadd.f32 %v7822, %v7778
        %v7859 = vadd.f32 %v7823, %v7780
        %v7860 = vadd.f32 %v7824, %v7783
        %v7861 = vadd.f32 %v7825, %v7785
        %v7862 = vadd.f32 %v7826, %v7788
        %v7863 = vadd.f32 %v7827, %v7790
        %7864 = vst [vmem:[#allocation3] sm:$0xff] %v7828
        %7865 = vst [vmem:[#allocation3 + $0x8] sm:$0xff] %v7829
        %7866 = vst [vmem:[#allocation3 + $0x10] sm:$0xff] %v7830
        %7867 = vst [vmem:[#allocation3 + $0x18] sm:$0xff] %v7831
        %7868 = vst [vmem:[#allocation3 + $0x20] sm:$0xff] %v7832
        %7869 = vst [vmem:[#allocation3 + $0x28] sm:$0xff] %v7833
        %7870 = vst [vmem:[#allocation3 + $0x30] sm:$0xff] %v7834
        %7871 = vst [vmem:[#allocation3 + $0x38] sm:$0xff] %v7835
        %7872 = vst [vmem:[#allocation3 + $0x40] sm:$0xff] %v7836
        %7873 = vst [vmem:[#allocation3 + $0x48] sm:$0xff] %v7837
        %7874 = vst [vmem:[#allocation3 + $0x50] sm:$0xff] %v7838
        %7875 = vst [vmem:[#allocation3 + $0x58] sm:$0xff] %v7839
        %7876 = vst [vmem:[#allocation3 + $0x60] sm:$0xff] %v7840
        %7877 = vst [vmem:[#allocation3 + $0x68] sm:$0xff] %v7841
        %7878 = vst [vmem:[#allocation3 + $0x70] sm:$0xff] %v7842
        %7879 = vst [vmem:[#allocation3 + $0x78] sm:$0xff] %v7843
        %7880 = vst [vmem:[#allocation3 + $0x80] sm:$0xff] %v7844
        %7881 = vst [vmem:[#allocation3 + $0x88] sm:$0xff] %v7845
        %7882 = vst [vmem:[#allocation3 + $0x90] sm:$0xff] %v7846
        %7883 = vst [vmem:[#allocation3 + $0x98] sm:$0xff] %v7847
        %7884 = vst [vmem:[#allocation3 + $0xa0] sm:$0xff] %v7848
        %7885 = vst [vmem:[#allocation3 + $0xa8] sm:$0xff] %v7849
        %7886 = vst [vmem:[#allocation3 + $0xb0] sm:$0xff] %v7850
        %7887 = vst [vmem:[#allocation3 + $0xb8] sm:$0xff] %v7851
        %7888 = vst [vmem:[#allocation3 + $0xc0] sm:$0xff] %v7852
        %7889 = vst [vmem:[#allocation3 + $0xc8] sm:$0xff] %v7853
        %7890 = vst [vmem:[#allocation3 + $0xd0] sm:$0xff] %v7854
        %7891 = vst [vmem:[#allocation3 + $0xd8] sm:$0xff] %v7855
        %7892 = vst [vmem:[#allocation3 + $0xe0] sm:$0xff] %v7856
        %7893 = vst [vmem:[#allocation3 + $0xe8] sm:$0xff] %v7857
        %7894 = vst [vmem:[#allocation3 + $0xf0] sm:$0xff] %v7858
        %7895 = vst [vmem:[#allocation3 + $0xf8] sm:$0xff] %v7859
        %7896 = vst [vmem:[#allocation3 + $0x100] sm:$0xff] %v7860
        %7897 = vst [vmem:[#allocation3 + $0x108] sm:$0xff] %v7861
        %7898 = vst [vmem:[#allocation3 + $0x110] sm:$0xff] %v7862
        %7899 = vst [vmem:[#allocation3 + $0x118] sm:$0xff] %v7863
        %v7900 = vld [vmem:[#allocation2 + $0x8] sm:$0xe]
        %v7901 = vld [vmem:[#allocation2 + $0xc] sm:$0xf]
        %v7902 = vld [vmem:[#allocation2 + $0x10] sm:$0xf]
        %v7903 = vld [vmem:[#allocation2 + $0x14] sm:$0xf]
        %v7904 = vld [vmem:[#allocation2 + $0x18] sm:$0xf]
        %v7905 = vld [vmem:[#allocation2 + $0x1c] sm:$0xf]
        %v7906 = vld [vmem:[#allocation2 + $0x20] sm:$0xf]
        %v7907 = vld [vmem:[#allocation2 + $0x24] sm:$0xf]
        %v7908 = vld [vmem:[#allocation2 + $0x28] sm:$0xf]
        %v7909 = vld [vmem:[#allocation2 + $0x2c] sm:$0xf]
        %v7910 = vld [vmem:[#allocation2 + $0x30] sm:$0xf]
        %v7911 = vld [vmem:[#allocation2 + $0x34] sm:$0xf]
        %v7912 = vld [vmem:[#allocation2 + $0x38] sm:$0xf]
        %v7913 = vld [vmem:[#allocation2 + $0x3c] sm:$0xf]
        %v7914 = vld [vmem:[#allocation2 + $0x40] sm:$0xf]
        %v7915 = vld [vmem:[#allocation2 + $0x44] sm:$0xf]
        %v7916 = vld [vmem:[#allocation2 + $0x48] sm:$0xf]
        %v7917 = vld [vmem:[#allocation2 + $0x4c] sm:$0xf]
        %v7918 = vld [vmem:[#allocation2 + $0x50] sm:$0xf]
        %v7919 = vld [vmem:[#allocation2 + $0x54] sm:$0xf]
        %v7920 = vld [vmem:[#allocation2 + $0x58] sm:$0xf]
        %v7921 = vld [vmem:[#allocation2 + $0x5c] sm:$0xf]
        %v7922 = vld [vmem:[#allocation2 + $0x60] sm:$0xf]
        %v7923 = vld [vmem:[#allocation2 + $0x64] sm:$0xf]
        %v7924 = vld [vmem:[#allocation2 + $0x68] sm:$0xf]
        %v7925 = vld [vmem:[#allocation2 + $0x6c] sm:$0xf]
        %v7926 = vld [vmem:[#allocation2 + $0x70] sm:$0xf]
        %v7927 = vld [vmem:[#allocation2 + $0x74] sm:$0xf]
        %v7928 = vld [vmem:[#allocation2 + $0x78] sm:$0xf]
        %v7929 = vld [vmem:[#allocation2 + $0x7c] sm:$0xf]
        %v7930 = vld [vmem:[#allocation2 + $0x80] sm:$0xf]
        %v7931 = vld [vmem:[#allocation2 + $0x84] sm:$0xf]
        %v7932 = vld [vmem:[#allocation2 + $0x88] sm:$0xf]
        %v7933 = vld [vmem:[#allocation2 + $0x8c] sm:$0xf]
        %v7934 = vld [vmem:[#allocation2 + $0x90] sm:$0xf]
        %v7935 = vld [vmem:[#allocation2 + $0x94] sm:$0xf]
        %v7936 = vld [vmem:[#allocation2 + $0x98] sm:$0x3]
        %s7937 = scalar_lea.vmem [#allocation4], 256
        %v7938 = vld [vmem:[%s7937] sm:$0xf]
        %v7939 = vld [vmem:[%s7937 + $0x4] sm:$0xf]
        %v7940 = vld [vmem:[%s7937 + $0x8] sm:$0xf]
        %v7941 = vld [vmem:[%s7937 + $0xc] sm:$0xf]
        %v7942 = vld [vmem:[%s7937 + $0x10] sm:$0xf]
        %v7943 = vld [vmem:[%s7937 + $0x14] sm:$0xf]
        %v7944 = vld [vmem:[%s7937 + $0x18] sm:$0xf]
        %v7945 = vld [vmem:[%s7937 + $0x1c] sm:$0xf]
        %v7946 = vld [vmem:[%s7937 + $0x20] sm:$0xf]
        %v7947 = vld [vmem:[%s7937 + $0x24] sm:$0xf]
        %v7948 = vld [vmem:[%s7937 + $0x28] sm:$0xf]
        %v7949 = vld [vmem:[%s7937 + $0x2c] sm:$0xf]
        %v7950 = vld [vmem:[%s7937 + $0x30] sm:$0xf]
        %v7951 = vld [vmem:[%s7937 + $0x34] sm:$0xf]
        %v7952 = vld [vmem:[%s7937 + $0x38] sm:$0xf]
        %v7953 = vld [vmem:[%s7937 + $0x3c] sm:$0xf]
        %v7991 = vunpack.c.l.b16 %v7900
        %v7992 = vunpack.c.l.b16 %v7901
        %v7993 = vunpack.c.l.b16 %v7902
        %v7994 = vunpack.c.l.b16 %v7903
        %v7995 = vunpack.c.l.b16 %v7904
        %v7996 = vunpack.c.l.b16 %v7905
        %v7997 = vunpack.c.l.b16 %v7906
        %v7998 = vunpack.c.l.b16 %v7907
        %v7999 = vunpack.c.l.b16 %v7908
        %v8000 = vunpack.c.l.b16 %v7909
        %v8001 = vunpack.c.l.b16 %v7910
        %v8002 = vunpack.c.l.b16 %v7911
        %v8003 = vunpack.c.l.b16 %v7912
        %v8004 = vunpack.c.l.b16 %v7913
        %v8005 = vunpack.c.l.b16 %v7914
        %v8006 = vunpack.c.l.b16 %v7915
        %v8007 = vunpack.c.l.b16 %v7916
        %v8008 = vunpack.c.l.b16 %v7917
        %v8009 = vunpack.c.l.b16 %v7918
        %v8010 = vunpack.c.l.b16 %v7919
        %v8011 = vunpack.c.l.b16 %v7920
        %v8012 = vunpack.c.l.b16 %v7921
        %v8013 = vunpack.c.l.b16 %v7922
        %v8014 = vunpack.c.l.b16 %v7923
        %v8015 = vunpack.c.l.b16 %v7924
        %v8016 = vunpack.c.l.b16 %v7925
        %v8017 = vunpack.c.l.b16 %v7926
        %v8018 = vunpack.c.l.b16 %v7927
        %v8019 = vunpack.c.l.b16 %v7928
        %v8020 = vunpack.c.l.b16 %v7929
        %v8021 = vunpack.c.l.b16 %v7930
        %v8022 = vunpack.c.l.b16 %v7931
        %v8023 = vunpack.c.l.b16 %v7932
        %v8024 = vunpack.c.l.b16 %v7933
        %v8025 = vunpack.c.l.b16 %v7934
        %v8026 = vunpack.c.l.b16 %v7935
        %v8027 = vunpack.c.l.b16 %v7936
        %v8028 = vpack.c.b16 %v7992, %v7991
        %v8029 = vpack.c.b16 %v7994, %v7993
        %v8030 = vpack.c.b16 %v7996, %v7995
        %v8031 = vpack.c.b16 %v7998, %v7997
        %v8032 = vpack.c.b16 %v8000, %v7999
        %v8033 = vpack.c.b16 %v8002, %v8001
        %v8034 = vpack.c.b16 %v8004, %v8003
        %v8035 = vpack.c.b16 %v8006, %v8005
        %v8036 = vpack.c.b16 %v8008, %v8007
        %v8037 = vpack.c.b16 %v8010, %v8009
        %v8038 = vpack.c.b16 %v8012, %v8011
        %v8039 = vpack.c.b16 %v8014, %v8013
        %v8040 = vpack.c.b16 %v8016, %v8015
        %v8041 = vpack.c.b16 %v8018, %v8017
        %v8042 = vpack.c.b16 %v8020, %v8019
        %v8043 = vpack.c.b16 %v8022, %v8021
        %v8044 = vpack.c.b16 %v8024, %v8023
        %v8045 = vpack.c.b16 %v8026, %v8025
        %v8046 = vpack.c.b16 %v8027, %v8027
        %v8048 = vshrl.u32 %v8028, 16
        %v8050 = vrot.slane %v8048, 1
        %v8051 = vshll.u32 %v8028, 16
        %v8053 = vrot.slane %v8051, 2
        %v8054 = vor.u32 %v8050, %v8053
        %v8056 = vshrl.u32 %v8029, 16
        %v8058 = vrot.slane %v8056, 1
        %v8059 = vshll.u32 %v8029, 16
        %v8061 = vrot.slane %v8059, 2
        %v8062 = vor.u32 %v8058, %v8061
        %v8063 = vsel %vm2222, %v8054, %v8062
        %v8065 = vshrl.u32 %v8030, 16
        %v8067 = vrot.slane %v8065, 1
        %v8068 = vshll.u32 %v8030, 16
        %v8070 = vrot.slane %v8068, 2
        %v8071 = vor.u32 %v8067, %v8070
        %v8072 = vsel %vm2222, %v8062, %v8071
        %v8074 = vshrl.u32 %v8031, 16
        %v8076 = vrot.slane %v8074, 1
        %v8077 = vshll.u32 %v8031, 16
        %v8079 = vrot.slane %v8077, 2
        %v8080 = vor.u32 %v8076, %v8079
        %v8081 = vsel %vm2222, %v8071, %v8080
        %v8083 = vshrl.u32 %v8032, 16
        %v8085 = vrot.slane %v8083, 1
        %v8086 = vshll.u32 %v8032, 16
        %v8088 = vrot.slane %v8086, 2
        %v8089 = vor.u32 %v8085, %v8088
        %v8090 = vsel %vm2222, %v8080, %v8089
        %v8092 = vshrl.u32 %v8033, 16
        %v8094 = vrot.slane %v8092, 1
        %v8095 = vshll.u32 %v8033, 16
        %v8097 = vrot.slane %v8095, 2
        %v8098 = vor.u32 %v8094, %v8097
        %v8099 = vsel %vm2222, %v8089, %v8098
        %v8101 = vshrl.u32 %v8034, 16
        %v8103 = vrot.slane %v8101, 1
        %v8104 = vshll.u32 %v8034, 16
        %v8106 = vrot.slane %v8104, 2
        %v8107 = vor.u32 %v8103, %v8106
        %v8108 = vsel %vm2222, %v8098, %v8107
        %v8110 = vshrl.u32 %v8035, 16
        %v8112 = vrot.slane %v8110, 1
        %v8113 = vshll.u32 %v8035, 16
        %v8115 = vrot.slane %v8113, 2
        %v8116 = vor.u32 %v8112, %v8115
        %v8117 = vsel %vm2222, %v8107, %v8116
        %v8119 = vshrl.u32 %v8036, 16
        %v8121 = vrot.slane %v8119, 1
        %v8122 = vshll.u32 %v8036, 16
        %v8124 = vrot.slane %v8122, 2
        %v8125 = vor.u32 %v8121, %v8124
        %v8126 = vsel %vm2222, %v8116, %v8125
        %v8128 = vshrl.u32 %v8037, 16
        %v8130 = vrot.slane %v8128, 1
        %v8131 = vshll.u32 %v8037, 16
        %v8133 = vrot.slane %v8131, 2
        %v8134 = vor.u32 %v8130, %v8133
        %v8135 = vsel %vm2222, %v8125, %v8134
        %v8137 = vshrl.u32 %v8038, 16
        %v8139 = vrot.slane %v8137, 1
        %v8140 = vshll.u32 %v8038, 16
        %v8142 = vrot.slane %v8140, 2
        %v8143 = vor.u32 %v8139, %v8142
        %v8144 = vsel %vm2222, %v8134, %v8143
        %v8146 = vshrl.u32 %v8039, 16
        %v8148 = vrot.slane %v8146, 1
        %v8149 = vshll.u32 %v8039, 16
        %v8151 = vrot.slane %v8149, 2
        %v8152 = vor.u32 %v8148, %v8151
        %v8153 = vsel %vm2222, %v8143, %v8152
        %v8155 = vshrl.u32 %v8040, 16
        %v8157 = vrot.slane %v8155, 1
        %v8158 = vshll.u32 %v8040, 16
        %v8160 = vrot.slane %v8158, 2
        %v8161 = vor.u32 %v8157, %v8160
        %v8162 = vsel %vm2222, %v8152, %v8161
        %v8164 = vshrl.u32 %v8041, 16
        %v8166 = vrot.slane %v8164, 1
        %v8167 = vshll.u32 %v8041, 16
        %v8169 = vrot.slane %v8167, 2
        %v8170 = vor.u32 %v8166, %v8169
        %v8171 = vsel %vm2222, %v8161, %v8170
        %v8173 = vshrl.u32 %v8042, 16
        %v8175 = vrot.slane %v8173, 1
        %v8176 = vshll.u32 %v8042, 16
        %v8178 = vrot.slane %v8176, 2
        %v8179 = vor.u32 %v8175, %v8178
        %v8180 = vsel %vm2222, %v8170, %v8179
        %v8182 = vshrl.u32 %v8043, 16
        %v8184 = vrot.slane %v8182, 1
        %v8185 = vshll.u32 %v8043, 16
        %v8187 = vrot.slane %v8185, 2
        %v8188 = vor.u32 %v8184, %v8187
        %v8189 = vsel %vm2222, %v8179, %v8188
        %v8191 = vshrl.u32 %v8044, 16
        %v8193 = vrot.slane %v8191, 1
        %v8194 = vshll.u32 %v8044, 16
        %v8196 = vrot.slane %v8194, 2
        %v8197 = vor.u32 %v8193, %v8196
        %v8198 = vsel %vm2222, %v8188, %v8197
        %v8200 = vshrl.u32 %v8045, 16
        %v8202 = vrot.slane %v8200, 1
        %v8203 = vshll.u32 %v8045, 16
        %v8205 = vrot.slane %v8203, 2
        %v8206 = vor.u32 %v8202, %v8205
        %v8207 = vsel %vm2222, %v8197, %v8206
        %v8209 = vshrl.u32 %v8046, 16
        %v8211 = vrot.slane %v8209, 1
        %v8212 = vshll.u32 %v8046, 16
        %v8214 = vrot.slane %v8212, 2
        %v8215 = vor.u32 %v8211, %v8214
        %v8216 = vsel %vm2222, %v8206, %v8215
        %v8251 = vunpack.c.l.b16 %v7938
        %v8252 = vunpack.c.l.b16 %v7939
        %v8253 = vunpack.c.l.b16 %v7940
        %v8254 = vunpack.c.l.b16 %v7941
        %v8255 = vunpack.c.l.b16 %v7942
        %v8256 = vunpack.c.l.b16 %v7943
        %v8257 = vunpack.c.l.b16 %v7944
        %v8258 = vunpack.c.l.b16 %v7945
        %v8259 = vunpack.c.l.b16 %v7946
        %v8260 = vunpack.c.l.b16 %v7947
        %v8261 = vunpack.c.l.b16 %v7948
        %v8262 = vunpack.c.l.b16 %v7949
        %v8263 = vunpack.c.l.b16 %v7950
        %v8264 = vunpack.c.l.b16 %v7951
        %v8265 = vunpack.c.l.b16 %v7952
        %v8266 = vunpack.c.l.b16 %v7953
        %v8267 = vpack.c.b16 %v8252, %v8251
        %v8268 = vpack.c.b16 %v8254, %v8253
        %v8269 = vpack.c.b16 %v8256, %v8255
        %v8270 = vpack.c.b16 %v8258, %v8257
        %v8271 = vpack.c.b16 %v8260, %v8259
        %v8272 = vpack.c.b16 %v8262, %v8261
        %v8273 = vpack.c.b16 %v8264, %v8263
        %v8274 = vpack.c.b16 %v8266, %v8265
        %8283 = vmatpush.bf16.msra.mxu0 %v8274
        %8284 = vmatpush.bf16.msra.mxu0 %v8273
        %8285 = vmatpush.bf16.msra.mxu0 %v8272
        %8286 = vmatpush.bf16.msra.mxu0 %v8271
        %8287 = vmatpush.bf16.msra.mxu0 %v8270
        %8288 = vmatpush.bf16.msra.mxu0 %v8269
        %8289 = vmatpush.bf16.msra.mxu0 %v8268
        %8290 = vmatpush.bf16.msra.mxu0 %v8267
        %8291 = vmatmul.bf16.gmra.mxu0 %v8063
        %v8292 = vpop.f32.mrf.mxu0
        %v8293 = vadd.f32 0.0, %v8292
        %v8294 = vpop.f32.mrf.mxu0
        %v8295 = vadd.f32 0.0, %v8294
        %8296 = vmatmul.bf16.gmra.mxu0 %v8072
        %v8297 = vpop.f32.mrf.mxu0
        %v8298 = vadd.f32 0.0, %v8297
        %v8299 = vpop.f32.mrf.mxu0
        %v8300 = vadd.f32 0.0, %v8299
        %8301 = vmatmul.bf16.gmra.mxu0 %v8081
        %v8302 = vpop.f32.mrf.mxu0
        %v8303 = vadd.f32 0.0, %v8302
        %v8304 = vpop.f32.mrf.mxu0
        %v8305 = vadd.f32 0.0, %v8304
        %8306 = vmatmul.bf16.gmra.mxu0 %v8090
        %v8307 = vpop.f32.mrf.mxu0
        %v8308 = vadd.f32 0.0, %v8307
        %v8309 = vpop.f32.mrf.mxu0
        %v8310 = vadd.f32 0.0, %v8309
        %8311 = vmatmul.bf16.gmra.mxu0 %v8099
        %v8312 = vpop.f32.mrf.mxu0
        %v8313 = vadd.f32 0.0, %v8312
        %v8314 = vpop.f32.mrf.mxu0
        %v8315 = vadd.f32 0.0, %v8314
        %8316 = vmatmul.bf16.gmra.mxu0 %v8108
        %v8317 = vpop.f32.mrf.mxu0
        %v8318 = vadd.f32 0.0, %v8317
        %v8319 = vpop.f32.mrf.mxu0
        %v8320 = vadd.f32 0.0, %v8319
        %8321 = vmatmul.bf16.gmra.mxu0 %v8117
        %v8322 = vpop.f32.mrf.mxu0
        %v8323 = vadd.f32 0.0, %v8322
        %v8324 = vpop.f32.mrf.mxu0
        %v8325 = vadd.f32 0.0, %v8324
        %8326 = vmatmul.bf16.gmra.mxu0 %v8126
        %v8327 = vpop.f32.mrf.mxu0
        %v8328 = vadd.f32 0.0, %v8327
        %v8329 = vpop.f32.mrf.mxu0
        %v8330 = vadd.f32 0.0, %v8329
        %8331 = vmatmul.bf16.gmra.mxu0 %v8135
        %v8332 = vpop.f32.mrf.mxu0
        %v8333 = vadd.f32 0.0, %v8332
        %v8334 = vpop.f32.mrf.mxu0
        %v8335 = vadd.f32 0.0, %v8334
        %8336 = vmatmul.bf16.gmra.mxu0 %v8144
        %v8337 = vpop.f32.mrf.mxu0
        %v8338 = vadd.f32 0.0, %v8337
        %v8339 = vpop.f32.mrf.mxu0
        %v8340 = vadd.f32 0.0, %v8339
        %8341 = vmatmul.bf16.gmra.mxu0 %v8153
        %v8342 = vpop.f32.mrf.mxu0
        %v8343 = vadd.f32 0.0, %v8342
        %v8344 = vpop.f32.mrf.mxu0
        %v8345 = vadd.f32 0.0, %v8344
        %8346 = vmatmul.bf16.gmra.mxu0 %v8162
        %v8347 = vpop.f32.mrf.mxu0
        %v8348 = vadd.f32 0.0, %v8347
        %v8349 = vpop.f32.mrf.mxu0
        %v8350 = vadd.f32 0.0, %v8349
        %8351 = vmatmul.bf16.gmra.mxu0 %v8171
        %v8352 = vpop.f32.mrf.mxu0
        %v8353 = vadd.f32 0.0, %v8352
        %v8354 = vpop.f32.mrf.mxu0
        %v8355 = vadd.f32 0.0, %v8354
        %8356 = vmatmul.bf16.gmra.mxu0 %v8180
        %v8357 = vpop.f32.mrf.mxu0
        %v8358 = vadd.f32 0.0, %v8357
        %v8359 = vpop.f32.mrf.mxu0
        %v8360 = vadd.f32 0.0, %v8359
        %8361 = vmatmul.bf16.gmra.mxu0 %v8189
        %v8362 = vpop.f32.mrf.mxu0
        %v8363 = vadd.f32 0.0, %v8362
        %v8364 = vpop.f32.mrf.mxu0
        %v8365 = vadd.f32 0.0, %v8364
        %8366 = vmatmul.bf16.gmra.mxu0 %v8198
        %v8367 = vpop.f32.mrf.mxu0
        %v8368 = vadd.f32 0.0, %v8367
        %v8369 = vpop.f32.mrf.mxu0
        %v8370 = vadd.f32 0.0, %v8369
        %8371 = vmatmul.bf16.gmra.mxu0 %v8207
        %v8372 = vpop.f32.mrf.mxu0
        %v8373 = vadd.f32 0.0, %v8372
        %v8374 = vpop.f32.mrf.mxu0
        %v8375 = vadd.f32 0.0, %v8374
        %8376 = vmatmul.bf16.gmra.mxu0 %v8216
        %v8377 = vpop.f32.mrf.mxu0
        %v8378 = vadd.f32 0.0, %v8377
        %v8379 = vpop.f32.mrf.mxu0
        %v8380 = vadd.f32 0.0, %v8379
        %8381 = vdwg.mxu0
        %v8382 = vld [vmem:[#allocation3] sm:$0xff]
        %v8383 = vld [vmem:[#allocation3 + $0x8] sm:$0xff]
        %v8384 = vld [vmem:[#allocation3 + $0x10] sm:$0xff]
        %v8385 = vld [vmem:[#allocation3 + $0x18] sm:$0xff]
        %v8386 = vld [vmem:[#allocation3 + $0x20] sm:$0xff]
        %v8387 = vld [vmem:[#allocation3 + $0x28] sm:$0xff]
        %v8388 = vld [vmem:[#allocation3 + $0x30] sm:$0xff]
        %v8389 = vld [vmem:[#allocation3 + $0x38] sm:$0xff]
        %v8390 = vld [vmem:[#allocation3 + $0x40] sm:$0xff]
        %v8391 = vld [vmem:[#allocation3 + $0x48] sm:$0xff]
        %v8392 = vld [vmem:[#allocation3 + $0x50] sm:$0xff]
        %v8393 = vld [vmem:[#allocation3 + $0x58] sm:$0xff]
        %v8394 = vld [vmem:[#allocation3 + $0x60] sm:$0xff]
        %v8395 = vld [vmem:[#allocation3 + $0x68] sm:$0xff]
        %v8396 = vld [vmem:[#allocation3 + $0x70] sm:$0xff]
        %v8397 = vld [vmem:[#allocation3 + $0x78] sm:$0xff]
        %v8398 = vld [vmem:[#allocation3 + $0x80] sm:$0xff]
        %v8399 = vld [vmem:[#allocation3 + $0x88] sm:$0xff]
        %v8400 = vld [vmem:[#allocation3 + $0x90] sm:$0xff]
        %v8401 = vld [vmem:[#allocation3 + $0x98] sm:$0xff]
        %v8402 = vld [vmem:[#allocation3 + $0xa0] sm:$0xff]
        %v8403 = vld [vmem:[#allocation3 + $0xa8] sm:$0xff]
        %v8404 = vld [vmem:[#allocation3 + $0xb0] sm:$0xff]
        %v8405 = vld [vmem:[#allocation3 + $0xb8] sm:$0xff]
        %v8406 = vld [vmem:[#allocation3 + $0xc0] sm:$0xff]
        %v8407 = vld [vmem:[#allocation3 + $0xc8] sm:$0xff]
        %v8408 = vld [vmem:[#allocation3 + $0xd0] sm:$0xff]
        %v8409 = vld [vmem:[#allocation3 + $0xd8] sm:$0xff]
        %v8410 = vld [vmem:[#allocation3 + $0xe0] sm:$0xff]
        %v8411 = vld [vmem:[#allocation3 + $0xe8] sm:$0xff]
        %v8412 = vld [vmem:[#allocation3 + $0xf0] sm:$0xff]
        %v8413 = vld [vmem:[#allocation3 + $0xf8] sm:$0xff]
        %v8414 = vld [vmem:[#allocation3 + $0x100] sm:$0xff]
        %v8415 = vld [vmem:[#allocation3 + $0x108] sm:$0xff]
        %v8416 = vld [vmem:[#allocation3 + $0x110] sm:$0xff]
        %v8417 = vld [vmem:[#allocation3 + $0x118] sm:$0xff]
        %v8418 = vadd.f32 %v8382, %v8293
        %v8419 = vadd.f32 %v8383, %v8295
        %v8420 = vadd.f32 %v8384, %v8298
        %v8421 = vadd.f32 %v8385, %v8300
        %v8422 = vadd.f32 %v8386, %v8303
        %v8423 = vadd.f32 %v8387, %v8305
        %v8424 = vadd.f32 %v8388, %v8308
        %v8425 = vadd.f32 %v8389, %v8310
        %v8426 = vadd.f32 %v8390, %v8313
        %v8427 = vadd.f32 %v8391, %v8315
        %v8428 = vadd.f32 %v8392, %v8318
        %v8429 = vadd.f32 %v8393, %v8320
        %v8430 = vadd.f32 %v8394, %v8323
        %v8431 = vadd.f32 %v8395, %v8325
        %v8432 = vadd.f32 %v8396, %v8328
        %v8433 = vadd.f32 %v8397, %v8330
        %v8434 = vadd.f32 %v8398, %v8333
        %v8435 = vadd.f32 %v8399, %v8335
        %v8436 = vadd.f32 %v8400, %v8338
        %v8437 = vadd.f32 %v8401, %v8340
        %v8438 = vadd.f32 %v8402, %v8343
        %v8439 = vadd.f32 %v8403, %v8345
        %v8440 = vadd.f32 %v8404, %v8348
        %v8441 = vadd.f32 %v8405, %v8350
        %v8442 = vadd.f32 %v8406, %v8353
        %v8443 = vadd.f32 %v8407, %v8355
        %v8444 = vadd.f32 %v8408, %v8358
        %v8445 = vadd.f32 %v8409, %v8360
        %v8446 = vadd.f32 %v8410, %v8363
        %v8447 = vadd.f32 %v8411, %v8365
        %v8448 = vadd.f32 %v8412, %v8368
        %v8449 = vadd.f32 %v8413, %v8370
        %v8450 = vadd.f32 %v8414, %v8373
        %v8451 = vadd.f32 %v8415, %v8375
        %v8452 = vadd.f32 %v8416, %v8378
        %v8453 = vadd.f32 %v8417, %v8380
        %8454 = vst [vmem:[#allocation3] sm:$0xff] %v8418
        %8455 = vst [vmem:[#allocation3 + $0x8] sm:$0xff] %v8419
        %8456 = vst [vmem:[#allocation3 + $0x10] sm:$0xff] %v8420
        %8457 = vst [vmem:[#allocation3 + $0x18] sm:$0xff] %v8421
        %8458 = vst [vmem:[#allocation3 + $0x20] sm:$0xff] %v8422
        %8459 = vst [vmem:[#allocation3 + $0x28] sm:$0xff] %v8423
        %8460 = vst [vmem:[#allocation3 + $0x30] sm:$0xff] %v8424
        %8461 = vst [vmem:[#allocation3 + $0x38] sm:$0xff] %v8425
        %8462 = vst [vmem:[#allocation3 + $0x40] sm:$0xff] %v8426
        %8463 = vst [vmem:[#allocation3 + $0x48] sm:$0xff] %v8427
        %8464 = vst [vmem:[#allocation3 + $0x50] sm:$0xff] %v8428
        %8465 = vst [vmem:[#allocation3 + $0x58] sm:$0xff] %v8429
        %8466 = vst [vmem:[#allocation3 + $0x60] sm:$0xff] %v8430
        %8467 = vst [vmem:[#allocation3 + $0x68] sm:$0xff] %v8431
        %8468 = vst [vmem:[#allocation3 + $0x70] sm:$0xff] %v8432
        %8469 = vst [vmem:[#allocation3 + $0x78] sm:$0xff] %v8433
        %8470 = vst [vmem:[#allocation3 + $0x80] sm:$0xff] %v8434
        %8471 = vst [vmem:[#allocation3 + $0x88] sm:$0xff] %v8435
        %8472 = vst [vmem:[#allocation3 + $0x90] sm:$0xff] %v8436
        %8473 = vst [vmem:[#allocation3 + $0x98] sm:$0xff] %v8437
        %8474 = vst [vmem:[#allocation3 + $0xa0] sm:$0xff] %v8438
        %8475 = vst [vmem:[#allocation3 + $0xa8] sm:$0xff] %v8439
        %8476 = vst [vmem:[#allocation3 + $0xb0] sm:$0xff] %v8440
        %8477 = vst [vmem:[#allocation3 + $0xb8] sm:$0xff] %v8441
        %8478 = vst [vmem:[#allocation3 + $0xc0] sm:$0xff] %v8442
        %8479 = vst [vmem:[#allocation3 + $0xc8] sm:$0xff] %v8443
        %8480 = vst [vmem:[#allocation3 + $0xd0] sm:$0xff] %v8444
        %8481 = vst [vmem:[#allocation3 + $0xd8] sm:$0xff] %v8445
        %8482 = vst [vmem:[#allocation3 + $0xe0] sm:$0xff] %v8446
        %8483 = vst [vmem:[#allocation3 + $0xe8] sm:$0xff] %v8447
        %8484 = vst [vmem:[#allocation3 + $0xf0] sm:$0xff] %v8448
        %8485 = vst [vmem:[#allocation3 + $0xf8] sm:$0xff] %v8449
        %8486 = vst [vmem:[#allocation3 + $0x100] sm:$0xff] %v8450
        %8487 = vst [vmem:[#allocation3 + $0x108] sm:$0xff] %v8451
        %8488 = vst [vmem:[#allocation3 + $0x110] sm:$0xff] %v8452
        %8489 = vst [vmem:[#allocation3 + $0x118] sm:$0xff] %v8453
        %v8490 = vld [vmem:[#allocation2 + $0x8] sm:$0xc]
        %v8491 = vld [vmem:[#allocation2 + $0xc] sm:$0xf]
        %v8492 = vld [vmem:[#allocation2 + $0x10] sm:$0xf]
        %v8493 = vld [vmem:[#allocation2 + $0x14] sm:$0xf]
        %v8494 = vld [vmem:[#allocation2 + $0x18] sm:$0xf]
        %v8495 = vld [vmem:[#allocation2 + $0x1c] sm:$0xf]
        %v8496 = vld [vmem:[#allocation2 + $0x20] sm:$0xf]
        %v8497 = vld [vmem:[#allocation2 + $0x24] sm:$0xf]
        %v8498 = vld [vmem:[#allocation2 + $0x28] sm:$0xf]
        %v8499 = vld [vmem:[#allocation2 + $0x2c] sm:$0xf]
        %v8500 = vld [vmem:[#allocation2 + $0x30] sm:$0xf]
        %v8501 = vld [vmem:[#allocation2 + $0x34] sm:$0xf]
        %v8502 = vld [vmem:[#allocation2 + $0x38] sm:$0xf]
        %v8503 = vld [vmem:[#allocation2 + $0x3c] sm:$0xf]
        %v8504 = vld [vmem:[#allocation2 + $0x40] sm:$0xf]
        %v8505 = vld [vmem:[#allocation2 + $0x44] sm:$0xf]
        %v8506 = vld [vmem:[#allocation2 + $0x48] sm:$0xf]
        %v8507 = vld [vmem:[#allocation2 + $0x4c] sm:$0xf]
        %v8508 = vld [vmem:[#allocation2 + $0x50] sm:$0xf]
        %v8509 = vld [vmem:[#allocation2 + $0x54] sm:$0xf]
        %v8510 = vld [vmem:[#allocation2 + $0x58] sm:$0xf]
        %v8511 = vld [vmem:[#allocation2 + $0x5c] sm:$0xf]
        %v8512 = vld [vmem:[#allocation2 + $0x60] sm:$0xf]
        %v8513 = vld [vmem:[#allocation2 + $0x64] sm:$0xf]
        %v8514 = vld [vmem:[#allocation2 + $0x68] sm:$0xf]
        %v8515 = vld [vmem:[#allocation2 + $0x6c] sm:$0xf]
        %v8516 = vld [vmem:[#allocation2 + $0x70] sm:$0xf]
        %v8517 = vld [vmem:[#allocation2 + $0x74] sm:$0xf]
        %v8518 = vld [vmem:[#allocation2 + $0x78] sm:$0xf]
        %v8519 = vld [vmem:[#allocation2 + $0x7c] sm:$0xf]
        %v8520 = vld [vmem:[#allocation2 + $0x80] sm:$0xf]
        %v8521 = vld [vmem:[#allocation2 + $0x84] sm:$0xf]
        %v8522 = vld [vmem:[#allocation2 + $0x88] sm:$0xf]
        %v8523 = vld [vmem:[#allocation2 + $0x8c] sm:$0xf]
        %v8524 = vld [vmem:[#allocation2 + $0x90] sm:$0xf]
        %v8525 = vld [vmem:[#allocation2 + $0x94] sm:$0xf]
        %v8526 = vld [vmem:[#allocation2 + $0x98] sm:$0x3]
        %s8527 = scalar_lea.vmem [#allocation4], 320
        %v8528 = vld [vmem:[%s8527] sm:$0xf]
        %v8529 = vld [vmem:[%s8527 + $0x4] sm:$0xf]
        %v8530 = vld [vmem:[%s8527 + $0x8] sm:$0xf]
        %v8531 = vld [vmem:[%s8527 + $0xc] sm:$0xf]
        %v8532 = vld [vmem:[%s8527 + $0x10] sm:$0xf]
        %v8533 = vld [vmem:[%s8527 + $0x14] sm:$0xf]
        %v8534 = vld [vmem:[%s8527 + $0x18] sm:$0xf]
        %v8535 = vld [vmem:[%s8527 + $0x1c] sm:$0xf]
        %v8536 = vld [vmem:[%s8527 + $0x20] sm:$0xf]
        %v8537 = vld [vmem:[%s8527 + $0x24] sm:$0xf]
        %v8538 = vld [vmem:[%s8527 + $0x28] sm:$0xf]
        %v8539 = vld [vmem:[%s8527 + $0x2c] sm:$0xf]
        %v8540 = vld [vmem:[%s8527 + $0x30] sm:$0xf]
        %v8541 = vld [vmem:[%s8527 + $0x34] sm:$0xf]
        %v8542 = vld [vmem:[%s8527 + $0x38] sm:$0xf]
        %v8543 = vld [vmem:[%s8527 + $0x3c] sm:$0xf]
        %v8581 = vunpack.c.l.b16 %v8490
        %v8582 = vunpack.c.l.b16 %v8491
        %v8583 = vunpack.c.l.b16 %v8492
        %v8584 = vunpack.c.l.b16 %v8493
        %v8585 = vunpack.c.l.b16 %v8494
        %v8586 = vunpack.c.l.b16 %v8495
        %v8587 = vunpack.c.l.b16 %v8496
        %v8588 = vunpack.c.l.b16 %v8497
        %v8589 = vunpack.c.l.b16 %v8498
        %v8590 = vunpack.c.l.b16 %v8499
        %v8591 = vunpack.c.l.b16 %v8500
        %v8592 = vunpack.c.l.b16 %v8501
        %v8593 = vunpack.c.l.b16 %v8502
        %v8594 = vunpack.c.l.b16 %v8503
        %v8595 = vunpack.c.l.b16 %v8504
        %v8596 = vunpack.c.l.b16 %v8505
        %v8597 = vunpack.c.l.b16 %v8506
        %v8598 = vunpack.c.l.b16 %v8507
        %v8599 = vunpack.c.l.b16 %v8508
        %v8600 = vunpack.c.l.b16 %v8509
        %v8601 = vunpack.c.l.b16 %v8510
        %v8602 = vunpack.c.l.b16 %v8511
        %v8603 = vunpack.c.l.b16 %v8512
        %v8604 = vunpack.c.l.b16 %v8513
        %v8605 = vunpack.c.l.b16 %v8514
        %v8606 = vunpack.c.l.b16 %v8515
        %v8607 = vunpack.c.l.b16 %v8516
        %v8608 = vunpack.c.l.b16 %v8517
        %v8609 = vunpack.c.l.b16 %v8518
        %v8610 = vunpack.c.l.b16 %v8519
        %v8611 = vunpack.c.l.b16 %v8520
        %v8612 = vunpack.c.l.b16 %v8521
        %v8613 = vunpack.c.l.b16 %v8522
        %v8614 = vunpack.c.l.b16 %v8523
        %v8615 = vunpack.c.l.b16 %v8524
        %v8616 = vunpack.c.l.b16 %v8525
        %v8617 = vunpack.c.l.b16 %v8526
        %v8618 = vpack.c.b16 %v8582, %v8581
        %v8619 = vpack.c.b16 %v8584, %v8583
        %v8620 = vpack.c.b16 %v8586, %v8585
        %v8621 = vpack.c.b16 %v8588, %v8587
        %v8622 = vpack.c.b16 %v8590, %v8589
        %v8623 = vpack.c.b16 %v8592, %v8591
        %v8624 = vpack.c.b16 %v8594, %v8593
        %v8625 = vpack.c.b16 %v8596, %v8595
        %v8626 = vpack.c.b16 %v8598, %v8597
        %v8627 = vpack.c.b16 %v8600, %v8599
        %v8628 = vpack.c.b16 %v8602, %v8601
        %v8629 = vpack.c.b16 %v8604, %v8603
        %v8630 = vpack.c.b16 %v8606, %v8605
        %v8631 = vpack.c.b16 %v8608, %v8607
        %v8632 = vpack.c.b16 %v8610, %v8609
        %v8633 = vpack.c.b16 %v8612, %v8611
        %v8634 = vpack.c.b16 %v8614, %v8613
        %v8635 = vpack.c.b16 %v8616, %v8615
        %v8636 = vpack.c.b16 %v8617, %v8617
        %v8637 = vrot.slane %v8618, 2
        %v8638 = vrot.slane %v8619, 2
        %v8639 = vsel %vm2813, %v8637, %v8638
        %v8640 = vrot.slane %v8620, 2
        %v8641 = vsel %vm2813, %v8638, %v8640
        %v8642 = vrot.slane %v8621, 2
        %v8643 = vsel %vm2813, %v8640, %v8642
        %v8644 = vrot.slane %v8622, 2
        %v8645 = vsel %vm2813, %v8642, %v8644
        %v8646 = vrot.slane %v8623, 2
        %v8647 = vsel %vm2813, %v8644, %v8646
        %v8648 = vrot.slane %v8624, 2
        %v8649 = vsel %vm2813, %v8646, %v8648
        %v8650 = vrot.slane %v8625, 2
        %v8651 = vsel %vm2813, %v8648, %v8650
        %v8652 = vrot.slane %v8626, 2
        %v8653 = vsel %vm2813, %v8650, %v8652
        %v8654 = vrot.slane %v8627, 2
        %v8655 = vsel %vm2813, %v8652, %v8654
        %v8656 = vrot.slane %v8628, 2
        %v8657 = vsel %vm2813, %v8654, %v8656
        %v8658 = vrot.slane %v8629, 2
        %v8659 = vsel %vm2813, %v8656, %v8658
        %v8660 = vrot.slane %v8630, 2
        %v8661 = vsel %vm2813, %v8658, %v8660
        %v8662 = vrot.slane %v8631, 2
        %v8663 = vsel %vm2813, %v8660, %v8662
        %v8664 = vrot.slane %v8632, 2
        %v8665 = vsel %vm2813, %v8662, %v8664
        %v8666 = vrot.slane %v8633, 2
        %v8667 = vsel %vm2813, %v8664, %v8666
        %v8668 = vrot.slane %v8634, 2
        %v8669 = vsel %vm2813, %v8666, %v8668
        %v8670 = vrot.slane %v8635, 2
        %v8671 = vsel %vm2813, %v8668, %v8670
        %v8672 = vrot.slane %v8636, 2
        %v8673 = vsel %vm2813, %v8670, %v8672
        %v8708 = vunpack.c.l.b16 %v8528
        %v8709 = vunpack.c.l.b16 %v8529
        %v8710 = vunpack.c.l.b16 %v8530
        %v8711 = vunpack.c.l.b16 %v8531
        %v8712 = vunpack.c.l.b16 %v8532
        %v8713 = vunpack.c.l.b16 %v8533
        %v8714 = vunpack.c.l.b16 %v8534
        %v8715 = vunpack.c.l.b16 %v8535
        %v8716 = vunpack.c.l.b16 %v8536
        %v8717 = vunpack.c.l.b16 %v8537
        %v8718 = vunpack.c.l.b16 %v8538
        %v8719 = vunpack.c.l.b16 %v8539
        %v8720 = vunpack.c.l.b16 %v8540
        %v8721 = vunpack.c.l.b16 %v8541
        %v8722 = vunpack.c.l.b16 %v8542
        %v8723 = vunpack.c.l.b16 %v8543
        %v8724 = vpack.c.b16 %v8709, %v8708
        %v8725 = vpack.c.b16 %v8711, %v8710
        %v8726 = vpack.c.b16 %v8713, %v8712
        %v8727 = vpack.c.b16 %v8715, %v8714
        %v8728 = vpack.c.b16 %v8717, %v8716
        %v8729 = vpack.c.b16 %v8719, %v8718
        %v8730 = vpack.c.b16 %v8721, %v8720
        %v8731 = vpack.c.b16 %v8723, %v8722
        %8740 = vmatpush.bf16.msra.mxu0 %v8731
        %8741 = vmatpush.bf16.msra.mxu0 %v8730
        %8742 = vmatpush.bf16.msra.mxu0 %v8729
        %8743 = vmatpush.bf16.msra.mxu0 %v8728
        %8744 = vmatpush.bf16.msra.mxu0 %v8727
        %8745 = vmatpush.bf16.msra.mxu0 %v8726
        %8746 = vmatpush.bf16.msra.mxu0 %v8725
        %8747 = vmatpush.bf16.msra.mxu0 %v8724
        %8748 = vmatmul.bf16.gmra.mxu0 %v8639
        %v8749 = vpop.f32.mrf.mxu0
        %v8750 = vadd.f32 0.0, %v8749
        %v8751 = vpop.f32.mrf.mxu0
        %v8752 = vadd.f32 0.0, %v8751
        %8753 = vmatmul.bf16.gmra.mxu0 %v8641
        %v8754 = vpop.f32.mrf.mxu0
        %v8755 = vadd.f32 0.0, %v8754
        %v8756 = vpop.f32.mrf.mxu0
        %v8757 = vadd.f32 0.0, %v8756
        %8758 = vmatmul.bf16.gmra.mxu0 %v8643
        %v8759 = vpop.f32.mrf.mxu0
        %v8760 = vadd.f32 0.0, %v8759
        %v8761 = vpop.f32.mrf.mxu0
        %v8762 = vadd.f32 0.0, %v8761
        %8763 = vmatmul.bf16.gmra.mxu0 %v8645
        %v8764 = vpop.f32.mrf.mxu0
        %v8765 = vadd.f32 0.0, %v8764
        %v8766 = vpop.f32.mrf.mxu0
        %v8767 = vadd.f32 0.0, %v8766
        %8768 = vmatmul.bf16.gmra.mxu0 %v8647
        %v8769 = vpop.f32.mrf.mxu0
        %v8770 = vadd.f32 0.0, %v8769
        %v8771 = vpop.f32.mrf.mxu0
        %v8772 = vadd.f32 0.0, %v8771
        %8773 = vmatmul.bf16.gmra.mxu0 %v8649
        %v8774 = vpop.f32.mrf.mxu0
        %v8775 = vadd.f32 0.0, %v8774
        %v8776 = vpop.f32.mrf.mxu0
        %v8777 = vadd.f32 0.0, %v8776
        %8778 = vmatmul.bf16.gmra.mxu0 %v8651
        %v8779 = vpop.f32.mrf.mxu0
        %v8780 = vadd.f32 0.0, %v8779
        %v8781 = vpop.f32.mrf.mxu0
        %v8782 = vadd.f32 0.0, %v8781
        %8783 = vmatmul.bf16.gmra.mxu0 %v8653
        %v8784 = vpop.f32.mrf.mxu0
        %v8785 = vadd.f32 0.0, %v8784
        %v8786 = vpop.f32.mrf.mxu0
        %v8787 = vadd.f32 0.0, %v8786
        %8788 = vmatmul.bf16.gmra.mxu0 %v8655
        %v8789 = vpop.f32.mrf.mxu0
        %v8790 = vadd.f32 0.0, %v8789
        %v8791 = vpop.f32.mrf.mxu0
        %v8792 = vadd.f32 0.0, %v8791
        %8793 = vmatmul.bf16.gmra.mxu0 %v8657
        %v8794 = vpop.f32.mrf.mxu0
        %v8795 = vadd.f32 0.0, %v8794
        %v8796 = vpop.f32.mrf.mxu0
        %v8797 = vadd.f32 0.0, %v8796
        %8798 = vmatmul.bf16.gmra.mxu0 %v8659
        %v8799 = vpop.f32.mrf.mxu0
        %v8800 = vadd.f32 0.0, %v8799
        %v8801 = vpop.f32.mrf.mxu0
        %v8802 = vadd.f32 0.0, %v8801
        %8803 = vmatmul.bf16.gmra.mxu0 %v8661
        %v8804 = vpop.f32.mrf.mxu0
        %v8805 = vadd.f32 0.0, %v8804
        %v8806 = vpop.f32.mrf.mxu0
        %v8807 = vadd.f32 0.0, %v8806
        %8808 = vmatmul.bf16.gmra.mxu0 %v8663
        %v8809 = vpop.f32.mrf.mxu0
        %v8810 = vadd.f32 0.0, %v8809
        %v8811 = vpop.f32.mrf.mxu0
        %v8812 = vadd.f32 0.0, %v8811
        %8813 = vmatmul.bf16.gmra.mxu0 %v8665
        %v8814 = vpop.f32.mrf.mxu0
        %v8815 = vadd.f32 0.0, %v8814
        %v8816 = vpop.f32.mrf.mxu0
        %v8817 = vadd.f32 0.0, %v8816
        %8818 = vmatmul.bf16.gmra.mxu0 %v8667
        %v8819 = vpop.f32.mrf.mxu0
        %v8820 = vadd.f32 0.0, %v8819
        %v8821 = vpop.f32.mrf.mxu0
        %v8822 = vadd.f32 0.0, %v8821
        %8823 = vmatmul.bf16.gmra.mxu0 %v8669
        %v8824 = vpop.f32.mrf.mxu0
        %v8825 = vadd.f32 0.0, %v8824
        %v8826 = vpop.f32.mrf.mxu0
        %v8827 = vadd.f32 0.0, %v8826
        %8828 = vmatmul.bf16.gmra.mxu0 %v8671
        %v8829 = vpop.f32.mrf.mxu0
        %v8830 = vadd.f32 0.0, %v8829
        %v8831 = vpop.f32.mrf.mxu0
        %v8832 = vadd.f32 0.0, %v8831
        %8833 = vmatmul.bf16.gmra.mxu0 %v8673
        %v8834 = vpop.f32.mrf.mxu0
        %v8835 = vadd.f32 0.0, %v8834
        %v8836 = vpop.f32.mrf.mxu0
        %v8837 = vadd.f32 0.0, %v8836
        %8838 = vdwg.mxu0
        %v8839 = vld [vmem:[#allocation3] sm:$0xff]
        %v8840 = vld [vmem:[#allocation3 + $0x8] sm:$0xff]
        %v8841 = vld [vmem:[#allocation3 + $0x10] sm:$0xff]
        %v8842 = vld [vmem:[#allocation3 + $0x18] sm:$0xff]
        %v8843 = vld [vmem:[#allocation3 + $0x20] sm:$0xff]
        %v8844 = vld [vmem:[#allocation3 + $0x28] sm:$0xff]
        %v8845 = vld [vmem:[#allocation3 + $0x30] sm:$0xff]
        %v8846 = vld [vmem:[#allocation3 + $0x38] sm:$0xff]
        %v8847 = vld [vmem:[#allocation3 + $0x40] sm:$0xff]
        %v8848 = vld [vmem:[#allocation3 + $0x48] sm:$0xff]
        %v8849 = vld [vmem:[#allocation3 + $0x50] sm:$0xff]
        %v8850 = vld [vmem:[#allocation3 + $0x58] sm:$0xff]
        %v8851 = vld [vmem:[#allocation3 + $0x60] sm:$0xff]
        %v8852 = vld [vmem:[#allocation3 + $0x68] sm:$0xff]
        %v8853 = vld [vmem:[#allocation3 + $0x70] sm:$0xff]
        %v8854 = vld [vmem:[#allocation3 + $0x78] sm:$0xff]
        %v8855 = vld [vmem:[#allocation3 + $0x80] sm:$0xff]
        %v8856 = vld [vmem:[#allocation3 + $0x88] sm:$0xff]
        %v8857 = vld [vmem:[#allocation3 + $0x90] sm:$0xff]
        %v8858 = vld [vmem:[#allocation3 + $0x98] sm:$0xff]
        %v8859 = vld [vmem:[#allocation3 + $0xa0] sm:$0xff]
        %v8860 = vld [vmem:[#allocation3 + $0xa8] sm:$0xff]
        %v8861 = vld [vmem:[#allocation3 + $0xb0] sm:$0xff]
        %v8862 = vld [vmem:[#allocation3 + $0xb8] sm:$0xff]
        %v8863 = vld [vmem:[#allocation3 + $0xc0] sm:$0xff]
        %v8864 = vld [vmem:[#allocation3 + $0xc8] sm:$0xff]
        %v8865 = vld [vmem:[#allocation3 + $0xd0] sm:$0xff]
        %v8866 = vld [vmem:[#allocation3 + $0xd8] sm:$0xff]
        %v8867 = vld [vmem:[#allocation3 + $0xe0] sm:$0xff]
        %v8868 = vld [vmem:[#allocation3 + $0xe8] sm:$0xff]
        %v8869 = vld [vmem:[#allocation3 + $0xf0] sm:$0xff]
        %v8870 = vld [vmem:[#allocation3 + $0xf8] sm:$0xff]
        %v8871 = vld [vmem:[#allocation3 + $0x100] sm:$0xff]
        %v8872 = vld [vmem:[#allocation3 + $0x108] sm:$0xff]
        %v8873 = vld [vmem:[#allocation3 + $0x110] sm:$0xff]
        %v8874 = vld [vmem:[#allocation3 + $0x118] sm:$0xff]
        %v8875 = vadd.f32 %v8839, %v8750
        %v8876 = vadd.f32 %v8840, %v8752
        %v8877 = vadd.f32 %v8841, %v8755
        %v8878 = vadd.f32 %v8842, %v8757
        %v8879 = vadd.f32 %v8843, %v8760
        %v8880 = vadd.f32 %v8844, %v8762
        %v8881 = vadd.f32 %v8845, %v8765
        %v8882 = vadd.f32 %v8846, %v8767
        %v8883 = vadd.f32 %v8847, %v8770
        %v8884 = vadd.f32 %v8848, %v8772
        %v8885 = vadd.f32 %v8849, %v8775
        %v8886 = vadd.f32 %v8850, %v8777
        %v8887 = vadd.f32 %v8851, %v8780
        %v8888 = vadd.f32 %v8852, %v8782
        %v8889 = vadd.f32 %v8853, %v8785
        %v8890 = vadd.f32 %v8854, %v8787
        %v8891 = vadd.f32 %v8855, %v8790
        %v8892 = vadd.f32 %v8856, %v8792
        %v8893 = vadd.f32 %v8857, %v8795
        %v8894 = vadd.f32 %v8858, %v8797
        %v8895 = vadd.f32 %v8859, %v8800
        %v8896 = vadd.f32 %v8860, %v8802
        %v8897 = vadd.f32 %v8861, %v8805
        %v8898 = vadd.f32 %v8862, %v8807
        %v8899 = vadd.f32 %v8863, %v8810
        %v8900 = vadd.f32 %v8864, %v8812
        %v8901 = vadd.f32 %v8865, %v8815
        %v8902 = vadd.f32 %v8866, %v8817
        %v8903 = vadd.f32 %v8867, %v8820
        %v8904 = vadd.f32 %v8868, %v8822
        %v8905 = vadd.f32 %v8869, %v8825
        %v8906 = vadd.f32 %v8870, %v8827
        %v8907 = vadd.f32 %v8871, %v8830
        %v8908 = vadd.f32 %v8872, %v8832
        %v8909 = vadd.f32 %v8873, %v8835
        %v8910 = vadd.f32 %v8874, %v8837
        %8911 = vst [vmem:[#allocation3] sm:$0xff] %v8875
        %8912 = vst [vmem:[#allocation3 + $0x8] sm:$0xff] %v8876
        %8913 = vst [vmem:[#allocation3 + $0x10] sm:$0xff] %v8877
        %8914 = vst [vmem:[#allocation3 + $0x18] sm:$0xff] %v8878
        %8915 = vst [vmem:[#allocation3 + $0x20] sm:$0xff] %v8879
        %8916 = vst [vmem:[#allocation3 + $0x28] sm:$0xff] %v8880
        %8917 = vst [vmem:[#allocation3 + $0x30] sm:$0xff] %v8881
        %8918 = vst [vmem:[#allocation3 + $0x38] sm:$0xff] %v8882
        %8919 = vst [vmem:[#allocation3 + $0x40] sm:$0xff] %v8883
        %8920 = vst [vmem:[#allocation3 + $0x48] sm:$0xff] %v8884
        %8921 = vst [vmem:[#allocation3 + $0x50] sm:$0xff] %v8885
        %8922 = vst [vmem:[#allocation3 + $0x58] sm:$0xff] %v8886
        %8923 = vst [vmem:[#allocation3 + $0x60] sm:$0xff] %v8887
        %8924 = vst [vmem:[#allocation3 + $0x68] sm:$0xff] %v8888
        %8925 = vst [vmem:[#allocation3 + $0x70] sm:$0xff] %v8889
        %8926 = vst [vmem:[#allocation3 + $0x78] sm:$0xff] %v8890
        %8927 = vst [vmem:[#allocation3 + $0x80] sm:$0xff] %v8891
        %8928 = vst [vmem:[#allocation3 + $0x88] sm:$0xff] %v8892
        %8929 = vst [vmem:[#allocation3 + $0x90] sm:$0xff] %v8893
        %8930 = vst [vmem:[#allocation3 + $0x98] sm:$0xff] %v8894
        %8931 = vst [vmem:[#allocation3 + $0xa0] sm:$0xff] %v8895
        %8932 = vst [vmem:[#allocation3 + $0xa8] sm:$0xff] %v8896
        %8933 = vst [vmem:[#allocation3 + $0xb0] sm:$0xff] %v8897
        %8934 = vst [vmem:[#allocation3 + $0xb8] sm:$0xff] %v8898
        %8935 = vst [vmem:[#allocation3 + $0xc0] sm:$0xff] %v8899
        %8936 = vst [vmem:[#allocation3 + $0xc8] sm:$0xff] %v8900
        %8937 = vst [vmem:[#allocation3 + $0xd0] sm:$0xff] %v8901
        %8938 = vst [vmem:[#allocation3 + $0xd8] sm:$0xff] %v8902
        %8939 = vst [vmem:[#allocation3 + $0xe0] sm:$0xff] %v8903
        %8940 = vst [vmem:[#allocation3 + $0xe8] sm:$0xff] %v8904
        %8941 = vst [vmem:[#allocation3 + $0xf0] sm:$0xff] %v8905
        %8942 = vst [vmem:[#allocation3 + $0xf8] sm:$0xff] %v8906
        %8943 = vst [vmem:[#allocation3 + $0x100] sm:$0xff] %v8907
        %8944 = vst [vmem:[#allocation3 + $0x108] sm:$0xff] %v8908
        %8945 = vst [vmem:[#allocation3 + $0x110] sm:$0xff] %v8909
        %8946 = vst [vmem:[#allocation3 + $0x118] sm:$0xff] %v8910
        %v8947 = vld [vmem:[#allocation2 + $0x10] sm:$0xc]
        %v8948 = vld [vmem:[#allocation2 + $0x14] sm:$0xf]
        %v8949 = vld [vmem:[#allocation2 + $0x18] sm:$0xf]
        %v8950 = vld [vmem:[#allocation2 + $0x1c] sm:$0xf]
        %v8951 = vld [vmem:[#allocation2 + $0x20] sm:$0xf]
        %v8952 = vld [vmem:[#allocation2 + $0x24] sm:$0xf]
        %v8953 = vld [vmem:[#allocation2 + $0x28] sm:$0xf]
        %v8954 = vld [vmem:[#allocation2 + $0x2c] sm:$0xf]
        %v8955 = vld [vmem:[#allocation2 + $0x30] sm:$0xf]
        %v8956 = vld [vmem:[#allocation2 + $0x34] sm:$0xf]
        %v8957 = vld [vmem:[#allocation2 + $0x38] sm:$0xf]
        %v8958 = vld [vmem:[#allocation2 + $0x3c] sm:$0xf]
        %v8959 = vld [vmem:[#allocation2 + $0x40] sm:$0xf]
        %v8960 = vld [vmem:[#allocation2 + $0x44] sm:$0xf]
        %v8961 = vld [vmem:[#allocation2 + $0x48] sm:$0xf]
        %v8962 = vld [vmem:[#allocation2 + $0x4c] sm:$0xf]
        %v8963 = vld [vmem:[#allocation2 + $0x50] sm:$0xf]
        %v8964 = vld [vmem:[#allocation2 + $0x54] sm:$0xf]
        %v8965 = vld [vmem:[#allocation2 + $0x58] sm:$0xf]
        %v8966 = vld [vmem:[#allocation2 + $0x5c] sm:$0xf]
        %v8967 = vld [vmem:[#allocation2 + $0x60] sm:$0xf]
        %v8968 = vld [vmem:[#allocation2 + $0x64] sm:$0xf]
        %v8969 = vld [vmem:[#allocation2 + $0x68] sm:$0xf]
        %v8970 = vld [vmem:[#allocation2 + $0x6c] sm:$0xf]
        %v8971 = vld [vmem:[#allocation2 + $0x70] sm:$0xf]
        %v8972 = vld [vmem:[#allocation2 + $0x74] sm:$0xf]
        %v8973 = vld [vmem:[#allocation2 + $0x78] sm:$0xf]
        %v8974 = vld [vmem:[#allocation2 + $0x7c] sm:$0xf]
        %v8975 = vld [vmem:[#allocation2 + $0x80] sm:$0xf]
        %v8976 = vld [vmem:[#allocation2 + $0x84] sm:$0xf]
        %v8977 = vld [vmem:[#allocation2 + $0x88] sm:$0xf]
        %v8978 = vld [vmem:[#allocation2 + $0x8c] sm:$0xf]
        %v8979 = vld [vmem:[#allocation2 + $0x90] sm:$0xf]
        %v8980 = vld [vmem:[#allocation2 + $0x94] sm:$0xf]
        %v8981 = vld [vmem:[#allocation2 + $0x98] sm:$0xf]
        %v8982 = vld [vmem:[#allocation2 + $0x9c] sm:$0xf]
        %v8983 = vld [vmem:[#allocation2 + $0xa0] sm:$0x3]
        %s8984 = scalar_lea.vmem [#allocation4], 384
        %v8985 = vld [vmem:[%s8984] sm:$0xf]
        %v8986 = vld [vmem:[%s8984 + $0x4] sm:$0xf]
        %v8987 = vld [vmem:[%s8984 + $0x8] sm:$0xf]
        %v8988 = vld [vmem:[%s8984 + $0xc] sm:$0xf]
        %v8989 = vld [vmem:[%s8984 + $0x10] sm:$0xf]
        %v8990 = vld [vmem:[%s8984 + $0x14] sm:$0xf]
        %v8991 = vld [vmem:[%s8984 + $0x18] sm:$0xf]
        %v8992 = vld [vmem:[%s8984 + $0x1c] sm:$0xf]
        %v8993 = vld [vmem:[%s8984 + $0x20] sm:$0xf]
        %v8994 = vld [vmem:[%s8984 + $0x24] sm:$0xf]
        %v8995 = vld [vmem:[%s8984 + $0x28] sm:$0xf]
        %v8996 = vld [vmem:[%s8984 + $0x2c] sm:$0xf]
        %v8997 = vld [vmem:[%s8984 + $0x30] sm:$0xf]
        %v8998 = vld [vmem:[%s8984 + $0x34] sm:$0xf]
        %v8999 = vld [vmem:[%s8984 + $0x38] sm:$0xf]
        %v9000 = vld [vmem:[%s8984 + $0x3c] sm:$0xf]
        %v9038 = vunpack.c.l.b16 %v8947
        %v9039 = vunpack.c.l.b16 %v8948
        %v9040 = vunpack.c.l.b16 %v8949
        %v9041 = vunpack.c.l.b16 %v8950
        %v9042 = vunpack.c.l.b16 %v8951
        %v9043 = vunpack.c.l.b16 %v8952
        %v9044 = vunpack.c.l.b16 %v8953
        %v9045 = vunpack.c.l.b16 %v8954
        %v9046 = vunpack.c.l.b16 %v8955
        %v9047 = vunpack.c.l.b16 %v8956
        %v9048 = vunpack.c.l.b16 %v8957
        %v9049 = vunpack.c.l.b16 %v8958
        %v9050 = vunpack.c.l.b16 %v8959
        %v9051 = vunpack.c.l.b16 %v8960
        %v9052 = vunpack.c.l.b16 %v8961
        %v9053 = vunpack.c.l.b16 %v8962
        %v9054 = vunpack.c.l.b16 %v8963
        %v9055 = vunpack.c.l.b16 %v8964
        %v9056 = vunpack.c.l.b16 %v8965
        %v9057 = vunpack.c.l.b16 %v8966
        %v9058 = vunpack.c.l.b16 %v8967
        %v9059 = vunpack.c.l.b16 %v8968
        %v9060 = vunpack.c.l.b16 %v8969
        %v9061 = vunpack.c.l.b16 %v8970
        %v9062 = vunpack.c.l.b16 %v8971
        %v9063 = vunpack.c.l.b16 %v8972
        %v9064 = vunpack.c.l.b16 %v8973
        %v9065 = vunpack.c.l.b16 %v8974
        %v9066 = vunpack.c.l.b16 %v8975
        %v9067 = vunpack.c.l.b16 %v8976
        %v9068 = vunpack.c.l.b16 %v8977
        %v9069 = vunpack.c.l.b16 %v8978
        %v9070 = vunpack.c.l.b16 %v8979
        %v9071 = vunpack.c.l.b16 %v8980
        %v9072 = vunpack.c.l.b16 %v8981
        %v9073 = vunpack.c.l.b16 %v8982
        %v9074 = vunpack.c.l.b16 %v8983
        %v9075 = vpack.c.b16 %v9039, %v9038
        %v9076 = vpack.c.b16 %v9041, %v9040
        %v9077 = vpack.c.b16 %v9043, %v9042
        %v9078 = vpack.c.b16 %v9045, %v9044
        %v9079 = vpack.c.b16 %v9047, %v9046
        %v9080 = vpack.c.b16 %v9049, %v9048
        %v9081 = vpack.c.b16 %v9051, %v9050
        %v9082 = vpack.c.b16 %v9053, %v9052
        %v9083 = vpack.c.b16 %v9055, %v9054
        %v9084 = vpack.c.b16 %v9057, %v9056
        %v9085 = vpack.c.b16 %v9059, %v9058
        %v9086 = vpack.c.b16 %v9061, %v9060
        %v9087 = vpack.c.b16 %v9063, %v9062
        %v9088 = vpack.c.b16 %v9065, %v9064
        %v9089 = vpack.c.b16 %v9067, %v9066
        %v9090 = vpack.c.b16 %v9069, %v9068
        %v9091 = vpack.c.b16 %v9071, %v9070
        %v9092 = vpack.c.b16 %v9073, %v9072
        %v9093 = vpack.c.b16 %v9074, %v9074
        %v9094 = vrot.slane %v9075, 2
        %v9095 = vrot.slane %v9076, 2
        %v9096 = vsel %vm2813, %v9094, %v9095
        %v9097 = vrot.slane %v9077, 2
        %v9098 = vsel %vm2813, %v9095, %v9097
        %v9099 = vrot.slane %v9078, 2
        %v9100 = vsel %vm2813, %v9097, %v9099
        %v9101 = vrot.slane %v9079, 2
        %v9102 = vsel %vm2813, %v9099, %v9101
        %v9103 = vrot.slane %v9080, 2
        %v9104 = vsel %vm2813, %v9101, %v9103
        %v9105 = vrot.slane %v9081, 2
        %v9106 = vsel %vm2813, %v9103, %v9105
        %v9107 = vrot.slane %v9082, 2
        %v9108 = vsel %vm2813, %v9105, %v9107
        %v9109 = vrot.slane %v9083, 2
        %v9110 = vsel %vm2813, %v9107, %v9109
        %v9111 = vrot.slane %v9084, 2
        %v9112 = vsel %vm2813, %v9109, %v9111
        %v9113 = vrot.slane %v9085, 2
        %v9114 = vsel %vm2813, %v9111, %v9113
        %v9115 = vrot.slane %v9086, 2
        %v9116 = vsel %vm2813, %v9113, %v9115
        %v9117 = vrot.slane %v9087, 2
        %v9118 = vsel %vm2813, %v9115, %v9117
        %v9119 = vrot.slane %v9088, 2
        %v9120 = vsel %vm2813, %v9117, %v9119
        %v9121 = vrot.slane %v9089, 2
        %v9122 = vsel %vm2813, %v9119, %v9121
        %v9123 = vrot.slane %v9090, 2
        %v9124 = vsel %vm2813, %v9121, %v9123
        %v9125 = vrot.slane %v9091, 2
        %v9126 = vsel %vm2813, %v9123, %v9125
        %v9127 = vrot.slane %v9092, 2
        %v9128 = vsel %vm2813, %v9125, %v9127
        %v9129 = vrot.slane %v9093, 2
        %v9130 = vsel %vm2813, %v9127, %v9129
        %v9165 = vunpack.c.l.b16 %v8985
        %v9166 = vunpack.c.l.b16 %v8986
        %v9167 = vunpack.c.l.b16 %v8987
        %v9168 = vunpack.c.l.b16 %v8988
        %v9169 = vunpack.c.l.b16 %v8989
        %v9170 = vunpack.c.l.b16 %v8990
        %v9171 = vunpack.c.l.b16 %v8991
        %v9172 = vunpack.c.l.b16 %v8992
        %v9173 = vunpack.c.l.b16 %v8993
        %v9174 = vunpack.c.l.b16 %v8994
        %v9175 = vunpack.c.l.b16 %v8995
        %v9176 = vunpack.c.l.b16 %v8996
        %v9177 = vunpack.c.l.b16 %v8997
        %v9178 = vunpack.c.l.b16 %v8998
        %v9179 = vunpack.c.l.b16 %v8999
        %v9180 = vunpack.c.l.b16 %v9000
        %v9181 = vpack.c.b16 %v9166, %v9165
        %v9182 = vpack.c.b16 %v9168, %v9167
        %v9183 = vpack.c.b16 %v9170, %v9169
        %v9184 = vpack.c.b16 %v9172, %v9171
        %v9185 = vpack.c.b16 %v9174, %v9173
        %v9186 = vpack.c.b16 %v9176, %v9175
        %v9187 = vpack.c.b16 %v9178, %v9177
        %v9188 = vpack.c.b16 %v9180, %v9179
        %9197 = vmatpush.bf16.msra.mxu0 %v9188
        %9198 = vmatpush.bf16.msra.mxu0 %v9187
        %9199 = vmatpush.bf16.msra.mxu0 %v9186
        %9200 = vmatpush.bf16.msra.mxu0 %v9185
        %9201 = vmatpush.bf16.msra.mxu0 %v9184
        %9202 = vmatpush.bf16.msra.mxu0 %v9183
        %9203 = vmatpush.bf16.msra.mxu0 %v9182
        %9204 = vmatpush.bf16.msra.mxu0 %v9181
        %9205 = vmatmul.bf16.gmra.mxu0 %v9096
        %v9206 = vpop.f32.mrf.mxu0
        %v9207 = vadd.f32 0.0, %v9206
        %v9208 = vpop.f32.mrf.mxu0
        %v9209 = vadd.f32 0.0, %v9208
        %9210 = vmatmul.bf16.gmra.mxu0 %v9098
        %v9211 = vpop.f32.mrf.mxu0
        %v9212 = vadd.f32 0.0, %v9211
        %v9213 = vpop.f32.mrf.mxu0
        %v9214 = vadd.f32 0.0, %v9213
        %9215 = vmatmul.bf16.gmra.mxu0 %v9100
        %v9216 = vpop.f32.mrf.mxu0
        %v9217 = vadd.f32 0.0, %v9216
        %v9218 = vpop.f32.mrf.mxu0
        %v9219 = vadd.f32 0.0, %v9218
        %9220 = vmatmul.bf16.gmra.mxu0 %v9102
        %v9221 = vpop.f32.mrf.mxu0
        %v9222 = vadd.f32 0.0, %v9221
        %v9223 = vpop.f32.mrf.mxu0
        %v9224 = vadd.f32 0.0, %v9223
        %9225 = vmatmul.bf16.gmra.mxu0 %v9104
        %v9226 = vpop.f32.mrf.mxu0
        %v9227 = vadd.f32 0.0, %v9226
        %v9228 = vpop.f32.mrf.mxu0
        %v9229 = vadd.f32 0.0, %v9228
        %9230 = vmatmul.bf16.gmra.mxu0 %v9106
        %v9231 = vpop.f32.mrf.mxu0
        %v9232 = vadd.f32 0.0, %v9231
        %v9233 = vpop.f32.mrf.mxu0
        %v9234 = vadd.f32 0.0, %v9233
        %9235 = vmatmul.bf16.gmra.mxu0 %v9108
        %v9236 = vpop.f32.mrf.mxu0
        %v9237 = vadd.f32 0.0, %v9236
        %v9238 = vpop.f32.mrf.mxu0
        %v9239 = vadd.f32 0.0, %v9238
        %9240 = vmatmul.bf16.gmra.mxu0 %v9110
        %v9241 = vpop.f32.mrf.mxu0
        %v9242 = vadd.f32 0.0, %v9241
        %v9243 = vpop.f32.mrf.mxu0
        %v9244 = vadd.f32 0.0, %v9243
        %9245 = vmatmul.bf16.gmra.mxu0 %v9112
        %v9246 = vpop.f32.mrf.mxu0
        %v9247 = vadd.f32 0.0, %v9246
        %v9248 = vpop.f32.mrf.mxu0
        %v9249 = vadd.f32 0.0, %v9248
        %9250 = vmatmul.bf16.gmra.mxu0 %v9114
        %v9251 = vpop.f32.mrf.mxu0
        %v9252 = vadd.f32 0.0, %v9251
        %v9253 = vpop.f32.mrf.mxu0
        %v9254 = vadd.f32 0.0, %v9253
        %9255 = vmatmul.bf16.gmra.mxu0 %v9116
        %v9256 = vpop.f32.mrf.mxu0
        %v9257 = vadd.f32 0.0, %v9256
        %v9258 = vpop.f32.mrf.mxu0
        %v9259 = vadd.f32 0.0, %v9258
        %9260 = vmatmul.bf16.gmra.mxu0 %v9118
        %v9261 = vpop.f32.mrf.mxu0
        %v9262 = vadd.f32 0.0, %v9261
        %v9263 = vpop.f32.mrf.mxu0
        %v9264 = vadd.f32 0.0, %v9263
        %9265 = vmatmul.bf16.gmra.mxu0 %v9120
        %v9266 = vpop.f32.mrf.mxu0
        %v9267 = vadd.f32 0.0, %v9266
        %v9268 = vpop.f32.mrf.mxu0
        %v9269 = vadd.f32 0.0, %v9268
        %9270 = vmatmul.bf16.gmra.mxu0 %v9122
        %v9271 = vpop.f32.mrf.mxu0
        %v9272 = vadd.f32 0.0, %v9271
        %v9273 = vpop.f32.mrf.mxu0
        %v9274 = vadd.f32 0.0, %v9273
        %9275 = vmatmul.bf16.gmra.mxu0 %v9124
        %v9276 = vpop.f32.mrf.mxu0
        %v9277 = vadd.f32 0.0, %v9276
        %v9278 = vpop.f32.mrf.mxu0
        %v9279 = vadd.f32 0.0, %v9278
        %9280 = vmatmul.bf16.gmra.mxu0 %v9126
        %v9281 = vpop.f32.mrf.mxu0
        %v9282 = vadd.f32 0.0, %v9281
        %v9283 = vpop.f32.mrf.mxu0
        %v9284 = vadd.f32 0.0, %v9283
        %9285 = vmatmul.bf16.gmra.mxu0 %v9128
        %v9286 = vpop.f32.mrf.mxu0
        %v9287 = vadd.f32 0.0, %v9286
        %v9288 = vpop.f32.mrf.mxu0
        %v9289 = vadd.f32 0.0, %v9288
        %9290 = vmatmul.bf16.gmra.mxu0 %v9130
        %v9291 = vpop.f32.mrf.mxu0
        %v9292 = vadd.f32 0.0, %v9291
        %v9293 = vpop.f32.mrf.mxu0
        %v9294 = vadd.f32 0.0, %v9293
        %9295 = vdwg.mxu0
        %v9296 = vld [vmem:[#allocation3] sm:$0xff]
        %v9297 = vld [vmem:[#allocation3 + $0x8] sm:$0xff]
        %v9298 = vld [vmem:[#allocation3 + $0x10] sm:$0xff]
        %v9299 = vld [vmem:[#allocation3 + $0x18] sm:$0xff]
        %v9300 = vld [vmem:[#allocation3 + $0x20] sm:$0xff]
        %v9301 = vld [vmem:[#allocation3 + $0x28] sm:$0xff]
        %v9302 = vld [vmem:[#allocation3 + $0x30] sm:$0xff]
        %v9303 = vld [vmem:[#allocation3 + $0x38] sm:$0xff]
        %v9304 = vld [vmem:[#allocation3 + $0x40] sm:$0xff]
        %v9305 = vld [vmem:[#allocation3 + $0x48] sm:$0xff]
        %v9306 = vld [vmem:[#allocation3 + $0x50] sm:$0xff]
        %v9307 = vld [vmem:[#allocation3 + $0x58] sm:$0xff]
        %v9308 = vld [vmem:[#allocation3 + $0x60] sm:$0xff]
        %v9309 = vld [vmem:[#allocation3 + $0x68] sm:$0xff]
        %v9310 = vld [vmem:[#allocation3 + $0x70] sm:$0xff]
        %v9311 = vld [vmem:[#allocation3 + $0x78] sm:$0xff]
        %v9312 = vld [vmem:[#allocation3 + $0x80] sm:$0xff]
        %v9313 = vld [vmem:[#allocation3 + $0x88] sm:$0xff]
        %v9314 = vld [vmem:[#allocation3 + $0x90] sm:$0xff]
        %v9315 = vld [vmem:[#allocation3 + $0x98] sm:$0xff]
        %v9316 = vld [vmem:[#allocation3 + $0xa0] sm:$0xff]
        %v9317 = vld [vmem:[#allocation3 + $0xa8] sm:$0xff]
        %v9318 = vld [vmem:[#allocation3 + $0xb0] sm:$0xff]
        %v9319 = vld [vmem:[#allocation3 + $0xb8] sm:$0xff]
        %v9320 = vld [vmem:[#allocation3 + $0xc0] sm:$0xff]
        %v9321 = vld [vmem:[#allocation3 + $0xc8] sm:$0xff]
        %v9322 = vld [vmem:[#allocation3 + $0xd0] sm:$0xff]
        %v9323 = vld [vmem:[#allocation3 + $0xd8] sm:$0xff]
        %v9324 = vld [vmem:[#allocation3 + $0xe0] sm:$0xff]
        %v9325 = vld [vmem:[#allocation3 + $0xe8] sm:$0xff]
        %v9326 = vld [vmem:[#allocation3 + $0xf0] sm:$0xff]
        %v9327 = vld [vmem:[#allocation3 + $0xf8] sm:$0xff]
        %v9328 = vld [vmem:[#allocation3 + $0x100] sm:$0xff]
        %v9329 = vld [vmem:[#allocation3 + $0x108] sm:$0xff]
        %v9330 = vld [vmem:[#allocation3 + $0x110] sm:$0xff]
        %v9331 = vld [vmem:[#allocation3 + $0x118] sm:$0xff]
        %v9332 = vadd.f32 %v9296, %v9207
        %v9333 = vadd.f32 %v9297, %v9209
        %v9334 = vadd.f32 %v9298, %v9212
        %v9335 = vadd.f32 %v9299, %v9214
        %v9336 = vadd.f32 %v9300, %v9217
        %v9337 = vadd.f32 %v9301, %v9219
        %v9338 = vadd.f32 %v9302, %v9222
        %v9339 = vadd.f32 %v9303, %v9224
        %v9340 = vadd.f32 %v9304, %v9227
        %v9341 = vadd.f32 %v9305, %v9229
        %v9342 = vadd.f32 %v9306, %v9232
        %v9343 = vadd.f32 %v9307, %v9234
        %v9344 = vadd.f32 %v9308, %v9237
        %v9345 = vadd.f32 %v9309, %v9239
        %v9346 = vadd.f32 %v9310, %v9242
        %v9347 = vadd.f32 %v9311, %v9244
        %v9348 = vadd.f32 %v9312, %v9247
        %v9349 = vadd.f32 %v9313, %v9249
        %v9350 = vadd.f32 %v9314, %v9252
        %v9351 = vadd.f32 %v9315, %v9254
        %v9352 = vadd.f32 %v9316, %v9257
        %v9353 = vadd.f32 %v9317, %v9259
        %v9354 = vadd.f32 %v9318, %v9262
        %v9355 = vadd.f32 %v9319, %v9264
        %v9356 = vadd.f32 %v9320, %v9267
        %v9357 = vadd.f32 %v9321, %v9269
        %v9358 = vadd.f32 %v9322, %v9272
        %v9359 = vadd.f32 %v9323, %v9274
        %v9360 = vadd.f32 %v9324, %v9277
        %v9361 = vadd.f32 %v9325, %v9279
        %v9362 = vadd.f32 %v9326, %v9282
        %v9363 = vadd.f32 %v9327, %v9284
        %v9364 = vadd.f32 %v9328, %v9287
        %v9365 = vadd.f32 %v9329, %v9289
        %v9366 = vadd.f32 %v9330, %v9292
        %v9367 = vadd.f32 %v9331, %v9294
        %9368 = vst [vmem:[#allocation3] sm:$0xff] %v9332
        %9369 = vst [vmem:[#allocation3 + $0x8] sm:$0xff] %v9333
        %9370 = vst [vmem:[#allocation3 + $0x10] sm:$0xff] %v9334
        %9371 = vst [vmem:[#allocation3 + $0x18] sm:$0xff] %v9335
        %9372 = vst [vmem:[#allocation3 + $0x20] sm:$0xff] %v9336
        %9373 = vst [vmem:[#allocation3 + $0x28] sm:$0xff] %v9337
        %9374 = vst [vmem:[#allocation3 + $0x30] sm:$0xff] %v9338
        %9375 = vst [vmem:[#allocation3 + $0x38] sm:$0xff] %v9339
        %9376 = vst [vmem:[#allocation3 + $0x40] sm:$0xff] %v9340
        %9377 = vst [vmem:[#allocation3 + $0x48] sm:$0xff] %v9341
        %9378 = vst [vmem:[#allocation3 + $0x50] sm:$0xff] %v9342
        %9379 = vst [vmem:[#allocation3 + $0x58] sm:$0xff] %v9343
        %9380 = vst [vmem:[#allocation3 + $0x60] sm:$0xff] %v9344
        %9381 = vst [vmem:[#allocation3 + $0x68] sm:$0xff] %v9345
        %9382 = vst [vmem:[#allocation3 + $0x70] sm:$0xff] %v9346
        %9383 = vst [vmem:[#allocation3 + $0x78] sm:$0xff] %v9347
        %9384 = vst [vmem:[#allocation3 + $0x80] sm:$0xff] %v9348
        %9385 = vst [vmem:[#allocation3 + $0x88] sm:$0xff] %v9349
        %9386 = vst [vmem:[#allocation3 + $0x90] sm:$0xff] %v9350
        %9387 = vst [vmem:[#allocation3 + $0x98] sm:$0xff] %v9351
        %9388 = vst [vmem:[#allocation3 + $0xa0] sm:$0xff] %v9352
        %9389 = vst [vmem:[#allocation3 + $0xa8] sm:$0xff] %v9353
        %9390 = vst [vmem:[#allocation3 + $0xb0] sm:$0xff] %v9354
        %9391 = vst [vmem:[#allocation3 + $0xb8] sm:$0xff] %v9355
        %9392 = vst [vmem:[#allocation3 + $0xc0] sm:$0xff] %v9356
        %9393 = vst [vmem:[#allocation3 + $0xc8] sm:$0xff] %v9357
        %9394 = vst [vmem:[#allocation3 + $0xd0] sm:$0xff] %v9358
        %9395 = vst [vmem:[#allocation3 + $0xd8] sm:$0xff] %v9359
        %9396 = vst [vmem:[#allocation3 + $0xe0] sm:$0xff] %v9360
        %9397 = vst [vmem:[#allocation3 + $0xe8] sm:$0xff] %v9361
        %9398 = vst [vmem:[#allocation3 + $0xf0] sm:$0xff] %v9362
        %9399 = vst [vmem:[#allocation3 + $0xf8] sm:$0xff] %v9363
        %9400 = vst [vmem:[#allocation3 + $0x100] sm:$0xff] %v9364
        %9401 = vst [vmem:[#allocation3 + $0x108] sm:$0xff] %v9365
        %9402 = vst [vmem:[#allocation3 + $0x110] sm:$0xff] %v9366
        %9403 = vst [vmem:[#allocation3 + $0x118] sm:$0xff] %v9367
        %v9404 = vld [vmem:[#allocation2 + $0x10] sm:$0xc]
        %v9405 = vld [vmem:[#allocation2 + $0x14] sm:$0xf]
        %v9406 = vld [vmem:[#allocation2 + $0x18] sm:$0xf]
        %v9407 = vld [vmem:[#allocation2 + $0x1c] sm:$0xf]
        %v9408 = vld [vmem:[#allocation2 + $0x20] sm:$0xf]
        %v9409 = vld [vmem:[#allocation2 + $0x24] sm:$0xf]
        %v9410 = vld [vmem:[#allocation2 + $0x28] sm:$0xf]
        %v9411 = vld [vmem:[#allocation2 + $0x2c] sm:$0xf]
        %v9412 = vld [vmem:[#allocation2 + $0x30] sm:$0xf]
        %v9413 = vld [vmem:[#allocation2 + $0x34] sm:$0xf]
        %v9414 = vld [vmem:[#allocation2 + $0x38] sm:$0xf]
        %v9415 = vld [vmem:[#allocation2 + $0x3c] sm:$0xf]
        %v9416 = vld [vmem:[#allocation2 + $0x40] sm:$0xf]
        %v9417 = vld [vmem:[#allocation2 + $0x44] sm:$0xf]
        %v9418 = vld [vmem:[#allocation2 + $0x48] sm:$0xf]
        %v9419 = vld [vmem:[#allocation2 + $0x4c] sm:$0xf]
        %v9420 = vld [vmem:[#allocation2 + $0x50] sm:$0xf]
        %v9421 = vld [vmem:[#allocation2 + $0x54] sm:$0xf]
        %v9422 = vld [vmem:[#allocation2 + $0x58] sm:$0xf]
        %v9423 = vld [vmem:[#allocation2 + $0x5c] sm:$0xf]
        %v9424 = vld [vmem:[#allocation2 + $0x60] sm:$0xf]
        %v9425 = vld [vmem:[#allocation2 + $0x64] sm:$0xf]
        %v9426 = vld [vmem:[#allocation2 + $0x68] sm:$0xf]
        %v9427 = vld [vmem:[#allocation2 + $0x6c] sm:$0xf]
        %v9428 = vld [vmem:[#allocation2 + $0x70] sm:$0xf]
        %v9429 = vld [vmem:[#allocation2 + $0x74] sm:$0xf]
        %v9430 = vld [vmem:[#allocation2 + $0x78] sm:$0xf]
        %v9431 = vld [vmem:[#allocation2 + $0x7c] sm:$0xf]
        %v9432 = vld [vmem:[#allocation2 + $0x80] sm:$0xf]
        %v9433 = vld [vmem:[#allocation2 + $0x84] sm:$0xf]
        %v9434 = vld [vmem:[#allocation2 + $0x88] sm:$0xf]
        %v9435 = vld [vmem:[#allocation2 + $0x8c] sm:$0xf]
        %v9436 = vld [vmem:[#allocation2 + $0x90] sm:$0xf]
        %v9437 = vld [vmem:[#allocation2 + $0x94] sm:$0xf]
        %v9438 = vld [vmem:[#allocation2 + $0x98] sm:$0xf]
        %v9439 = vld [vmem:[#allocation2 + $0x9c] sm:$0xf]
        %v9440 = vld [vmem:[#allocation2 + $0xa0] sm:$0x7]
        %s9441 = scalar_lea.vmem [#allocation4], 448
        %v9442 = vld [vmem:[%s9441] sm:$0xf]
        %v9443 = vld [vmem:[%s9441 + $0x4] sm:$0xf]
        %v9444 = vld [vmem:[%s9441 + $0x8] sm:$0xf]
        %v9445 = vld [vmem:[%s9441 + $0xc] sm:$0xf]
        %v9446 = vld [vmem:[%s9441 + $0x10] sm:$0xf]
        %v9447 = vld [vmem:[%s9441 + $0x14] sm:$0xf]
        %v9448 = vld [vmem:[%s9441 + $0x18] sm:$0xf]
        %v9449 = vld [vmem:[%s9441 + $0x1c] sm:$0xf]
        %v9450 = vld [vmem:[%s9441 + $0x20] sm:$0xf]
        %v9451 = vld [vmem:[%s9441 + $0x24] sm:$0xf]
        %v9452 = vld [vmem:[%s9441 + $0x28] sm:$0xf]
        %v9453 = vld [vmem:[%s9441 + $0x2c] sm:$0xf]
        %v9454 = vld [vmem:[%s9441 + $0x30] sm:$0xf]
        %v9455 = vld [vmem:[%s9441 + $0x34] sm:$0xf]
        %v9456 = vld [vmem:[%s9441 + $0x38] sm:$0xf]
        %v9457 = vld [vmem:[%s9441 + $0x3c] sm:$0xf]
        %v9495 = vunpack.c.l.b16 %v9404
        %v9496 = vunpack.c.l.b16 %v9405
        %v9497 = vunpack.c.l.b16 %v9406
        %v9498 = vunpack.c.l.b16 %v9407
        %v9499 = vunpack.c.l.b16 %v9408
        %v9500 = vunpack.c.l.b16 %v9409
        %v9501 = vunpack.c.l.b16 %v9410
        %v9502 = vunpack.c.l.b16 %v9411
        %v9503 = vunpack.c.l.b16 %v9412
        %v9504 = vunpack.c.l.b16 %v9413
        %v9505 = vunpack.c.l.b16 %v9414
        %v9506 = vunpack.c.l.b16 %v9415
        %v9507 = vunpack.c.l.b16 %v9416
        %v9508 = vunpack.c.l.b16 %v9417
        %v9509 = vunpack.c.l.b16 %v9418
        %v9510 = vunpack.c.l.b16 %v9419
        %v9511 = vunpack.c.l.b16 %v9420
        %v9512 = vunpack.c.l.b16 %v9421
        %v9513 = vunpack.c.l.b16 %v9422
        %v9514 = vunpack.c.l.b16 %v9423
        %v9515 = vunpack.c.l.b16 %v9424
        %v9516 = vunpack.c.l.b16 %v9425
        %v9517 = vunpack.c.l.b16 %v9426
        %v9518 = vunpack.c.l.b16 %v9427
        %v9519 = vunpack.c.l.b16 %v9428
        %v9520 = vunpack.c.l.b16 %v9429
        %v9521 = vunpack.c.l.b16 %v9430
        %v9522 = vunpack.c.l.b16 %v9431
        %v9523 = vunpack.c.l.b16 %v9432
        %v9524 = vunpack.c.l.b16 %v9433
        %v9525 = vunpack.c.l.b16 %v9434
        %v9526 = vunpack.c.l.b16 %v9435
        %v9527 = vunpack.c.l.b16 %v9436
        %v9528 = vunpack.c.l.b16 %v9437
        %v9529 = vunpack.c.l.b16 %v9438
        %v9530 = vunpack.c.l.b16 %v9439
        %v9531 = vunpack.c.l.b16 %v9440
        %v9532 = vpack.c.b16 %v9496, %v9495
        %v9533 = vpack.c.b16 %v9498, %v9497
        %v9534 = vpack.c.b16 %v9500, %v9499
        %v9535 = vpack.c.b16 %v9502, %v9501
        %v9536 = vpack.c.b16 %v9504, %v9503
        %v9537 = vpack.c.b16 %v9506, %v9505
        %v9538 = vpack.c.b16 %v9508, %v9507
        %v9539 = vpack.c.b16 %v9510, %v9509
        %v9540 = vpack.c.b16 %v9512, %v9511
        %v9541 = vpack.c.b16 %v9514, %v9513
        %v9542 = vpack.c.b16 %v9516, %v9515
        %v9543 = vpack.c.b16 %v9518, %v9517
        %v9544 = vpack.c.b16 %v9520, %v9519
        %v9545 = vpack.c.b16 %v9522, %v9521
        %v9546 = vpack.c.b16 %v9524, %v9523
        %v9547 = vpack.c.b16 %v9526, %v9525
        %v9548 = vpack.c.b16 %v9528, %v9527
        %v9549 = vpack.c.b16 %v9530, %v9529
        %v9550 = vpack.c.b16 %v9531, %v9531
        %v9552 = vshrl.u32 %v9532, 16
        %v9554 = vrot.slane %v9552, 2
        %v9555 = vshll.u32 %v9532, 16
        %v9557 = vrot.slane %v9555, 3
        %v9558 = vor.u32 %v9554, %v9557
        %v9560 = vshrl.u32 %v9533, 16
        %v9562 = vrot.slane %v9560, 2
        %v9563 = vshll.u32 %v9533, 16
        %v9565 = vrot.slane %v9563, 3
        %v9566 = vor.u32 %v9562, %v9565
        %v9567 = vsel %vm3728, %v9558, %v9566
        %v9569 = vshrl.u32 %v9534, 16
        %v9571 = vrot.slane %v9569, 2
        %v9572 = vshll.u32 %v9534, 16
        %v9574 = vrot.slane %v9572, 3
        %v9575 = vor.u32 %v9571, %v9574
        %v9576 = vsel %vm3728, %v9566, %v9575
        %v9578 = vshrl.u32 %v9535, 16
        %v9580 = vrot.slane %v9578, 2
        %v9581 = vshll.u32 %v9535, 16
        %v9583 = vrot.slane %v9581, 3
        %v9584 = vor.u32 %v9580, %v9583
        %v9585 = vsel %vm3728, %v9575, %v9584
        %v9587 = vshrl.u32 %v9536, 16
        %v9589 = vrot.slane %v9587, 2
        %v9590 = vshll.u32 %v9536, 16
        %v9592 = vrot.slane %v9590, 3
        %v9593 = vor.u32 %v9589, %v9592
        %v9594 = vsel %vm3728, %v9584, %v9593
        %v9596 = vshrl.u32 %v9537, 16
        %v9598 = vrot.slane %v9596, 2
        %v9599 = vshll.u32 %v9537, 16
        %v9601 = vrot.slane %v9599, 3
        %v9602 = vor.u32 %v9598, %v9601
        %v9603 = vsel %vm3728, %v9593, %v9602
        %v9605 = vshrl.u32 %v9538, 16
        %v9607 = vrot.slane %v9605, 2
        %v9608 = vshll.u32 %v9538, 16
        %v9610 = vrot.slane %v9608, 3
        %v9611 = vor.u32 %v9607, %v9610
        %v9612 = vsel %vm3728, %v9602, %v9611
        %v9614 = vshrl.u32 %v9539, 16
        %v9616 = vrot.slane %v9614, 2
        %v9617 = vshll.u32 %v9539, 16
        %v9619 = vrot.slane %v9617, 3
        %v9620 = vor.u32 %v9616, %v9619
        %v9621 = vsel %vm3728, %v9611, %v9620
        %v9623 = vshrl.u32 %v9540, 16
        %v9625 = vrot.slane %v9623, 2
        %v9626 = vshll.u32 %v9540, 16
        %v9628 = vrot.slane %v9626, 3
        %v9629 = vor.u32 %v9625, %v9628
        %v9630 = vsel %vm3728, %v9620, %v9629
        %v9632 = vshrl.u32 %v9541, 16
        %v9634 = vrot.slane %v9632, 2
        %v9635 = vshll.u32 %v9541, 16
        %v9637 = vrot.slane %v9635, 3
        %v9638 = vor.u32 %v9634, %v9637
        %v9639 = vsel %vm3728, %v9629, %v9638
        %v9641 = vshrl.u32 %v9542, 16
        %v9643 = vrot.slane %v9641, 2
        %v9644 = vshll.u32 %v9542, 16
        %v9646 = vrot.slane %v9644, 3
        %v9647 = vor.u32 %v9643, %v9646
        %v9648 = vsel %vm3728, %v9638, %v9647
        %v9650 = vshrl.u32 %v9543, 16
        %v9652 = vrot.slane %v9650, 2
        %v9653 = vshll.u32 %v9543, 16
        %v9655 = vrot.slane %v9653, 3
        %v9656 = vor.u32 %v9652, %v9655
        %v9657 = vsel %vm3728, %v9647, %v9656
        %v9659 = vshrl.u32 %v9544, 16
        %v9661 = vrot.slane %v9659, 2
        %v9662 = vshll.u32 %v9544, 16
        %v9664 = vrot.slane %v9662, 3
        %v9665 = vor.u32 %v9661, %v9664
        %v9666 = vsel %vm3728, %v9656, %v9665
        %v9668 = vshrl.u32 %v9545, 16
        %v9670 = vrot.slane %v9668, 2
        %v9671 = vshll.u32 %v9545, 16
        %v9673 = vrot.slane %v9671, 3
        %v9674 = vor.u32 %v9670, %v9673
        %v9675 = vsel %vm3728, %v9665, %v9674
        %v9677 = vshrl.u32 %v9546, 16
        %v9679 = vrot.slane %v9677, 2
        %v9680 = vshll.u32 %v9546, 16
        %v9682 = vrot.slane %v9680, 3
        %v9683 = vor.u32 %v9679, %v9682
        %v9684 = vsel %vm3728, %v9674, %v9683
        %v9686 = vshrl.u32 %v9547, 16
        %v9688 = vrot.slane %v9686, 2
        %v9689 = vshll.u32 %v9547, 16
        %v9691 = vrot.slane %v9689, 3
        %v9692 = vor.u32 %v9688, %v9691
        %v9693 = vsel %vm3728, %v9683, %v9692
        %v9695 = vshrl.u32 %v9548, 16
        %v9697 = vrot.slane %v9695, 2
        %v9698 = vshll.u32 %v9548, 16
        %v9700 = vrot.slane %v9698, 3
        %v9701 = vor.u32 %v9697, %v9700
        %v9702 = vsel %vm3728, %v9692, %v9701
        %v9704 = vshrl.u32 %v9549, 16
        %v9706 = vrot.slane %v9704, 2
        %v9707 = vshll.u32 %v9549, 16
        %v9709 = vrot.slane %v9707, 3
        %v9710 = vor.u32 %v9706, %v9709
        %v9711 = vsel %vm3728, %v9701, %v9710
        %v9713 = vshrl.u32 %v9550, 16
        %v9715 = vrot.slane %v9713, 2
        %v9716 = vshll.u32 %v9550, 16
        %v9718 = vrot.slane %v9716, 3
        %v9719 = vor.u32 %v9715, %v9718
        %v9720 = vsel %vm3728, %v9710, %v9719
        %v9755 = vunpack.c.l.b16 %v9442
        %v9756 = vunpack.c.l.b16 %v9443
        %v9757 = vunpack.c.l.b16 %v9444
        %v9758 = vunpack.c.l.b16 %v9445
        %v9759 = vunpack.c.l.b16 %v9446
        %v9760 = vunpack.c.l.b16 %v9447
        %v9761 = vunpack.c.l.b16 %v9448
        %v9762 = vunpack.c.l.b16 %v9449
        %v9763 = vunpack.c.l.b16 %v9450
        %v9764 = vunpack.c.l.b16 %v9451
        %v9765 = vunpack.c.l.b16 %v9452
        %v9766 = vunpack.c.l.b16 %v9453
        %v9767 = vunpack.c.l.b16 %v9454
        %v9768 = vunpack.c.l.b16 %v9455
        %v9769 = vunpack.c.l.b16 %v9456
        %v9770 = vunpack.c.l.b16 %v9457
        %v9771 = vpack.c.b16 %v9756, %v9755
        %v9772 = vpack.c.b16 %v9758, %v9757
        %v9773 = vpack.c.b16 %v9760, %v9759
        %v9774 = vpack.c.b16 %v9762, %v9761
        %v9775 = vpack.c.b16 %v9764, %v9763
        %v9776 = vpack.c.b16 %v9766, %v9765
        %v9777 = vpack.c.b16 %v9768, %v9767
        %v9778 = vpack.c.b16 %v9770, %v9769
        %9787 = vmatpush.bf16.msra.mxu0 %v9778
        %9788 = vmatpush.bf16.msra.mxu0 %v9777
        %9789 = vmatpush.bf16.msra.mxu0 %v9776
        %9790 = vmatpush.bf16.msra.mxu0 %v9775
        %9791 = vmatpush.bf16.msra.mxu0 %v9774
        %9792 = vmatpush.bf16.msra.mxu0 %v9773
        %9793 = vmatpush.bf16.msra.mxu0 %v9772
        %9794 = vmatpush.bf16.msra.mxu0 %v9771
        %9795 = vmatmul.bf16.gmra.mxu0 %v9567
        %v9796 = vpop.f32.mrf.mxu0
        %v9797 = vadd.f32 0.0, %v9796
        %v9798 = vpop.f32.mrf.mxu0
        %v9799 = vadd.f32 0.0, %v9798
        %9800 = vmatmul.bf16.gmra.mxu0 %v9576
        %v9801 = vpop.f32.mrf.mxu0
        %v9802 = vadd.f32 0.0, %v9801
        %v9803 = vpop.f32.mrf.mxu0
        %v9804 = vadd.f32 0.0, %v9803
        %9805 = vmatmul.bf16.gmra.mxu0 %v9585
        %v9806 = vpop.f32.mrf.mxu0
        %v9807 = vadd.f32 0.0, %v9806
        %v9808 = vpop.f32.mrf.mxu0
        %v9809 = vadd.f32 0.0, %v9808
        %9810 = vmatmul.bf16.gmra.mxu0 %v9594
        %v9811 = vpop.f32.mrf.mxu0
        %v9812 = vadd.f32 0.0, %v9811
        %v9813 = vpop.f32.mrf.mxu0
        %v9814 = vadd.f32 0.0, %v9813
        %9815 = vmatmul.bf16.gmra.mxu0 %v9603
        %v9816 = vpop.f32.mrf.mxu0
        %v9817 = vadd.f32 0.0, %v9816
        %v9818 = vpop.f32.mrf.mxu0
        %v9819 = vadd.f32 0.0, %v9818
        %9820 = vmatmul.bf16.gmra.mxu0 %v9612
        %v9821 = vpop.f32.mrf.mxu0
        %v9822 = vadd.f32 0.0, %v9821
        %v9823 = vpop.f32.mrf.mxu0
        %v9824 = vadd.f32 0.0, %v9823
        %9825 = vmatmul.bf16.gmra.mxu0 %v9621
        %v9826 = vpop.f32.mrf.mxu0
        %v9827 = vadd.f32 0.0, %v9826
        %v9828 = vpop.f32.mrf.mxu0
        %v9829 = vadd.f32 0.0, %v9828
        %9830 = vmatmul.bf16.gmra.mxu0 %v9630
        %v9831 = vpop.f32.mrf.mxu0
        %v9832 = vadd.f32 0.0, %v9831
        %v9833 = vpop.f32.mrf.mxu0
        %v9834 = vadd.f32 0.0, %v9833
        %9835 = vmatmul.bf16.gmra.mxu0 %v9639
        %v9836 = vpop.f32.mrf.mxu0
        %v9837 = vadd.f32 0.0, %v9836
        %v9838 = vpop.f32.mrf.mxu0
        %v9839 = vadd.f32 0.0, %v9838
        %9840 = vmatmul.bf16.gmra.mxu0 %v9648
        %v9841 = vpop.f32.mrf.mxu0
        %v9842 = vadd.f32 0.0, %v9841
        %v9843 = vpop.f32.mrf.mxu0
        %v9844 = vadd.f32 0.0, %v9843
        %9845 = vmatmul.bf16.gmra.mxu0 %v9657
        %v9846 = vpop.f32.mrf.mxu0
        %v9847 = vadd.f32 0.0, %v9846
        %v9848 = vpop.f32.mrf.mxu0
        %v9849 = vadd.f32 0.0, %v9848
        %9850 = vmatmul.bf16.gmra.mxu0 %v9666
        %v9851 = vpop.f32.mrf.mxu0
        %v9852 = vadd.f32 0.0, %v9851
        %v9853 = vpop.f32.mrf.mxu0
        %v9854 = vadd.f32 0.0, %v9853
        %9855 = vmatmul.bf16.gmra.mxu0 %v9675
        %v9856 = vpop.f32.mrf.mxu0
        %v9857 = vadd.f32 0.0, %v9856
        %v9858 = vpop.f32.mrf.mxu0
        %v9859 = vadd.f32 0.0, %v9858
        %9860 = vmatmul.bf16.gmra.mxu0 %v9684
        %v9861 = vpop.f32.mrf.mxu0
        %v9862 = vadd.f32 0.0, %v9861
        %v9863 = vpop.f32.mrf.mxu0
        %v9864 = vadd.f32 0.0, %v9863
        %9865 = vmatmul.bf16.gmra.mxu0 %v9693
        %v9866 = vpop.f32.mrf.mxu0
        %v9867 = vadd.f32 0.0, %v9866
        %v9868 = vpop.f32.mrf.mxu0
        %v9869 = vadd.f32 0.0, %v9868
        %9870 = vmatmul.bf16.gmra.mxu0 %v9702
        %v9871 = vpop.f32.mrf.mxu0
        %v9872 = vadd.f32 0.0, %v9871
        %v9873 = vpop.f32.mrf.mxu0
        %v9874 = vadd.f32 0.0, %v9873
        %9875 = vmatmul.bf16.gmra.mxu0 %v9711
        %v9876 = vpop.f32.mrf.mxu0
        %v9877 = vadd.f32 0.0, %v9876
        %v9878 = vpop.f32.mrf.mxu0
        %v9879 = vadd.f32 0.0, %v9878
        %9880 = vmatmul.bf16.gmra.mxu0 %v9720
        %v9881 = vpop.f32.mrf.mxu0
        %v9882 = vadd.f32 0.0, %v9881
        %v9883 = vpop.f32.mrf.mxu0
        %v9884 = vadd.f32 0.0, %v9883
        %9885 = vdwg.mxu0
        %v9886 = vld [vmem:[#allocation3] sm:$0xff]
        %v9887 = vld [vmem:[#allocation3 + $0x8] sm:$0xff]
        %v9888 = vld [vmem:[#allocation3 + $0x10] sm:$0xff]
        %v9889 = vld [vmem:[#allocation3 + $0x18] sm:$0xff]
        %v9890 = vld [vmem:[#allocation3 + $0x20] sm:$0xff]
        %v9891 = vld [vmem:[#allocation3 + $0x28] sm:$0xff]
        %v9892 = vld [vmem:[#allocation3 + $0x30] sm:$0xff]
        %v9893 = vld [vmem:[#allocation3 + $0x38] sm:$0xff]
        %v9894 = vld [vmem:[#allocation3 + $0x40] sm:$0xff]
        %v9895 = vld [vmem:[#allocation3 + $0x48] sm:$0xff]
        %v9896 = vld [vmem:[#allocation3 + $0x50] sm:$0xff]
        %v9897 = vld [vmem:[#allocation3 + $0x58] sm:$0xff]
        %v9898 = vld [vmem:[#allocation3 + $0x60] sm:$0xff]
        %v9899 = vld [vmem:[#allocation3 + $0x68] sm:$0xff]
        %v9900 = vld [vmem:[#allocation3 + $0x70] sm:$0xff]
        %v9901 = vld [vmem:[#allocation3 + $0x78] sm:$0xff]
        %v9902 = vld [vmem:[#allocation3 + $0x80] sm:$0xff]
        %v9903 = vld [vmem:[#allocation3 + $0x88] sm:$0xff]
        %v9904 = vld [vmem:[#allocation3 + $0x90] sm:$0xff]
        %v9905 = vld [vmem:[#allocation3 + $0x98] sm:$0xff]
        %v9906 = vld [vmem:[#allocation3 + $0xa0] sm:$0xff]
        %v9907 = vld [vmem:[#allocation3 + $0xa8] sm:$0xff]
        %v9908 = vld [vmem:[#allocation3 + $0xb0] sm:$0xff]
        %v9909 = vld [vmem:[#allocation3 + $0xb8] sm:$0xff]
        %v9910 = vld [vmem:[#allocation3 + $0xc0] sm:$0xff]
        %v9911 = vld [vmem:[#allocation3 + $0xc8] sm:$0xff]
        %v9912 = vld [vmem:[#allocation3 + $0xd0] sm:$0xff]
        %v9913 = vld [vmem:[#allocation3 + $0xd8] sm:$0xff]
        %v9914 = vld [vmem:[#allocation3 + $0xe0] sm:$0xff]
        %v9915 = vld [vmem:[#allocation3 + $0xe8] sm:$0xff]
        %v9916 = vld [vmem:[#allocation3 + $0xf0] sm:$0xff]
        %v9917 = vld [vmem:[#allocation3 + $0xf8] sm:$0xff]
        %v9918 = vld [vmem:[#allocation3 + $0x100] sm:$0xff]
        %v9919 = vld [vmem:[#allocation3 + $0x108] sm:$0xff]
        %v9920 = vld [vmem:[#allocation3 + $0x110] sm:$0xff]
        %v9921 = vld [vmem:[#allocation3 + $0x118] sm:$0xff]
        %v9922 = vadd.f32 %v9886, %v9797
        %v9923 = vadd.f32 %v9887, %v9799
        %v9924 = vadd.f32 %v9888, %v9802
        %v9925 = vadd.f32 %v9889, %v9804
        %v9926 = vadd.f32 %v9890, %v9807
        %v9927 = vadd.f32 %v9891, %v9809
        %v9928 = vadd.f32 %v9892, %v9812
        %v9929 = vadd.f32 %v9893, %v9814
        %v9930 = vadd.f32 %v9894, %v9817
        %v9931 = vadd.f32 %v9895, %v9819
        %v9932 = vadd.f32 %v9896, %v9822
        %v9933 = vadd.f32 %v9897, %v9824
        %v9934 = vadd.f32 %v9898, %v9827
        %v9935 = vadd.f32 %v9899, %v9829
        %v9936 = vadd.f32 %v9900, %v9832
        %v9937 = vadd.f32 %v9901, %v9834
        %v9938 = vadd.f32 %v9902, %v9837
        %v9939 = vadd.f32 %v9903, %v9839
        %v9940 = vadd.f32 %v9904, %v9842
        %v9941 = vadd.f32 %v9905, %v9844
        %v9942 = vadd.f32 %v9906, %v9847
        %v9943 = vadd.f32 %v9907, %v9849
        %v9944 = vadd.f32 %v9908, %v9852
        %v9945 = vadd.f32 %v9909, %v9854
        %v9946 = vadd.f32 %v9910, %v9857
        %v9947 = vadd.f32 %v9911, %v9859
        %v9948 = vadd.f32 %v9912, %v9862
        %v9949 = vadd.f32 %v9913, %v9864
        %v9950 = vadd.f32 %v9914, %v9867
        %v9951 = vadd.f32 %v9915, %v9869
        %v9952 = vadd.f32 %v9916, %v9872
        %v9953 = vadd.f32 %v9917, %v9874
        %v9954 = vadd.f32 %v9918, %v9877
        %v9955 = vadd.f32 %v9919, %v9879
        %v9956 = vadd.f32 %v9920, %v9882
        %v9957 = vadd.f32 %v9921, %v9884
        %9958 = vst [vmem:[#allocation3] sm:$0xff] %v9922
        %9959 = vst [vmem:[#allocation3 + $0x8] sm:$0xff] %v9923
        %9960 = vst [vmem:[#allocation3 + $0x10] sm:$0xff] %v9924
        %9961 = vst [vmem:[#allocation3 + $0x18] sm:$0xff] %v9925
        %9962 = vst [vmem:[#allocation3 + $0x20] sm:$0xff] %v9926
        %9963 = vst [vmem:[#allocation3 + $0x28] sm:$0xff] %v9927
        %9964 = vst [vmem:[#allocation3 + $0x30] sm:$0xff] %v9928
        %9965 = vst [vmem:[#allocation3 + $0x38] sm:$0xff] %v9929
        %9966 = vst [vmem:[#allocation3 + $0x40] sm:$0xff] %v9930
        %9967 = vst [vmem:[#allocation3 + $0x48] sm:$0xff] %v9931
        %9968 = vst [vmem:[#allocation3 + $0x50] sm:$0xff] %v9932
        %9969 = vst [vmem:[#allocation3 + $0x58] sm:$0xff] %v9933
        %9970 = vst [vmem:[#allocation3 + $0x60] sm:$0xff] %v9934
        %9971 = vst [vmem:[#allocation3 + $0x68] sm:$0xff] %v9935
        %9972 = vst [vmem:[#allocation3 + $0x70] sm:$0xff] %v9936
        %9973 = vst [vmem:[#allocation3 + $0x78] sm:$0xff] %v9937
        %9974 = vst [vmem:[#allocation3 + $0x80] sm:$0xff] %v9938
        %9975 = vst [vmem:[#allocation3 + $0x88] sm:$0xff] %v9939
        %9976 = vst [vmem:[#allocation3 + $0x90] sm:$0xff] %v9940
        %9977 = vst [vmem:[#allocation3 + $0x98] sm:$0xff] %v9941
        %9978 = vst [vmem:[#allocation3 + $0xa0] sm:$0xff] %v9942
        %9979 = vst [vmem:[#allocation3 + $0xa8] sm:$0xff] %v9943
        %9980 = vst [vmem:[#allocation3 + $0xb0] sm:$0xff] %v9944
        %9981 = vst [vmem:[#allocation3 + $0xb8] sm:$0xff] %v9945
        %9982 = vst [vmem:[#allocation3 + $0xc0] sm:$0xff] %v9946
        %9983 = vst [vmem:[#allocation3 + $0xc8] sm:$0xff] %v9947
        %9984 = vst [vmem:[#allocation3 + $0xd0] sm:$0xff] %v9948
        %9985 = vst [vmem:[#allocation3 + $0xd8] sm:$0xff] %v9949
        %9986 = vst [vmem:[#allocation3 + $0xe0] sm:$0xff] %v9950
        %9987 = vst [vmem:[#allocation3 + $0xe8] sm:$0xff] %v9951
        %9988 = vst [vmem:[#allocation3 + $0xf0] sm:$0xff] %v9952
        %9989 = vst [vmem:[#allocation3 + $0xf8] sm:$0xff] %v9953
        %9990 = vst [vmem:[#allocation3 + $0x100] sm:$0xff] %v9954
        %9991 = vst [vmem:[#allocation3 + $0x108] sm:$0xff] %v9955
        %9992 = vst [vmem:[#allocation3 + $0x110] sm:$0xff] %v9956
        %9993 = vst [vmem:[#allocation3 + $0x118] sm:$0xff] %v9957
        %v9994 = vld [vmem:[#allocation2 + $0x10] sm:$0x8]
        %v9995 = vld [vmem:[#allocation2 + $0x14] sm:$0xf]
        %v9996 = vld [vmem:[#allocation2 + $0x18] sm:$0xf]
        %v9997 = vld [vmem:[#allocation2 + $0x1c] sm:$0xf]
        %v9998 = vld [vmem:[#allocation2 + $0x20] sm:$0xf]
        %v9999 = vld [vmem:[#allocation2 + $0x24] sm:$0xf]
        %v10000 = vld [vmem:[#allocation2 + $0x28] sm:$0xf]
        %v10001 = vld [vmem:[#allocation2 + $0x2c] sm:$0xf]
        %v10002 = vld [vmem:[#allocation2 + $0x30] sm:$0xf]
        %v10003 = vld [vmem:[#allocation2 + $0x34] sm:$0xf]
        %v10004 = vld [vmem:[#allocation2 + $0x38] sm:$0xf]
        %v10005 = vld [vmem:[#allocation2 + $0x3c] sm:$0xf]
        %v10006 = vld [vmem:[#allocation2 + $0x40] sm:$0xf]
        %v10007 = vld [vmem:[#allocation2 + $0x44] sm:$0xf]
        %v10008 = vld [vmem:[#allocation2 + $0x48] sm:$0xf]
        %v10009 = vld [vmem:[#allocation2 + $0x4c] sm:$0xf]
        %v10010 = vld [vmem:[#allocation2 + $0x50] sm:$0xf]
        %v10011 = vld [vmem:[#allocation2 + $0x54] sm:$0xf]
        %v10012 = vld [vmem:[#allocation2 + $0x58] sm:$0xf]
        %v10013 = vld [vmem:[#allocation2 + $0x5c] sm:$0xf]
        %v10014 = vld [vmem:[#allocation2 + $0x60] sm:$0xf]
        %v10015 = vld [vmem:[#allocation2 + $0x64] sm:$0xf]
        %v10016 = vld [vmem:[#allocation2 + $0x68] sm:$0xf]
        %v10017 = vld [vmem:[#allocation2 + $0x6c] sm:$0xf]
        %v10018 = vld [vmem:[#allocation2 + $0x70] sm:$0xf]
        %v10019 = vld [vmem:[#allocation2 + $0x74] sm:$0xf]
        %v10020 = vld [vmem:[#allocation2 + $0x78] sm:$0xf]
        %v10021 = vld [vmem:[#allocation2 + $0x7c] sm:$0xf]
        %v10022 = vld [vmem:[#allocation2 + $0x80] sm:$0xf]
        %v10023 = vld [vmem:[#allocation2 + $0x84] sm:$0xf]
        %v10024 = vld [vmem:[#allocation2 + $0x88] sm:$0xf]
        %v10025 = vld [vmem:[#allocation2 + $0x8c] sm:$0xf]
        %v10026 = vld [vmem:[#allocation2 + $0x90] sm:$0xf]
        %v10027 = vld [vmem:[#allocation2 + $0x94] sm:$0xf]
        %v10028 = vld [vmem:[#allocation2 + $0x98] sm:$0xf]
        %v10029 = vld [vmem:[#allocation2 + $0x9c] sm:$0xf]
        %v10030 = vld [vmem:[#allocation2 + $0xa0] sm:$0x7]
        %s10031 = scalar_lea.vmem [#allocation4], 512
        %v10032 = vld [vmem:[%s10031] sm:$0xf]
        %v10033 = vld [vmem:[%s10031 + $0x4] sm:$0xf]
        %v10034 = vld [vmem:[%s10031 + $0x8] sm:$0xf]
        %v10035 = vld [vmem:[%s10031 + $0xc] sm:$0xf]
        %v10036 = vld [vmem:[%s10031 + $0x10] sm:$0xf]
        %v10037 = vld [vmem:[%s10031 + $0x14] sm:$0xf]
        %v10038 = vld [vmem:[%s10031 + $0x18] sm:$0xf]
        %v10039 = vld [vmem:[%s10031 + $0x1c] sm:$0xf]
        %v10040 = vld [vmem:[%s10031 + $0x20] sm:$0xf]
        %v10041 = vld [vmem:[%s10031 + $0x24] sm:$0xf]
        %v10042 = vld [vmem:[%s10031 + $0x28] sm:$0xf]
        %v10043 = vld [vmem:[%s10031 + $0x2c] sm:$0xf]
        %v10044 = vld [vmem:[%s10031 + $0x30] sm:$0xf]
        %v10045 = vld [vmem:[%s10031 + $0x34] sm:$0xf]
        %v10046 = vld [vmem:[%s10031 + $0x38] sm:$0xf]
        %v10047 = vld [vmem:[%s10031 + $0x3c] sm:$0xf]
        %v10085 = vunpack.c.l.b16 %v9994
        %v10086 = vunpack.c.l.b16 %v9995
        %v10087 = vunpack.c.l.b16 %v9996
        %v10088 = vunpack.c.l.b16 %v9997
        %v10089 = vunpack.c.l.b16 %v9998
        %v10090 = vunpack.c.l.b16 %v9999
        %v10091 = vunpack.c.l.b16 %v10000
        %v10092 = vunpack.c.l.b16 %v10001
        %v10093 = vunpack.c.l.b16 %v10002
        %v10094 = vunpack.c.l.b16 %v10003
        %v10095 = vunpack.c.l.b16 %v10004
        %v10096 = vunpack.c.l.b16 %v10005
        %v10097 = vunpack.c.l.b16 %v10006
        %v10098 = vunpack.c.l.b16 %v10007
        %v10099 = vunpack.c.l.b16 %v10008
        %v10100 = vunpack.c.l.b16 %v10009
        %v10101 = vunpack.c.l.b16 %v10010
        %v10102 = vunpack.c.l.b16 %v10011
        %v10103 = vunpack.c.l.b16 %v10012
        %v10104 = vunpack.c.l.b16 %v10013
        %v10105 = vunpack.c.l.b16 %v10014
        %v10106 = vunpack.c.l.b16 %v10015
        %v10107 = vunpack.c.l.b16 %v10016
        %v10108 = vunpack.c.l.b16 %v10017
        %v10109 = vunpack.c.l.b16 %v10018
        %v10110 = vunpack.c.l.b16 %v10019
        %v10111 = vunpack.c.l.b16 %v10020
        %v10112 = vunpack.c.l.b16 %v10021
        %v10113 = vunpack.c.l.b16 %v10022
        %v10114 = vunpack.c.l.b16 %v10023
        %v10115 = vunpack.c.l.b16 %v10024
        %v10116 = vunpack.c.l.b16 %v10025
        %v10117 = vunpack.c.l.b16 %v10026
        %v10118 = vunpack.c.l.b16 %v10027
        %v10119 = vunpack.c.l.b16 %v10028
        %v10120 = vunpack.c.l.b16 %v10029
        %v10121 = vunpack.c.l.b16 %v10030
        %v10122 = vpack.c.b16 %v10086, %v10085
        %v10123 = vpack.c.b16 %v10088, %v10087
        %v10124 = vpack.c.b16 %v10090, %v10089
        %v10125 = vpack.c.b16 %v10092, %v10091
        %v10126 = vpack.c.b16 %v10094, %v10093
        %v10127 = vpack.c.b16 %v10096, %v10095
        %v10128 = vpack.c.b16 %v10098, %v10097
        %v10129 = vpack.c.b16 %v10100, %v10099
        %v10130 = vpack.c.b16 %v10102, %v10101
        %v10131 = vpack.c.b16 %v10104, %v10103
        %v10132 = vpack.c.b16 %v10106, %v10105
        %v10133 = vpack.c.b16 %v10108, %v10107
        %v10134 = vpack.c.b16 %v10110, %v10109
        %v10135 = vpack.c.b16 %v10112, %v10111
        %v10136 = vpack.c.b16 %v10114, %v10113
        %v10137 = vpack.c.b16 %v10116, %v10115
        %v10138 = vpack.c.b16 %v10118, %v10117
        %v10139 = vpack.c.b16 %v10120, %v10119
        %v10140 = vpack.c.b16 %v10121, %v10121
        %v10141 = vrot.slane %v10122, 3
        %v10142 = vrot.slane %v10123, 3
        %v10143 = vsel %vm4319, %v10141, %v10142
        %v10144 = vrot.slane %v10124, 3
        %v10145 = vsel %vm4319, %v10142, %v10144
        %v10146 = vrot.slane %v10125, 3
        %v10147 = vsel %vm4319, %v10144, %v10146
        %v10148 = vrot.slane %v10126, 3
        %v10149 = vsel %vm4319, %v10146, %v10148
        %v10150 = vrot.slane %v10127, 3
        %v10151 = vsel %vm4319, %v10148, %v10150
        %v10152 = vrot.slane %v10128, 3
        %v10153 = vsel %vm4319, %v10150, %v10152
        %v10154 = vrot.slane %v10129, 3
        %v10155 = vsel %vm4319, %v10152, %v10154
        %v10156 = vrot.slane %v10130, 3
        %v10157 = vsel %vm4319, %v10154, %v10156
        %v10158 = vrot.slane %v10131, 3
        %v10159 = vsel %vm4319, %v10156, %v10158
        %v10160 = vrot.slane %v10132, 3
        %v10161 = vsel %vm4319, %v10158, %v10160
        %v10162 = vrot.slane %v10133, 3
        %v10163 = vsel %vm4319, %v10160, %v10162
        %v10164 = vrot.slane %v10134, 3
        %v10165 = vsel %vm4319, %v10162, %v10164
        %v10166 = vrot.slane %v10135, 3
        %v10167 = vsel %vm4319, %v10164, %v10166
        %v10168 = vrot.slane %v10136, 3
        %v10169 = vsel %vm4319, %v10166, %v10168
        %v10170 = vrot.slane %v10137, 3
        %v10171 = vsel %vm4319, %v10168, %v10170
        %v10172 = vrot.slane %v10138, 3
        %v10173 = vsel %vm4319, %v10170, %v10172
        %v10174 = vrot.slane %v10139, 3
        %v10175 = vsel %vm4319, %v10172, %v10174
        %v10176 = vrot.slane %v10140, 3
        %v10177 = vsel %vm4319, %v10174, %v10176
        %v10212 = vunpack.c.l.b16 %v10032
        %v10213 = vunpack.c.l.b16 %v10033
        %v10214 = vunpack.c.l.b16 %v10034
        %v10215 = vunpack.c.l.b16 %v10035
        %v10216 = vunpack.c.l.b16 %v10036
        %v10217 = vunpack.c.l.b16 %v10037
        %v10218 = vunpack.c.l.b16 %v10038
        %v10219 = vunpack.c.l.b16 %v10039
        %v10220 = vunpack.c.l.b16 %v10040
        %v10221 = vunpack.c.l.b16 %v10041
        %v10222 = vunpack.c.l.b16 %v10042
        %v10223 = vunpack.c.l.b16 %v10043
        %v10224 = vunpack.c.l.b16 %v10044
        %v10225 = vunpack.c.l.b16 %v10045
        %v10226 = vunpack.c.l.b16 %v10046
        %v10227 = vunpack.c.l.b16 %v10047
        %v10228 = vpack.c.b16 %v10213, %v10212
        %v10229 = vpack.c.b16 %v10215, %v10214
        %v10230 = vpack.c.b16 %v10217, %v10216
        %v10231 = vpack.c.b16 %v10219, %v10218
        %v10232 = vpack.c.b16 %v10221, %v10220
        %v10233 = vpack.c.b16 %v10223, %v10222
        %v10234 = vpack.c.b16 %v10225, %v10224
        %v10235 = vpack.c.b16 %v10227, %v10226
        %10244 = vmatpush.bf16.msra.mxu0 %v10235
        %10245 = vmatpush.bf16.msra.mxu0 %v10234
        %10246 = vmatpush.bf16.msra.mxu0 %v10233
        %10247 = vmatpush.bf16.msra.mxu0 %v10232
        %10248 = vmatpush.bf16.msra.mxu0 %v10231
        %10249 = vmatpush.bf16.msra.mxu0 %v10230
        %10250 = vmatpush.bf16.msra.mxu0 %v10229
        %10251 = vmatpush.bf16.msra.mxu0 %v10228
        %10252 = vmatmul.bf16.gmra.mxu0 %v10143
        %v10253 = vpop.f32.mrf.mxu0
        %v10254 = vadd.f32 0.0, %v10253
        %v10255 = vpop.f32.mrf.mxu0
        %v10256 = vadd.f32 0.0, %v10255
        %10257 = vmatmul.bf16.gmra.mxu0 %v10145
        %v10258 = vpop.f32.mrf.mxu0
        %v10259 = vadd.f32 0.0, %v10258
        %v10260 = vpop.f32.mrf.mxu0
        %v10261 = vadd.f32 0.0, %v10260
        %10262 = vmatmul.bf16.gmra.mxu0 %v10147
        %v10263 = vpop.f32.mrf.mxu0
        %v10264 = vadd.f32 0.0, %v10263
        %v10265 = vpop.f32.mrf.mxu0
        %v10266 = vadd.f32 0.0, %v10265
        %10267 = vmatmul.bf16.gmra.mxu0 %v10149
        %v10268 = vpop.f32.mrf.mxu0
        %v10269 = vadd.f32 0.0, %v10268
        %v10270 = vpop.f32.mrf.mxu0
        %v10271 = vadd.f32 0.0, %v10270
        %10272 = vmatmul.bf16.gmra.mxu0 %v10151
        %v10273 = vpop.f32.mrf.mxu0
        %v10274 = vadd.f32 0.0, %v10273
        %v10275 = vpop.f32.mrf.mxu0
        %v10276 = vadd.f32 0.0, %v10275
        %10277 = vmatmul.bf16.gmra.mxu0 %v10153
        %v10278 = vpop.f32.mrf.mxu0
        %v10279 = vadd.f32 0.0, %v10278
        %v10280 = vpop.f32.mrf.mxu0
        %v10281 = vadd.f32 0.0, %v10280
        %10282 = vmatmul.bf16.gmra.mxu0 %v10155
        %v10283 = vpop.f32.mrf.mxu0
        %v10284 = vadd.f32 0.0, %v10283
        %v10285 = vpop.f32.mrf.mxu0
        %v10286 = vadd.f32 0.0, %v10285
        %10287 = vmatmul.bf16.gmra.mxu0 %v10157
        %v10288 = vpop.f32.mrf.mxu0
        %v10289 = vadd.f32 0.0, %v10288
        %v10290 = vpop.f32.mrf.mxu0
        %v10291 = vadd.f32 0.0, %v10290
        %10292 = vmatmul.bf16.gmra.mxu0 %v10159
        %v10293 = vpop.f32.mrf.mxu0
        %v10294 = vadd.f32 0.0, %v10293
        %v10295 = vpop.f32.mrf.mxu0
        %v10296 = vadd.f32 0.0, %v10295
        %10297 = vmatmul.bf16.gmra.mxu0 %v10161
        %v10298 = vpop.f32.mrf.mxu0
        %v10299 = vadd.f32 0.0, %v10298
        %v10300 = vpop.f32.mrf.mxu0
        %v10301 = vadd.f32 0.0, %v10300
        %10302 = vmatmul.bf16.gmra.mxu0 %v10163
        %v10303 = vpop.f32.mrf.mxu0
        %v10304 = vadd.f32 0.0, %v10303
        %v10305 = vpop.f32.mrf.mxu0
        %v10306 = vadd.f32 0.0, %v10305
        %10307 = vmatmul.bf16.gmra.mxu0 %v10165
        %v10308 = vpop.f32.mrf.mxu0
        %v10309 = vadd.f32 0.0, %v10308
        %v10310 = vpop.f32.mrf.mxu0
        %v10311 = vadd.f32 0.0, %v10310
        %10312 = vmatmul.bf16.gmra.mxu0 %v10167
        %v10313 = vpop.f32.mrf.mxu0
        %v10314 = vadd.f32 0.0, %v10313
        %v10315 = vpop.f32.mrf.mxu0
        %v10316 = vadd.f32 0.0, %v10315
        %10317 = vmatmul.bf16.gmra.mxu0 %v10169
        %v10318 = vpop.f32.mrf.mxu0
        %v10319 = vadd.f32 0.0, %v10318
        %v10320 = vpop.f32.mrf.mxu0
        %v10321 = vadd.f32 0.0, %v10320
        %10322 = vmatmul.bf16.gmra.mxu0 %v10171
        %v10323 = vpop.f32.mrf.mxu0
        %v10324 = vadd.f32 0.0, %v10323
        %v10325 = vpop.f32.mrf.mxu0
        %v10326 = vadd.f32 0.0, %v10325
        %10327 = vmatmul.bf16.gmra.mxu0 %v10173
        %v10328 = vpop.f32.mrf.mxu0
        %v10329 = vadd.f32 0.0, %v10328
        %v10330 = vpop.f32.mrf.mxu0
        %v10331 = vadd.f32 0.0, %v10330
        %10332 = vmatmul.bf16.gmra.mxu0 %v10175
        %v10333 = vpop.f32.mrf.mxu0
        %v10334 = vadd.f32 0.0, %v10333
        %v10335 = vpop.f32.mrf.mxu0
        %v10336 = vadd.f32 0.0, %v10335
        %10337 = vmatmul.bf16.gmra.mxu0 %v10177
        %v10338 = vpop.f32.mrf.mxu0
        %v10339 = vadd.f32 0.0, %v10338
        %v10340 = vpop.f32.mrf.mxu0
        %v10341 = vadd.f32 0.0, %v10340
        %10342 = vdwg.mxu0
        %v10343 = vld [vmem:[#allocation3] sm:$0xff]
        %v10344 = vld [vmem:[#allocation3 + $0x8] sm:$0xff]
        %v10345 = vld [vmem:[#allocation3 + $0x10] sm:$0xff]
        %v10346 = vld [vmem:[#allocation3 + $0x18] sm:$0xff]
        %v10347 = vld [vmem:[#allocation3 + $0x20] sm:$0xff]
        %v10348 = vld [vmem:[#allocation3 + $0x28] sm:$0xff]
        %v10349 = vld [vmem:[#allocation3 + $0x30] sm:$0xff]
        %v10350 = vld [vmem:[#allocation3 + $0x38] sm:$0xff]
        %v10351 = vld [vmem:[#allocation3 + $0x40] sm:$0xff]
        %v10352 = vld [vmem:[#allocation3 + $0x48] sm:$0xff]
        %v10353 = vld [vmem:[#allocation3 + $0x50] sm:$0xff]
        %v10354 = vld [vmem:[#allocation3 + $0x58] sm:$0xff]
        %v10355 = vld [vmem:[#allocation3 + $0x60] sm:$0xff]
        %v10356 = vld [vmem:[#allocation3 + $0x68] sm:$0xff]
        %v10357 = vld [vmem:[#allocation3 + $0x70] sm:$0xff]
        %v10358 = vld [vmem:[#allocation3 + $0x78] sm:$0xff]
        %v10359 = vld [vmem:[#allocation3 + $0x80] sm:$0xff]
        %v10360 = vld [vmem:[#allocation3 + $0x88] sm:$0xff]
        %v10361 = vld [vmem:[#allocation3 + $0x90] sm:$0xff]
        %v10362 = vld [vmem:[#allocation3 + $0x98] sm:$0xff]
        %v10363 = vld [vmem:[#allocation3 + $0xa0] sm:$0xff]
        %v10364 = vld [vmem:[#allocation3 + $0xa8] sm:$0xff]
        %v10365 = vld [vmem:[#allocation3 + $0xb0] sm:$0xff]
        %v10366 = vld [vmem:[#allocation3 + $0xb8] sm:$0xff]
        %v10367 = vld [vmem:[#allocation3 + $0xc0] sm:$0xff]
        %v10368 = vld [vmem:[#allocation3 + $0xc8] sm:$0xff]
        %v10369 = vld [vmem:[#allocation3 + $0xd0] sm:$0xff]
        %v10370 = vld [vmem:[#allocation3 + $0xd8] sm:$0xff]
        %v10371 = vld [vmem:[#allocation3 + $0xe0] sm:$0xff]
        %v10372 = vld [vmem:[#allocation3 + $0xe8] sm:$0xff]
        %v10373 = vld [vmem:[#allocation3 + $0xf0] sm:$0xff]
        %v10374 = vld [vmem:[#allocation3 + $0xf8] sm:$0xff]
        %v10375 = vld [vmem:[#allocation3 + $0x100] sm:$0xff]
        %v10376 = vld [vmem:[#allocation3 + $0x108] sm:$0xff]
        %v10377 = vld [vmem:[#allocation3 + $0x110] sm:$0xff]
        %v10378 = vld [vmem:[#allocation3 + $0x118] sm:$0xff]
        %v10379 = vadd.f32 %v10343, %v10254
        %v10380 = vadd.f32 %v10344, %v10256
        %v10381 = vadd.f32 %v10345, %v10259
        %v10382 = vadd.f32 %v10346, %v10261
        %v10383 = vadd.f32 %v10347, %v10264
        %v10384 = vadd.f32 %v10348, %v10266
        %v10385 = vadd.f32 %v10349, %v10269
        %v10386 = vadd.f32 %v10350, %v10271
        %v10387 = vadd.f32 %v10351, %v10274
        %v10388 = vadd.f32 %v10352, %v10276
        %v10389 = vadd.f32 %v10353, %v10279
        %v10390 = vadd.f32 %v10354, %v10281
        %v10391 = vadd.f32 %v10355, %v10284
        %v10392 = vadd.f32 %v10356, %v10286
        %v10393 = vadd.f32 %v10357, %v10289
        %v10394 = vadd.f32 %v10358, %v10291
        %v10395 = vadd.f32 %v10359, %v10294
        %v10396 = vadd.f32 %v10360, %v10296
        %v10397 = vadd.f32 %v10361, %v10299
        %v10398 = vadd.f32 %v10362, %v10301
        %v10399 = vadd.f32 %v10363, %v10304
        %v10400 = vadd.f32 %v10364, %v10306
        %v10401 = vadd.f32 %v10365, %v10309
        %v10402 = vadd.f32 %v10366, %v10311
        %v10403 = vadd.f32 %v10367, %v10314
        %v10404 = vadd.f32 %v10368, %v10316
        %v10405 = vadd.f32 %v10369, %v10319
        %v10406 = vadd.f32 %v10370, %v10321
        %v10407 = vadd.f32 %v10371, %v10324
        %v10408 = vadd.f32 %v10372, %v10326
        %v10409 = vadd.f32 %v10373, %v10329
        %v10410 = vadd.f32 %v10374, %v10331
        %v10411 = vadd.f32 %v10375, %v10334
        %v10412 = vadd.f32 %v10376, %v10336
        %v10413 = vadd.f32 %v10377, %v10339
        %v10414 = vadd.f32 %v10378, %v10341
        %10415 = vst [vmem:[#allocation3] sm:$0xff] %v10379
        %10416 = vst [vmem:[#allocation3 + $0x8] sm:$0xff] %v10380
        %10417 = vst [vmem:[#allocation3 + $0x10] sm:$0xff] %v10381
        %10418 = vst [vmem:[#allocation3 + $0x18] sm:$0xff] %v10382
        %10419 = vst [vmem:[#allocation3 + $0x20] sm:$0xff] %v10383
        %10420 = vst [vmem:[#allocation3 + $0x28] sm:$0xff] %v10384
        %10421 = vst [vmem:[#allocation3 + $0x30] sm:$0xff] %v10385
        %10422 = vst [vmem:[#allocation3 + $0x38] sm:$0xff] %v10386
        %10423 = vst [vmem:[#allocation3 + $0x40] sm:$0xff] %v10387
        %10424 = vst [vmem:[#allocation3 + $0x48] sm:$0xff] %v10388
        %10425 = vst [vmem:[#allocation3 + $0x50] sm:$0xff] %v10389
        %10426 = vst [vmem:[#allocation3 + $0x58] sm:$0xff] %v10390
        %10427 = vst [vmem:[#allocation3 + $0x60] sm:$0xff] %v10391
        %10428 = vst [vmem:[#allocation3 + $0x68] sm:$0xff] %v10392
        %10429 = vst [vmem:[#allocation3 + $0x70] sm:$0xff] %v10393
        %10430 = vst [vmem:[#allocation3 + $0x78] sm:$0xff] %v10394
        %10431 = vst [vmem:[#allocation3 + $0x80] sm:$0xff] %v10395
        %10432 = vst [vmem:[#allocation3 + $0x88] sm:$0xff] %v10396
        %10433 = vst [vmem:[#allocation3 + $0x90] sm:$0xff] %v10397
        %10434 = vst [vmem:[#allocation3 + $0x98] sm:$0xff] %v10398
        %10435 = vst [vmem:[#allocation3 + $0xa0] sm:$0xff] %v10399
        %10436 = vst [vmem:[#allocation3 + $0xa8] sm:$0xff] %v10400
        %10437 = vst [vmem:[#allocation3 + $0xb0] sm:$0xff] %v10401
        %10438 = vst [vmem:[#allocation3 + $0xb8] sm:$0xff] %v10402
        %10439 = vst [vmem:[#allocation3 + $0xc0] sm:$0xff] %v10403
        %10440 = vst [vmem:[#allocation3 + $0xc8] sm:$0xff] %v10404
        %10441 = vst [vmem:[#allocation3 + $0xd0] sm:$0xff] %v10405
        %10442 = vst [vmem:[#allocation3 + $0xd8] sm:$0xff] %v10406
        %10443 = vst [vmem:[#allocation3 + $0xe0] sm:$0xff] %v10407
        %10444 = vst [vmem:[#allocation3 + $0xe8] sm:$0xff] %v10408
        %10445 = vst [vmem:[#allocation3 + $0xf0] sm:$0xff] %v10409
        %10446 = vst [vmem:[#allocation3 + $0xf8] sm:$0xff] %v10410
        %10447 = vst [vmem:[#allocation3 + $0x100] sm:$0xff] %v10411
        %10448 = vst [vmem:[#allocation3 + $0x108] sm:$0xff] %v10412
        %10449 = vst [vmem:[#allocation3 + $0x110] sm:$0xff] %v10413
        %10450 = vst [vmem:[#allocation3 + $0x118] sm:$0xff] %v10414
        %v10451 = vld [vmem:[#allocation3] sm:$0xff]
        %v10452 = vld [vmem:[#allocation3 + $0x8] sm:$0xff]
        %v10453 = vld [vmem:[#allocation3 + $0x10] sm:$0xff]
        %v10454 = vld [vmem:[#allocation3 + $0x18] sm:$0xff]
        %v10455 = vld [vmem:[#allocation3 + $0x20] sm:$0xff]
        %v10456 = vld [vmem:[#allocation3 + $0x28] sm:$0xff]
        %v10457 = vld [vmem:[#allocation3 + $0x30] sm:$0xff]
        %v10458 = vld [vmem:[#allocation3 + $0x38] sm:$0xff]
        %v10459 = vld [vmem:[#allocation3 + $0x40] sm:$0xff]
        %v10460 = vld [vmem:[#allocation3 + $0x48] sm:$0xff]
        %v10461 = vld [vmem:[#allocation3 + $0x50] sm:$0xff]
        %v10462 = vld [vmem:[#allocation3 + $0x58] sm:$0xff]
        %v10463 = vld [vmem:[#allocation3 + $0x60] sm:$0xff]
        %v10464 = vld [vmem:[#allocation3 + $0x68] sm:$0xff]
        %v10465 = vld [vmem:[#allocation3 + $0x70] sm:$0xff]
        %v10466 = vld [vmem:[#allocation3 + $0x78] sm:$0xff]
        %v10467 = vld [vmem:[#allocation3 + $0x80] sm:$0xff]
        %v10468 = vld [vmem:[#allocation3 + $0x88] sm:$0xff]
        %v10469 = vld [vmem:[#allocation3 + $0x90] sm:$0xff]
        %v10470 = vld [vmem:[#allocation3 + $0x98] sm:$0xff]
        %v10471 = vld [vmem:[#allocation3 + $0xa0] sm:$0xff]
        %v10472 = vld [vmem:[#allocation3 + $0xa8] sm:$0xff]
        %v10473 = vld [vmem:[#allocation3 + $0xb0] sm:$0xff]
        %v10474 = vld [vmem:[#allocation3 + $0xb8] sm:$0xff]
        %v10475 = vld [vmem:[#allocation3 + $0xc0] sm:$0xff]
        %v10476 = vld [vmem:[#allocation3 + $0xc8] sm:$0xff]
        %v10477 = vld [vmem:[#allocation3 + $0xd0] sm:$0xff]
        %v10478 = vld [vmem:[#allocation3 + $0xd8] sm:$0xff]
        %v10479 = vld [vmem:[#allocation3 + $0xe0] sm:$0xff]
        %v10480 = vld [vmem:[#allocation3 + $0xe8] sm:$0xff]
        %v10481 = vld [vmem:[#allocation3 + $0xf0] sm:$0xff]
        %v10482 = vld [vmem:[#allocation3 + $0xf8] sm:$0xff]
        %v10483 = vld [vmem:[#allocation3 + $0x100] sm:$0xff]
        %v10484 = vld [vmem:[#allocation3 + $0x108] sm:$0xff]
        %v10485 = vld [vmem:[#allocation3 + $0x110] sm:$0xff]
        %v10486 = vld [vmem:[#allocation3 + $0x118] sm:$0xff]
        %v10487 = vld [vmem:[%s4] sm:$0x1]
        %v10488 = vperm.slane %v10487, 0
        %v10489 = vmul.f32 %v10451, %v10488
        %v10490 = vmul.f32 %v10452, %v10488
        %v10491 = vmul.f32 %v10453, %v10488
        %v10492 = vmul.f32 %v10454, %v10488
        %v10493 = vmul.f32 %v10455, %v10488
        %v10494 = vmul.f32 %v10456, %v10488
        %v10495 = vmul.f32 %v10457, %v10488
        %v10496 = vmul.f32 %v10458, %v10488
        %v10497 = vmul.f32 %v10459, %v10488
        %v10498 = vmul.f32 %v10460, %v10488
        %v10499 = vmul.f32 %v10461, %v10488
        %v10500 = vmul.f32 %v10462, %v10488
        %v10501 = vmul.f32 %v10463, %v10488
        %v10502 = vmul.f32 %v10464, %v10488
        %v10503 = vmul.f32 %v10465, %v10488
        %v10504 = vmul.f32 %v10466, %v10488
        %v10505 = vmul.f32 %v10467, %v10488
        %v10506 = vmul.f32 %v10468, %v10488
        %v10507 = vmul.f32 %v10469, %v10488
        %v10508 = vmul.f32 %v10470, %v10488
        %v10509 = vmul.f32 %v10471, %v10488
        %v10510 = vmul.f32 %v10472, %v10488
        %v10511 = vmul.f32 %v10473, %v10488
        %v10512 = vmul.f32 %v10474, %v10488
        %v10513 = vmul.f32 %v10475, %v10488
        %v10514 = vmul.f32 %v10476, %v10488
        %v10515 = vmul.f32 %v10477, %v10488
        %v10516 = vmul.f32 %v10478, %v10488
        %v10517 = vmul.f32 %v10479, %v10488
        %v10518 = vmul.f32 %v10480, %v10488
        %v10519 = vmul.f32 %v10481, %v10488
        %v10520 = vmul.f32 %v10482, %v10488
        %v10521 = vmul.f32 %v10483, %v10488
        %v10522 = vmul.f32 %v10484, %v10488
        %v10523 = vmul.f32 %v10485, %v10488
        %v10524 = vmul.f32 %v10486, %v10488
        %v10525 = vld [vmem:[%s4 + $0x1] sm:$0x1]
        %v10526 = vperm.slane %v10525, 0
        %v10527 = vadd.f32 %v10489, %v10526
        %v10528 = vadd.f32 %v10490, %v10526
        %v10529 = vadd.f32 %v10491, %v10526
        %v10530 = vadd.f32 %v10492, %v10526
        %v10531 = vadd.f32 %v10493, %v10526
        %v10532 = vadd.f32 %v10494, %v10526
        %v10533 = vadd.f32 %v10495, %v10526
        %v10534 = vadd.f32 %v10496, %v10526
        %v10535 = vadd.f32 %v10497, %v10526
        %v10536 = vadd.f32 %v10498, %v10526
        %v10537 = vadd.f32 %v10499, %v10526
        %v10538 = vadd.f32 %v10500, %v10526
        %v10539 = vadd.f32 %v10501, %v10526
        %v10540 = vadd.f32 %v10502, %v10526
        %v10541 = vadd.f32 %v10503, %v10526
        %v10542 = vadd.f32 %v10504, %v10526
        %v10543 = vadd.f32 %v10505, %v10526
        %v10544 = vadd.f32 %v10506, %v10526
        %v10545 = vadd.f32 %v10507, %v10526
        %v10546 = vadd.f32 %v10508, %v10526
        %v10547 = vadd.f32 %v10509, %v10526
        %v10548 = vadd.f32 %v10510, %v10526
        %v10549 = vadd.f32 %v10511, %v10526
        %v10550 = vadd.f32 %v10512, %v10526
        %v10551 = vadd.f32 %v10513, %v10526
        %v10552 = vadd.f32 %v10514, %v10526
        %v10553 = vadd.f32 %v10515, %v10526
        %v10554 = vadd.f32 %v10516, %v10526
        %v10555 = vadd.f32 %v10517, %v10526
        %v10556 = vadd.f32 %v10518, %v10526
        %v10557 = vadd.f32 %v10519, %v10526
        %v10558 = vadd.f32 %v10520, %v10526
        %v10559 = vadd.f32 %v10521, %v10526
        %v10560 = vadd.f32 %v10522, %v10526
        %v10561 = vadd.f32 %v10523, %v10526
        %v10562 = vadd.f32 %v10524, %v10526
        %v10563 = vmax.f32 %v10527, 0.0
        %v10564 = vmax.f32 %v10528, 0.0
        %v10565 = vmax.f32 %v10529, 0.0
        %v10566 = vmax.f32 %v10530, 0.0
        %v10567 = vmax.f32 %v10531, 0.0
        %v10568 = vmax.f32 %v10532, 0.0
        %v10569 = vmax.f32 %v10533, 0.0
        %v10570 = vmax.f32 %v10534, 0.0
        %v10571 = vmax.f32 %v10535, 0.0
        %v10572 = vmax.f32 %v10536, 0.0
        %v10573 = vmax.f32 %v10537, 0.0
        %v10574 = vmax.f32 %v10538, 0.0
        %v10575 = vmax.f32 %v10539, 0.0
        %v10576 = vmax.f32 %v10540, 0.0
        %v10577 = vmax.f32 %v10541, 0.0
        %v10578 = vmax.f32 %v10542, 0.0
        %v10579 = vmax.f32 %v10543, 0.0
        %v10580 = vmax.f32 %v10544, 0.0
        %v10581 = vmax.f32 %v10545, 0.0
        %v10582 = vmax.f32 %v10546, 0.0
        %v10583 = vmax.f32 %v10547, 0.0
        %v10584 = vmax.f32 %v10548, 0.0
        %v10585 = vmax.f32 %v10549, 0.0
        %v10586 = vmax.f32 %v10550, 0.0
        %v10587 = vmax.f32 %v10551, 0.0
        %v10588 = vmax.f32 %v10552, 0.0
        %v10589 = vmax.f32 %v10553, 0.0
        %v10590 = vmax.f32 %v10554, 0.0
        %v10591 = vmax.f32 %v10555, 0.0
        %v10592 = vmax.f32 %v10556, 0.0
        %v10593 = vmax.f32 %v10557, 0.0
        %v10594 = vmax.f32 %v10558, 0.0
        %v10595 = vmax.f32 %v10559, 0.0
        %v10596 = vmax.f32 %v10560, 0.0
        %v10597 = vmax.f32 %v10561, 0.0
        %v10598 = vmax.f32 %v10562, 0.0
        %10599 = vst [vmem:[%s234] sm:$0xff] %v10563
        %10600 = vst [vmem:[%s234 + $0x8] sm:$0xff] %v10564
        %10601 = vst [vmem:[%s234 + $0x10] sm:$0xff] %v10565
        %10602 = vst [vmem:[%s234 + $0x18] sm:$0xff] %v10566
        %10603 = vst [vmem:[%s234 + $0x20] sm:$0xff] %v10567
        %10604 = vst [vmem:[%s234 + $0x28] sm:$0xff] %v10568
        %10605 = vst [vmem:[%s234 + $0x30] sm:$0xff] %v10569
        %10606 = vst [vmem:[%s234 + $0x38] sm:$0xff] %v10570
        %10607 = vst [vmem:[%s234 + $0x40] sm:$0xff] %v10571
        %10608 = vst [vmem:[%s234 + $0x48] sm:$0xff] %v10572
        %10609 = vst [vmem:[%s234 + $0x50] sm:$0xff] %v10573
        %10610 = vst [vmem:[%s234 + $0x58] sm:$0xff] %v10574
        %10611 = vst [vmem:[%s234 + $0x60] sm:$0xff] %v10575
        %10612 = vst [vmem:[%s234 + $0x68] sm:$0xff] %v10576
        %10613 = vst [vmem:[%s234 + $0x70] sm:$0xff] %v10577
        %10614 = vst [vmem:[%s234 + $0x78] sm:$0xff] %v10578
        %10615 = vst [vmem:[%s234 + $0x80] sm:$0xff] %v10579
        %10616 = vst [vmem:[%s234 + $0x88] sm:$0xff] %v10580
        %10617 = vst [vmem:[%s234 + $0x90] sm:$0xff] %v10581
        %10618 = vst [vmem:[%s234 + $0x98] sm:$0xff] %v10582
        %10619 = vst [vmem:[%s234 + $0xa0] sm:$0xff] %v10583
        %10620 = vst [vmem:[%s234 + $0xa8] sm:$0xff] %v10584
        %10621 = vst [vmem:[%s234 + $0xb0] sm:$0xff] %v10585
        %10622 = vst [vmem:[%s234 + $0xb8] sm:$0xff] %v10586
        %10623 = vst [vmem:[%s234 + $0xc0] sm:$0xff] %v10587
        %10624 = vst [vmem:[%s234 + $0xc8] sm:$0xff] %v10588
        %10625 = vst [vmem:[%s234 + $0xd0] sm:$0xff] %v10589
        %10626 = vst [vmem:[%s234 + $0xd8] sm:$0xff] %v10590
        %10627 = vst [vmem:[%s234 + $0xe0] sm:$0xff] %v10591
        %10628 = vst [vmem:[%s234 + $0xe8] sm:$0xff] %v10592
        %10629 = vst [vmem:[%s234 + $0xf0] sm:$0xff] %v10593
        %10630 = vst [vmem:[%s234 + $0xf8] sm:$0xff] %v10594
        %10631 = vst [vmem:[%s234 + $0x100] sm:$0xff] %v10595
        %10632 = vst [vmem:[%s234 + $0x108] sm:$0xff] %v10596
        %10633 = vst [vmem:[%s234 + $0x110] sm:$0xff] %v10597
        %10634 = vst [vmem:[%s234 + $0x118] sm:$0xff] %v10598
        %s10635 = sand.u32 %s138, 1
        %s10636 = scalar_lea.sflag [#allocation6], %s10635
        %s10637 = sand.u32 %s138, 1
        %s10638 = smul.addr %s10637, 288
        %s10639 = scalar_lea.vmem [#allocation7], %s10638
        // Predicated region
        $region45: #{tpu_custom_call.1} parent=39 // pred_check
          %p10640 = pneg %p148
        $region46: #{tpu_custom_call.1} parent=39 // pred_check_branch
          %10642 = sbr.rel (%p10640) target = $region48
        $region47: #{tpu_custom_call.1} parent=39 // pred_region
          %10644 = vsyncadd %s10636, 0
          %s10645 = smul.addr %s20, 36
          %s10646 = smul.addr %s10645, 8
          %s10647 = scalar_lea.hbm %s5, %s10646
          %s10648 = sshll.u32 %s10639, 4
          %s10649 = int_to_ptr.vmem [resolvable:$true] %s10648
          %s10650 = sshll.u32 %s10647, 4
          %s10651 = int_to_ptr.hbm [resolvable:$true] %s10650
          %10656 = dma.vmem_to_hbm [thread:$0]  %s10649, 4608, %s10651, %s10636, 128, 128, 8
        $region48: #{tpu_custom_call.1} parent=39 // pred_fallthru
          _
      $region40: #{tpu_custom_call.1} parent=5 // pred_fallthru
        _
      %p10657 = scmp.le.s32.totalorder 2, %s15
      // Predicated region
      $region49: #{tpu_custom_call.1} parent=5 // pred_check
        %p10658 = pneg %p10657
      $region50: #{tpu_custom_call.1} parent=5 // pred_check_branch
        %10660 = sbr.rel (%p10658) target = $region52
      $region51: #{tpu_custom_call.1} parent=5 // pred_region
        %s10661 = ssub.s32 %s15, 2
        // Predicated region
        $region53: #{tpu_custom_call.1} parent=51 // pred_check
          %p10662 = pneg %p154
        $region54: #{tpu_custom_call.1} parent=51 // pred_check_branch
          %10664 = sbr.rel (%p10662) target = $region56
        $region55: #{tpu_custom_call.1} parent=51 // pred_region
          %s10665 = sand.u32 %s139, 1
          %s10666 = scalar_lea.sflag [#allocation6], %s10665
          %s10667 = sand.u32 %s139, 1
          %s10668 = smul.addr %s10667, 288
          %s10669 = scalar_lea.vmem [#allocation7], %s10668
          %10671 = dma.done %s10666, 4608
        $region56: #{tpu_custom_call.1} parent=51 // pred_fallthru
          _
      $region52: #{tpu_custom_call.1} parent=5 // pred_fallthru
        _
    $region6: #{tpu_custom_call.1} parent=1 // loop_footer
      %s19 = sadd.s32 1, %s15
    $region7: #{tpu_custom_call.1} parent=1 // loop_footer_branch
      %14 = sbr.rel target = $region3
    $region8: #{tpu_custom_call.1} parent=1 // loop_exit
      _
    %10672 = vsyncpa [#allocation5], 1
    %s10673 = scalar_lea.sflag [#allocation5], 1
    %10674 = vsyncpa %s10673, 1
    %10675 = vsyncpa [#allocation6], 1
    %s10676 = scalar_lea.sflag [#allocation6], 1
    %10677 = vsyncpa %s10676, 1

</llo_original>
